<compile_context>
chip_gen: v7x
topology: tpu7x:2x2x1
jax: 0.10.0
libtpu: 0.0.40
codegen_flags: <defaults>
</compile_context>

<pallas_src>
import jax
import jax.numpy as jnp
from jax.experimental import pallas as pl
from jax.experimental.pallas import tpu as pltpu

D_IN, D_H1, D_H2, D_OUT = 2352, 512, 256, 10
D_OUT_PAD = 128                 # lane-dense padded fc3 width
NEG_PAD = -1e30                 # bias for padded logit lanes (exp -> 0); keep f32
B_TILE = 256                    # batch rows per grid step (MXU-row fill on v6e/v7x)
VMEM_LIMIT = 24 * 1024 * 1024   # right-sized for v7x's 64 MiB; generous elsewhere


def _mlp_kernel(x_ref, w1_ref, b1_ref, w2_ref, b2_ref, w3_ref, b3_ref, out_ref):
    # fc1 + ReLU (dropout = identity at inference). bf16 MXU, f32 accumulate.
    x = x_ref[...].astype(jnp.bfloat16)            # no-op if x already bf16
    h1 = jnp.dot(x, w1_ref[...], preferred_element_type=jnp.float32) + b1_ref[...]
    h1 = jnp.maximum(h1, 0.0)                      # [bt, 512] f32

    # fc2 + ReLU (dropout = identity at inference)
    h2 = jnp.dot(h1.astype(jnp.bfloat16), w2_ref[...],
                 preferred_element_type=jnp.float32) + b2_ref[...]
    h2 = jnp.maximum(h2, 0.0)                      # [bt, 256] f32

    # fc3 (output padded to 128 lanes; padded lanes carry bias = -1e30)
    logits = jnp.dot(h2.astype(jnp.bfloat16), w3_ref[...],
                     preferred_element_type=jnp.float32) + b3_ref[...]   # [bt, 128]

    # numerically stable log_softmax along the last axis; padded lanes
    # contribute exp(-huge) == 0 to the sum, so the first 10 lanes are exact.
    m = jnp.max(logits, axis=-1, keepdims=True)
    shifted = logits - m
    lse = jnp.log(jnp.sum(jnp.exp(shifted), axis=-1, keepdims=True))
    out_ref[...] = shifted - lse                   # [bt, 128]


def _resident_spec(shape, single_buffer):
    """Weight/bias block with constant index_map: resident in VMEM all grid long.
    Single-buffered when requested (2nd pipeline buffer would never be used)."""
    idx_map = lambda i: (0, 0)
    if single_buffer:
        return pl.BlockSpec(shape, idx_map, pipeline_mode=pl.Buffered(1))
    return pl.BlockSpec(shape, idx_map)


def _build_call(b_tile, n_tiles, out_rows, single_buffer_weights):
    return pl.pallas_call(
        _mlp_kernel,
        out_shape=jax.ShapeDtypeStruct((out_rows, D_OUT_PAD), jnp.float32),
        grid_spec=pltpu.PrefetchScalarGridSpec(
            num_scalar_prefetch=0,
            grid=(n_tiles,),
            in_specs=[
                pl.BlockSpec((b_tile, D_IN), lambda i: (i, 0)),          # x tile
                _resident_spec((D_IN, D_H1), single_buffer_weights),     # W1 (bf16)
                _resident_spec((1, D_H1), single_buffer_weights),        # b1 (f32)
                _resident_spec((D_H1, D_H2), single_buffer_weights),     # W2 (bf16)
                _resident_spec((1, D_H2), single_buffer_weights),        # b2 (f32)
                _resident_spec((D_H2, D_OUT_PAD), single_buffer_weights),# W3 pad (bf16)
                _resident_spec((1, D_OUT_PAD), single_buffer_weights),   # b3 pad (f32)
            ],
            out_specs=pl.BlockSpec((b_tile, D_OUT_PAD), lambda i: (i, 0)),
        ),
        compiler_params=pltpu.CompilerParams(
            # On v7x, switch to pltpu.CORE_PARALLEL if profiling shows the 1-D
            # "parallel" batch axis is not sharded across the two TensorCores.
            dimension_semantics=("parallel",),
            vmem_limit_bytes=VMEM_LIMIT,
        ),
    )


def net_forward(x, w1, b1, w2, b2, w3p, b3p, *, b_tile=None):
    """x: [B, 2352] f32 (or bf16). Weights bf16 [in, out]; fc3 padded to 128."""
    B = x.shape[0]
    if b_tile is None:
        # Single tile (rounded up to the 8-row sublane) for small batches, else
        # B_TILE rows per grid step. No wrapper jnp.pad: the ragged last block
        # is covered by Pallas' masked OOB writes; those rows are never read.
        b_tile = min(B_TILE, ((B + 7) // 8) * 8)
    n_tiles = pl.cdiv(B, b_tile)

    args = (x, w1, b1, w2, b2, w3p, b3p)
    try:
        out = _build_call(b_tile, n_tiles, B, True)(*args)
    except Exception:
        # Fallback for jax versions without BlockSpec(pipeline_mode=pl.Buffered(1)).
        out = _build_call(b_tile, n_tiles, B, False)(*args)
    return out[:, :D_OUT]


def init_params(key):
    """f32 params mimicking PyTorch's default U(-1/sqrt(fan_in), 1/sqrt(fan_in))."""
    ks = jax.random.split(key, 6)

    def lin(kw, kb, fan_in, fan_out):
        bound = 1.0 / jnp.sqrt(jnp.float32(fan_in))
        w = jax.random.uniform(kw, (fan_in, fan_out), jnp.float32, -bound, bound)
        b = jax.random.uniform(kb, (1, fan_out), jnp.float32, -bound, bound)
        return w, b

    w1, b1 = lin(ks[0], ks[1], D_IN, D_H1)
    w2, b2 = lin(ks[2], ks[3], D_H1, D_H2)
    w3, b3 = lin(ks[4], ks[5], D_H2, D_OUT)
    return w1, b1, w2, b2, w3, b3


def prepare_params(w1, b1, w2, b2, w3, b3):
    """Cast weights to bf16 and pad fc3 to a lane-dense 128-wide output."""
    w3p = jnp.zeros((D_H2, D_OUT_PAD), jnp.float32).at[:, :D_OUT].set(w3)
    b3p = jnp.full((1, D_OUT_PAD), NEG_PAD, jnp.float32).at[:, :D_OUT].set(b3)
    return (w1.astype(jnp.bfloat16), b1,
            w2.astype(jnp.bfloat16), b2,
            w3p.astype(jnp.bfloat16), b3p)     # NOTE: b3p stays f32 (NEG_PAD)


def reference_forward(x, w1, b1, w2, b2, w3, b3):
    """Pure-JAX reference with the same bf16-input / f32-accumulate matmul math."""
    bf = jnp.bfloat16
    h1 = jnp.maximum(jnp.dot(x.astype(bf), w1.astype(bf),
                             preferred_element_type=jnp.float32) + b1, 0.0)
    h2 = jnp.maximum(jnp.dot(h1.astype(bf), w2.astype(bf),
                             preferred_element_type=jnp.float32) + b2, 0.0)
    logits = jnp.dot(h2.astype(bf), w3.astype(bf),
                     preferred_element_type=jnp.float32) + b3
    return jax.nn.log_softmax(logits, axis=1)


if __name__ == "__main__":
    key = jax.random.PRNGKey(0)
    k_x, k_p = jax.random.split(key)

    B = 64  # small demo batch; feature dim fixed at 2352 by fc1
    x = jax.random.normal(k_x, (B, D_IN), jnp.float32)

    params = init_params(k_p)
    prepped = prepare_params(*params)

    out = jax.block_until_ready(net_forward(x, *prepped))

    w1, b1, w2, b2, w3, b3 = params
    ref = reference_forward(x, w1, b1, w2, b2, w3, b3)

    assert out.shape == (B, D_OUT), out.shape
    assert bool(jnp.all(jnp.isfinite(out))), "non-finite output"
    assert jnp.allclose(out, ref, atol=5e-2, rtol=5e-2), "mismatch vs JAX reference"
    # log-probs must exponentiate-sum to 1
    assert jnp.allclose(jnp.sum(jnp.exp(out), axis=1), 1.0, atol=1e-3)

    print("KERNEL_OK")
</pallas_src>

<mosaic_0001>
module attributes {stable_mosaic.version = 11 : i64} {
  func.func @_mlp_kernel(%arg0: i32, %arg1: memref<64x2352xf32, #tpu.memory_space<vmem>>, %arg2: memref<2352x512xbf16, #tpu.memory_space<vmem>>, %arg3: memref<1x512xf32, #tpu.memory_space<vmem>>, %arg4: memref<512x256xbf16, #tpu.memory_space<vmem>>, %arg5: memref<1x256xf32, #tpu.memory_space<vmem>>, %arg6: memref<256x128xbf16, #tpu.memory_space<vmem>>, %arg7: memref<1x128xf32, #tpu.memory_space<vmem>>, %arg8: memref<64x128xf32, #tpu.memory_space<vmem>>) attributes {dimension_semantics = [#tpu.dimension_semantics<parallel>], iteration_bounds = array<i64: 1>, scalar_prefetch = 0 : i64, scratch_operands = 0 : i64, tpu.core_type = #tpu.core_type<tc>, window_params = [{transform_indices = @transform_0, window_bounds = array<i64: 64, 2352>}, {pipeline_mode = #tpu.pipeline_mode<synchronous>, transform_indices = @transform_1, window_bounds = array<i64: 2352, 512>}, {pipeline_mode = #tpu.pipeline_mode<synchronous>, transform_indices = @transform_2, window_bounds = array<i64: 1, 512>}, {pipeline_mode = #tpu.pipeline_mode<synchronous>, transform_indices = @transform_3, window_bounds = array<i64: 512, 256>}, {pipeline_mode = #tpu.pipeline_mode<synchronous>, transform_indices = @transform_4, window_bounds = array<i64: 1, 256>}, {pipeline_mode = #tpu.pipeline_mode<synchronous>, transform_indices = @transform_5, window_bounds = array<i64: 256, 128>}, {pipeline_mode = #tpu.pipeline_mode<synchronous>, transform_indices = @transform_6, window_bounds = array<i64: 1, 128>}, {transform_indices = @transform_7, window_bounds = array<i64: 64, 128>}]} {
    %c0 = arith.constant 0 : index
    %c0_0 = arith.constant 0 : index
    %0 = vector.load %arg1[%c0, %c0_0] : memref<64x2352xf32, #tpu.memory_space<vmem>>, vector<64x2352xf32>
    %1 = arith.truncf %0 : vector<64x2352xf32> to vector<64x2352xbf16>
    %c0_1 = arith.constant 0 : index
    %c0_2 = arith.constant 0 : index
    %2 = vector.load %arg2[%c0_1, %c0_2] : memref<2352x512xbf16, #tpu.memory_space<vmem>>, vector<2352x512xbf16>
    %cst = arith.constant dense<0.000000e+00> : vector<64x512xf32>
    %3 = tpu.matmul %1, %2, %cst {dimension_numbers = #tpu.dot_dimension_numbers<[1], [0], [0], [1], [0, 0, 1, 1], [], []>} : vector<64x2352xbf16>, vector<2352x512xbf16>, vector<64x512xf32> -> vector<64x512xf32>
    %c0_3 = arith.constant 0 : index
    %c0_4 = arith.constant 0 : index
    %4 = vector.load %arg3[%c0_3, %c0_4] : memref<1x512xf32, #tpu.memory_space<vmem>>, vector<1x512xf32>
    %5 = vector.broadcast %4 : vector<1x512xf32> to vector<64x512xf32>
    %6 = arith.addf %3, %5 : vector<64x512xf32>
    %cst_5 = arith.constant 0.000000e+00 : f32
    %7 = vector.broadcast %cst_5 : f32 to vector<64x512xf32>
    %8 = arith.maximumf %6, %7 : vector<64x512xf32>
    %9 = arith.truncf %8 : vector<64x512xf32> to vector<64x512xbf16>
    %c0_6 = arith.constant 0 : index
    %c0_7 = arith.constant 0 : index
    %10 = vector.load %arg4[%c0_6, %c0_7] : memref<512x256xbf16, #tpu.memory_space<vmem>>, vector<512x256xbf16>
    %cst_8 = arith.constant dense<0.000000e+00> : vector<64x256xf32>
    %11 = tpu.matmul %9, %10, %cst_8 {dimension_numbers = #tpu.dot_dimension_numbers<[1], [0], [0], [1], [0, 0, 1, 1], [], []>} : vector<64x512xbf16>, vector<512x256xbf16>, vector<64x256xf32> -> vector<64x256xf32>
    %c0_9 = arith.constant 0 : index
    %c0_10 = arith.constant 0 : index
    %12 = vector.load %arg5[%c0_9, %c0_10] : memref<1x256xf32, #tpu.memory_space<vmem>>, vector<1x256xf32>
    %13 = vector.broadcast %12 : vector<1x256xf32> to vector<64x256xf32>
    %14 = arith.addf %11, %13 : vector<64x256xf32>
    %cst_11 = arith.constant 0.000000e+00 : f32
    %15 = vector.broadcast %cst_11 : f32 to vector<64x256xf32>
    %16 = arith.maximumf %14, %15 : vector<64x256xf32>
    %17 = arith.truncf %16 : vector<64x256xf32> to vector<64x256xbf16>
    %c0_12 = arith.constant 0 : index
    %c0_13 = arith.constant 0 : index
    %18 = vector.load %arg6[%c0_12, %c0_13] : memref<256x128xbf16, #tpu.memory_space<vmem>>, vector<256x128xbf16>
    %cst_14 = arith.constant dense<0.000000e+00> : vector<64x128xf32>
    %19 = tpu.matmul %17, %18, %cst_14 {dimension_numbers = #tpu.dot_dimension_numbers<[1], [0], [0], [1], [0, 0, 1, 1], [], []>} : vector<64x256xbf16>, vector<256x128xbf16>, vector<64x128xf32> -> vector<64x128xf32>
    %c0_15 = arith.constant 0 : index
    %c0_16 = arith.constant 0 : index
    %20 = vector.load %arg7[%c0_15, %c0_16] : memref<1x128xf32, #tpu.memory_space<vmem>>, vector<1x128xf32>
    %21 = vector.broadcast %20 : vector<1x128xf32> to vector<64x128xf32>
    %22 = arith.addf %19, %21 : vector<64x128xf32>
    %cst_17 = arith.constant dense<0xFF800000> : vector<64xf32>
    %23 = vector.multi_reduction <maximumf>, %22, %cst_17 [1] : vector<64x128xf32> to vector<64xf32>
    %24 = vector.shape_cast %23 : vector<64xf32> to vector<64x1xf32>
    %25 = vector.broadcast %24 : vector<64x1xf32> to vector<64x128xf32>
    %26 = arith.subf %22, %25 : vector<64x128xf32>
    %27 = math.exp %26 : vector<64x128xf32>
    %cst_18 = arith.constant dense<0.000000e+00> : vector<64xf32>
    %28 = vector.multi_reduction <add>, %27, %cst_18 [1] : vector<64x128xf32> to vector<64xf32>
    %29 = vector.shape_cast %28 : vector<64xf32> to vector<64x1xf32>
    %30 = math.log %29 : vector<64x1xf32>
    %31 = vector.broadcast %30 : vector<64x1xf32> to vector<64x128xf32>
    %32 = arith.subf %26, %31 : vector<64x128xf32>
    %c0_19 = arith.constant 0 : index
    %c0_20 = arith.constant 0 : index
    %33 = vector.load %arg8[%c0_19, %c0_20] : memref<64x128xf32, #tpu.memory_space<vmem>>, vector<64x128xf32>
    tpu.vector_store %arg8[%c0_19, %c0_20], %32 {strides = array<i32>} : memref<64x128xf32, #tpu.memory_space<vmem>>, vector<64x128xf32>,
    return
  }
  func.func @transform_0(%arg0: i32) -> (i32, i32) {
    %c0_i32 = arith.constant 0 : i32
    %c0_i32_0 = arith.constant 0 : i32
    return %arg0, %c0_i32 : i32, i32
  }
  func.func @transform_1(%arg0: i32) -> (i32, i32) {
    %c0_i32 = arith.constant 0 : i32
    %c0_i32_0 = arith.constant 0 : i32
    %c0_i32_1 = arith.constant 0 : i32
    return %c0_i32, %c0_i32_0 : i32, i32
  }
  func.func @transform_2(%arg0: i32) -> (i32, i32) {
    %c0_i32 = arith.constant 0 : i32
    %c0_i32_0 = arith.constant 0 : i32
    %c0_i32_1 = arith.constant 0 : i32
    return %c0_i32, %c0_i32_0 : i32, i32
  }
  func.func @transform_3(%arg0: i32) -> (i32, i32) {
    %c0_i32 = arith.constant 0 : i32
    %c0_i32_0 = arith.constant 0 : i32
    %c0_i32_1 = arith.constant 0 : i32
    return %c0_i32, %c0_i32_0 : i32, i32
  }
  func.func @transform_4(%arg0: i32) -> (i32, i32) {
    %c0_i32 = arith.constant 0 : i32
    %c0_i32_0 = arith.constant 0 : i32
    %c0_i32_1 = arith.constant 0 : i32
    return %c0_i32, %c0_i32_0 : i32, i32
  }
  func.func @transform_5(%arg0: i32) -> (i32, i32) {
    %c0_i32 = arith.constant 0 : i32
    %c0_i32_0 = arith.constant 0 : i32
    %c0_i32_1 = arith.constant 0 : i32
    return %c0_i32, %c0_i32_0 : i32, i32
  }
  func.func @transform_6(%arg0: i32) -> (i32, i32) {
    %c0_i32 = arith.constant 0 : i32
    %c0_i32_0 = arith.constant 0 : i32
    %c0_i32_1 = arith.constant 0 : i32
    return %c0_i32, %c0_i32_0 : i32, i32
  }
  func.func @transform_7(%arg0: i32) -> (i32, i32) {
    %c0_i32 = arith.constant 0 : i32
    %c0_i32_0 = arith.constant 0 : i32
    return %arg0, %c0_i32 : i32, i32
  }
}

module attributes {stable_mosaic.version = 11 : i64} {
  func.func @_mlp_kernel(%arg0: i32, %arg1: memref<64x2352xf32, #tpu.memory_space<vmem>>, %arg2: memref<2352x512xbf16, #tpu.memory_space<vmem>>, %arg3: memref<1x512xf32, #tpu.memory_space<vmem>>, %arg4: memref<512x256xbf16, #tpu.memory_space<vmem>>, %arg5: memref<1x256xf32, #tpu.memory_space<vmem>>, %arg6: memref<256x128xbf16, #tpu.memory_space<vmem>>, %arg7: memref<1x128xf32, #tpu.memory_space<vmem>>, %arg8: memref<64x128xf32, #tpu.memory_space<vmem>>) attributes {dimension_semantics = [#tpu.dimension_semantics<parallel>], iteration_bounds = array<i64: 1>, scalar_prefetch = 0 : i64, scratch_operands = 0 : i64, tpu.core_type = #tpu.core_type<tc>, window_params = [{transform_indices = @transform_0, window_bounds = array<i64: 64, 2352>}, {pipeline_mode = #tpu.pipeline_mode<synchronous>, transform_indices = @transform_1, window_bounds = array<i64: 2352, 512>}, {pipeline_mode = #tpu.pipeline_mode<synchronous>, transform_indices = @transform_2, window_bounds = array<i64: 1, 512>}, {pipeline_mode = #tpu.pipeline_mode<synchronous>, transform_indices = @transform_3, window_bounds = array<i64: 512, 256>}, {pipeline_mode = #tpu.pipeline_mode<synchronous>, transform_indices = @transform_4, window_bounds = array<i64: 1, 256>}, {pipeline_mode = #tpu.pipeline_mode<synchronous>, transform_indices = @transform_5, window_bounds = array<i64: 256, 128>}, {pipeline_mode = #tpu.pipeline_mode<synchronous>, transform_indices = @transform_6, window_bounds = array<i64: 1, 128>}, {transform_indices = @transform_7, window_bounds = array<i64: 64, 128>}]} {
    %c0 = arith.constant 0 : index
    %c0_0 = arith.constant 0 : index
    %0 = vector.load %arg1[%c0, %c0_0] : memref<64x2352xf32, #tpu.memory_space<vmem>>, vector<64x2352xf32>
    %1 = arith.truncf %0 : vector<64x2352xf32> to vector<64x2352xbf16>
    %c0_1 = arith.constant 0 : index
    %c0_2 = arith.constant 0 : index
    %2 = vector.load %arg2[%c0_1, %c0_2] : memref<2352x512xbf16, #tpu.memory_space<vmem>>, vector<2352x512xbf16>
    %cst = arith.constant dense<0.000000e+00> : vector<64x512xf32>
    %3 = tpu.matmul %1, %2, %cst {dimension_numbers = #tpu.dot_dimension_numbers<[1], [0], [0], [1], [0, 0, 1, 1], [], []>} : vector<64x2352xbf16>, vector<2352x512xbf16>, vector<64x512xf32> -> vector<64x512xf32>
    %c0_3 = arith.constant 0 : index
    %c0_4 = arith.constant 0 : index
    %4 = vector.load %arg3[%c0_3, %c0_4] : memref<1x512xf32, #tpu.memory_space<vmem>>, vector<1x512xf32>
    %5 = vector.broadcast %4 : vector<1x512xf32> to vector<64x512xf32>
    %6 = arith.addf %3, %5 : vector<64x512xf32>
    %cst_5 = arith.constant 0.000000e+00 : f32
    %7 = vector.broadcast %cst_5 : f32 to vector<64x512xf32>
    %8 = arith.maximumf %6, %7 : vector<64x512xf32>
    %9 = arith.truncf %8 : vector<64x512xf32> to vector<64x512xbf16>
    %c0_6 = arith.constant 0 : index
    %c0_7 = arith.constant 0 : index
    %10 = vector.load %arg4[%c0_6, %c0_7] : memref<512x256xbf16, #tpu.memory_space<vmem>>, vector<512x256xbf16>
    %cst_8 = arith.constant dense<0.000000e+00> : vector<64x256xf32>
    %11 = tpu.matmul %9, %10, %cst_8 {dimension_numbers = #tpu.dot_dimension_numbers<[1], [0], [0], [1], [0, 0, 1, 1], [], []>} : vector<64x512xbf16>, vector<512x256xbf16>, vector<64x256xf32> -> vector<64x256xf32>
    %c0_9 = arith.constant 0 : index
    %c0_10 = arith.constant 0 : index
    %12 = vector.load %arg5[%c0_9, %c0_10] : memref<1x256xf32, #tpu.memory_space<vmem>>, vector<1x256xf32>
    %13 = vector.broadcast %12 : vector<1x256xf32> to vector<64x256xf32>
    %14 = arith.addf %11, %13 : vector<64x256xf32>
    %cst_11 = arith.constant 0.000000e+00 : f32
    %15 = vector.broadcast %cst_11 : f32 to vector<64x256xf32>
    %16 = arith.maximumf %14, %15 : vector<64x256xf32>
    %17 = arith.truncf %16 : vector<64x256xf32> to vector<64x256xbf16>
    %c0_12 = arith.constant 0 : index
    %c0_13 = arith.constant 0 : index
    %18 = vector.load %arg6[%c0_12, %c0_13] : memref<256x128xbf16, #tpu.memory_space<vmem>>, vector<256x128xbf16>
    %cst_14 = arith.constant dense<0.000000e+00> : vector<64x128xf32>
    %19 = tpu.matmul %17, %18, %cst_14 {dimension_numbers = #tpu.dot_dimension_numbers<[1], [0], [0], [1], [0, 0, 1, 1], [], []>} : vector<64x256xbf16>, vector<256x128xbf16>, vector<64x128xf32> -> vector<64x128xf32>
    %c0_15 = arith.constant 0 : index
    %c0_16 = arith.constant 0 : index
    %20 = vector.load %arg7[%c0_15, %c0_16] : memref<1x128xf32, #tpu.memory_space<vmem>>, vector<1x128xf32>
    %21 = vector.broadcast %20 : vector<1x128xf32> to vector<64x128xf32>
    %22 = arith.addf %19, %21 : vector<64x128xf32>
    %cst_17 = arith.constant dense<0xFF800000> : vector<64xf32>
    %23 = vector.multi_reduction <maximumf>, %22, %cst_17 [1] : vector<64x128xf32> to vector<64xf32>
    %24 = vector.shape_cast %23 : vector<64xf32> to vector<64x1xf32>
    %25 = vector.broadcast %24 : vector<64x1xf32> to vector<64x128xf32>
    %26 = arith.subf %22, %25 : vector<64x128xf32>
    %27 = math.exp %26 : vector<64x128xf32>
    %cst_18 = arith.constant dense<0.000000e+00> : vector<64xf32>
    %28 = vector.multi_reduction <add>, %27, %cst_18 [1] : vector<64x128xf32> to vector<64xf32>
    %29 = vector.shape_cast %28 : vector<64xf32> to vector<64x1xf32>
    %30 = math.log %29 : vector<64x1xf32>
    %31 = vector.broadcast %30 : vector<64x1xf32> to vector<64x128xf32>
    %32 = arith.subf %26, %31 : vector<64x128xf32>
    %c0_19 = arith.constant 0 : index
    %c0_20 = arith.constant 0 : index
    %33 = vector.load %arg8[%c0_19, %c0_20] : memref<64x128xf32, #tpu.memory_space<vmem>>, vector<64x128xf32>
    tpu.vector_store %arg8[%c0_19, %c0_20], %32 {strides = array<i32>} : memref<64x128xf32, #tpu.memory_space<vmem>>, vector<64x128xf32>,
    return
  }
  func.func @transform_0(%arg0: i32) -> (i32, i32) {
    %c0_i32 = arith.constant 0 : i32
    %c0_i32_0 = arith.constant 0 : i32
    return %arg0, %c0_i32 : i32, i32
  }
  func.func @transform_1(%arg0: i32) -> (i32, i32) {
    %c0_i32 = arith.constant 0 : i32
    %c0_i32_0 = arith.constant 0 : i32
    %c0_i32_1 = arith.constant 0 : i32
    return %c0_i32, %c0_i32_0 : i32, i32
  }
  func.func @transform_2(%arg0: i32) -> (i32, i32) {
    %c0_i32 = arith.constant 0 : i32
    %c0_i32_0 = arith.constant 0 : i32
    %c0_i32_1 = arith.constant 0 : i32
    return %c0_i32, %c0_i32_0 : i32, i32
  }
  func.func @transform_3(%arg0: i32) -> (i32, i32) {
    %c0_i32 = arith.constant 0 : i32
    %c0_i32_0 = arith.constant 0 : i32
    %c0_i32_1 = arith.constant 0 : i32
    return %c0_i32, %c0_i32_0 : i32, i32
  }
  func.func @transform_4(%arg0: i32) -> (i32, i32) {
    %c0_i32 = arith.constant 0 : i32
    %c0_i32_0 = arith.constant 0 : i32
    %c0_i32_1 = arith.constant 0 : i32
    return %c0_i32, %c0_i32_0 : i32, i32
  }
  func.func @transform_5(%arg0: i32) -> (i32, i32) {
    %c0_i32 = arith.constant 0 : i32
    %c0_i32_0 = arith.constant 0 : i32
    %c0_i32_1 = arith.constant 0 : i32
    return %c0_i32, %c0_i32_0 : i32, i32
  }
  func.func @transform_6(%arg0: i32) -> (i32, i32) {
    %c0_i32 = arith.constant 0 : i32
    %c0_i32_0 = arith.constant 0 : i32
    %c0_i32_1 = arith.constant 0 : i32
    return %c0_i32, %c0_i32_0 : i32, i32
  }
  func.func @transform_7(%arg0: i32) -> (i32, i32) {
    %c0_i32 = arith.constant 0 : i32
    %c0_i32_0 = arith.constant 0 : i32
    return %arg0, %c0_i32 : i32, i32
  }
}

</mosaic_0001>

<llo_original>
// kernel: tpu_custom_call.1
$region0: #{tpu_custom_call.1}
  #allocation0 [shape = 'u32[]', space=smem, size = 0x4, offset = 0x4, fixed_abs, tag = 'smem constant byte address 0x4 - core index']
  #allocation1 [shape = 'u32[144,128]{1,0:T(1,128)}', space=vmem, size = 0x12000, scoped, tag = 'internal scratch']
  %s0 = inlined_call_operand.hbm [shape: f32[64,2352], index: 0, kind: input, shape index: {}]
  %s1 = inlined_call_operand.hbm [shape: bf16[2352,512], index: 1, kind: input, shape index: {}]
  %s2 = inlined_call_operand.hbm [shape: f32[1,512], index: 2, kind: input, shape index: {}]
  %s3 = inlined_call_operand.hbm [shape: bf16[512,256], index: 3, kind: input, shape index: {}]
  %s4 = inlined_call_operand.hbm [shape: f32[1,256], index: 4, kind: input, shape index: {}]
  %s5 = inlined_call_operand.hbm [shape: bf16[256,128], index: 5, kind: input, shape index: {}]
  %s6 = inlined_call_operand.hbm [shape: f32[1,128], index: 6, kind: input, shape index: {}]
  %s7 = inlined_call_operand.hbm [shape: f32[64,128], index: 7, kind: output, shape index: {}]
  %s8 = sld [smem:[#allocation0]]
  $region66: #{tpu_custom_call.1} parent=0
    _
  %s10 = ssub.s32 1, %s8
  %s11 = scalar_select 0, %s10, %s8
  $region1: #{tpu_custom_call.1} parent=0
    #allocation2 [shape = 'u8[622592]{0}', space=vmem, size = 0x98000, scoped, tag = 'input window, operand 0, single buffered']
    #allocation3 [shape = 's32[1]{0}', space=sflag, size = 0x4, scoped, tag = 'scoped memory for tpu_custom_call.1']
    #allocation4 [shape = 's32[1]{0}', space=sflag, size = 0x4, scoped, tag = 'scoped memory for tpu_custom_call.1']
    #allocation5 [shape = 'u8[2408448]{0}', space=vmem, size = 0x24c000, scoped, tag = 'input window, operand 1, single buffered']
    #allocation6 [shape = 's32[1]{0}', space=sflag, size = 0x4, scoped, tag = 'scoped memory for tpu_custom_call.1']
    #allocation7 [shape = 'u8[2048]{0}', space=vmem, size = 0x800, scoped, tag = 'input window, operand 2, single buffered']
    #allocation8 [shape = 'u8[262144]{0}', space=vmem, size = 0x40000, scoped, tag = 'input window, operand 3, single buffered']
    #allocation9 [shape = 's32[1]{0}', space=sflag, size = 0x4, scoped, tag = 'scoped memory for tpu_custom_call.1']
    #allocation10 [shape = 'u8[1024]{0}', space=vmem, size = 0x400, scoped, tag = 'input window, operand 4, single buffered']
    #allocation11 [shape = 'u8[65536]{0}', space=vmem, size = 0x10000, scoped, tag = 'input window, operand 5, single buffered']
    #allocation12 [shape = 's32[1]{0}', space=sflag, size = 0x4, scoped, tag = 'scoped memory for tpu_custom_call.1']
    #allocation13 [shape = 'u8[512]{0}', space=vmem, size = 0x400, scoped, tag = 'input window, operand 6, single buffered']
    #allocation14 [shape = 'u8[32768]{0}', space=vmem, size = 0x8000, scoped, tag = 'output window, operand 0, single buffered']
    %12 = vsyncpa [#allocation3], 0
    %13 = vsyncpa [#allocation6], 0
    %14 = vsyncpa [#allocation9], 0
    %15 = vsyncpa [#allocation12], 0
    %16 = vsyncpa [#allocation4], 0
    // Predicated region
    $region2: #{tpu_custom_call.1} parent=1 // pred_check
      _
    $region3: #{tpu_custom_call.1} parent=1 // pred_check_branch
      %18 = sbr.rel (0) target = $region5
    $region4: #{tpu_custom_call.1} parent=1 // pred_region
      %s20 = ssub.s32 19456, 19456
      %21 = vsyncadd [#allocation3], %s20
      %s22 = sshll.u32 [#allocation2], 4
      %s23 = int_to_ptr.vmem [resolvable:$true] %s22
      %28 = dma.hbm_to_vmem [thread:$0]  %s0, 19456, %s23, [#allocation3], 2432, 2432, 152
    $region5: #{tpu_custom_call.1} parent=1 // pred_fallthru
      _
    // Predicated region
    $region6: #{tpu_custom_call.1} parent=1 // pred_check
      _
    $region7: #{tpu_custom_call.1} parent=1 // pred_check_branch
      %30 = sbr.rel (0) target = $region9
    $region8: #{tpu_custom_call.1} parent=1 // pred_region
      %s32 = ssub.s32 75264, 75264
      %33 = vsyncadd [#allocation6], %s32
      %s34 = sshll.u32 [#allocation5], 4
      %s35 = int_to_ptr.vmem [resolvable:$true] %s34
      %40 = dma.hbm_to_vmem [thread:$0]  %s1, 75264, %s35, [#allocation6], 256, 256, 16
    $region9: #{tpu_custom_call.1} parent=1 // pred_fallthru
      _
    // Predicated region
    $region10: #{tpu_custom_call.1} parent=1 // pred_check
      _
    $region11: #{tpu_custom_call.1} parent=1 // pred_check_branch
      %42 = sbr.rel (0) target = $region13
    $region12: #{tpu_custom_call.1} parent=1 // pred_region
      %s44 = ssub.s32 64, 64
      %45 = vsyncadd [#allocation6], %s44
      %s47 = sshll.u32 [#allocation7], 4
      %s48 = int_to_ptr.vmem [resolvable:$true] %s47
      %50 = dma.hbm_to_vmem [thread:$0]  %s2, 64, %s48, [#allocation6]
    $region13: #{tpu_custom_call.1} parent=1 // pred_fallthru
      _
    // Predicated region
    $region14: #{tpu_custom_call.1} parent=1 // pred_check
      _
    $region15: #{tpu_custom_call.1} parent=1 // pred_check_branch
      %52 = sbr.rel (0) target = $region17
    $region16: #{tpu_custom_call.1} parent=1 // pred_region
      %s54 = ssub.s32 8192, 8192
      %55 = vsyncadd [#allocation9], %s54
      %s56 = sshll.u32 [#allocation8], 4
      %s57 = int_to_ptr.vmem [resolvable:$true] %s56
      %62 = dma.hbm_to_vmem [thread:$0]  %s3, 8192, %s57, [#allocation9], 128, 128, 8
    $region17: #{tpu_custom_call.1} parent=1 // pred_fallthru
      _
    // Predicated region
    $region18: #{tpu_custom_call.1} parent=1 // pred_check
      _
    $region19: #{tpu_custom_call.1} parent=1 // pred_check_branch
      %64 = sbr.rel (0) target = $region21
    $region20: #{tpu_custom_call.1} parent=1 // pred_region
      %s66 = ssub.s32 32, 32
      %67 = vsyncadd [#allocation9], %s66
      %s69 = sshll.u32 [#allocation10], 4
      %s70 = int_to_ptr.vmem [resolvable:$true] %s69
      %72 = dma.hbm_to_vmem [thread:$0]  %s4, 32, %s70, [#allocation9]
    $region21: #{tpu_custom_call.1} parent=1 // pred_fallthru
      _
    // Predicated region
    $region22: #{tpu_custom_call.1} parent=1 // pred_check
      _
    $region23: #{tpu_custom_call.1} parent=1 // pred_check_branch
      %74 = sbr.rel (0) target = $region25
    $region24: #{tpu_custom_call.1} parent=1 // pred_region
      %s76 = ssub.s32 2048, 2048
      %77 = vsyncadd [#allocation12], %s76
      %s78 = sshll.u32 [#allocation11], 4
      %s79 = int_to_ptr.vmem [resolvable:$true] %s78
      %84 = dma.hbm_to_vmem [thread:$0]  %s5, 2048, %s79, [#allocation12], 64, 64, 4
    $region25: #{tpu_custom_call.1} parent=1 // pred_fallthru
      _
    // Predicated region
    $region26: #{tpu_custom_call.1} parent=1 // pred_check
      _
    $region27: #{tpu_custom_call.1} parent=1 // pred_check_branch
      %86 = sbr.rel (0) target = $region29
    $region28: #{tpu_custom_call.1} parent=1 // pred_region
      %s88 = ssub.s32 16, 16
      %89 = vsyncadd [#allocation12], %s88
      %s91 = sshll.u32 [#allocation13], 4
      %s92 = int_to_ptr.vmem [resolvable:$true] %s91
      %94 = dma.hbm_to_vmem [thread:$0]  %s6, 16, %s92, [#allocation12]
    $region29: #{tpu_custom_call.1} parent=1 // pred_fallthru
      _
    // Predicated region
    $region30: #{tpu_custom_call.1} parent=1 // pred_check
      _
    $region31: #{tpu_custom_call.1} parent=1 // pred_check_branch
      %96 = sbr.rel (0) target = $region33
    $region32: #{tpu_custom_call.1} parent=1 // pred_region
      %97 = dma.done [#allocation3], 19456
    $region33: #{tpu_custom_call.1} parent=1 // pred_fallthru
      _
    // Predicated region
    $region34: #{tpu_custom_call.1} parent=1 // pred_check
      _
    $region35: #{tpu_custom_call.1} parent=1 // pred_check_branch
      %99 = sbr.rel (0) target = $region37
    $region36: #{tpu_custom_call.1} parent=1 // pred_region
      %100 = dma.done [#allocation6], 75264
    $region37: #{tpu_custom_call.1} parent=1 // pred_fallthru
      _
    // Predicated region
    $region38: #{tpu_custom_call.1} parent=1 // pred_check
      _
    $region39: #{tpu_custom_call.1} parent=1 // pred_check_branch
      %102 = sbr.rel (0) target = $region41
    $region40: #{tpu_custom_call.1} parent=1 // pred_region
      %103 = dma.done [#allocation6], 64
    $region41: #{tpu_custom_call.1} parent=1 // pred_fallthru
      _
    // Predicated region
    $region42: #{tpu_custom_call.1} parent=1 // pred_check
      _
    $region43: #{tpu_custom_call.1} parent=1 // pred_check_branch
      %105 = sbr.rel (0) target = $region45
    $region44: #{tpu_custom_call.1} parent=1 // pred_region
      %106 = dma.done [#allocation9], 8192
    $region45: #{tpu_custom_call.1} parent=1 // pred_fallthru
      _
    // Predicated region
    $region46: #{tpu_custom_call.1} parent=1 // pred_check
      _
    $region47: #{tpu_custom_call.1} parent=1 // pred_check_branch
      %108 = sbr.rel (0) target = $region49
    $region48: #{tpu_custom_call.1} parent=1 // pred_region
      %109 = dma.done [#allocation9], 32
    $region49: #{tpu_custom_call.1} parent=1 // pred_fallthru
      _
    // Predicated region
    $region50: #{tpu_custom_call.1} parent=1 // pred_check
      _
    $region51: #{tpu_custom_call.1} parent=1 // pred_check_branch
      %111 = sbr.rel (0) target = $region53
    $region52: #{tpu_custom_call.1} parent=1 // pred_region
      %112 = dma.done [#allocation12], 2048
    $region53: #{tpu_custom_call.1} parent=1 // pred_fallthru
      _
    // Predicated region
    $region54: #{tpu_custom_call.1} parent=1 // pred_check
      _
    $region55: #{tpu_custom_call.1} parent=1 // pred_check_branch
      %114 = sbr.rel (0) target = $region57
    $region56: #{tpu_custom_call.1} parent=1 // pred_region
      %115 = dma.done [#allocation12], 16
    $region57: #{tpu_custom_call.1} parent=1 // pred_fallthru
      _
    %v117 = vld [vmem:[#allocation2] sm:$0xff]
    %v118 = vld [vmem:[#allocation2 + $0x8] sm:$0xff]
    %v119 = vld [vmem:[#allocation2 + $0x10] sm:$0xff]
    %v120 = vld [vmem:[#allocation2 + $0x18] sm:$0xff]
    %v121 = vld [vmem:[#allocation2 + $0x20] sm:$0xff]
    %v122 = vld [vmem:[#allocation2 + $0x28] sm:$0xff]
    %v123 = vld [vmem:[#allocation2 + $0x30] sm:$0xff]
    %v124 = vld [vmem:[#allocation2 + $0x38] sm:$0xff]
    %v125 = vld [vmem:[#allocation2 + $0x40] sm:$0xff]
    %v126 = vld [vmem:[#allocation2 + $0x48] sm:$0xff]
    %v127 = vld [vmem:[#allocation2 + $0x50] sm:$0xff]
    %v128 = vld [vmem:[#allocation2 + $0x58] sm:$0xff]
    %v129 = vld [vmem:[#allocation2 + $0x60] sm:$0xff]
    %v130 = vld [vmem:[#allocation2 + $0x68] sm:$0xff]
    %v131 = vld [vmem:[#allocation2 + $0x70] sm:$0xff]
    %v132 = vld [vmem:[#allocation2 + $0x78] sm:$0xff]
    %v133 = vld [vmem:[#allocation2 + $0x80] sm:$0xff]
    %v134 = vld [vmem:[#allocation2 + $0x88] sm:$0xff]
    %v135 = vld [vmem:[#allocation2 + $0x90] sm:$0xff]
    %v136 = vld [vmem:[#allocation2 + $0x98] sm:$0xff]
    %v137 = vld [vmem:[#allocation2 + $0xa0] sm:$0xff]
    %v138 = vld [vmem:[#allocation2 + $0xa8] sm:$0xff]
    %v139 = vld [vmem:[#allocation2 + $0xb0] sm:$0xff]
    %v140 = vld [vmem:[#allocation2 + $0xb8] sm:$0xff]
    %v141 = vld [vmem:[#allocation2 + $0xc0] sm:$0xff]
    %v142 = vld [vmem:[#allocation2 + $0xc8] sm:$0xff]
    %v143 = vld [vmem:[#allocation2 + $0xd0] sm:$0xff]
    %v144 = vld [vmem:[#allocation2 + $0xd8] sm:$0xff]
    %v145 = vld [vmem:[#allocation2 + $0xe0] sm:$0xff]
    %v146 = vld [vmem:[#allocation2 + $0xe8] sm:$0xff]
    %v147 = vld [vmem:[#allocation2 + $0xf0] sm:$0xff]
    %v148 = vld [vmem:[#allocation2 + $0xf8] sm:$0xff]
    %v149 = vld [vmem:[#allocation2 + $0x100] sm:$0xff]
    %v150 = vld [vmem:[#allocation2 + $0x108] sm:$0xff]
    %v151 = vld [vmem:[#allocation2 + $0x110] sm:$0xff]
    %v152 = vld [vmem:[#allocation2 + $0x118] sm:$0xff]
    %v153 = vld [vmem:[#allocation2 + $0x120] sm:$0xff]
    %v154 = vld [vmem:[#allocation2 + $0x128] sm:$0xff]
    %v155 = vld [vmem:[#allocation2 + $0x130] sm:$0xff]
    %v156 = vld [vmem:[#allocation2 + $0x138] sm:$0xff]
    %v157 = vld [vmem:[#allocation2 + $0x140] sm:$0xff]
    %v158 = vld [vmem:[#allocation2 + $0x148] sm:$0xff]
    %v159 = vld [vmem:[#allocation2 + $0x150] sm:$0xff]
    %v160 = vld [vmem:[#allocation2 + $0x158] sm:$0xff]
    %v161 = vld [vmem:[#allocation2 + $0x160] sm:$0xff]
    %v162 = vld [vmem:[#allocation2 + $0x168] sm:$0xff]
    %v163 = vld [vmem:[#allocation2 + $0x170] sm:$0xff]
    %v164 = vld [vmem:[#allocation2 + $0x178] sm:$0xff]
    %v165 = vld [vmem:[#allocation2 + $0x180] sm:$0xff]
    %v166 = vld [vmem:[#allocation2 + $0x188] sm:$0xff]
    %v167 = vld [vmem:[#allocation2 + $0x190] sm:$0xff]
    %v168 = vld [vmem:[#allocation2 + $0x198] sm:$0xff]
    %v169 = vld [vmem:[#allocation2 + $0x1a0] sm:$0xff]
    %v170 = vld [vmem:[#allocation2 + $0x1a8] sm:$0xff]
    %v171 = vld [vmem:[#allocation2 + $0x1b0] sm:$0xff]
    %v172 = vld [vmem:[#allocation2 + $0x1b8] sm:$0xff]
    %v173 = vld [vmem:[#allocation2 + $0x1c0] sm:$0xff]
    %v174 = vld [vmem:[#allocation2 + $0x1c8] sm:$0xff]
    %v175 = vld [vmem:[#allocation2 + $0x1d0] sm:$0xff]
    %v176 = vld [vmem:[#allocation2 + $0x1d8] sm:$0xff]
    %v177 = vld [vmem:[#allocation2 + $0x1e0] sm:$0xff]
    %v178 = vld [vmem:[#allocation2 + $0x1e8] sm:$0xff]
    %v179 = vld [vmem:[#allocation2 + $0x1f0] sm:$0xff]
    %v180 = vld [vmem:[#allocation2 + $0x1f8] sm:$0xff]
    %v181 = vld [vmem:[#allocation2 + $0x200] sm:$0xff]
    %v182 = vld [vmem:[#allocation2 + $0x208] sm:$0xff]
    %v183 = vld [vmem:[#allocation2 + $0x210] sm:$0xff]
    %v184 = vld [vmem:[#allocation2 + $0x218] sm:$0xff]
    %v185 = vld [vmem:[#allocation2 + $0x220] sm:$0xff]
    %v186 = vld [vmem:[#allocation2 + $0x228] sm:$0xff]
    %v187 = vld [vmem:[#allocation2 + $0x230] sm:$0xff]
    %v188 = vld [vmem:[#allocation2 + $0x238] sm:$0xff]
    %v189 = vld [vmem:[#allocation2 + $0x240] sm:$0xff]
    %v190 = vld [vmem:[#allocation2 + $0x248] sm:$0xff]
    %v191 = vld [vmem:[#allocation2 + $0x250] sm:$0xff]
    %v192 = vld [vmem:[#allocation2 + $0x258] sm:$0xff]
    %v193 = vld [vmem:[#allocation2 + $0x260] sm:$0xff]
    %v194 = vld [vmem:[#allocation2 + $0x268] sm:$0xff]
    %v195 = vld [vmem:[#allocation2 + $0x270] sm:$0xff]
    %v196 = vld [vmem:[#allocation2 + $0x278] sm:$0xff]
    %v197 = vld [vmem:[#allocation2 + $0x280] sm:$0xff]
    %v198 = vld [vmem:[#allocation2 + $0x288] sm:$0xff]
    %v199 = vld [vmem:[#allocation2 + $0x290] sm:$0xff]
    %v200 = vld [vmem:[#allocation2 + $0x298] sm:$0xff]
    %v201 = vld [vmem:[#allocation2 + $0x2a0] sm:$0xff]
    %v202 = vld [vmem:[#allocation2 + $0x2a8] sm:$0xff]
    %v203 = vld [vmem:[#allocation2 + $0x2b0] sm:$0xff]
    %v204 = vld [vmem:[#allocation2 + $0x2b8] sm:$0xff]
    %v205 = vld [vmem:[#allocation2 + $0x2c0] sm:$0xff]
    %v206 = vld [vmem:[#allocation2 + $0x2c8] sm:$0xff]
    %v207 = vld [vmem:[#allocation2 + $0x2d0] sm:$0xff]
    %v208 = vld [vmem:[#allocation2 + $0x2d8] sm:$0xff]
    %v209 = vld [vmem:[#allocation2 + $0x2e0] sm:$0xff]
    %v210 = vld [vmem:[#allocation2 + $0x2e8] sm:$0xff]
    %v211 = vld [vmem:[#allocation2 + $0x2f0] sm:$0xff]
    %v212 = vld [vmem:[#allocation2 + $0x2f8] sm:$0xff]
    %v213 = vld [vmem:[#allocation2 + $0x300] sm:$0xff]
    %v214 = vld [vmem:[#allocation2 + $0x308] sm:$0xff]
    %v215 = vld [vmem:[#allocation2 + $0x310] sm:$0xff]
    %v216 = vld [vmem:[#allocation2 + $0x318] sm:$0xff]
    %v217 = vld [vmem:[#allocation2 + $0x320] sm:$0xff]
    %v218 = vld [vmem:[#allocation2 + $0x328] sm:$0xff]
    %v219 = vld [vmem:[#allocation2 + $0x330] sm:$0xff]
    %v220 = vld [vmem:[#allocation2 + $0x338] sm:$0xff]
    %v221 = vld [vmem:[#allocation2 + $0x340] sm:$0xff]
    %v222 = vld [vmem:[#allocation2 + $0x348] sm:$0xff]
    %v223 = vld [vmem:[#allocation2 + $0x350] sm:$0xff]
    %v224 = vld [vmem:[#allocation2 + $0x358] sm:$0xff]
    %v225 = vld [vmem:[#allocation2 + $0x360] sm:$0xff]
    %v226 = vld [vmem:[#allocation2 + $0x368] sm:$0xff]
    %v227 = vld [vmem:[#allocation2 + $0x370] sm:$0xff]
    %v228 = vld [vmem:[#allocation2 + $0x378] sm:$0xff]
    %v229 = vld [vmem:[#allocation2 + $0x380] sm:$0xff]
    %v230 = vld [vmem:[#allocation2 + $0x388] sm:$0xff]
    %v231 = vld [vmem:[#allocation2 + $0x390] sm:$0xff]
    %v232 = vld [vmem:[#allocation2 + $0x398] sm:$0xff]
    %v233 = vld [vmem:[#allocation2 + $0x3a0] sm:$0xff]
    %v234 = vld [vmem:[#allocation2 + $0x3a8] sm:$0xff]
    %v235 = vld [vmem:[#allocation2 + $0x3b0] sm:$0xff]
    %v236 = vld [vmem:[#allocation2 + $0x3b8] sm:$0xff]
    %v237 = vld [vmem:[#allocation2 + $0x3c0] sm:$0xff]
    %v238 = vld [vmem:[#allocation2 + $0x3c8] sm:$0xff]
    %v239 = vld [vmem:[#allocation2 + $0x3d0] sm:$0xff]
    %v240 = vld [vmem:[#allocation2 + $0x3d8] sm:$0xff]
    %v241 = vld [vmem:[#allocation2 + $0x3e0] sm:$0xff]
    %v242 = vld [vmem:[#allocation2 + $0x3e8] sm:$0xff]
    %v243 = vld [vmem:[#allocation2 + $0x3f0] sm:$0xff]
    %v244 = vld [vmem:[#allocation2 + $0x3f8] sm:$0xff]
    %v245 = vld [vmem:[#allocation2 + $0x400] sm:$0xff]
    %v246 = vld [vmem:[#allocation2 + $0x408] sm:$0xff]
    %v247 = vld [vmem:[#allocation2 + $0x410] sm:$0xff]
    %v248 = vld [vmem:[#allocation2 + $0x418] sm:$0xff]
    %v249 = vld [vmem:[#allocation2 + $0x420] sm:$0xff]
    %v250 = vld [vmem:[#allocation2 + $0x428] sm:$0xff]
    %v251 = vld [vmem:[#allocation2 + $0x430] sm:$0xff]
    %v252 = vld [vmem:[#allocation2 + $0x438] sm:$0xff]
    %v253 = vld [vmem:[#allocation2 + $0x440] sm:$0xff]
    %v254 = vld [vmem:[#allocation2 + $0x448] sm:$0xff]
    %v255 = vld [vmem:[#allocation2 + $0x450] sm:$0xff]
    %v256 = vld [vmem:[#allocation2 + $0x458] sm:$0xff]
    %v257 = vld [vmem:[#allocation2 + $0x460] sm:$0xff]
    %v258 = vld [vmem:[#allocation2 + $0x468] sm:$0xff]
    %v259 = vld [vmem:[#allocation2 + $0x470] sm:$0xff]
    %v260 = vld [vmem:[#allocation2 + $0x478] sm:$0xff]
    %v261 = vld [vmem:[#allocation2 + $0x480] sm:$0xff]
    %v262 = vld [vmem:[#allocation2 + $0x488] sm:$0xff]
    %v263 = vld [vmem:[#allocation2 + $0x490] sm:$0xff]
    %v264 = vld [vmem:[#allocation2 + $0x498] sm:$0xff]
    %v265 = vld [vmem:[#allocation2 + $0x4a0] sm:$0xff]
    %v266 = vld [vmem:[#allocation2 + $0x4a8] sm:$0xff]
    %v267 = vld [vmem:[#allocation2 + $0x4b0] sm:$0xff]
    %v268 = vld [vmem:[#allocation2 + $0x4b8] sm:$0xff]
    %v269 = vpack.c.bf16 %v136, %v117
    %v270 = vpack.c.bf16 %v137, %v118
    %v271 = vpack.c.bf16 %v138, %v119
    %v272 = vpack.c.bf16 %v139, %v120
    %v273 = vpack.c.bf16 %v140, %v121
    %v274 = vpack.c.bf16 %v141, %v122
    %v275 = vpack.c.bf16 %v142, %v123
    %v276 = vpack.c.bf16 %v143, %v124
    %v277 = vpack.c.bf16 %v144, %v125
    %v278 = vpack.c.bf16 %v145, %v126
    %v279 = vpack.c.bf16 %v146, %v127
    %v280 = vpack.c.bf16 %v147, %v128
    %v281 = vpack.c.bf16 %v148, %v129
    %v282 = vpack.c.bf16 %v149, %v130
    %v283 = vpack.c.bf16 %v150, %v131
    %v284 = vpack.c.bf16 %v151, %v132
    %v285 = vpack.c.bf16 %v152, %v133
    %v286 = vpack.c.bf16 %v153, %v134
    %v287 = vpack.c.bf16 %v154, %v135
    %v288 = vpack.c.bf16 %v174, %v155
    %v289 = vpack.c.bf16 %v175, %v156
    %v290 = vpack.c.bf16 %v176, %v157
    %v291 = vpack.c.bf16 %v177, %v158
    %v292 = vpack.c.bf16 %v178, %v159
    %v293 = vpack.c.bf16 %v179, %v160
    %v294 = vpack.c.bf16 %v180, %v161
    %v295 = vpack.c.bf16 %v181, %v162
    %v296 = vpack.c.bf16 %v182, %v163
    %v297 = vpack.c.bf16 %v183, %v164
    %v298 = vpack.c.bf16 %v184, %v165
    %v299 = vpack.c.bf16 %v185, %v166
    %v300 = vpack.c.bf16 %v186, %v167
    %v301 = vpack.c.bf16 %v187, %v168
    %v302 = vpack.c.bf16 %v188, %v169
    %v303 = vpack.c.bf16 %v189, %v170
    %v304 = vpack.c.bf16 %v190, %v171
    %v305 = vpack.c.bf16 %v191, %v172
    %v306 = vpack.c.bf16 %v192, %v173
    %v307 = vpack.c.bf16 %v212, %v193
    %v308 = vpack.c.bf16 %v213, %v194
    %v309 = vpack.c.bf16 %v214, %v195
    %v310 = vpack.c.bf16 %v215, %v196
    %v311 = vpack.c.bf16 %v216, %v197
    %v312 = vpack.c.bf16 %v217, %v198
    %v313 = vpack.c.bf16 %v218, %v199
    %v314 = vpack.c.bf16 %v219, %v200
    %v315 = vpack.c.bf16 %v220, %v201
    %v316 = vpack.c.bf16 %v221, %v202
    %v317 = vpack.c.bf16 %v222, %v203
    %v318 = vpack.c.bf16 %v223, %v204
    %v319 = vpack.c.bf16 %v224, %v205
    %v320 = vpack.c.bf16 %v225, %v206
    %v321 = vpack.c.bf16 %v226, %v207
    %v322 = vpack.c.bf16 %v227, %v208
    %v323 = vpack.c.bf16 %v228, %v209
    %v324 = vpack.c.bf16 %v229, %v210
    %v325 = vpack.c.bf16 %v230, %v211
    %v326 = vpack.c.bf16 %v250, %v231
    %v327 = vpack.c.bf16 %v251, %v232
    %v328 = vpack.c.bf16 %v252, %v233
    %v329 = vpack.c.bf16 %v253, %v234
    %v330 = vpack.c.bf16 %v254, %v235
    %v331 = vpack.c.bf16 %v255, %v236
    %v332 = vpack.c.bf16 %v256, %v237
    %v333 = vpack.c.bf16 %v257, %v238
    %v334 = vpack.c.bf16 %v258, %v239
    %v335 = vpack.c.bf16 %v259, %v240
    %v336 = vpack.c.bf16 %v260, %v241
    %v337 = vpack.c.bf16 %v261, %v242
    %v338 = vpack.c.bf16 %v262, %v243
    %v339 = vpack.c.bf16 %v263, %v244
    %v340 = vpack.c.bf16 %v264, %v245
    %v341 = vpack.c.bf16 %v265, %v246
    %v342 = vpack.c.bf16 %v266, %v247
    %v343 = vpack.c.bf16 %v267, %v248
    %v344 = vpack.c.bf16 %v268, %v249
    %v345 = vld [vmem:[#allocation5] sm:$0xff]
    %v346 = vld [vmem:[#allocation5 + $0x8] sm:$0xff]
    %v347 = vld [vmem:[#allocation5 + $0x10] sm:$0xff]
    %v348 = vld [vmem:[#allocation5 + $0x18] sm:$0xff]
    %v349 = vld [vmem:[#allocation5 + $0x20] sm:$0xff]
    %v350 = vld [vmem:[#allocation5 + $0x28] sm:$0xff]
    %v351 = vld [vmem:[#allocation5 + $0x30] sm:$0xff]
    %v352 = vld [vmem:[#allocation5 + $0x38] sm:$0xff]
    %v353 = vld [vmem:[#allocation5 + $0x40] sm:$0xff]
    %v354 = vld [vmem:[#allocation5 + $0x48] sm:$0xff]
    %v355 = vld [vmem:[#allocation5 + $0x50] sm:$0xff]
    %v356 = vld [vmem:[#allocation5 + $0x58] sm:$0xff]
    %v357 = vld [vmem:[#allocation5 + $0x60] sm:$0xff]
    %v358 = vld [vmem:[#allocation5 + $0x68] sm:$0xff]
    %v359 = vld [vmem:[#allocation5 + $0x70] sm:$0xff]
    %v360 = vld [vmem:[#allocation5 + $0x78] sm:$0xff]
    %v361 = vld [vmem:[#allocation5 + $0x80] sm:$0xff]
    %v362 = vld [vmem:[#allocation5 + $0x88] sm:$0xff]
    %v363 = vld [vmem:[#allocation5 + $0x90] sm:$0xff]
    %v364 = vld [vmem:[#allocation5 + $0x98] sm:$0xff]
    %v365 = vld [vmem:[#allocation5 + $0xa0] sm:$0xff]
    %v366 = vld [vmem:[#allocation5 + $0xa8] sm:$0xff]
    %v367 = vld [vmem:[#allocation5 + $0xb0] sm:$0xff]
    %v368 = vld [vmem:[#allocation5 + $0xb8] sm:$0xff]
    %v369 = vld [vmem:[#allocation5 + $0xc0] sm:$0xff]
    %v370 = vld [vmem:[#allocation5 + $0xc8] sm:$0xff]
    %v371 = vld [vmem:[#allocation5 + $0xd0] sm:$0xff]
    %v372 = vld [vmem:[#allocation5 + $0xd8] sm:$0xff]
    %v373 = vld [vmem:[#allocation5 + $0xe0] sm:$0xff]
    %v374 = vld [vmem:[#allocation5 + $0xe8] sm:$0xff]
    %v375 = vld [vmem:[#allocation5 + $0xf0] sm:$0xff]
    %v376 = vld [vmem:[#allocation5 + $0xf8] sm:$0xff]
    %v377 = vld [vmem:[#allocation5 + $0x100] sm:$0xff]
    %v378 = vld [vmem:[#allocation5 + $0x108] sm:$0xff]
    %v379 = vld [vmem:[#allocation5 + $0x110] sm:$0xff]
    %v380 = vld [vmem:[#allocation5 + $0x118] sm:$0xff]
    %v381 = vld [vmem:[#allocation5 + $0x120] sm:$0xff]
    %v382 = vld [vmem:[#allocation5 + $0x128] sm:$0xff]
    %v383 = vld [vmem:[#allocation5 + $0x130] sm:$0xff]
    %v384 = vld [vmem:[#allocation5 + $0x138] sm:$0xff]
    %v385 = vld [vmem:[#allocation5 + $0x140] sm:$0xff]
    %v386 = vld [vmem:[#allocation5 + $0x148] sm:$0xff]
    %v387 = vld [vmem:[#allocation5 + $0x150] sm:$0xff]
    %v388 = vld [vmem:[#allocation5 + $0x158] sm:$0xff]
    %v389 = vld [vmem:[#allocation5 + $0x160] sm:$0xff]
    %v390 = vld [vmem:[#allocation5 + $0x168] sm:$0xff]
    %v391 = vld [vmem:[#allocation5 + $0x170] sm:$0xff]
    %v392 = vld [vmem:[#allocation5 + $0x178] sm:$0xff]
    %v393 = vld [vmem:[#allocation5 + $0x180] sm:$0xff]
    %v394 = vld [vmem:[#allocation5 + $0x188] sm:$0xff]
    %v395 = vld [vmem:[#allocation5 + $0x190] sm:$0xff]
    %v396 = vld [vmem:[#allocation5 + $0x198] sm:$0xff]
    %v397 = vld [vmem:[#allocation5 + $0x1a0] sm:$0xff]
    %v398 = vld [vmem:[#allocation5 + $0x1a8] sm:$0xff]
    %v399 = vld [vmem:[#allocation5 + $0x1b0] sm:$0xff]
    %v400 = vld [vmem:[#allocation5 + $0x1b8] sm:$0xff]
    %v401 = vld [vmem:[#allocation5 + $0x1c0] sm:$0xff]
    %v402 = vld [vmem:[#allocation5 + $0x1c8] sm:$0xff]
    %v403 = vld [vmem:[#allocation5 + $0x1d0] sm:$0xff]
    %v404 = vld [vmem:[#allocation5 + $0x1d8] sm:$0xff]
    %v405 = vld [vmem:[#allocation5 + $0x1e0] sm:$0xff]
    %v406 = vld [vmem:[#allocation5 + $0x1e8] sm:$0xff]
    %v407 = vld [vmem:[#allocation5 + $0x1f0] sm:$0xff]
    %v408 = vld [vmem:[#allocation5 + $0x1f8] sm:$0xff]
    %v409 = vld [vmem:[#allocation5 + $0x200] sm:$0xff]
    %v410 = vld [vmem:[#allocation5 + $0x208] sm:$0xff]
    %v411 = vld [vmem:[#allocation5 + $0x210] sm:$0xff]
    %v412 = vld [vmem:[#allocation5 + $0x218] sm:$0xff]
    %v413 = vld [vmem:[#allocation5 + $0x220] sm:$0xff]
    %v414 = vld [vmem:[#allocation5 + $0x228] sm:$0xff]
    %v415 = vld [vmem:[#allocation5 + $0x230] sm:$0xff]
    %v416 = vld [vmem:[#allocation5 + $0x238] sm:$0xff]
    %v417 = vld [vmem:[#allocation5 + $0x240] sm:$0xff]
    %v418 = vld [vmem:[#allocation5 + $0x248] sm:$0xff]
    %v419 = vld [vmem:[#allocation5 + $0x250] sm:$0xff]
    %v420 = vld [vmem:[#allocation5 + $0x258] sm:$0xff]
    %v421 = vld [vmem:[#allocation5 + $0x260] sm:$0xff]
    %v422 = vld [vmem:[#allocation5 + $0x268] sm:$0xff]
    %v423 = vld [vmem:[#allocation5 + $0x270] sm:$0xff]
    %v424 = vld [vmem:[#allocation5 + $0x278] sm:$0xff]
    %v425 = vld [vmem:[#allocation5 + $0x280] sm:$0xff]
    %v426 = vld [vmem:[#allocation5 + $0x288] sm:$0xff]
    %v427 = vld [vmem:[#allocation5 + $0x290] sm:$0xff]
    %v428 = vld [vmem:[#allocation5 + $0x298] sm:$0xff]
    %v429 = vld [vmem:[#allocation5 + $0x2a0] sm:$0xff]
    %v430 = vld [vmem:[#allocation5 + $0x2a8] sm:$0xff]
    %v431 = vld [vmem:[#allocation5 + $0x2b0] sm:$0xff]
    %v432 = vld [vmem:[#allocation5 + $0x2b8] sm:$0xff]
    %v433 = vld [vmem:[#allocation5 + $0x2c0] sm:$0xff]
    %v434 = vld [vmem:[#allocation5 + $0x2c8] sm:$0xff]
    %v435 = vld [vmem:[#allocation5 + $0x2d0] sm:$0xff]
    %v436 = vld [vmem:[#allocation5 + $0x2d8] sm:$0xff]
    %v437 = vld [vmem:[#allocation5 + $0x2e0] sm:$0xff]
    %v438 = vld [vmem:[#allocation5 + $0x2e8] sm:$0xff]
    %v439 = vld [vmem:[#allocation5 + $0x2f0] sm:$0xff]
    %v440 = vld [vmem:[#allocation5 + $0x2f8] sm:$0xff]
    %v441 = vld [vmem:[#allocation5 + $0x300] sm:$0xff]
    %v442 = vld [vmem:[#allocation5 + $0x308] sm:$0xff]
    %v443 = vld [vmem:[#allocation5 + $0x310] sm:$0xff]
    %v444 = vld [vmem:[#allocation5 + $0x318] sm:$0xff]
    %v445 = vld [vmem:[#allocation5 + $0x320] sm:$0xff]
    %v446 = vld [vmem:[#allocation5 + $0x328] sm:$0xff]
    %v447 = vld [vmem:[#allocation5 + $0x330] sm:$0xff]
    %v448 = vld [vmem:[#allocation5 + $0x338] sm:$0xff]
    %v449 = vld [vmem:[#allocation5 + $0x340] sm:$0xff]
    %v450 = vld [vmem:[#allocation5 + $0x348] sm:$0xff]
    %v451 = vld [vmem:[#allocation5 + $0x350] sm:$0xff]
    %v452 = vld [vmem:[#allocation5 + $0x358] sm:$0xff]
    %v453 = vld [vmem:[#allocation5 + $0x360] sm:$0xff]
    %v454 = vld [vmem:[#allocation5 + $0x368] sm:$0xff]
    %v455 = vld [vmem:[#allocation5 + $0x370] sm:$0xff]
    %v456 = vld [vmem:[#allocation5 + $0x378] sm:$0xff]
    %v457 = vld [vmem:[#allocation5 + $0x380] sm:$0xff]
    %v458 = vld [vmem:[#allocation5 + $0x388] sm:$0xff]
    %v459 = vld [vmem:[#allocation5 + $0x390] sm:$0xff]
    %v460 = vld [vmem:[#allocation5 + $0x398] sm:$0xff]
    %v461 = vld [vmem:[#allocation5 + $0x3a0] sm:$0xff]
    %v462 = vld [vmem:[#allocation5 + $0x3a8] sm:$0xff]
    %v463 = vld [vmem:[#allocation5 + $0x3b0] sm:$0xff]
    %v464 = vld [vmem:[#allocation5 + $0x3b8] sm:$0xff]
    %v465 = vld [vmem:[#allocation5 + $0x3c0] sm:$0xff]
    %v466 = vld [vmem:[#allocation5 + $0x3c8] sm:$0xff]
    %v467 = vld [vmem:[#allocation5 + $0x3d0] sm:$0xff]
    %v468 = vld [vmem:[#allocation5 + $0x3d8] sm:$0xff]
    %v469 = vld [vmem:[#allocation5 + $0x3e0] sm:$0xff]
    %v470 = vld [vmem:[#allocation5 + $0x3e8] sm:$0xff]
    %v471 = vld [vmem:[#allocation5 + $0x3f0] sm:$0xff]
    %v472 = vld [vmem:[#allocation5 + $0x3f8] sm:$0xff]
    %v473 = vld [vmem:[#allocation5 + $0x400] sm:$0xff]
    %v474 = vld [vmem:[#allocation5 + $0x408] sm:$0xff]
    %v475 = vld [vmem:[#allocation5 + $0x410] sm:$0xff]
    %v476 = vld [vmem:[#allocation5 + $0x418] sm:$0xff]
    %v477 = vld [vmem:[#allocation5 + $0x420] sm:$0xff]
    %v478 = vld [vmem:[#allocation5 + $0x428] sm:$0xff]
    %v479 = vld [vmem:[#allocation5 + $0x430] sm:$0xff]
    %v480 = vld [vmem:[#allocation5 + $0x438] sm:$0xff]
    %v481 = vld [vmem:[#allocation5 + $0x440] sm:$0xff]
    %v482 = vld [vmem:[#allocation5 + $0x448] sm:$0xff]
    %v483 = vld [vmem:[#allocation5 + $0x450] sm:$0xff]
    %v484 = vld [vmem:[#allocation5 + $0x458] sm:$0xff]
    %v485 = vld [vmem:[#allocation5 + $0x460] sm:$0xff]
    %v486 = vld [vmem:[#allocation5 + $0x468] sm:$0xff]
    %v487 = vld [vmem:[#allocation5 + $0x470] sm:$0xff]
    %v488 = vld [vmem:[#allocation5 + $0x478] sm:$0xff]
    %v489 = vld [vmem:[#allocation5 + $0x480] sm:$0xff]
    %v490 = vld [vmem:[#allocation5 + $0x488] sm:$0xff]
    %v491 = vld [vmem:[#allocation5 + $0x490] sm:$0xff]
    %v492 = vld [vmem:[#allocation5 + $0x498] sm:$0xff]
    %v493 = vld [vmem:[#allocation5 + $0x4a0] sm:$0xff]
    %v494 = vld [vmem:[#allocation5 + $0x4a8] sm:$0xff]
    %v495 = vld [vmem:[#allocation5 + $0x4b0] sm:$0xff]
    %v496 = vld [vmem:[#allocation5 + $0x4b8] sm:$0xff]
    %v497 = vld [vmem:[#allocation5 + $0x4c0] sm:$0xff]
    %v498 = vld [vmem:[#allocation5 + $0x4c8] sm:$0xff]
    %v499 = vld [vmem:[#allocation5 + $0x4d0] sm:$0xff]
    %v500 = vld [vmem:[#allocation5 + $0x4d8] sm:$0xff]
    %v501 = vld [vmem:[#allocation5 + $0x4e0] sm:$0xff]
    %v502 = vld [vmem:[#allocation5 + $0x4e8] sm:$0xff]
    %v503 = vld [vmem:[#allocation5 + $0x4f0] sm:$0xff]
    %v504 = vld [vmem:[#allocation5 + $0x4f8] sm:$0xff]
    %v505 = vld [vmem:[#allocation5 + $0x500] sm:$0xff]
    %v506 = vld [vmem:[#allocation5 + $0x508] sm:$0xff]
    %v507 = vld [vmem:[#allocation5 + $0x510] sm:$0xff]
    %v508 = vld [vmem:[#allocation5 + $0x518] sm:$0xff]
    %v509 = vld [vmem:[#allocation5 + $0x520] sm:$0xff]
    %v510 = vld [vmem:[#allocation5 + $0x528] sm:$0xff]
    %v511 = vld [vmem:[#allocation5 + $0x530] sm:$0xff]
    %v512 = vld [vmem:[#allocation5 + $0x538] sm:$0xff]
    %v513 = vld [vmem:[#allocation5 + $0x540] sm:$0xff]
    %v514 = vld [vmem:[#allocation5 + $0x548] sm:$0xff]
    %v515 = vld [vmem:[#allocation5 + $0x550] sm:$0xff]
    %v516 = vld [vmem:[#allocation5 + $0x558] sm:$0xff]
    %v517 = vld [vmem:[#allocation5 + $0x560] sm:$0xff]
    %v518 = vld [vmem:[#allocation5 + $0x568] sm:$0xff]
    %v519 = vld [vmem:[#allocation5 + $0x570] sm:$0xff]
    %v520 = vld [vmem:[#allocation5 + $0x578] sm:$0xff]
    %v521 = vld [vmem:[#allocation5 + $0x580] sm:$0xff]
    %v522 = vld [vmem:[#allocation5 + $0x588] sm:$0xff]
    %v523 = vld [vmem:[#allocation5 + $0x590] sm:$0xff]
    %v524 = vld [vmem:[#allocation5 + $0x598] sm:$0xff]
    %v525 = vld [vmem:[#allocation5 + $0x5a0] sm:$0xff]
    %v526 = vld [vmem:[#allocation5 + $0x5a8] sm:$0xff]
    %v527 = vld [vmem:[#allocation5 + $0x5b0] sm:$0xff]
    %v528 = vld [vmem:[#allocation5 + $0x5b8] sm:$0xff]
    %v529 = vld [vmem:[#allocation5 + $0x5c0] sm:$0xff]
    %v530 = vld [vmem:[#allocation5 + $0x5c8] sm:$0xff]
    %v531 = vld [vmem:[#allocation5 + $0x5d0] sm:$0xff]
    %v532 = vld [vmem:[#allocation5 + $0x5d8] sm:$0xff]
    %v533 = vld [vmem:[#allocation5 + $0x5e0] sm:$0xff]
    %v534 = vld [vmem:[#allocation5 + $0x5e8] sm:$0xff]
    %v535 = vld [vmem:[#allocation5 + $0x5f0] sm:$0xff]
    %v536 = vld [vmem:[#allocation5 + $0x5f8] sm:$0xff]
    %v537 = vld [vmem:[#allocation5 + $0x600] sm:$0xff]
    %v538 = vld [vmem:[#allocation5 + $0x608] sm:$0xff]
    %v539 = vld [vmem:[#allocation5 + $0x610] sm:$0xff]
    %v540 = vld [vmem:[#allocation5 + $0x618] sm:$0xff]
    %v541 = vld [vmem:[#allocation5 + $0x620] sm:$0xff]
    %v542 = vld [vmem:[#allocation5 + $0x628] sm:$0xff]
    %v543 = vld [vmem:[#allocation5 + $0x630] sm:$0xff]
    %v544 = vld [vmem:[#allocation5 + $0x638] sm:$0xff]
    %v545 = vld [vmem:[#allocation5 + $0x640] sm:$0xff]
    %v546 = vld [vmem:[#allocation5 + $0x648] sm:$0xff]
    %v547 = vld [vmem:[#allocation5 + $0x650] sm:$0xff]
    %v548 = vld [vmem:[#allocation5 + $0x658] sm:$0xff]
    %v549 = vld [vmem:[#allocation5 + $0x660] sm:$0xff]
    %v550 = vld [vmem:[#allocation5 + $0x668] sm:$0xff]
    %v551 = vld [vmem:[#allocation5 + $0x670] sm:$0xff]
    %v552 = vld [vmem:[#allocation5 + $0x678] sm:$0xff]
    %v553 = vld [vmem:[#allocation5 + $0x680] sm:$0xff]
    %v554 = vld [vmem:[#allocation5 + $0x688] sm:$0xff]
    %v555 = vld [vmem:[#allocation5 + $0x690] sm:$0xff]
    %v556 = vld [vmem:[#allocation5 + $0x698] sm:$0xff]
    %v557 = vld [vmem:[#allocation5 + $0x6a0] sm:$0xff]
    %v558 = vld [vmem:[#allocation5 + $0x6a8] sm:$0xff]
    %v559 = vld [vmem:[#allocation5 + $0x6b0] sm:$0xff]
    %v560 = vld [vmem:[#allocation5 + $0x6b8] sm:$0xff]
    %v561 = vld [vmem:[#allocation5 + $0x6c0] sm:$0xff]
    %v562 = vld [vmem:[#allocation5 + $0x6c8] sm:$0xff]
    %v563 = vld [vmem:[#allocation5 + $0x6d0] sm:$0xff]
    %v564 = vld [vmem:[#allocation5 + $0x6d8] sm:$0xff]
    %v565 = vld [vmem:[#allocation5 + $0x6e0] sm:$0xff]
    %v566 = vld [vmem:[#allocation5 + $0x6e8] sm:$0xff]
    %v567 = vld [vmem:[#allocation5 + $0x6f0] sm:$0xff]
    %v568 = vld [vmem:[#allocation5 + $0x6f8] sm:$0xff]
    %v569 = vld [vmem:[#allocation5 + $0x700] sm:$0xff]
    %v570 = vld [vmem:[#allocation5 + $0x708] sm:$0xff]
    %v571 = vld [vmem:[#allocation5 + $0x710] sm:$0xff]
    %v572 = vld [vmem:[#allocation5 + $0x718] sm:$0xff]
    %v573 = vld [vmem:[#allocation5 + $0x720] sm:$0xff]
    %v574 = vld [vmem:[#allocation5 + $0x728] sm:$0xff]
    %v575 = vld [vmem:[#allocation5 + $0x730] sm:$0xff]
    %v576 = vld [vmem:[#allocation5 + $0x738] sm:$0xff]
    %v577 = vld [vmem:[#allocation5 + $0x740] sm:$0xff]
    %v578 = vld [vmem:[#allocation5 + $0x748] sm:$0xff]
    %v579 = vld [vmem:[#allocation5 + $0x750] sm:$0xff]
    %v580 = vld [vmem:[#allocation5 + $0x758] sm:$0xff]
    %v581 = vld [vmem:[#allocation5 + $0x760] sm:$0xff]
    %v582 = vld [vmem:[#allocation5 + $0x768] sm:$0xff]
    %v583 = vld [vmem:[#allocation5 + $0x770] sm:$0xff]
    %v584 = vld [vmem:[#allocation5 + $0x778] sm:$0xff]
    %v585 = vld [vmem:[#allocation5 + $0x780] sm:$0xff]
    %v586 = vld [vmem:[#allocation5 + $0x788] sm:$0xff]
    %v587 = vld [vmem:[#allocation5 + $0x790] sm:$0xff]
    %v588 = vld [vmem:[#allocation5 + $0x798] sm:$0xff]
    %v589 = vld [vmem:[#allocation5 + $0x7a0] sm:$0xff]
    %v590 = vld [vmem:[#allocation5 + $0x7a8] sm:$0xff]
    %v591 = vld [vmem:[#allocation5 + $0x7b0] sm:$0xff]
    %v592 = vld [vmem:[#allocation5 + $0x7b8] sm:$0xff]
    %v593 = vld [vmem:[#allocation5 + $0x7c0] sm:$0xff]
    %v594 = vld [vmem:[#allocation5 + $0x7c8] sm:$0xff]
    %v595 = vld [vmem:[#allocation5 + $0x7d0] sm:$0xff]
    %v596 = vld [vmem:[#allocation5 + $0x7d8] sm:$0xff]
    %v597 = vld [vmem:[#allocation5 + $0x7e0] sm:$0xff]
    %v598 = vld [vmem:[#allocation5 + $0x7e8] sm:$0xff]
    %v599 = vld [vmem:[#allocation5 + $0x7f0] sm:$0xff]
    %v600 = vld [vmem:[#allocation5 + $0x7f8] sm:$0xff]
    %v601 = vld [vmem:[#allocation5 + $0x800] sm:$0xff]
    %v602 = vld [vmem:[#allocation5 + $0x808] sm:$0xff]
    %v603 = vld [vmem:[#allocation5 + $0x810] sm:$0xff]
    %v604 = vld [vmem:[#allocation5 + $0x818] sm:$0xff]
    %v605 = vld [vmem:[#allocation5 + $0x820] sm:$0xff]
    %v606 = vld [vmem:[#allocation5 + $0x828] sm:$0xff]
    %v607 = vld [vmem:[#allocation5 + $0x830] sm:$0xff]
    %v608 = vld [vmem:[#allocation5 + $0x838] sm:$0xff]
    %v609 = vld [vmem:[#allocation5 + $0x840] sm:$0xff]
    %v610 = vld [vmem:[#allocation5 + $0x848] sm:$0xff]
    %v611 = vld [vmem:[#allocation5 + $0x850] sm:$0xff]
    %v612 = vld [vmem:[#allocation5 + $0x858] sm:$0xff]
    %v613 = vld [vmem:[#allocation5 + $0x860] sm:$0xff]
    %v614 = vld [vmem:[#allocation5 + $0x868] sm:$0xff]
    %v615 = vld [vmem:[#allocation5 + $0x870] sm:$0xff]
    %v616 = vld [vmem:[#allocation5 + $0x878] sm:$0xff]
    %v617 = vld [vmem:[#allocation5 + $0x880] sm:$0xff]
    %v618 = vld [vmem:[#allocation5 + $0x888] sm:$0xff]
    %v619 = vld [vmem:[#allocation5 + $0x890] sm:$0xff]
    %v620 = vld [vmem:[#allocation5 + $0x898] sm:$0xff]
    %v621 = vld [vmem:[#allocation5 + $0x8a0] sm:$0xff]
    %v622 = vld [vmem:[#allocation5 + $0x8a8] sm:$0xff]
    %v623 = vld [vmem:[#allocation5 + $0x8b0] sm:$0xff]
    %v624 = vld [vmem:[#allocation5 + $0x8b8] sm:$0xff]
    %v625 = vld [vmem:[#allocation5 + $0x8c0] sm:$0xff]
    %v626 = vld [vmem:[#allocation5 + $0x8c8] sm:$0xff]
    %v627 = vld [vmem:[#allocation5 + $0x8d0] sm:$0xff]
    %v628 = vld [vmem:[#allocation5 + $0x8d8] sm:$0xff]
    %v629 = vld [vmem:[#allocation5 + $0x8e0] sm:$0xff]
    %v630 = vld [vmem:[#allocation5 + $0x8e8] sm:$0xff]
    %v631 = vld [vmem:[#allocation5 + $0x8f0] sm:$0xff]
    %v632 = vld [vmem:[#allocation5 + $0x8f8] sm:$0xff]
    %v633 = vld [vmem:[#allocation5 + $0x900] sm:$0xff]
    %v634 = vld [vmem:[#allocation5 + $0x908] sm:$0xff]
    %v635 = vld [vmem:[#allocation5 + $0x910] sm:$0xff]
    %v636 = vld [vmem:[#allocation5 + $0x918] sm:$0xff]
    %v637 = vld [vmem:[#allocation5 + $0x920] sm:$0xff]
    %v638 = vld [vmem:[#allocation5 + $0x928] sm:$0xff]
    %v639 = vld [vmem:[#allocation5 + $0x930] sm:$0xff]
    %v640 = vld [vmem:[#allocation5 + $0x938] sm:$0xff]
    %v641 = vld [vmem:[#allocation5 + $0x940] sm:$0xff]
    %v642 = vld [vmem:[#allocation5 + $0x948] sm:$0xff]
    %v643 = vld [vmem:[#allocation5 + $0x950] sm:$0xff]
    %v644 = vld [vmem:[#allocation5 + $0x958] sm:$0xff]
    %v645 = vld [vmem:[#allocation5 + $0x960] sm:$0xff]
    %v646 = vld [vmem:[#allocation5 + $0x968] sm:$0xff]
    %v647 = vld [vmem:[#allocation5 + $0x970] sm:$0xff]
    %v648 = vld [vmem:[#allocation5 + $0x978] sm:$0xff]
    %v649 = vld [vmem:[#allocation5 + $0x980] sm:$0xff]
    %v650 = vld [vmem:[#allocation5 + $0x988] sm:$0xff]
    %v651 = vld [vmem:[#allocation5 + $0x990] sm:$0xff]
    %v652 = vld [vmem:[#allocation5 + $0x998] sm:$0xff]
    %v653 = vld [vmem:[#allocation5 + $0x9a0] sm:$0xff]
    %v654 = vld [vmem:[#allocation5 + $0x9a8] sm:$0xff]
    %v655 = vld [vmem:[#allocation5 + $0x9b0] sm:$0xff]
    %v656 = vld [vmem:[#allocation5 + $0x9b8] sm:$0xff]
    %v657 = vld [vmem:[#allocation5 + $0x9c0] sm:$0xff]
    %v658 = vld [vmem:[#allocation5 + $0x9c8] sm:$0xff]
    %v659 = vld [vmem:[#allocation5 + $0x9d0] sm:$0xff]
    %v660 = vld [vmem:[#allocation5 + $0x9d8] sm:$0xff]
    %v661 = vld [vmem:[#allocation5 + $0x9e0] sm:$0xff]
    %v662 = vld [vmem:[#allocation5 + $0x9e8] sm:$0xff]
    %v663 = vld [vmem:[#allocation5 + $0x9f0] sm:$0xff]
    %v664 = vld [vmem:[#allocation5 + $0x9f8] sm:$0xff]
    %v665 = vld [vmem:[#allocation5 + $0xa00] sm:$0xff]
    %v666 = vld [vmem:[#allocation5 + $0xa08] sm:$0xff]
    %v667 = vld [vmem:[#allocation5 + $0xa10] sm:$0xff]
    %v668 = vld [vmem:[#allocation5 + $0xa18] sm:$0xff]
    %v669 = vld [vmem:[#allocation5 + $0xa20] sm:$0xff]
    %v670 = vld [vmem:[#allocation5 + $0xa28] sm:$0xff]
    %v671 = vld [vmem:[#allocation5 + $0xa30] sm:$0xff]
    %v672 = vld [vmem:[#allocation5 + $0xa38] sm:$0xff]
    %v673 = vld [vmem:[#allocation5 + $0xa40] sm:$0xff]
    %v674 = vld [vmem:[#allocation5 + $0xa48] sm:$0xff]
    %v675 = vld [vmem:[#allocation5 + $0xa50] sm:$0xff]
    %v676 = vld [vmem:[#allocation5 + $0xa58] sm:$0xff]
    %v677 = vld [vmem:[#allocation5 + $0xa60] sm:$0xff]
    %v678 = vld [vmem:[#allocation5 + $0xa68] sm:$0xff]
    %v679 = vld [vmem:[#allocation5 + $0xa70] sm:$0xff]
    %v680 = vld [vmem:[#allocation5 + $0xa78] sm:$0xff]
    %v681 = vld [vmem:[#allocation5 + $0xa80] sm:$0xff]
    %v682 = vld [vmem:[#allocation5 + $0xa88] sm:$0xff]
    %v683 = vld [vmem:[#allocation5 + $0xa90] sm:$0xff]
    %v684 = vld [vmem:[#allocation5 + $0xa98] sm:$0xff]
    %v685 = vld [vmem:[#allocation5 + $0xaa0] sm:$0xff]
    %v686 = vld [vmem:[#allocation5 + $0xaa8] sm:$0xff]
    %v687 = vld [vmem:[#allocation5 + $0xab0] sm:$0xff]
    %v688 = vld [vmem:[#allocation5 + $0xab8] sm:$0xff]
    %v689 = vld [vmem:[#allocation5 + $0xac0] sm:$0xff]
    %v690 = vld [vmem:[#allocation5 + $0xac8] sm:$0xff]
    %v691 = vld [vmem:[#allocation5 + $0xad0] sm:$0xff]
    %v692 = vld [vmem:[#allocation5 + $0xad8] sm:$0xff]
    %v693 = vld [vmem:[#allocation5 + $0xae0] sm:$0xff]
    %v694 = vld [vmem:[#allocation5 + $0xae8] sm:$0xff]
    %v695 = vld [vmem:[#allocation5 + $0xaf0] sm:$0xff]
    %v696 = vld [vmem:[#allocation5 + $0xaf8] sm:$0xff]
    %v697 = vld [vmem:[#allocation5 + $0xb00] sm:$0xff]
    %v698 = vld [vmem:[#allocation5 + $0xb08] sm:$0xff]
    %v699 = vld [vmem:[#allocation5 + $0xb10] sm:$0xff]
    %v700 = vld [vmem:[#allocation5 + $0xb18] sm:$0xff]
    %v701 = vld [vmem:[#allocation5 + $0xb20] sm:$0xff]
    %v702 = vld [vmem:[#allocation5 + $0xb28] sm:$0xff]
    %v703 = vld [vmem:[#allocation5 + $0xb30] sm:$0xff]
    %v704 = vld [vmem:[#allocation5 + $0xb38] sm:$0xff]
    %v705 = vld [vmem:[#allocation5 + $0xb40] sm:$0xff]
    %v706 = vld [vmem:[#allocation5 + $0xb48] sm:$0xff]
    %v707 = vld [vmem:[#allocation5 + $0xb50] sm:$0xff]
    %v708 = vld [vmem:[#allocation5 + $0xb58] sm:$0xff]
    %v709 = vld [vmem:[#allocation5 + $0xb60] sm:$0xff]
    %v710 = vld [vmem:[#allocation5 + $0xb68] sm:$0xff]
    %v711 = vld [vmem:[#allocation5 + $0xb70] sm:$0xff]
    %v712 = vld [vmem:[#allocation5 + $0xb78] sm:$0xff]
    %v713 = vld [vmem:[#allocation5 + $0xb80] sm:$0xff]
    %v714 = vld [vmem:[#allocation5 + $0xb88] sm:$0xff]
    %v715 = vld [vmem:[#allocation5 + $0xb90] sm:$0xff]
    %v716 = vld [vmem:[#allocation5 + $0xb98] sm:$0xff]
    %v717 = vld [vmem:[#allocation5 + $0xba0] sm:$0xff]
    %v718 = vld [vmem:[#allocation5 + $0xba8] sm:$0xff]
    %v719 = vld [vmem:[#allocation5 + $0xbb0] sm:$0xff]
    %v720 = vld [vmem:[#allocation5 + $0xbb8] sm:$0xff]
    %v721 = vld [vmem:[#allocation5 + $0xbc0] sm:$0xff]
    %v722 = vld [vmem:[#allocation5 + $0xbc8] sm:$0xff]
    %v723 = vld [vmem:[#allocation5 + $0xbd0] sm:$0xff]
    %v724 = vld [vmem:[#allocation5 + $0xbd8] sm:$0xff]
    %v725 = vld [vmem:[#allocation5 + $0xbe0] sm:$0xff]
    %v726 = vld [vmem:[#allocation5 + $0xbe8] sm:$0xff]
    %v727 = vld [vmem:[#allocation5 + $0xbf0] sm:$0xff]
    %v728 = vld [vmem:[#allocation5 + $0xbf8] sm:$0xff]
    %v729 = vld [vmem:[#allocation5 + $0xc00] sm:$0xff]
    %v730 = vld [vmem:[#allocation5 + $0xc08] sm:$0xff]
    %v731 = vld [vmem:[#allocation5 + $0xc10] sm:$0xff]
    %v732 = vld [vmem:[#allocation5 + $0xc18] sm:$0xff]
    %v733 = vld [vmem:[#allocation5 + $0xc20] sm:$0xff]
    %v734 = vld [vmem:[#allocation5 + $0xc28] sm:$0xff]
    %v735 = vld [vmem:[#allocation5 + $0xc30] sm:$0xff]
    %v736 = vld [vmem:[#allocation5 + $0xc38] sm:$0xff]
    %v737 = vld [vmem:[#allocation5 + $0xc40] sm:$0xff]
    %v738 = vld [vmem:[#allocation5 + $0xc48] sm:$0xff]
    %v739 = vld [vmem:[#allocation5 + $0xc50] sm:$0xff]
    %v740 = vld [vmem:[#allocation5 + $0xc58] sm:$0xff]
    %v741 = vld [vmem:[#allocation5 + $0xc60] sm:$0xff]
    %v742 = vld [vmem:[#allocation5 + $0xc68] sm:$0xff]
    %v743 = vld [vmem:[#allocation5 + $0xc70] sm:$0xff]
    %v744 = vld [vmem:[#allocation5 + $0xc78] sm:$0xff]
    %v745 = vld [vmem:[#allocation5 + $0xc80] sm:$0xff]
    %v746 = vld [vmem:[#allocation5 + $0xc88] sm:$0xff]
    %v747 = vld [vmem:[#allocation5 + $0xc90] sm:$0xff]
    %v748 = vld [vmem:[#allocation5 + $0xc98] sm:$0xff]
    %v749 = vld [vmem:[#allocation5 + $0xca0] sm:$0xff]
    %v750 = vld [vmem:[#allocation5 + $0xca8] sm:$0xff]
    %v751 = vld [vmem:[#allocation5 + $0xcb0] sm:$0xff]
    %v752 = vld [vmem:[#allocation5 + $0xcb8] sm:$0xff]
    %v753 = vld [vmem:[#allocation5 + $0xcc0] sm:$0xff]
    %v754 = vld [vmem:[#allocation5 + $0xcc8] sm:$0xff]
    %v755 = vld [vmem:[#allocation5 + $0xcd0] sm:$0xff]
    %v756 = vld [vmem:[#allocation5 + $0xcd8] sm:$0xff]
    %v757 = vld [vmem:[#allocation5 + $0xce0] sm:$0xff]
    %v758 = vld [vmem:[#allocation5 + $0xce8] sm:$0xff]
    %v759 = vld [vmem:[#allocation5 + $0xcf0] sm:$0xff]
    %v760 = vld [vmem:[#allocation5 + $0xcf8] sm:$0xff]
    %v761 = vld [vmem:[#allocation5 + $0xd00] sm:$0xff]
    %v762 = vld [vmem:[#allocation5 + $0xd08] sm:$0xff]
    %v763 = vld [vmem:[#allocation5 + $0xd10] sm:$0xff]
    %v764 = vld [vmem:[#allocation5 + $0xd18] sm:$0xff]
    %v765 = vld [vmem:[#allocation5 + $0xd20] sm:$0xff]
    %v766 = vld [vmem:[#allocation5 + $0xd28] sm:$0xff]
    %v767 = vld [vmem:[#allocation5 + $0xd30] sm:$0xff]
    %v768 = vld [vmem:[#allocation5 + $0xd38] sm:$0xff]
    %v769 = vld [vmem:[#allocation5 + $0xd40] sm:$0xff]
    %v770 = vld [vmem:[#allocation5 + $0xd48] sm:$0xff]
    %v771 = vld [vmem:[#allocation5 + $0xd50] sm:$0xff]
    %v772 = vld [vmem:[#allocation5 + $0xd58] sm:$0xff]
    %v773 = vld [vmem:[#allocation5 + $0xd60] sm:$0xff]
    %v774 = vld [vmem:[#allocation5 + $0xd68] sm:$0xff]
    %v775 = vld [vmem:[#allocation5 + $0xd70] sm:$0xff]
    %v776 = vld [vmem:[#allocation5 + $0xd78] sm:$0xff]
    %v777 = vld [vmem:[#allocation5 + $0xd80] sm:$0xff]
    %v778 = vld [vmem:[#allocation5 + $0xd88] sm:$0xff]
    %v779 = vld [vmem:[#allocation5 + $0xd90] sm:$0xff]
    %v780 = vld [vmem:[#allocation5 + $0xd98] sm:$0xff]
    %v781 = vld [vmem:[#allocation5 + $0xda0] sm:$0xff]
    %v782 = vld [vmem:[#allocation5 + $0xda8] sm:$0xff]
    %v783 = vld [vmem:[#allocation5 + $0xdb0] sm:$0xff]
    %v784 = vld [vmem:[#allocation5 + $0xdb8] sm:$0xff]
    %v785 = vld [vmem:[#allocation5 + $0xdc0] sm:$0xff]
    %v786 = vld [vmem:[#allocation5 + $0xdc8] sm:$0xff]
    %v787 = vld [vmem:[#allocation5 + $0xdd0] sm:$0xff]
    %v788 = vld [vmem:[#allocation5 + $0xdd8] sm:$0xff]
    %v789 = vld [vmem:[#allocation5 + $0xde0] sm:$0xff]
    %v790 = vld [vmem:[#allocation5 + $0xde8] sm:$0xff]
    %v791 = vld [vmem:[#allocation5 + $0xdf0] sm:$0xff]
    %v792 = vld [vmem:[#allocation5 + $0xdf8] sm:$0xff]
    %v793 = vld [vmem:[#allocation5 + $0xe00] sm:$0xff]
    %v794 = vld [vmem:[#allocation5 + $0xe08] sm:$0xff]
    %v795 = vld [vmem:[#allocation5 + $0xe10] sm:$0xff]
    %v796 = vld [vmem:[#allocation5 + $0xe18] sm:$0xff]
    %v797 = vld [vmem:[#allocation5 + $0xe20] sm:$0xff]
    %v798 = vld [vmem:[#allocation5 + $0xe28] sm:$0xff]
    %v799 = vld [vmem:[#allocation5 + $0xe30] sm:$0xff]
    %v800 = vld [vmem:[#allocation5 + $0xe38] sm:$0xff]
    %v801 = vld [vmem:[#allocation5 + $0xe40] sm:$0xff]
    %v802 = vld [vmem:[#allocation5 + $0xe48] sm:$0xff]
    %v803 = vld [vmem:[#allocation5 + $0xe50] sm:$0xff]
    %v804 = vld [vmem:[#allocation5 + $0xe58] sm:$0xff]
    %v805 = vld [vmem:[#allocation5 + $0xe60] sm:$0xff]
    %v806 = vld [vmem:[#allocation5 + $0xe68] sm:$0xff]
    %v807 = vld [vmem:[#allocation5 + $0xe70] sm:$0xff]
    %v808 = vld [vmem:[#allocation5 + $0xe78] sm:$0xff]
    %v809 = vld [vmem:[#allocation5 + $0xe80] sm:$0xff]
    %v810 = vld [vmem:[#allocation5 + $0xe88] sm:$0xff]
    %v811 = vld [vmem:[#allocation5 + $0xe90] sm:$0xff]
    %v812 = vld [vmem:[#allocation5 + $0xe98] sm:$0xff]
    %v813 = vld [vmem:[#allocation5 + $0xea0] sm:$0xff]
    %v814 = vld [vmem:[#allocation5 + $0xea8] sm:$0xff]
    %v815 = vld [vmem:[#allocation5 + $0xeb0] sm:$0xff]
    %v816 = vld [vmem:[#allocation5 + $0xeb8] sm:$0xff]
    %v817 = vld [vmem:[#allocation5 + $0xec0] sm:$0xff]
    %v818 = vld [vmem:[#allocation5 + $0xec8] sm:$0xff]
    %v819 = vld [vmem:[#allocation5 + $0xed0] sm:$0xff]
    %v820 = vld [vmem:[#allocation5 + $0xed8] sm:$0xff]
    %v821 = vld [vmem:[#allocation5 + $0xee0] sm:$0xff]
    %v822 = vld [vmem:[#allocation5 + $0xee8] sm:$0xff]
    %v823 = vld [vmem:[#allocation5 + $0xef0] sm:$0xff]
    %v824 = vld [vmem:[#allocation5 + $0xef8] sm:$0xff]
    %v825 = vld [vmem:[#allocation5 + $0xf00] sm:$0xff]
    %v826 = vld [vmem:[#allocation5 + $0xf08] sm:$0xff]
    %v827 = vld [vmem:[#allocation5 + $0xf10] sm:$0xff]
    %v828 = vld [vmem:[#allocation5 + $0xf18] sm:$0xff]
    %v829 = vld [vmem:[#allocation5 + $0xf20] sm:$0xff]
    %v830 = vld [vmem:[#allocation5 + $0xf28] sm:$0xff]
    %v831 = vld [vmem:[#allocation5 + $0xf30] sm:$0xff]
    %v832 = vld [vmem:[#allocation5 + $0xf38] sm:$0xff]
    %v833 = vld [vmem:[#allocation5 + $0xf40] sm:$0xff]
    %v834 = vld [vmem:[#allocation5 + $0xf48] sm:$0xff]
    %v835 = vld [vmem:[#allocation5 + $0xf50] sm:$0xff]
    %v836 = vld [vmem:[#allocation5 + $0xf58] sm:$0xff]
    %v837 = vld [vmem:[#allocation5 + $0xf60] sm:$0xff]
    %v838 = vld [vmem:[#allocation5 + $0xf68] sm:$0xff]
    %v839 = vld [vmem:[#allocation5 + $0xf70] sm:$0xff]
    %v840 = vld [vmem:[#allocation5 + $0xf78] sm:$0xff]
    %v841 = vld [vmem:[#allocation5 + $0xf80] sm:$0xff]
    %v842 = vld [vmem:[#allocation5 + $0xf88] sm:$0xff]
    %v843 = vld [vmem:[#allocation5 + $0xf90] sm:$0xff]
    %v844 = vld [vmem:[#allocation5 + $0xf98] sm:$0xff]
    %v845 = vld [vmem:[#allocation5 + $0xfa0] sm:$0xff]
    %v846 = vld [vmem:[#allocation5 + $0xfa8] sm:$0xff]
    %v847 = vld [vmem:[#allocation5 + $0xfb0] sm:$0xff]
    %v848 = vld [vmem:[#allocation5 + $0xfb8] sm:$0xff]
    %v849 = vld [vmem:[#allocation5 + $0xfc0] sm:$0xff]
    %v850 = vld [vmem:[#allocation5 + $0xfc8] sm:$0xff]
    %v851 = vld [vmem:[#allocation5 + $0xfd0] sm:$0xff]
    %v852 = vld [vmem:[#allocation5 + $0xfd8] sm:$0xff]
    %v853 = vld [vmem:[#allocation5 + $0xfe0] sm:$0xff]
    %v854 = vld [vmem:[#allocation5 + $0xfe8] sm:$0xff]
    %v855 = vld [vmem:[#allocation5 + $0xff0] sm:$0xff]
    %v856 = vld [vmem:[#allocation5 + $0xff8] sm:$0xff]
    %v857 = vld [vmem:[#allocation5 + $0x1000] sm:$0xff]
    %v858 = vld [vmem:[#allocation5 + $0x1008] sm:$0xff]
    %v859 = vld [vmem:[#allocation5 + $0x1010] sm:$0xff]
    %v860 = vld [vmem:[#allocation5 + $0x1018] sm:$0xff]
    %v861 = vld [vmem:[#allocation5 + $0x1020] sm:$0xff]
    %v862 = vld [vmem:[#allocation5 + $0x1028] sm:$0xff]
    %v863 = vld [vmem:[#allocation5 + $0x1030] sm:$0xff]
    %v864 = vld [vmem:[#allocation5 + $0x1038] sm:$0xff]
    %v865 = vld [vmem:[#allocation5 + $0x1040] sm:$0xff]
    %v866 = vld [vmem:[#allocation5 + $0x1048] sm:$0xff]
    %v867 = vld [vmem:[#allocation5 + $0x1050] sm:$0xff]
    %v868 = vld [vmem:[#allocation5 + $0x1058] sm:$0xff]
    %v869 = vld [vmem:[#allocation5 + $0x1060] sm:$0xff]
    %v870 = vld [vmem:[#allocation5 + $0x1068] sm:$0xff]
    %v871 = vld [vmem:[#allocation5 + $0x1070] sm:$0xff]
    %v872 = vld [vmem:[#allocation5 + $0x1078] sm:$0xff]
    %v873 = vld [vmem:[#allocation5 + $0x1080] sm:$0xff]
    %v874 = vld [vmem:[#allocation5 + $0x1088] sm:$0xff]
    %v875 = vld [vmem:[#allocation5 + $0x1090] sm:$0xff]
    %v876 = vld [vmem:[#allocation5 + $0x1098] sm:$0xff]
    %v877 = vld [vmem:[#allocation5 + $0x10a0] sm:$0xff]
    %v878 = vld [vmem:[#allocation5 + $0x10a8] sm:$0xff]
    %v879 = vld [vmem:[#allocation5 + $0x10b0] sm:$0xff]
    %v880 = vld [vmem:[#allocation5 + $0x10b8] sm:$0xff]
    %v881 = vld [vmem:[#allocation5 + $0x10c0] sm:$0xff]
    %v882 = vld [vmem:[#allocation5 + $0x10c8] sm:$0xff]
    %v883 = vld [vmem:[#allocation5 + $0x10d0] sm:$0xff]
    %v884 = vld [vmem:[#allocation5 + $0x10d8] sm:$0xff]
    %v885 = vld [vmem:[#allocation5 + $0x10e0] sm:$0xff]
    %v886 = vld [vmem:[#allocation5 + $0x10e8] sm:$0xff]
    %v887 = vld [vmem:[#allocation5 + $0x10f0] sm:$0xff]
    %v888 = vld [vmem:[#allocation5 + $0x10f8] sm:$0xff]
    %v889 = vld [vmem:[#allocation5 + $0x1100] sm:$0xff]
    %v890 = vld [vmem:[#allocation5 + $0x1108] sm:$0xff]
    %v891 = vld [vmem:[#allocation5 + $0x1110] sm:$0xff]
    %v892 = vld [vmem:[#allocation5 + $0x1118] sm:$0xff]
    %v893 = vld [vmem:[#allocation5 + $0x1120] sm:$0xff]
    %v894 = vld [vmem:[#allocation5 + $0x1128] sm:$0xff]
    %v895 = vld [vmem:[#allocation5 + $0x1130] sm:$0xff]
    %v896 = vld [vmem:[#allocation5 + $0x1138] sm:$0xff]
    %v897 = vld [vmem:[#allocation5 + $0x1140] sm:$0xff]
    %v898 = vld [vmem:[#allocation5 + $0x1148] sm:$0xff]
    %v899 = vld [vmem:[#allocation5 + $0x1150] sm:$0xff]
    %v900 = vld [vmem:[#allocation5 + $0x1158] sm:$0xff]
    %v901 = vld [vmem:[#allocation5 + $0x1160] sm:$0xff]
    %v902 = vld [vmem:[#allocation5 + $0x1168] sm:$0xff]
    %v903 = vld [vmem:[#allocation5 + $0x1170] sm:$0xff]
    %v904 = vld [vmem:[#allocation5 + $0x1178] sm:$0xff]
    %v905 = vld [vmem:[#allocation5 + $0x1180] sm:$0xff]
    %v906 = vld [vmem:[#allocation5 + $0x1188] sm:$0xff]
    %v907 = vld [vmem:[#allocation5 + $0x1190] sm:$0xff]
    %v908 = vld [vmem:[#allocation5 + $0x1198] sm:$0xff]
    %v909 = vld [vmem:[#allocation5 + $0x11a0] sm:$0xff]
    %v910 = vld [vmem:[#allocation5 + $0x11a8] sm:$0xff]
    %v911 = vld [vmem:[#allocation5 + $0x11b0] sm:$0xff]
    %v912 = vld [vmem:[#allocation5 + $0x11b8] sm:$0xff]
    %v913 = vld [vmem:[#allocation5 + $0x11c0] sm:$0xff]
    %v914 = vld [vmem:[#allocation5 + $0x11c8] sm:$0xff]
    %v915 = vld [vmem:[#allocation5 + $0x11d0] sm:$0xff]
    %v916 = vld [vmem:[#allocation5 + $0x11d8] sm:$0xff]
    %v917 = vld [vmem:[#allocation5 + $0x11e0] sm:$0xff]
    %v918 = vld [vmem:[#allocation5 + $0x11e8] sm:$0xff]
    %v919 = vld [vmem:[#allocation5 + $0x11f0] sm:$0xff]
    %v920 = vld [vmem:[#allocation5 + $0x11f8] sm:$0xff]
    %v921 = vld [vmem:[#allocation5 + $0x1200] sm:$0xff]
    %v922 = vld [vmem:[#allocation5 + $0x1208] sm:$0xff]
    %v923 = vld [vmem:[#allocation5 + $0x1210] sm:$0xff]
    %v924 = vld [vmem:[#allocation5 + $0x1218] sm:$0xff]
    %v925 = vld [vmem:[#allocation5 + $0x1220] sm:$0xff]
    %v926 = vld [vmem:[#allocation5 + $0x1228] sm:$0xff]
    %v927 = vld [vmem:[#allocation5 + $0x1230] sm:$0xff]
    %v928 = vld [vmem:[#allocation5 + $0x1238] sm:$0xff]
    %v929 = vld [vmem:[#allocation5 + $0x1240] sm:$0xff]
    %v930 = vld [vmem:[#allocation5 + $0x1248] sm:$0xff]
    %v931 = vld [vmem:[#allocation5 + $0x1250] sm:$0xff]
    %v932 = vld [vmem:[#allocation5 + $0x1258] sm:$0xff]
    %v933 = vld [vmem:[#allocation7] sm:$0xf]
    %v935 = vlaneseq
    %v936 = vshrl.u32 %v935, 7
    %v937 = vsub.s32 0, %v936
    %v938 = vrot.slane %v933, %v937
    %v939 = vlaneseq
    %v940 = vshrl.u32 %v939, 7
    %v941 = vsub.s32 1, %v940
    %v942 = vrot.slane %v933, %v941
    %v943 = vlaneseq
    %v944 = vshrl.u32 %v943, 7
    %v945 = vsub.s32 2, %v944
    %v946 = vrot.slane %v933, %v945
    %v947 = vlaneseq
    %v948 = vshrl.u32 %v947, 7
    %v949 = vsub.s32 3, %v948
    %v950 = vrot.slane %v933, %v949
    %v1543 = vunpack.c.l.b16 %v345
    %v1544 = vunpack.c.h.b16 %v345
    %v1545 = vunpack.c.l.b16 %v346
    %v1546 = vunpack.c.h.b16 %v346
    %v1547 = vunpack.c.l.b16 %v347
    %v1548 = vunpack.c.h.b16 %v347
    %v1549 = vunpack.c.l.b16 %v348
    %v1550 = vunpack.c.h.b16 %v348
    %v1551 = vunpack.c.l.b16 %v349
    %v1552 = vunpack.c.h.b16 %v349
    %v1553 = vunpack.c.l.b16 %v350
    %v1554 = vunpack.c.h.b16 %v350
    %v1555 = vunpack.c.l.b16 %v351
    %v1556 = vunpack.c.h.b16 %v351
    %v1557 = vunpack.c.l.b16 %v352
    %v1558 = vunpack.c.h.b16 %v352
    %v1559 = vunpack.c.l.b16 %v353
    %v1560 = vunpack.c.h.b16 %v353
    %v1561 = vunpack.c.l.b16 %v354
    %v1562 = vunpack.c.h.b16 %v354
    %v1563 = vunpack.c.l.b16 %v355
    %v1564 = vunpack.c.h.b16 %v355
    %v1565 = vunpack.c.l.b16 %v356
    %v1566 = vunpack.c.h.b16 %v356
    %v1567 = vunpack.c.l.b16 %v357
    %v1568 = vunpack.c.h.b16 %v357
    %v1569 = vunpack.c.l.b16 %v358
    %v1570 = vunpack.c.h.b16 %v358
    %v1571 = vunpack.c.l.b16 %v359
    %v1572 = vunpack.c.h.b16 %v359
    %v1573 = vunpack.c.l.b16 %v360
    %v1574 = vunpack.c.h.b16 %v360
    %v1575 = vunpack.c.l.b16 %v361
    %v1576 = vunpack.c.h.b16 %v361
    %v1577 = vunpack.c.l.b16 %v362
    %v1578 = vunpack.c.h.b16 %v362
    %v1579 = vunpack.c.l.b16 %v363
    %v1580 = vunpack.c.h.b16 %v363
    %v1581 = vunpack.c.l.b16 %v364
    %v1582 = vunpack.c.h.b16 %v364
    %v1583 = vunpack.c.l.b16 %v365
    %v1584 = vunpack.c.h.b16 %v365
    %v1585 = vunpack.c.l.b16 %v366
    %v1586 = vunpack.c.h.b16 %v366
    %v1587 = vunpack.c.l.b16 %v367
    %v1588 = vunpack.c.h.b16 %v367
    %v1589 = vunpack.c.l.b16 %v368
    %v1590 = vunpack.c.h.b16 %v368
    %v1591 = vunpack.c.l.b16 %v369
    %v1592 = vunpack.c.h.b16 %v369
    %v1593 = vunpack.c.l.b16 %v370
    %v1594 = vunpack.c.h.b16 %v370
    %v1595 = vunpack.c.l.b16 %v371
    %v1596 = vunpack.c.h.b16 %v371
    %v1597 = vunpack.c.l.b16 %v372
    %v1598 = vunpack.c.h.b16 %v372
    %v1599 = vunpack.c.l.b16 %v373
    %v1600 = vunpack.c.h.b16 %v373
    %v1601 = vunpack.c.l.b16 %v374
    %v1602 = vunpack.c.h.b16 %v374
    %v1603 = vunpack.c.l.b16 %v375
    %v1604 = vunpack.c.h.b16 %v375
    %v1605 = vunpack.c.l.b16 %v376
    %v1606 = vunpack.c.h.b16 %v376
    %v1607 = vunpack.c.l.b16 %v377
    %v1608 = vunpack.c.h.b16 %v377
    %v1609 = vunpack.c.l.b16 %v378
    %v1610 = vunpack.c.h.b16 %v378
    %v1611 = vunpack.c.l.b16 %v379
    %v1612 = vunpack.c.h.b16 %v379
    %v1613 = vunpack.c.l.b16 %v380
    %v1614 = vunpack.c.h.b16 %v380
    %v1615 = vunpack.c.l.b16 %v381
    %v1616 = vunpack.c.h.b16 %v381
    %v1617 = vunpack.c.l.b16 %v382
    %v1618 = vunpack.c.h.b16 %v382
    %v1619 = vunpack.c.l.b16 %v383
    %v1620 = vunpack.c.h.b16 %v383
    %v1621 = vunpack.c.l.b16 %v384
    %v1622 = vunpack.c.h.b16 %v384
    %v1623 = vunpack.c.l.b16 %v385
    %v1624 = vunpack.c.h.b16 %v385
    %v1625 = vunpack.c.l.b16 %v386
    %v1626 = vunpack.c.h.b16 %v386
    %v1627 = vunpack.c.l.b16 %v387
    %v1628 = vunpack.c.h.b16 %v387
    %v1629 = vunpack.c.l.b16 %v388
    %v1630 = vunpack.c.h.b16 %v388
    %v1631 = vunpack.c.l.b16 %v389
    %v1632 = vunpack.c.h.b16 %v389
    %v1633 = vunpack.c.l.b16 %v390
    %v1634 = vunpack.c.h.b16 %v390
    %v1635 = vunpack.c.l.b16 %v391
    %v1636 = vunpack.c.h.b16 %v391
    %v1637 = vunpack.c.l.b16 %v392
    %v1638 = vunpack.c.h.b16 %v392
    %v1639 = vunpack.c.l.b16 %v393
    %v1640 = vunpack.c.h.b16 %v393
    %v1641 = vunpack.c.l.b16 %v394
    %v1642 = vunpack.c.h.b16 %v394
    %v1643 = vunpack.c.l.b16 %v395
    %v1644 = vunpack.c.h.b16 %v395
    %v1645 = vunpack.c.l.b16 %v396
    %v1646 = vunpack.c.h.b16 %v396
    %v1647 = vunpack.c.l.b16 %v397
    %v1648 = vunpack.c.h.b16 %v397
    %v1649 = vunpack.c.l.b16 %v398
    %v1650 = vunpack.c.h.b16 %v398
    %v1651 = vunpack.c.l.b16 %v399
    %v1652 = vunpack.c.h.b16 %v399
    %v1653 = vunpack.c.l.b16 %v400
    %v1654 = vunpack.c.h.b16 %v400
    %v1655 = vunpack.c.l.b16 %v401
    %v1656 = vunpack.c.h.b16 %v401
    %v1657 = vunpack.c.l.b16 %v402
    %v1658 = vunpack.c.h.b16 %v402
    %v1659 = vunpack.c.l.b16 %v403
    %v1660 = vunpack.c.h.b16 %v403
    %v1661 = vunpack.c.l.b16 %v404
    %v1662 = vunpack.c.h.b16 %v404
    %v1663 = vunpack.c.l.b16 %v405
    %v1664 = vunpack.c.h.b16 %v405
    %v1665 = vunpack.c.l.b16 %v406
    %v1666 = vunpack.c.h.b16 %v406
    %v1667 = vunpack.c.l.b16 %v407
    %v1668 = vunpack.c.h.b16 %v407
    %v1669 = vunpack.c.l.b16 %v408
    %v1670 = vunpack.c.h.b16 %v408
    %v1671 = vunpack.c.l.b16 %v409
    %v1672 = vunpack.c.h.b16 %v409
    %v1673 = vunpack.c.l.b16 %v410
    %v1674 = vunpack.c.h.b16 %v410
    %v1675 = vunpack.c.l.b16 %v411
    %v1676 = vunpack.c.h.b16 %v411
    %v1677 = vunpack.c.l.b16 %v412
    %v1678 = vunpack.c.h.b16 %v412
    %v1679 = vunpack.c.l.b16 %v413
    %v1680 = vunpack.c.h.b16 %v413
    %v1681 = vunpack.c.l.b16 %v414
    %v1682 = vunpack.c.h.b16 %v414
    %v1683 = vunpack.c.l.b16 %v415
    %v1684 = vunpack.c.h.b16 %v415
    %v1685 = vunpack.c.l.b16 %v416
    %v1686 = vunpack.c.h.b16 %v416
    %v1687 = vunpack.c.l.b16 %v417
    %v1688 = vunpack.c.h.b16 %v417
    %v1689 = vunpack.c.l.b16 %v418
    %v1690 = vunpack.c.h.b16 %v418
    %v1691 = vunpack.c.l.b16 %v419
    %v1692 = vunpack.c.h.b16 %v419
    %v1693 = vunpack.c.l.b16 %v420
    %v1694 = vunpack.c.h.b16 %v420
    %v1695 = vunpack.c.l.b16 %v421
    %v1696 = vunpack.c.h.b16 %v421
    %v1697 = vunpack.c.l.b16 %v422
    %v1698 = vunpack.c.h.b16 %v422
    %v1699 = vunpack.c.l.b16 %v423
    %v1700 = vunpack.c.h.b16 %v423
    %v1701 = vunpack.c.l.b16 %v424
    %v1702 = vunpack.c.h.b16 %v424
    %v1703 = vunpack.c.l.b16 %v425
    %v1704 = vunpack.c.h.b16 %v425
    %v1705 = vunpack.c.l.b16 %v426
    %v1706 = vunpack.c.h.b16 %v426
    %v1707 = vunpack.c.l.b16 %v427
    %v1708 = vunpack.c.h.b16 %v427
    %v1709 = vunpack.c.l.b16 %v428
    %v1710 = vunpack.c.h.b16 %v428
    %v1711 = vunpack.c.l.b16 %v429
    %v1712 = vunpack.c.h.b16 %v429
    %v1713 = vunpack.c.l.b16 %v430
    %v1714 = vunpack.c.h.b16 %v430
    %v1715 = vunpack.c.l.b16 %v431
    %v1716 = vunpack.c.h.b16 %v431
    %v1717 = vunpack.c.l.b16 %v432
    %v1718 = vunpack.c.h.b16 %v432
    %v1719 = vunpack.c.l.b16 %v433
    %v1720 = vunpack.c.h.b16 %v433
    %v1721 = vunpack.c.l.b16 %v434
    %v1722 = vunpack.c.h.b16 %v434
    %v1723 = vunpack.c.l.b16 %v435
    %v1724 = vunpack.c.h.b16 %v435
    %v1725 = vunpack.c.l.b16 %v436
    %v1726 = vunpack.c.h.b16 %v436
    %v1727 = vunpack.c.l.b16 %v437
    %v1728 = vunpack.c.h.b16 %v437
    %v1729 = vunpack.c.l.b16 %v438
    %v1730 = vunpack.c.h.b16 %v438
    %v1731 = vunpack.c.l.b16 %v439
    %v1732 = vunpack.c.h.b16 %v439
    %v1733 = vunpack.c.l.b16 %v440
    %v1734 = vunpack.c.h.b16 %v440
    %v1735 = vunpack.c.l.b16 %v441
    %v1736 = vunpack.c.h.b16 %v441
    %v1737 = vunpack.c.l.b16 %v442
    %v1738 = vunpack.c.h.b16 %v442
    %v1739 = vunpack.c.l.b16 %v443
    %v1740 = vunpack.c.h.b16 %v443
    %v1741 = vunpack.c.l.b16 %v444
    %v1742 = vunpack.c.h.b16 %v444
    %v1743 = vunpack.c.l.b16 %v445
    %v1744 = vunpack.c.h.b16 %v445
    %v1745 = vunpack.c.l.b16 %v446
    %v1746 = vunpack.c.h.b16 %v446
    %v1747 = vunpack.c.l.b16 %v447
    %v1748 = vunpack.c.h.b16 %v447
    %v1749 = vunpack.c.l.b16 %v448
    %v1750 = vunpack.c.h.b16 %v448
    %v1751 = vunpack.c.l.b16 %v449
    %v1752 = vunpack.c.h.b16 %v449
    %v1753 = vunpack.c.l.b16 %v450
    %v1754 = vunpack.c.h.b16 %v450
    %v1755 = vunpack.c.l.b16 %v451
    %v1756 = vunpack.c.h.b16 %v451
    %v1757 = vunpack.c.l.b16 %v452
    %v1758 = vunpack.c.h.b16 %v452
    %v1759 = vunpack.c.l.b16 %v453
    %v1760 = vunpack.c.h.b16 %v453
    %v1761 = vunpack.c.l.b16 %v454
    %v1762 = vunpack.c.h.b16 %v454
    %v1763 = vunpack.c.l.b16 %v455
    %v1764 = vunpack.c.h.b16 %v455
    %v1765 = vunpack.c.l.b16 %v456
    %v1766 = vunpack.c.h.b16 %v456
    %v1767 = vunpack.c.l.b16 %v457
    %v1768 = vunpack.c.h.b16 %v457
    %v1769 = vunpack.c.l.b16 %v458
    %v1770 = vunpack.c.h.b16 %v458
    %v1771 = vunpack.c.l.b16 %v459
    %v1772 = vunpack.c.h.b16 %v459
    %v1773 = vunpack.c.l.b16 %v460
    %v1774 = vunpack.c.h.b16 %v460
    %v1775 = vunpack.c.l.b16 %v461
    %v1776 = vunpack.c.h.b16 %v461
    %v1777 = vunpack.c.l.b16 %v462
    %v1778 = vunpack.c.h.b16 %v462
    %v1779 = vunpack.c.l.b16 %v463
    %v1780 = vunpack.c.h.b16 %v463
    %v1781 = vunpack.c.l.b16 %v464
    %v1782 = vunpack.c.h.b16 %v464
    %v1783 = vunpack.c.l.b16 %v465
    %v1784 = vunpack.c.h.b16 %v465
    %v1785 = vunpack.c.l.b16 %v466
    %v1786 = vunpack.c.h.b16 %v466
    %v1787 = vunpack.c.l.b16 %v467
    %v1788 = vunpack.c.h.b16 %v467
    %v1789 = vunpack.c.l.b16 %v468
    %v1790 = vunpack.c.h.b16 %v468
    %v1791 = vunpack.c.l.b16 %v469
    %v1792 = vunpack.c.h.b16 %v469
    %v1793 = vunpack.c.l.b16 %v470
    %v1794 = vunpack.c.h.b16 %v470
    %v1795 = vunpack.c.l.b16 %v471
    %v1796 = vunpack.c.h.b16 %v471
    %v1797 = vunpack.c.l.b16 %v472
    %v1798 = vunpack.c.h.b16 %v472
    %v1799 = vunpack.c.l.b16 %v473
    %v1800 = vunpack.c.h.b16 %v473
    %v1801 = vunpack.c.l.b16 %v474
    %v1802 = vunpack.c.h.b16 %v474
    %v1803 = vunpack.c.l.b16 %v475
    %v1804 = vunpack.c.h.b16 %v475
    %v1805 = vunpack.c.l.b16 %v476
    %v1806 = vunpack.c.h.b16 %v476
    %v1807 = vunpack.c.l.b16 %v477
    %v1808 = vunpack.c.h.b16 %v477
    %v1809 = vunpack.c.l.b16 %v478
    %v1810 = vunpack.c.h.b16 %v478
    %v1811 = vunpack.c.l.b16 %v479
    %v1812 = vunpack.c.h.b16 %v479
    %v1813 = vunpack.c.l.b16 %v480
    %v1814 = vunpack.c.h.b16 %v480
    %v1815 = vunpack.c.l.b16 %v481
    %v1816 = vunpack.c.h.b16 %v481
    %v1817 = vunpack.c.l.b16 %v482
    %v1818 = vunpack.c.h.b16 %v482
    %v1819 = vunpack.c.l.b16 %v483
    %v1820 = vunpack.c.h.b16 %v483
    %v1821 = vunpack.c.l.b16 %v484
    %v1822 = vunpack.c.h.b16 %v484
    %v1823 = vunpack.c.l.b16 %v485
    %v1824 = vunpack.c.h.b16 %v485
    %v1825 = vunpack.c.l.b16 %v486
    %v1826 = vunpack.c.h.b16 %v486
    %v1827 = vunpack.c.l.b16 %v487
    %v1828 = vunpack.c.h.b16 %v487
    %v1829 = vunpack.c.l.b16 %v488
    %v1830 = vunpack.c.h.b16 %v488
    %v1831 = vunpack.c.l.b16 %v489
    %v1832 = vunpack.c.h.b16 %v489
    %v1833 = vunpack.c.l.b16 %v490
    %v1834 = vunpack.c.h.b16 %v490
    %v1835 = vunpack.c.l.b16 %v491
    %v1836 = vunpack.c.h.b16 %v491
    %v1837 = vunpack.c.l.b16 %v492
    %v1838 = vunpack.c.h.b16 %v492
    %v1839 = vunpack.c.l.b16 %v493
    %v1840 = vunpack.c.h.b16 %v493
    %v1841 = vunpack.c.l.b16 %v494
    %v1842 = vunpack.c.h.b16 %v494
    %v1843 = vunpack.c.l.b16 %v495
    %v1844 = vunpack.c.h.b16 %v495
    %v1845 = vunpack.c.l.b16 %v496
    %v1846 = vunpack.c.h.b16 %v496
    %v1847 = vunpack.c.l.b16 %v497
    %v1848 = vunpack.c.h.b16 %v497
    %v1849 = vunpack.c.l.b16 %v498
    %v1850 = vunpack.c.h.b16 %v498
    %v1851 = vunpack.c.l.b16 %v499
    %v1852 = vunpack.c.h.b16 %v499
    %v1853 = vunpack.c.l.b16 %v500
    %v1854 = vunpack.c.h.b16 %v500
    %v1855 = vunpack.c.l.b16 %v501
    %v1856 = vunpack.c.h.b16 %v501
    %v1857 = vunpack.c.l.b16 %v502
    %v1858 = vunpack.c.h.b16 %v502
    %v1859 = vunpack.c.l.b16 %v503
    %v1860 = vunpack.c.h.b16 %v503
    %v1861 = vunpack.c.l.b16 %v504
    %v1862 = vunpack.c.h.b16 %v504
    %v1863 = vunpack.c.l.b16 %v505
    %v1864 = vunpack.c.h.b16 %v505
    %v1865 = vunpack.c.l.b16 %v506
    %v1866 = vunpack.c.h.b16 %v506
    %v1867 = vunpack.c.l.b16 %v507
    %v1868 = vunpack.c.h.b16 %v507
    %v1869 = vunpack.c.l.b16 %v508
    %v1870 = vunpack.c.h.b16 %v508
    %v1871 = vunpack.c.l.b16 %v509
    %v1872 = vunpack.c.h.b16 %v509
    %v1873 = vunpack.c.l.b16 %v510
    %v1874 = vunpack.c.h.b16 %v510
    %v1875 = vunpack.c.l.b16 %v511
    %v1876 = vunpack.c.h.b16 %v511
    %v1877 = vunpack.c.l.b16 %v512
    %v1878 = vunpack.c.h.b16 %v512
    %v1879 = vunpack.c.l.b16 %v513
    %v1880 = vunpack.c.h.b16 %v513
    %v1881 = vunpack.c.l.b16 %v514
    %v1882 = vunpack.c.h.b16 %v514
    %v1883 = vunpack.c.l.b16 %v515
    %v1884 = vunpack.c.h.b16 %v515
    %v1885 = vunpack.c.l.b16 %v516
    %v1886 = vunpack.c.h.b16 %v516
    %v1887 = vunpack.c.l.b16 %v517
    %v1888 = vunpack.c.h.b16 %v517
    %v1889 = vunpack.c.l.b16 %v518
    %v1890 = vunpack.c.h.b16 %v518
    %v1891 = vunpack.c.l.b16 %v519
    %v1892 = vunpack.c.h.b16 %v519
    %v1893 = vunpack.c.l.b16 %v520
    %v1894 = vunpack.c.h.b16 %v520
    %v1895 = vunpack.c.l.b16 %v521
    %v1896 = vunpack.c.h.b16 %v521
    %v1897 = vunpack.c.l.b16 %v522
    %v1898 = vunpack.c.h.b16 %v522
    %v1899 = vunpack.c.l.b16 %v523
    %v1900 = vunpack.c.h.b16 %v523
    %v1901 = vunpack.c.l.b16 %v524
    %v1902 = vunpack.c.h.b16 %v524
    %v1903 = vunpack.c.l.b16 %v525
    %v1904 = vunpack.c.h.b16 %v525
    %v1905 = vunpack.c.l.b16 %v526
    %v1906 = vunpack.c.h.b16 %v526
    %v1907 = vunpack.c.l.b16 %v527
    %v1908 = vunpack.c.h.b16 %v527
    %v1909 = vunpack.c.l.b16 %v528
    %v1910 = vunpack.c.h.b16 %v528
    %v1911 = vunpack.c.l.b16 %v529
    %v1912 = vunpack.c.h.b16 %v529
    %v1913 = vunpack.c.l.b16 %v530
    %v1914 = vunpack.c.h.b16 %v530
    %v1915 = vunpack.c.l.b16 %v531
    %v1916 = vunpack.c.h.b16 %v531
    %v1917 = vunpack.c.l.b16 %v532
    %v1918 = vunpack.c.h.b16 %v532
    %v1919 = vunpack.c.l.b16 %v533
    %v1920 = vunpack.c.h.b16 %v533
    %v1921 = vunpack.c.l.b16 %v534
    %v1922 = vunpack.c.h.b16 %v534
    %v1923 = vunpack.c.l.b16 %v535
    %v1924 = vunpack.c.h.b16 %v535
    %v1925 = vunpack.c.l.b16 %v536
    %v1926 = vunpack.c.h.b16 %v536
    %v1927 = vunpack.c.l.b16 %v537
    %v1928 = vunpack.c.h.b16 %v537
    %v1929 = vunpack.c.l.b16 %v538
    %v1930 = vunpack.c.h.b16 %v538
    %v1931 = vunpack.c.l.b16 %v539
    %v1932 = vunpack.c.h.b16 %v539
    %v1933 = vunpack.c.l.b16 %v540
    %v1934 = vunpack.c.h.b16 %v540
    %v1935 = vunpack.c.l.b16 %v541
    %v1936 = vunpack.c.h.b16 %v541
    %v1937 = vunpack.c.l.b16 %v542
    %v1938 = vunpack.c.h.b16 %v542
    %v1939 = vunpack.c.l.b16 %v543
    %v1940 = vunpack.c.h.b16 %v543
    %v1941 = vunpack.c.l.b16 %v544
    %v1942 = vunpack.c.h.b16 %v544
    %v1943 = vunpack.c.l.b16 %v545
    %v1944 = vunpack.c.h.b16 %v545
    %v1945 = vunpack.c.l.b16 %v546
    %v1946 = vunpack.c.h.b16 %v546
    %v1947 = vunpack.c.l.b16 %v547
    %v1948 = vunpack.c.h.b16 %v547
    %v1949 = vunpack.c.l.b16 %v548
    %v1950 = vunpack.c.h.b16 %v548
    %v1951 = vunpack.c.l.b16 %v549
    %v1952 = vunpack.c.h.b16 %v549
    %v1953 = vunpack.c.l.b16 %v550
    %v1954 = vunpack.c.h.b16 %v550
    %v1955 = vunpack.c.l.b16 %v551
    %v1956 = vunpack.c.h.b16 %v551
    %v1957 = vunpack.c.l.b16 %v552
    %v1958 = vunpack.c.h.b16 %v552
    %v1959 = vunpack.c.l.b16 %v553
    %v1960 = vunpack.c.h.b16 %v553
    %v1961 = vunpack.c.l.b16 %v554
    %v1962 = vunpack.c.h.b16 %v554
    %v1963 = vunpack.c.l.b16 %v555
    %v1964 = vunpack.c.h.b16 %v555
    %v1965 = vunpack.c.l.b16 %v556
    %v1966 = vunpack.c.h.b16 %v556
    %v1967 = vunpack.c.l.b16 %v557
    %v1968 = vunpack.c.h.b16 %v557
    %v1969 = vunpack.c.l.b16 %v558
    %v1970 = vunpack.c.h.b16 %v558
    %v1971 = vunpack.c.l.b16 %v559
    %v1972 = vunpack.c.h.b16 %v559
    %v1973 = vunpack.c.l.b16 %v560
    %v1974 = vunpack.c.h.b16 %v560
    %v1975 = vunpack.c.l.b16 %v561
    %v1976 = vunpack.c.h.b16 %v561
    %v1977 = vunpack.c.l.b16 %v562
    %v1978 = vunpack.c.h.b16 %v562
    %v1979 = vunpack.c.l.b16 %v563
    %v1980 = vunpack.c.h.b16 %v563
    %v1981 = vunpack.c.l.b16 %v564
    %v1982 = vunpack.c.h.b16 %v564
    %v1983 = vunpack.c.l.b16 %v565
    %v1984 = vunpack.c.h.b16 %v565
    %v1985 = vunpack.c.l.b16 %v566
    %v1986 = vunpack.c.h.b16 %v566
    %v1987 = vunpack.c.l.b16 %v567
    %v1988 = vunpack.c.h.b16 %v567
    %v1989 = vunpack.c.l.b16 %v568
    %v1990 = vunpack.c.h.b16 %v568
    %v1991 = vunpack.c.l.b16 %v569
    %v1992 = vunpack.c.h.b16 %v569
    %v1993 = vunpack.c.l.b16 %v570
    %v1994 = vunpack.c.h.b16 %v570
    %v1995 = vunpack.c.l.b16 %v571
    %v1996 = vunpack.c.h.b16 %v571
    %v1997 = vunpack.c.l.b16 %v572
    %v1998 = vunpack.c.h.b16 %v572
    %v1999 = vunpack.c.l.b16 %v573
    %v2000 = vunpack.c.h.b16 %v573
    %v2001 = vunpack.c.l.b16 %v574
    %v2002 = vunpack.c.h.b16 %v574
    %v2003 = vunpack.c.l.b16 %v575
    %v2004 = vunpack.c.h.b16 %v575
    %v2005 = vunpack.c.l.b16 %v576
    %v2006 = vunpack.c.h.b16 %v576
    %v2007 = vunpack.c.l.b16 %v577
    %v2008 = vunpack.c.h.b16 %v577
    %v2009 = vunpack.c.l.b16 %v578
    %v2010 = vunpack.c.h.b16 %v578
    %v2011 = vunpack.c.l.b16 %v579
    %v2012 = vunpack.c.h.b16 %v579
    %v2013 = vunpack.c.l.b16 %v580
    %v2014 = vunpack.c.h.b16 %v580
    %v2015 = vunpack.c.l.b16 %v581
    %v2016 = vunpack.c.h.b16 %v581
    %v2017 = vunpack.c.l.b16 %v582
    %v2018 = vunpack.c.h.b16 %v582
    %v2019 = vunpack.c.l.b16 %v583
    %v2020 = vunpack.c.h.b16 %v583
    %v2021 = vunpack.c.l.b16 %v584
    %v2022 = vunpack.c.h.b16 %v584
    %v2023 = vunpack.c.l.b16 %v585
    %v2024 = vunpack.c.h.b16 %v585
    %v2025 = vunpack.c.l.b16 %v586
    %v2026 = vunpack.c.h.b16 %v586
    %v2027 = vunpack.c.l.b16 %v587
    %v2028 = vunpack.c.h.b16 %v587
    %v2029 = vunpack.c.l.b16 %v588
    %v2030 = vunpack.c.h.b16 %v588
    %v2031 = vunpack.c.l.b16 %v589
    %v2032 = vunpack.c.h.b16 %v589
    %v2033 = vunpack.c.l.b16 %v590
    %v2034 = vunpack.c.h.b16 %v590
    %v2035 = vunpack.c.l.b16 %v591
    %v2036 = vunpack.c.h.b16 %v591
    %v2037 = vunpack.c.l.b16 %v592
    %v2038 = vunpack.c.h.b16 %v592
    %v2039 = vunpack.c.l.b16 %v593
    %v2040 = vunpack.c.h.b16 %v593
    %v2041 = vunpack.c.l.b16 %v594
    %v2042 = vunpack.c.h.b16 %v594
    %v2043 = vunpack.c.l.b16 %v595
    %v2044 = vunpack.c.h.b16 %v595
    %v2045 = vunpack.c.l.b16 %v596
    %v2046 = vunpack.c.h.b16 %v596
    %v2047 = vunpack.c.l.b16 %v597
    %v2048 = vunpack.c.h.b16 %v597
    %v2049 = vunpack.c.l.b16 %v598
    %v2050 = vunpack.c.h.b16 %v598
    %v2051 = vunpack.c.l.b16 %v599
    %v2052 = vunpack.c.h.b16 %v599
    %v2053 = vunpack.c.l.b16 %v600
    %v2054 = vunpack.c.h.b16 %v600
    %v2055 = vunpack.c.l.b16 %v601
    %v2056 = vunpack.c.h.b16 %v601
    %v2057 = vunpack.c.l.b16 %v602
    %v2058 = vunpack.c.h.b16 %v602
    %v2059 = vunpack.c.l.b16 %v603
    %v2060 = vunpack.c.h.b16 %v603
    %v2061 = vunpack.c.l.b16 %v604
    %v2062 = vunpack.c.h.b16 %v604
    %v2063 = vunpack.c.l.b16 %v605
    %v2064 = vunpack.c.h.b16 %v605
    %v2065 = vunpack.c.l.b16 %v606
    %v2066 = vunpack.c.h.b16 %v606
    %v2067 = vunpack.c.l.b16 %v607
    %v2068 = vunpack.c.h.b16 %v607
    %v2069 = vunpack.c.l.b16 %v608
    %v2070 = vunpack.c.h.b16 %v608
    %v2071 = vunpack.c.l.b16 %v609
    %v2072 = vunpack.c.h.b16 %v609
    %v2073 = vunpack.c.l.b16 %v610
    %v2074 = vunpack.c.h.b16 %v610
    %v2075 = vunpack.c.l.b16 %v611
    %v2076 = vunpack.c.h.b16 %v611
    %v2077 = vunpack.c.l.b16 %v612
    %v2078 = vunpack.c.h.b16 %v612
    %v2079 = vunpack.c.l.b16 %v613
    %v2080 = vunpack.c.h.b16 %v613
    %v2081 = vunpack.c.l.b16 %v614
    %v2082 = vunpack.c.h.b16 %v614
    %v2083 = vunpack.c.l.b16 %v615
    %v2084 = vunpack.c.h.b16 %v615
    %v2085 = vunpack.c.l.b16 %v616
    %v2086 = vunpack.c.h.b16 %v616
    %v2087 = vunpack.c.l.b16 %v617
    %v2088 = vunpack.c.h.b16 %v617
    %v2089 = vunpack.c.l.b16 %v618
    %v2090 = vunpack.c.h.b16 %v618
    %v2091 = vunpack.c.l.b16 %v619
    %v2092 = vunpack.c.h.b16 %v619
    %v2093 = vunpack.c.l.b16 %v620
    %v2094 = vunpack.c.h.b16 %v620
    %v2095 = vunpack.c.l.b16 %v621
    %v2096 = vunpack.c.h.b16 %v621
    %v2097 = vunpack.c.l.b16 %v622
    %v2098 = vunpack.c.h.b16 %v622
    %v2099 = vunpack.c.l.b16 %v623
    %v2100 = vunpack.c.h.b16 %v623
    %v2101 = vunpack.c.l.b16 %v624
    %v2102 = vunpack.c.h.b16 %v624
    %v2103 = vunpack.c.l.b16 %v625
    %v2104 = vunpack.c.h.b16 %v625
    %v2105 = vunpack.c.l.b16 %v626
    %v2106 = vunpack.c.h.b16 %v626
    %v2107 = vunpack.c.l.b16 %v627
    %v2108 = vunpack.c.h.b16 %v627
    %v2109 = vunpack.c.l.b16 %v628
    %v2110 = vunpack.c.h.b16 %v628
    %v2111 = vunpack.c.l.b16 %v629
    %v2112 = vunpack.c.h.b16 %v629
    %v2113 = vunpack.c.l.b16 %v630
    %v2114 = vunpack.c.h.b16 %v630
    %v2115 = vunpack.c.l.b16 %v631
    %v2116 = vunpack.c.h.b16 %v631
    %v2117 = vunpack.c.l.b16 %v632
    %v2118 = vunpack.c.h.b16 %v632
    %v2119 = vunpack.c.l.b16 %v633
    %v2120 = vunpack.c.h.b16 %v633
    %v2121 = vunpack.c.l.b16 %v634
    %v2122 = vunpack.c.h.b16 %v634
    %v2123 = vunpack.c.l.b16 %v635
    %v2124 = vunpack.c.h.b16 %v635
    %v2125 = vunpack.c.l.b16 %v636
    %v2126 = vunpack.c.h.b16 %v636
    %v2127 = vunpack.c.l.b16 %v637
    %v2128 = vunpack.c.h.b16 %v637
    %v2129 = vunpack.c.l.b16 %v638
    %v2130 = vunpack.c.h.b16 %v638
    %v2131 = vunpack.c.l.b16 %v639
    %v2132 = vunpack.c.h.b16 %v639
    %v2133 = vunpack.c.l.b16 %v640
    %v2134 = vunpack.c.h.b16 %v640
    %v2135 = vunpack.c.l.b16 %v641
    %v2136 = vunpack.c.h.b16 %v641
    %v2137 = vunpack.c.l.b16 %v642
    %v2138 = vunpack.c.h.b16 %v642
    %v2139 = vunpack.c.l.b16 %v643
    %v2140 = vunpack.c.h.b16 %v643
    %v2141 = vunpack.c.l.b16 %v644
    %v2142 = vunpack.c.h.b16 %v644
    %v2143 = vunpack.c.l.b16 %v645
    %v2144 = vunpack.c.h.b16 %v645
    %v2145 = vunpack.c.l.b16 %v646
    %v2146 = vunpack.c.h.b16 %v646
    %v2147 = vunpack.c.l.b16 %v647
    %v2148 = vunpack.c.h.b16 %v647
    %v2149 = vunpack.c.l.b16 %v648
    %v2150 = vunpack.c.h.b16 %v648
    %v2151 = vunpack.c.l.b16 %v649
    %v2152 = vunpack.c.h.b16 %v649
    %v2153 = vunpack.c.l.b16 %v650
    %v2154 = vunpack.c.h.b16 %v650
    %v2155 = vunpack.c.l.b16 %v651
    %v2156 = vunpack.c.h.b16 %v651
    %v2157 = vunpack.c.l.b16 %v652
    %v2158 = vunpack.c.h.b16 %v652
    %v2159 = vunpack.c.l.b16 %v653
    %v2160 = vunpack.c.h.b16 %v653
    %v2161 = vunpack.c.l.b16 %v654
    %v2162 = vunpack.c.h.b16 %v654
    %v2163 = vunpack.c.l.b16 %v655
    %v2164 = vunpack.c.h.b16 %v655
    %v2165 = vunpack.c.l.b16 %v656
    %v2166 = vunpack.c.h.b16 %v656
    %v2167 = vunpack.c.l.b16 %v657
    %v2168 = vunpack.c.h.b16 %v657
    %v2169 = vunpack.c.l.b16 %v658
    %v2170 = vunpack.c.h.b16 %v658
    %v2171 = vunpack.c.l.b16 %v659
    %v2172 = vunpack.c.h.b16 %v659
    %v2173 = vunpack.c.l.b16 %v660
    %v2174 = vunpack.c.h.b16 %v660
    %v2175 = vunpack.c.l.b16 %v661
    %v2176 = vunpack.c.h.b16 %v661
    %v2177 = vunpack.c.l.b16 %v662
    %v2178 = vunpack.c.h.b16 %v662
    %v2179 = vunpack.c.l.b16 %v663
    %v2180 = vunpack.c.h.b16 %v663
    %v2181 = vunpack.c.l.b16 %v664
    %v2182 = vunpack.c.h.b16 %v664
    %v2183 = vunpack.c.l.b16 %v665
    %v2184 = vunpack.c.h.b16 %v665
    %v2185 = vunpack.c.l.b16 %v666
    %v2186 = vunpack.c.h.b16 %v666
    %v2187 = vunpack.c.l.b16 %v667
    %v2188 = vunpack.c.h.b16 %v667
    %v2189 = vunpack.c.l.b16 %v668
    %v2190 = vunpack.c.h.b16 %v668
    %v2191 = vunpack.c.l.b16 %v669
    %v2192 = vunpack.c.h.b16 %v669
    %v2193 = vunpack.c.l.b16 %v670
    %v2194 = vunpack.c.h.b16 %v670
    %v2195 = vunpack.c.l.b16 %v671
    %v2196 = vunpack.c.h.b16 %v671
    %v2197 = vunpack.c.l.b16 %v672
    %v2198 = vunpack.c.h.b16 %v672
    %v2199 = vunpack.c.l.b16 %v673
    %v2200 = vunpack.c.h.b16 %v673
    %v2201 = vunpack.c.l.b16 %v674
    %v2202 = vunpack.c.h.b16 %v674
    %v2203 = vunpack.c.l.b16 %v675
    %v2204 = vunpack.c.h.b16 %v675
    %v2205 = vunpack.c.l.b16 %v676
    %v2206 = vunpack.c.h.b16 %v676
    %v2207 = vunpack.c.l.b16 %v677
    %v2208 = vunpack.c.h.b16 %v677
    %v2209 = vunpack.c.l.b16 %v678
    %v2210 = vunpack.c.h.b16 %v678
    %v2211 = vunpack.c.l.b16 %v679
    %v2212 = vunpack.c.h.b16 %v679
    %v2213 = vunpack.c.l.b16 %v680
    %v2214 = vunpack.c.h.b16 %v680
    %v2215 = vunpack.c.l.b16 %v681
    %v2216 = vunpack.c.h.b16 %v681
    %v2217 = vunpack.c.l.b16 %v682
    %v2218 = vunpack.c.h.b16 %v682
    %v2219 = vunpack.c.l.b16 %v683
    %v2220 = vunpack.c.h.b16 %v683
    %v2221 = vunpack.c.l.b16 %v684
    %v2222 = vunpack.c.h.b16 %v684
    %v2223 = vunpack.c.l.b16 %v685
    %v2224 = vunpack.c.h.b16 %v685
    %v2225 = vunpack.c.l.b16 %v686
    %v2226 = vunpack.c.h.b16 %v686
    %v2227 = vunpack.c.l.b16 %v687
    %v2228 = vunpack.c.h.b16 %v687
    %v2229 = vunpack.c.l.b16 %v688
    %v2230 = vunpack.c.h.b16 %v688
    %v2231 = vunpack.c.l.b16 %v689
    %v2232 = vunpack.c.h.b16 %v689
    %v2233 = vunpack.c.l.b16 %v690
    %v2234 = vunpack.c.h.b16 %v690
    %v2235 = vunpack.c.l.b16 %v691
    %v2236 = vunpack.c.h.b16 %v691
    %v2237 = vunpack.c.l.b16 %v692
    %v2238 = vunpack.c.h.b16 %v692
    %v2239 = vunpack.c.l.b16 %v693
    %v2240 = vunpack.c.h.b16 %v693
    %v2241 = vunpack.c.l.b16 %v694
    %v2242 = vunpack.c.h.b16 %v694
    %v2243 = vunpack.c.l.b16 %v695
    %v2244 = vunpack.c.h.b16 %v695
    %v2245 = vunpack.c.l.b16 %v696
    %v2246 = vunpack.c.h.b16 %v696
    %v2247 = vunpack.c.l.b16 %v697
    %v2248 = vunpack.c.h.b16 %v697
    %v2249 = vunpack.c.l.b16 %v698
    %v2250 = vunpack.c.h.b16 %v698
    %v2251 = vunpack.c.l.b16 %v699
    %v2252 = vunpack.c.h.b16 %v699
    %v2253 = vunpack.c.l.b16 %v700
    %v2254 = vunpack.c.h.b16 %v700
    %v2255 = vunpack.c.l.b16 %v701
    %v2256 = vunpack.c.h.b16 %v701
    %v2257 = vunpack.c.l.b16 %v702
    %v2258 = vunpack.c.h.b16 %v702
    %v2259 = vunpack.c.l.b16 %v703
    %v2260 = vunpack.c.h.b16 %v703
    %v2261 = vunpack.c.l.b16 %v704
    %v2262 = vunpack.c.h.b16 %v704
    %v2263 = vunpack.c.l.b16 %v705
    %v2264 = vunpack.c.h.b16 %v705
    %v2265 = vunpack.c.l.b16 %v706
    %v2266 = vunpack.c.h.b16 %v706
    %v2267 = vunpack.c.l.b16 %v707
    %v2268 = vunpack.c.h.b16 %v707
    %v2269 = vunpack.c.l.b16 %v708
    %v2270 = vunpack.c.h.b16 %v708
    %v2271 = vunpack.c.l.b16 %v709
    %v2272 = vunpack.c.h.b16 %v709
    %v2273 = vunpack.c.l.b16 %v710
    %v2274 = vunpack.c.h.b16 %v710
    %v2275 = vunpack.c.l.b16 %v711
    %v2276 = vunpack.c.h.b16 %v711
    %v2277 = vunpack.c.l.b16 %v712
    %v2278 = vunpack.c.h.b16 %v712
    %v2279 = vunpack.c.l.b16 %v713
    %v2280 = vunpack.c.h.b16 %v713
    %v2281 = vunpack.c.l.b16 %v714
    %v2282 = vunpack.c.h.b16 %v714
    %v2283 = vunpack.c.l.b16 %v715
    %v2284 = vunpack.c.h.b16 %v715
    %v2285 = vunpack.c.l.b16 %v716
    %v2286 = vunpack.c.h.b16 %v716
    %v2287 = vunpack.c.l.b16 %v717
    %v2288 = vunpack.c.h.b16 %v717
    %v2289 = vunpack.c.l.b16 %v718
    %v2290 = vunpack.c.h.b16 %v718
    %v2291 = vunpack.c.l.b16 %v719
    %v2292 = vunpack.c.h.b16 %v719
    %v2293 = vunpack.c.l.b16 %v720
    %v2294 = vunpack.c.h.b16 %v720
    %v2295 = vunpack.c.l.b16 %v721
    %v2296 = vunpack.c.h.b16 %v721
    %v2297 = vunpack.c.l.b16 %v722
    %v2298 = vunpack.c.h.b16 %v722
    %v2299 = vunpack.c.l.b16 %v723
    %v2300 = vunpack.c.h.b16 %v723
    %v2301 = vunpack.c.l.b16 %v724
    %v2302 = vunpack.c.h.b16 %v724
    %v2303 = vunpack.c.l.b16 %v725
    %v2304 = vunpack.c.h.b16 %v725
    %v2305 = vunpack.c.l.b16 %v726
    %v2306 = vunpack.c.h.b16 %v726
    %v2307 = vunpack.c.l.b16 %v727
    %v2308 = vunpack.c.h.b16 %v727
    %v2309 = vunpack.c.l.b16 %v728
    %v2310 = vunpack.c.h.b16 %v728
    %v2311 = vunpack.c.l.b16 %v729
    %v2312 = vunpack.c.h.b16 %v729
    %v2313 = vunpack.c.l.b16 %v730
    %v2314 = vunpack.c.h.b16 %v730
    %v2315 = vunpack.c.l.b16 %v731
    %v2316 = vunpack.c.h.b16 %v731
    %v2317 = vunpack.c.l.b16 %v732
    %v2318 = vunpack.c.h.b16 %v732
    %v2319 = vunpack.c.l.b16 %v733
    %v2320 = vunpack.c.h.b16 %v733
    %v2321 = vunpack.c.l.b16 %v734
    %v2322 = vunpack.c.h.b16 %v734
    %v2323 = vunpack.c.l.b16 %v735
    %v2324 = vunpack.c.h.b16 %v735
    %v2325 = vunpack.c.l.b16 %v736
    %v2326 = vunpack.c.h.b16 %v736
    %v2327 = vunpack.c.l.b16 %v737
    %v2328 = vunpack.c.h.b16 %v737
    %v2329 = vunpack.c.l.b16 %v738
    %v2330 = vunpack.c.h.b16 %v738
    %v2331 = vunpack.c.l.b16 %v739
    %v2332 = vunpack.c.h.b16 %v739
    %v2333 = vunpack.c.l.b16 %v740
    %v2334 = vunpack.c.h.b16 %v740
    %v2335 = vunpack.c.l.b16 %v741
    %v2336 = vunpack.c.h.b16 %v741
    %v2337 = vunpack.c.l.b16 %v742
    %v2338 = vunpack.c.h.b16 %v742
    %v2339 = vunpack.c.l.b16 %v743
    %v2340 = vunpack.c.h.b16 %v743
    %v2341 = vunpack.c.l.b16 %v744
    %v2342 = vunpack.c.h.b16 %v744
    %v2343 = vunpack.c.l.b16 %v745
    %v2344 = vunpack.c.h.b16 %v745
    %v2345 = vunpack.c.l.b16 %v746
    %v2346 = vunpack.c.h.b16 %v746
    %v2347 = vunpack.c.l.b16 %v747
    %v2348 = vunpack.c.h.b16 %v747
    %v2349 = vunpack.c.l.b16 %v748
    %v2350 = vunpack.c.h.b16 %v748
    %v2351 = vunpack.c.l.b16 %v749
    %v2352 = vunpack.c.h.b16 %v749
    %v2353 = vunpack.c.l.b16 %v750
    %v2354 = vunpack.c.h.b16 %v750
    %v2355 = vunpack.c.l.b16 %v751
    %v2356 = vunpack.c.h.b16 %v751
    %v2357 = vunpack.c.l.b16 %v752
    %v2358 = vunpack.c.h.b16 %v752
    %v2359 = vunpack.c.l.b16 %v753
    %v2360 = vunpack.c.h.b16 %v753
    %v2361 = vunpack.c.l.b16 %v754
    %v2362 = vunpack.c.h.b16 %v754
    %v2363 = vunpack.c.l.b16 %v755
    %v2364 = vunpack.c.h.b16 %v755
    %v2365 = vunpack.c.l.b16 %v756
    %v2366 = vunpack.c.h.b16 %v756
    %v2367 = vunpack.c.l.b16 %v757
    %v2368 = vunpack.c.h.b16 %v757
    %v2369 = vunpack.c.l.b16 %v758
    %v2370 = vunpack.c.h.b16 %v758
    %v2371 = vunpack.c.l.b16 %v759
    %v2372 = vunpack.c.h.b16 %v759
    %v2373 = vunpack.c.l.b16 %v760
    %v2374 = vunpack.c.h.b16 %v760
    %v2375 = vunpack.c.l.b16 %v761
    %v2376 = vunpack.c.h.b16 %v761
    %v2377 = vunpack.c.l.b16 %v762
    %v2378 = vunpack.c.h.b16 %v762
    %v2379 = vunpack.c.l.b16 %v763
    %v2380 = vunpack.c.h.b16 %v763
    %v2381 = vunpack.c.l.b16 %v764
    %v2382 = vunpack.c.h.b16 %v764
    %v2383 = vunpack.c.l.b16 %v765
    %v2384 = vunpack.c.h.b16 %v765
    %v2385 = vunpack.c.l.b16 %v766
    %v2386 = vunpack.c.h.b16 %v766
    %v2387 = vunpack.c.l.b16 %v767
    %v2388 = vunpack.c.h.b16 %v767
    %v2389 = vunpack.c.l.b16 %v768
    %v2390 = vunpack.c.h.b16 %v768
    %v2391 = vunpack.c.l.b16 %v769
    %v2392 = vunpack.c.h.b16 %v769
    %v2393 = vunpack.c.l.b16 %v770
    %v2394 = vunpack.c.h.b16 %v770
    %v2395 = vunpack.c.l.b16 %v771
    %v2396 = vunpack.c.h.b16 %v771
    %v2397 = vunpack.c.l.b16 %v772
    %v2398 = vunpack.c.h.b16 %v772
    %v2399 = vunpack.c.l.b16 %v773
    %v2400 = vunpack.c.h.b16 %v773
    %v2401 = vunpack.c.l.b16 %v774
    %v2402 = vunpack.c.h.b16 %v774
    %v2403 = vunpack.c.l.b16 %v775
    %v2404 = vunpack.c.h.b16 %v775
    %v2405 = vunpack.c.l.b16 %v776
    %v2406 = vunpack.c.h.b16 %v776
    %v2407 = vunpack.c.l.b16 %v777
    %v2408 = vunpack.c.h.b16 %v777
    %v2409 = vunpack.c.l.b16 %v778
    %v2410 = vunpack.c.h.b16 %v778
    %v2411 = vunpack.c.l.b16 %v779
    %v2412 = vunpack.c.h.b16 %v779
    %v2413 = vunpack.c.l.b16 %v780
    %v2414 = vunpack.c.h.b16 %v780
    %v2415 = vunpack.c.l.b16 %v781
    %v2416 = vunpack.c.h.b16 %v781
    %v2417 = vunpack.c.l.b16 %v782
    %v2418 = vunpack.c.h.b16 %v782
    %v2419 = vunpack.c.l.b16 %v783
    %v2420 = vunpack.c.h.b16 %v783
    %v2421 = vunpack.c.l.b16 %v784
    %v2422 = vunpack.c.h.b16 %v784
    %v2423 = vunpack.c.l.b16 %v785
    %v2424 = vunpack.c.h.b16 %v785
    %v2425 = vunpack.c.l.b16 %v786
    %v2426 = vunpack.c.h.b16 %v786
    %v2427 = vunpack.c.l.b16 %v787
    %v2428 = vunpack.c.h.b16 %v787
    %v2429 = vunpack.c.l.b16 %v788
    %v2430 = vunpack.c.h.b16 %v788
    %v2431 = vunpack.c.l.b16 %v789
    %v2432 = vunpack.c.h.b16 %v789
    %v2433 = vunpack.c.l.b16 %v790
    %v2434 = vunpack.c.h.b16 %v790
    %v2435 = vunpack.c.l.b16 %v791
    %v2436 = vunpack.c.h.b16 %v791
    %v2437 = vunpack.c.l.b16 %v792
    %v2438 = vunpack.c.h.b16 %v792
    %v2439 = vunpack.c.l.b16 %v793
    %v2440 = vunpack.c.h.b16 %v793
    %v2441 = vunpack.c.l.b16 %v794
    %v2442 = vunpack.c.h.b16 %v794
    %v2443 = vunpack.c.l.b16 %v795
    %v2444 = vunpack.c.h.b16 %v795
    %v2445 = vunpack.c.l.b16 %v796
    %v2446 = vunpack.c.h.b16 %v796
    %v2447 = vunpack.c.l.b16 %v797
    %v2448 = vunpack.c.h.b16 %v797
    %v2449 = vunpack.c.l.b16 %v798
    %v2450 = vunpack.c.h.b16 %v798
    %v2451 = vunpack.c.l.b16 %v799
    %v2452 = vunpack.c.h.b16 %v799
    %v2453 = vunpack.c.l.b16 %v800
    %v2454 = vunpack.c.h.b16 %v800
    %v2455 = vunpack.c.l.b16 %v801
    %v2456 = vunpack.c.h.b16 %v801
    %v2457 = vunpack.c.l.b16 %v802
    %v2458 = vunpack.c.h.b16 %v802
    %v2459 = vunpack.c.l.b16 %v803
    %v2460 = vunpack.c.h.b16 %v803
    %v2461 = vunpack.c.l.b16 %v804
    %v2462 = vunpack.c.h.b16 %v804
    %v2463 = vunpack.c.l.b16 %v805
    %v2464 = vunpack.c.h.b16 %v805
    %v2465 = vunpack.c.l.b16 %v806
    %v2466 = vunpack.c.h.b16 %v806
    %v2467 = vunpack.c.l.b16 %v807
    %v2468 = vunpack.c.h.b16 %v807
    %v2469 = vunpack.c.l.b16 %v808
    %v2470 = vunpack.c.h.b16 %v808
    %v2471 = vunpack.c.l.b16 %v809
    %v2472 = vunpack.c.h.b16 %v809
    %v2473 = vunpack.c.l.b16 %v810
    %v2474 = vunpack.c.h.b16 %v810
    %v2475 = vunpack.c.l.b16 %v811
    %v2476 = vunpack.c.h.b16 %v811
    %v2477 = vunpack.c.l.b16 %v812
    %v2478 = vunpack.c.h.b16 %v812
    %v2479 = vunpack.c.l.b16 %v813
    %v2480 = vunpack.c.h.b16 %v813
    %v2481 = vunpack.c.l.b16 %v814
    %v2482 = vunpack.c.h.b16 %v814
    %v2483 = vunpack.c.l.b16 %v815
    %v2484 = vunpack.c.h.b16 %v815
    %v2485 = vunpack.c.l.b16 %v816
    %v2486 = vunpack.c.h.b16 %v816
    %v2487 = vunpack.c.l.b16 %v817
    %v2488 = vunpack.c.h.b16 %v817
    %v2489 = vunpack.c.l.b16 %v818
    %v2490 = vunpack.c.h.b16 %v818
    %v2491 = vunpack.c.l.b16 %v819
    %v2492 = vunpack.c.h.b16 %v819
    %v2493 = vunpack.c.l.b16 %v820
    %v2494 = vunpack.c.h.b16 %v820
    %v2495 = vunpack.c.l.b16 %v821
    %v2496 = vunpack.c.h.b16 %v821
    %v2497 = vunpack.c.l.b16 %v822
    %v2498 = vunpack.c.h.b16 %v822
    %v2499 = vunpack.c.l.b16 %v823
    %v2500 = vunpack.c.h.b16 %v823
    %v2501 = vunpack.c.l.b16 %v824
    %v2502 = vunpack.c.h.b16 %v824
    %v2503 = vunpack.c.l.b16 %v825
    %v2504 = vunpack.c.h.b16 %v825
    %v2505 = vunpack.c.l.b16 %v826
    %v2506 = vunpack.c.h.b16 %v826
    %v2507 = vunpack.c.l.b16 %v827
    %v2508 = vunpack.c.h.b16 %v827
    %v2509 = vunpack.c.l.b16 %v828
    %v2510 = vunpack.c.h.b16 %v828
    %v2511 = vunpack.c.l.b16 %v829
    %v2512 = vunpack.c.h.b16 %v829
    %v2513 = vunpack.c.l.b16 %v830
    %v2514 = vunpack.c.h.b16 %v830
    %v2515 = vunpack.c.l.b16 %v831
    %v2516 = vunpack.c.h.b16 %v831
    %v2517 = vunpack.c.l.b16 %v832
    %v2518 = vunpack.c.h.b16 %v832
    %v2519 = vunpack.c.l.b16 %v833
    %v2520 = vunpack.c.h.b16 %v833
    %v2521 = vunpack.c.l.b16 %v834
    %v2522 = vunpack.c.h.b16 %v834
    %v2523 = vunpack.c.l.b16 %v835
    %v2524 = vunpack.c.h.b16 %v835
    %v2525 = vunpack.c.l.b16 %v836
    %v2526 = vunpack.c.h.b16 %v836
    %v2527 = vunpack.c.l.b16 %v837
    %v2528 = vunpack.c.h.b16 %v837
    %v2529 = vunpack.c.l.b16 %v838
    %v2530 = vunpack.c.h.b16 %v838
    %v2531 = vunpack.c.l.b16 %v839
    %v2532 = vunpack.c.h.b16 %v839
    %v2533 = vunpack.c.l.b16 %v840
    %v2534 = vunpack.c.h.b16 %v840
    %v2535 = vunpack.c.l.b16 %v841
    %v2536 = vunpack.c.h.b16 %v841
    %v2537 = vunpack.c.l.b16 %v842
    %v2538 = vunpack.c.h.b16 %v842
    %v2539 = vunpack.c.l.b16 %v843
    %v2540 = vunpack.c.h.b16 %v843
    %v2541 = vunpack.c.l.b16 %v844
    %v2542 = vunpack.c.h.b16 %v844
    %v2543 = vunpack.c.l.b16 %v845
    %v2544 = vunpack.c.h.b16 %v845
    %v2545 = vunpack.c.l.b16 %v846
    %v2546 = vunpack.c.h.b16 %v846
    %v2547 = vunpack.c.l.b16 %v847
    %v2548 = vunpack.c.h.b16 %v847
    %v2549 = vunpack.c.l.b16 %v848
    %v2550 = vunpack.c.h.b16 %v848
    %v2551 = vunpack.c.l.b16 %v849
    %v2552 = vunpack.c.h.b16 %v849
    %v2553 = vunpack.c.l.b16 %v850
    %v2554 = vunpack.c.h.b16 %v850
    %v2555 = vunpack.c.l.b16 %v851
    %v2556 = vunpack.c.h.b16 %v851
    %v2557 = vunpack.c.l.b16 %v852
    %v2558 = vunpack.c.h.b16 %v852
    %v2559 = vunpack.c.l.b16 %v853
    %v2560 = vunpack.c.h.b16 %v853
    %v2561 = vunpack.c.l.b16 %v854
    %v2562 = vunpack.c.h.b16 %v854
    %v2563 = vunpack.c.l.b16 %v855
    %v2564 = vunpack.c.h.b16 %v855
    %v2565 = vunpack.c.l.b16 %v856
    %v2566 = vunpack.c.h.b16 %v856
    %v2567 = vunpack.c.l.b16 %v857
    %v2568 = vunpack.c.h.b16 %v857
    %v2569 = vunpack.c.l.b16 %v858
    %v2570 = vunpack.c.h.b16 %v858
    %v2571 = vunpack.c.l.b16 %v859
    %v2572 = vunpack.c.h.b16 %v859
    %v2573 = vunpack.c.l.b16 %v860
    %v2574 = vunpack.c.h.b16 %v860
    %v2575 = vunpack.c.l.b16 %v861
    %v2576 = vunpack.c.h.b16 %v861
    %v2577 = vunpack.c.l.b16 %v862
    %v2578 = vunpack.c.h.b16 %v862
    %v2579 = vunpack.c.l.b16 %v863
    %v2580 = vunpack.c.h.b16 %v863
    %v2581 = vunpack.c.l.b16 %v864
    %v2582 = vunpack.c.h.b16 %v864
    %v2583 = vunpack.c.l.b16 %v865
    %v2584 = vunpack.c.h.b16 %v865
    %v2585 = vunpack.c.l.b16 %v866
    %v2586 = vunpack.c.h.b16 %v866
    %v2587 = vunpack.c.l.b16 %v867
    %v2588 = vunpack.c.h.b16 %v867
    %v2589 = vunpack.c.l.b16 %v868
    %v2590 = vunpack.c.h.b16 %v868
    %v2591 = vunpack.c.l.b16 %v869
    %v2592 = vunpack.c.h.b16 %v869
    %v2593 = vunpack.c.l.b16 %v870
    %v2594 = vunpack.c.h.b16 %v870
    %v2595 = vunpack.c.l.b16 %v871
    %v2596 = vunpack.c.h.b16 %v871
    %v2597 = vunpack.c.l.b16 %v872
    %v2598 = vunpack.c.h.b16 %v872
    %v2599 = vunpack.c.l.b16 %v873
    %v2600 = vunpack.c.h.b16 %v873
    %v2601 = vunpack.c.l.b16 %v874
    %v2602 = vunpack.c.h.b16 %v874
    %v2603 = vunpack.c.l.b16 %v875
    %v2604 = vunpack.c.h.b16 %v875
    %v2605 = vunpack.c.l.b16 %v876
    %v2606 = vunpack.c.h.b16 %v876
    %v2607 = vunpack.c.l.b16 %v877
    %v2608 = vunpack.c.h.b16 %v877
    %v2609 = vunpack.c.l.b16 %v878
    %v2610 = vunpack.c.h.b16 %v878
    %v2611 = vunpack.c.l.b16 %v879
    %v2612 = vunpack.c.h.b16 %v879
    %v2613 = vunpack.c.l.b16 %v880
    %v2614 = vunpack.c.h.b16 %v880
    %v2615 = vunpack.c.l.b16 %v881
    %v2616 = vunpack.c.h.b16 %v881
    %v2617 = vunpack.c.l.b16 %v882
    %v2618 = vunpack.c.h.b16 %v882
    %v2619 = vunpack.c.l.b16 %v883
    %v2620 = vunpack.c.h.b16 %v883
    %v2621 = vunpack.c.l.b16 %v884
    %v2622 = vunpack.c.h.b16 %v884
    %v2623 = vunpack.c.l.b16 %v885
    %v2624 = vunpack.c.h.b16 %v885
    %v2625 = vunpack.c.l.b16 %v886
    %v2626 = vunpack.c.h.b16 %v886
    %v2627 = vunpack.c.l.b16 %v887
    %v2628 = vunpack.c.h.b16 %v887
    %v2629 = vunpack.c.l.b16 %v888
    %v2630 = vunpack.c.h.b16 %v888
    %v2631 = vunpack.c.l.b16 %v889
    %v2632 = vunpack.c.h.b16 %v889
    %v2633 = vunpack.c.l.b16 %v890
    %v2634 = vunpack.c.h.b16 %v890
    %v2635 = vunpack.c.l.b16 %v891
    %v2636 = vunpack.c.h.b16 %v891
    %v2637 = vunpack.c.l.b16 %v892
    %v2638 = vunpack.c.h.b16 %v892
    %v2639 = vunpack.c.l.b16 %v893
    %v2640 = vunpack.c.h.b16 %v893
    %v2641 = vunpack.c.l.b16 %v894
    %v2642 = vunpack.c.h.b16 %v894
    %v2643 = vunpack.c.l.b16 %v895
    %v2644 = vunpack.c.h.b16 %v895
    %v2645 = vunpack.c.l.b16 %v896
    %v2646 = vunpack.c.h.b16 %v896
    %v2647 = vunpack.c.l.b16 %v897
    %v2648 = vunpack.c.h.b16 %v897
    %v2649 = vunpack.c.l.b16 %v898
    %v2650 = vunpack.c.h.b16 %v898
    %v2651 = vunpack.c.l.b16 %v899
    %v2652 = vunpack.c.h.b16 %v899
    %v2653 = vunpack.c.l.b16 %v900
    %v2654 = vunpack.c.h.b16 %v900
    %v2655 = vunpack.c.l.b16 %v901
    %v2656 = vunpack.c.h.b16 %v901
    %v2657 = vunpack.c.l.b16 %v902
    %v2658 = vunpack.c.h.b16 %v902
    %v2659 = vunpack.c.l.b16 %v903
    %v2660 = vunpack.c.h.b16 %v903
    %v2661 = vunpack.c.l.b16 %v904
    %v2662 = vunpack.c.h.b16 %v904
    %v2663 = vunpack.c.l.b16 %v905
    %v2664 = vunpack.c.h.b16 %v905
    %v2665 = vunpack.c.l.b16 %v906
    %v2666 = vunpack.c.h.b16 %v906
    %v2667 = vunpack.c.l.b16 %v907
    %v2668 = vunpack.c.h.b16 %v907
    %v2669 = vunpack.c.l.b16 %v908
    %v2670 = vunpack.c.h.b16 %v908
    %v2671 = vunpack.c.l.b16 %v909
    %v2672 = vunpack.c.h.b16 %v909
    %v2673 = vunpack.c.l.b16 %v910
    %v2674 = vunpack.c.h.b16 %v910
    %v2675 = vunpack.c.l.b16 %v911
    %v2676 = vunpack.c.h.b16 %v911
    %v2677 = vunpack.c.l.b16 %v912
    %v2678 = vunpack.c.h.b16 %v912
    %v2679 = vunpack.c.l.b16 %v913
    %v2680 = vunpack.c.h.b16 %v913
    %v2681 = vunpack.c.l.b16 %v914
    %v2682 = vunpack.c.h.b16 %v914
    %v2683 = vunpack.c.l.b16 %v915
    %v2684 = vunpack.c.h.b16 %v915
    %v2685 = vunpack.c.l.b16 %v916
    %v2686 = vunpack.c.h.b16 %v916
    %v2687 = vunpack.c.l.b16 %v917
    %v2688 = vunpack.c.h.b16 %v917
    %v2689 = vunpack.c.l.b16 %v918
    %v2690 = vunpack.c.h.b16 %v918
    %v2691 = vunpack.c.l.b16 %v919
    %v2692 = vunpack.c.h.b16 %v919
    %v2693 = vunpack.c.l.b16 %v920
    %v2694 = vunpack.c.h.b16 %v920
    %v2695 = vunpack.c.l.b16 %v921
    %v2696 = vunpack.c.h.b16 %v921
    %v2697 = vunpack.c.l.b16 %v922
    %v2698 = vunpack.c.h.b16 %v922
    %v2699 = vunpack.c.l.b16 %v923
    %v2700 = vunpack.c.h.b16 %v923
    %v2701 = vunpack.c.l.b16 %v924
    %v2702 = vunpack.c.h.b16 %v924
    %v2703 = vunpack.c.l.b16 %v925
    %v2704 = vunpack.c.h.b16 %v925
    %v2705 = vunpack.c.l.b16 %v926
    %v2706 = vunpack.c.h.b16 %v926
    %v2707 = vunpack.c.l.b16 %v927
    %v2708 = vunpack.c.h.b16 %v927
    %v2709 = vunpack.c.l.b16 %v928
    %v2710 = vunpack.c.h.b16 %v928
    %v2711 = vunpack.c.l.b16 %v929
    %v2712 = vunpack.c.h.b16 %v929
    %v2713 = vunpack.c.l.b16 %v930
    %v2714 = vunpack.c.h.b16 %v930
    %v2715 = vunpack.c.l.b16 %v931
    %v2716 = vunpack.c.h.b16 %v931
    %v2717 = vunpack.c.l.b16 %v932
    %v2718 = vunpack.c.h.b16 %v932
    %v2719 = vpack.c.b16 %v1547, %v1543
    %v2720 = vpack.c.b16 %v1548, %v1544
    %v2721 = vpack.c.b16 %v1549, %v1545
    %v2722 = vpack.c.b16 %v1550, %v1546
    %v2723 = vpack.c.b16 %v1555, %v1551
    %v2724 = vpack.c.b16 %v1556, %v1552
    %v2725 = vpack.c.b16 %v1557, %v1553
    %v2726 = vpack.c.b16 %v1558, %v1554
    %v2727 = vpack.c.b16 %v1563, %v1559
    %v2728 = vpack.c.b16 %v1564, %v1560
    %v2729 = vpack.c.b16 %v1565, %v1561
    %v2730 = vpack.c.b16 %v1566, %v1562
    %v2731 = vpack.c.b16 %v1571, %v1567
    %v2732 = vpack.c.b16 %v1572, %v1568
    %v2733 = vpack.c.b16 %v1573, %v1569
    %v2734 = vpack.c.b16 %v1574, %v1570
    %v2735 = vpack.c.b16 %v1579, %v1575
    %v2736 = vpack.c.b16 %v1580, %v1576
    %v2737 = vpack.c.b16 %v1581, %v1577
    %v2738 = vpack.c.b16 %v1582, %v1578
    %v2739 = vpack.c.b16 %v1587, %v1583
    %v2740 = vpack.c.b16 %v1588, %v1584
    %v2741 = vpack.c.b16 %v1589, %v1585
    %v2742 = vpack.c.b16 %v1590, %v1586
    %v2743 = vpack.c.b16 %v1595, %v1591
    %v2744 = vpack.c.b16 %v1596, %v1592
    %v2745 = vpack.c.b16 %v1597, %v1593
    %v2746 = vpack.c.b16 %v1598, %v1594
    %v2747 = vpack.c.b16 %v1603, %v1599
    %v2748 = vpack.c.b16 %v1604, %v1600
    %v2749 = vpack.c.b16 %v1605, %v1601
    %v2750 = vpack.c.b16 %v1606, %v1602
    %v2751 = vpack.c.b16 %v1611, %v1607
    %v2752 = vpack.c.b16 %v1612, %v1608
    %v2753 = vpack.c.b16 %v1613, %v1609
    %v2754 = vpack.c.b16 %v1614, %v1610
    %v2755 = vpack.c.b16 %v1619, %v1615
    %v2756 = vpack.c.b16 %v1620, %v1616
    %v2757 = vpack.c.b16 %v1621, %v1617
    %v2758 = vpack.c.b16 %v1622, %v1618
    %v2759 = vpack.c.b16 %v1627, %v1623
    %v2760 = vpack.c.b16 %v1628, %v1624
    %v2761 = vpack.c.b16 %v1629, %v1625
    %v2762 = vpack.c.b16 %v1630, %v1626
    %v2763 = vpack.c.b16 %v1635, %v1631
    %v2764 = vpack.c.b16 %v1636, %v1632
    %v2765 = vpack.c.b16 %v1637, %v1633
    %v2766 = vpack.c.b16 %v1638, %v1634
    %v2767 = vpack.c.b16 %v1643, %v1639
    %v2768 = vpack.c.b16 %v1644, %v1640
    %v2769 = vpack.c.b16 %v1645, %v1641
    %v2770 = vpack.c.b16 %v1646, %v1642
    %v2771 = vpack.c.b16 %v1651, %v1647
    %v2772 = vpack.c.b16 %v1652, %v1648
    %v2773 = vpack.c.b16 %v1653, %v1649
    %v2774 = vpack.c.b16 %v1654, %v1650
    %v2775 = vpack.c.b16 %v1659, %v1655
    %v2776 = vpack.c.b16 %v1660, %v1656
    %v2777 = vpack.c.b16 %v1661, %v1657
    %v2778 = vpack.c.b16 %v1662, %v1658
    %v2779 = vpack.c.b16 %v1667, %v1663
    %v2780 = vpack.c.b16 %v1668, %v1664
    %v2781 = vpack.c.b16 %v1669, %v1665
    %v2782 = vpack.c.b16 %v1670, %v1666
    %v2783 = vpack.c.b16 %v1675, %v1671
    %v2784 = vpack.c.b16 %v1676, %v1672
    %v2785 = vpack.c.b16 %v1677, %v1673
    %v2786 = vpack.c.b16 %v1678, %v1674
    %v2787 = vpack.c.b16 %v1683, %v1679
    %v2788 = vpack.c.b16 %v1684, %v1680
    %v2789 = vpack.c.b16 %v1685, %v1681
    %v2790 = vpack.c.b16 %v1686, %v1682
    %v2791 = vpack.c.b16 %v1691, %v1687
    %v2792 = vpack.c.b16 %v1692, %v1688
    %v2793 = vpack.c.b16 %v1693, %v1689
    %v2794 = vpack.c.b16 %v1694, %v1690
    %v2795 = vpack.c.b16 %v1699, %v1695
    %v2796 = vpack.c.b16 %v1700, %v1696
    %v2797 = vpack.c.b16 %v1701, %v1697
    %v2798 = vpack.c.b16 %v1702, %v1698
    %v2799 = vpack.c.b16 %v1707, %v1703
    %v2800 = vpack.c.b16 %v1708, %v1704
    %v2801 = vpack.c.b16 %v1709, %v1705
    %v2802 = vpack.c.b16 %v1710, %v1706
    %v2803 = vpack.c.b16 %v1715, %v1711
    %v2804 = vpack.c.b16 %v1716, %v1712
    %v2805 = vpack.c.b16 %v1717, %v1713
    %v2806 = vpack.c.b16 %v1718, %v1714
    %v2807 = vpack.c.b16 %v1723, %v1719
    %v2808 = vpack.c.b16 %v1724, %v1720
    %v2809 = vpack.c.b16 %v1725, %v1721
    %v2810 = vpack.c.b16 %v1726, %v1722
    %v2811 = vpack.c.b16 %v1731, %v1727
    %v2812 = vpack.c.b16 %v1732, %v1728
    %v2813 = vpack.c.b16 %v1733, %v1729
    %v2814 = vpack.c.b16 %v1734, %v1730
    %v2815 = vpack.c.b16 %v1739, %v1735
    %v2816 = vpack.c.b16 %v1740, %v1736
    %v2817 = vpack.c.b16 %v1741, %v1737
    %v2818 = vpack.c.b16 %v1742, %v1738
    %v2819 = vpack.c.b16 %v1747, %v1743
    %v2820 = vpack.c.b16 %v1748, %v1744
    %v2821 = vpack.c.b16 %v1749, %v1745
    %v2822 = vpack.c.b16 %v1750, %v1746
    %v2823 = vpack.c.b16 %v1755, %v1751
    %v2824 = vpack.c.b16 %v1756, %v1752
    %v2825 = vpack.c.b16 %v1757, %v1753
    %v2826 = vpack.c.b16 %v1758, %v1754
    %v2827 = vpack.c.b16 %v1763, %v1759
    %v2828 = vpack.c.b16 %v1764, %v1760
    %v2829 = vpack.c.b16 %v1765, %v1761
    %v2830 = vpack.c.b16 %v1766, %v1762
    %v2831 = vpack.c.b16 %v1771, %v1767
    %v2832 = vpack.c.b16 %v1772, %v1768
    %v2833 = vpack.c.b16 %v1773, %v1769
    %v2834 = vpack.c.b16 %v1774, %v1770
    %v2835 = vpack.c.b16 %v1779, %v1775
    %v2836 = vpack.c.b16 %v1780, %v1776
    %v2837 = vpack.c.b16 %v1781, %v1777
    %v2838 = vpack.c.b16 %v1782, %v1778
    %v2839 = vpack.c.b16 %v1787, %v1783
    %v2840 = vpack.c.b16 %v1788, %v1784
    %v2841 = vpack.c.b16 %v1789, %v1785
    %v2842 = vpack.c.b16 %v1790, %v1786
    %v2843 = vpack.c.b16 %v1795, %v1791
    %v2844 = vpack.c.b16 %v1796, %v1792
    %v2845 = vpack.c.b16 %v1797, %v1793
    %v2846 = vpack.c.b16 %v1798, %v1794
    %v2847 = vpack.c.b16 %v1803, %v1799
    %v2848 = vpack.c.b16 %v1804, %v1800
    %v2849 = vpack.c.b16 %v1805, %v1801
    %v2850 = vpack.c.b16 %v1806, %v1802
    %v2851 = vpack.c.b16 %v1811, %v1807
    %v2852 = vpack.c.b16 %v1812, %v1808
    %v2853 = vpack.c.b16 %v1813, %v1809
    %v2854 = vpack.c.b16 %v1814, %v1810
    %v2855 = vpack.c.b16 %v1819, %v1815
    %v2856 = vpack.c.b16 %v1820, %v1816
    %v2857 = vpack.c.b16 %v1821, %v1817
    %v2858 = vpack.c.b16 %v1822, %v1818
    %v2859 = vpack.c.b16 %v1827, %v1823
    %v2860 = vpack.c.b16 %v1828, %v1824
    %v2861 = vpack.c.b16 %v1829, %v1825
    %v2862 = vpack.c.b16 %v1830, %v1826
    %v2863 = vpack.c.b16 %v1835, %v1831
    %v2864 = vpack.c.b16 %v1836, %v1832
    %v2865 = vpack.c.b16 %v1837, %v1833
    %v2866 = vpack.c.b16 %v1838, %v1834
    %v2867 = vpack.c.b16 %v1843, %v1839
    %v2868 = vpack.c.b16 %v1844, %v1840
    %v2869 = vpack.c.b16 %v1845, %v1841
    %v2870 = vpack.c.b16 %v1846, %v1842
    %v2871 = vpack.c.b16 %v1851, %v1847
    %v2872 = vpack.c.b16 %v1852, %v1848
    %v2873 = vpack.c.b16 %v1853, %v1849
    %v2874 = vpack.c.b16 %v1854, %v1850
    %v2875 = vpack.c.b16 %v1859, %v1855
    %v2876 = vpack.c.b16 %v1860, %v1856
    %v2877 = vpack.c.b16 %v1861, %v1857
    %v2878 = vpack.c.b16 %v1862, %v1858
    %v2879 = vpack.c.b16 %v1867, %v1863
    %v2880 = vpack.c.b16 %v1868, %v1864
    %v2881 = vpack.c.b16 %v1869, %v1865
    %v2882 = vpack.c.b16 %v1870, %v1866
    %v2883 = vpack.c.b16 %v1875, %v1871
    %v2884 = vpack.c.b16 %v1876, %v1872
    %v2885 = vpack.c.b16 %v1877, %v1873
    %v2886 = vpack.c.b16 %v1878, %v1874
    %v2887 = vpack.c.b16 %v1883, %v1879
    %v2888 = vpack.c.b16 %v1884, %v1880
    %v2889 = vpack.c.b16 %v1885, %v1881
    %v2890 = vpack.c.b16 %v1886, %v1882
    %v2891 = vpack.c.b16 %v1891, %v1887
    %v2892 = vpack.c.b16 %v1892, %v1888
    %v2893 = vpack.c.b16 %v1893, %v1889
    %v2894 = vpack.c.b16 %v1894, %v1890
    %v2895 = vpack.c.b16 %v1899, %v1895
    %v2896 = vpack.c.b16 %v1900, %v1896
    %v2897 = vpack.c.b16 %v1901, %v1897
    %v2898 = vpack.c.b16 %v1902, %v1898
    %v2899 = vpack.c.b16 %v1907, %v1903
    %v2900 = vpack.c.b16 %v1908, %v1904
    %v2901 = vpack.c.b16 %v1909, %v1905
    %v2902 = vpack.c.b16 %v1910, %v1906
    %v2903 = vpack.c.b16 %v1915, %v1911
    %v2904 = vpack.c.b16 %v1916, %v1912
    %v2905 = vpack.c.b16 %v1917, %v1913
    %v2906 = vpack.c.b16 %v1918, %v1914
    %v2907 = vpack.c.b16 %v1923, %v1919
    %v2908 = vpack.c.b16 %v1924, %v1920
    %v2909 = vpack.c.b16 %v1925, %v1921
    %v2910 = vpack.c.b16 %v1926, %v1922
    %v2911 = vpack.c.b16 %v1931, %v1927
    %v2912 = vpack.c.b16 %v1932, %v1928
    %v2913 = vpack.c.b16 %v1933, %v1929
    %v2914 = vpack.c.b16 %v1934, %v1930
    %v2915 = vpack.c.b16 %v1939, %v1935
    %v2916 = vpack.c.b16 %v1940, %v1936
    %v2917 = vpack.c.b16 %v1941, %v1937
    %v2918 = vpack.c.b16 %v1942, %v1938
    %v2919 = vpack.c.b16 %v1947, %v1943
    %v2920 = vpack.c.b16 %v1948, %v1944
    %v2921 = vpack.c.b16 %v1949, %v1945
    %v2922 = vpack.c.b16 %v1950, %v1946
    %v2923 = vpack.c.b16 %v1955, %v1951
    %v2924 = vpack.c.b16 %v1956, %v1952
    %v2925 = vpack.c.b16 %v1957, %v1953
    %v2926 = vpack.c.b16 %v1958, %v1954
    %v2927 = vpack.c.b16 %v1963, %v1959
    %v2928 = vpack.c.b16 %v1964, %v1960
    %v2929 = vpack.c.b16 %v1965, %v1961
    %v2930 = vpack.c.b16 %v1966, %v1962
    %v2931 = vpack.c.b16 %v1971, %v1967
    %v2932 = vpack.c.b16 %v1972, %v1968
    %v2933 = vpack.c.b16 %v1973, %v1969
    %v2934 = vpack.c.b16 %v1974, %v1970
    %v2935 = vpack.c.b16 %v1979, %v1975
    %v2936 = vpack.c.b16 %v1980, %v1976
    %v2937 = vpack.c.b16 %v1981, %v1977
    %v2938 = vpack.c.b16 %v1982, %v1978
    %v2939 = vpack.c.b16 %v1987, %v1983
    %v2940 = vpack.c.b16 %v1988, %v1984
    %v2941 = vpack.c.b16 %v1989, %v1985
    %v2942 = vpack.c.b16 %v1990, %v1986
    %v2943 = vpack.c.b16 %v1995, %v1991
    %v2944 = vpack.c.b16 %v1996, %v1992
    %v2945 = vpack.c.b16 %v1997, %v1993
    %v2946 = vpack.c.b16 %v1998, %v1994
    %v2947 = vpack.c.b16 %v2003, %v1999
    %v2948 = vpack.c.b16 %v2004, %v2000
    %v2949 = vpack.c.b16 %v2005, %v2001
    %v2950 = vpack.c.b16 %v2006, %v2002
    %v2951 = vpack.c.b16 %v2011, %v2007
    %v2952 = vpack.c.b16 %v2012, %v2008
    %v2953 = vpack.c.b16 %v2013, %v2009
    %v2954 = vpack.c.b16 %v2014, %v2010
    %v2955 = vpack.c.b16 %v2019, %v2015
    %v2956 = vpack.c.b16 %v2020, %v2016
    %v2957 = vpack.c.b16 %v2021, %v2017
    %v2958 = vpack.c.b16 %v2022, %v2018
    %v2959 = vpack.c.b16 %v2027, %v2023
    %v2960 = vpack.c.b16 %v2028, %v2024
    %v2961 = vpack.c.b16 %v2029, %v2025
    %v2962 = vpack.c.b16 %v2030, %v2026
    %v2963 = vpack.c.b16 %v2035, %v2031
    %v2964 = vpack.c.b16 %v2036, %v2032
    %v2965 = vpack.c.b16 %v2037, %v2033
    %v2966 = vpack.c.b16 %v2038, %v2034
    %v2967 = vpack.c.b16 %v2043, %v2039
    %v2968 = vpack.c.b16 %v2044, %v2040
    %v2969 = vpack.c.b16 %v2045, %v2041
    %v2970 = vpack.c.b16 %v2046, %v2042
    %v2971 = vpack.c.b16 %v2051, %v2047
    %v2972 = vpack.c.b16 %v2052, %v2048
    %v2973 = vpack.c.b16 %v2053, %v2049
    %v2974 = vpack.c.b16 %v2054, %v2050
    %v2975 = vpack.c.b16 %v2059, %v2055
    %v2976 = vpack.c.b16 %v2060, %v2056
    %v2977 = vpack.c.b16 %v2061, %v2057
    %v2978 = vpack.c.b16 %v2062, %v2058
    %v2979 = vpack.c.b16 %v2067, %v2063
    %v2980 = vpack.c.b16 %v2068, %v2064
    %v2981 = vpack.c.b16 %v2069, %v2065
    %v2982 = vpack.c.b16 %v2070, %v2066
    %v2983 = vpack.c.b16 %v2075, %v2071
    %v2984 = vpack.c.b16 %v2076, %v2072
    %v2985 = vpack.c.b16 %v2077, %v2073
    %v2986 = vpack.c.b16 %v2078, %v2074
    %v2987 = vpack.c.b16 %v2083, %v2079
    %v2988 = vpack.c.b16 %v2084, %v2080
    %v2989 = vpack.c.b16 %v2085, %v2081
    %v2990 = vpack.c.b16 %v2086, %v2082
    %v2991 = vpack.c.b16 %v2091, %v2087
    %v2992 = vpack.c.b16 %v2092, %v2088
    %v2993 = vpack.c.b16 %v2093, %v2089
    %v2994 = vpack.c.b16 %v2094, %v2090
    %v2995 = vpack.c.b16 %v2099, %v2095
    %v2996 = vpack.c.b16 %v2100, %v2096
    %v2997 = vpack.c.b16 %v2101, %v2097
    %v2998 = vpack.c.b16 %v2102, %v2098
    %v2999 = vpack.c.b16 %v2107, %v2103
    %v3000 = vpack.c.b16 %v2108, %v2104
    %v3001 = vpack.c.b16 %v2109, %v2105
    %v3002 = vpack.c.b16 %v2110, %v2106
    %v3003 = vpack.c.b16 %v2115, %v2111
    %v3004 = vpack.c.b16 %v2116, %v2112
    %v3005 = vpack.c.b16 %v2117, %v2113
    %v3006 = vpack.c.b16 %v2118, %v2114
    %v3007 = vpack.c.b16 %v2123, %v2119
    %v3008 = vpack.c.b16 %v2124, %v2120
    %v3009 = vpack.c.b16 %v2125, %v2121
    %v3010 = vpack.c.b16 %v2126, %v2122
    %v3011 = vpack.c.b16 %v2131, %v2127
    %v3012 = vpack.c.b16 %v2132, %v2128
    %v3013 = vpack.c.b16 %v2133, %v2129
    %v3014 = vpack.c.b16 %v2134, %v2130
    %v3015 = vpack.c.b16 %v2139, %v2135
    %v3016 = vpack.c.b16 %v2140, %v2136
    %v3017 = vpack.c.b16 %v2141, %v2137
    %v3018 = vpack.c.b16 %v2142, %v2138
    %v3019 = vpack.c.b16 %v2147, %v2143
    %v3020 = vpack.c.b16 %v2148, %v2144
    %v3021 = vpack.c.b16 %v2149, %v2145
    %v3022 = vpack.c.b16 %v2150, %v2146
    %v3023 = vpack.c.b16 %v2155, %v2151
    %v3024 = vpack.c.b16 %v2156, %v2152
    %v3025 = vpack.c.b16 %v2157, %v2153
    %v3026 = vpack.c.b16 %v2158, %v2154
    %v3027 = vpack.c.b16 %v2163, %v2159
    %v3028 = vpack.c.b16 %v2164, %v2160
    %v3029 = vpack.c.b16 %v2165, %v2161
    %v3030 = vpack.c.b16 %v2166, %v2162
    %v3031 = vpack.c.b16 %v2171, %v2167
    %v3032 = vpack.c.b16 %v2172, %v2168
    %v3033 = vpack.c.b16 %v2173, %v2169
    %v3034 = vpack.c.b16 %v2174, %v2170
    %v3035 = vpack.c.b16 %v2179, %v2175
    %v3036 = vpack.c.b16 %v2180, %v2176
    %v3037 = vpack.c.b16 %v2181, %v2177
    %v3038 = vpack.c.b16 %v2182, %v2178
    %v3039 = vpack.c.b16 %v2187, %v2183
    %v3040 = vpack.c.b16 %v2188, %v2184
    %v3041 = vpack.c.b16 %v2189, %v2185
    %v3042 = vpack.c.b16 %v2190, %v2186
    %v3043 = vpack.c.b16 %v2195, %v2191
    %v3044 = vpack.c.b16 %v2196, %v2192
    %v3045 = vpack.c.b16 %v2197, %v2193
    %v3046 = vpack.c.b16 %v2198, %v2194
    %v3047 = vpack.c.b16 %v2203, %v2199
    %v3048 = vpack.c.b16 %v2204, %v2200
    %v3049 = vpack.c.b16 %v2205, %v2201
    %v3050 = vpack.c.b16 %v2206, %v2202
    %v3051 = vpack.c.b16 %v2211, %v2207
    %v3052 = vpack.c.b16 %v2212, %v2208
    %v3053 = vpack.c.b16 %v2213, %v2209
    %v3054 = vpack.c.b16 %v2214, %v2210
    %v3055 = vpack.c.b16 %v2219, %v2215
    %v3056 = vpack.c.b16 %v2220, %v2216
    %v3057 = vpack.c.b16 %v2221, %v2217
    %v3058 = vpack.c.b16 %v2222, %v2218
    %v3059 = vpack.c.b16 %v2227, %v2223
    %v3060 = vpack.c.b16 %v2228, %v2224
    %v3061 = vpack.c.b16 %v2229, %v2225
    %v3062 = vpack.c.b16 %v2230, %v2226
    %v3063 = vpack.c.b16 %v2235, %v2231
    %v3064 = vpack.c.b16 %v2236, %v2232
    %v3065 = vpack.c.b16 %v2237, %v2233
    %v3066 = vpack.c.b16 %v2238, %v2234
    %v3067 = vpack.c.b16 %v2243, %v2239
    %v3068 = vpack.c.b16 %v2244, %v2240
    %v3069 = vpack.c.b16 %v2245, %v2241
    %v3070 = vpack.c.b16 %v2246, %v2242
    %v3071 = vpack.c.b16 %v2251, %v2247
    %v3072 = vpack.c.b16 %v2252, %v2248
    %v3073 = vpack.c.b16 %v2253, %v2249
    %v3074 = vpack.c.b16 %v2254, %v2250
    %v3075 = vpack.c.b16 %v2259, %v2255
    %v3076 = vpack.c.b16 %v2260, %v2256
    %v3077 = vpack.c.b16 %v2261, %v2257
    %v3078 = vpack.c.b16 %v2262, %v2258
    %v3079 = vpack.c.b16 %v2267, %v2263
    %v3080 = vpack.c.b16 %v2268, %v2264
    %v3081 = vpack.c.b16 %v2269, %v2265
    %v3082 = vpack.c.b16 %v2270, %v2266
    %v3083 = vpack.c.b16 %v2275, %v2271
    %v3084 = vpack.c.b16 %v2276, %v2272
    %v3085 = vpack.c.b16 %v2277, %v2273
    %v3086 = vpack.c.b16 %v2278, %v2274
    %v3087 = vpack.c.b16 %v2283, %v2279
    %v3088 = vpack.c.b16 %v2284, %v2280
    %v3089 = vpack.c.b16 %v2285, %v2281
    %v3090 = vpack.c.b16 %v2286, %v2282
    %v3091 = vpack.c.b16 %v2291, %v2287
    %v3092 = vpack.c.b16 %v2292, %v2288
    %v3093 = vpack.c.b16 %v2293, %v2289
    %v3094 = vpack.c.b16 %v2294, %v2290
    %v3095 = vpack.c.b16 %v2299, %v2295
    %v3096 = vpack.c.b16 %v2300, %v2296
    %v3097 = vpack.c.b16 %v2301, %v2297
    %v3098 = vpack.c.b16 %v2302, %v2298
    %v3099 = vpack.c.b16 %v2307, %v2303
    %v3100 = vpack.c.b16 %v2308, %v2304
    %v3101 = vpack.c.b16 %v2309, %v2305
    %v3102 = vpack.c.b16 %v2310, %v2306
    %v3103 = vpack.c.b16 %v2315, %v2311
    %v3104 = vpack.c.b16 %v2316, %v2312
    %v3105 = vpack.c.b16 %v2317, %v2313
    %v3106 = vpack.c.b16 %v2318, %v2314
    %v3107 = vpack.c.b16 %v2323, %v2319
    %v3108 = vpack.c.b16 %v2324, %v2320
    %v3109 = vpack.c.b16 %v2325, %v2321
    %v3110 = vpack.c.b16 %v2326, %v2322
    %v3111 = vpack.c.b16 %v2331, %v2327
    %v3112 = vpack.c.b16 %v2332, %v2328
    %v3113 = vpack.c.b16 %v2333, %v2329
    %v3114 = vpack.c.b16 %v2334, %v2330
    %v3115 = vpack.c.b16 %v2339, %v2335
    %v3116 = vpack.c.b16 %v2340, %v2336
    %v3117 = vpack.c.b16 %v2341, %v2337
    %v3118 = vpack.c.b16 %v2342, %v2338
    %v3119 = vpack.c.b16 %v2347, %v2343
    %v3120 = vpack.c.b16 %v2348, %v2344
    %v3121 = vpack.c.b16 %v2349, %v2345
    %v3122 = vpack.c.b16 %v2350, %v2346
    %v3123 = vpack.c.b16 %v2355, %v2351
    %v3124 = vpack.c.b16 %v2356, %v2352
    %v3125 = vpack.c.b16 %v2357, %v2353
    %v3126 = vpack.c.b16 %v2358, %v2354
    %v3127 = vpack.c.b16 %v2363, %v2359
    %v3128 = vpack.c.b16 %v2364, %v2360
    %v3129 = vpack.c.b16 %v2365, %v2361
    %v3130 = vpack.c.b16 %v2366, %v2362
    %v3131 = vpack.c.b16 %v2371, %v2367
    %v3132 = vpack.c.b16 %v2372, %v2368
    %v3133 = vpack.c.b16 %v2373, %v2369
    %v3134 = vpack.c.b16 %v2374, %v2370
    %v3135 = vpack.c.b16 %v2379, %v2375
    %v3136 = vpack.c.b16 %v2380, %v2376
    %v3137 = vpack.c.b16 %v2381, %v2377
    %v3138 = vpack.c.b16 %v2382, %v2378
    %v3139 = vpack.c.b16 %v2387, %v2383
    %v3140 = vpack.c.b16 %v2388, %v2384
    %v3141 = vpack.c.b16 %v2389, %v2385
    %v3142 = vpack.c.b16 %v2390, %v2386
    %v3143 = vpack.c.b16 %v2395, %v2391
    %v3144 = vpack.c.b16 %v2396, %v2392
    %v3145 = vpack.c.b16 %v2397, %v2393
    %v3146 = vpack.c.b16 %v2398, %v2394
    %v3147 = vpack.c.b16 %v2403, %v2399
    %v3148 = vpack.c.b16 %v2404, %v2400
    %v3149 = vpack.c.b16 %v2405, %v2401
    %v3150 = vpack.c.b16 %v2406, %v2402
    %v3151 = vpack.c.b16 %v2411, %v2407
    %v3152 = vpack.c.b16 %v2412, %v2408
    %v3153 = vpack.c.b16 %v2413, %v2409
    %v3154 = vpack.c.b16 %v2414, %v2410
    %v3155 = vpack.c.b16 %v2419, %v2415
    %v3156 = vpack.c.b16 %v2420, %v2416
    %v3157 = vpack.c.b16 %v2421, %v2417
    %v3158 = vpack.c.b16 %v2422, %v2418
    %v3159 = vpack.c.b16 %v2427, %v2423
    %v3160 = vpack.c.b16 %v2428, %v2424
    %v3161 = vpack.c.b16 %v2429, %v2425
    %v3162 = vpack.c.b16 %v2430, %v2426
    %v3163 = vpack.c.b16 %v2435, %v2431
    %v3164 = vpack.c.b16 %v2436, %v2432
    %v3165 = vpack.c.b16 %v2437, %v2433
    %v3166 = vpack.c.b16 %v2438, %v2434
    %v3167 = vpack.c.b16 %v2443, %v2439
    %v3168 = vpack.c.b16 %v2444, %v2440
    %v3169 = vpack.c.b16 %v2445, %v2441
    %v3170 = vpack.c.b16 %v2446, %v2442
    %v3171 = vpack.c.b16 %v2451, %v2447
    %v3172 = vpack.c.b16 %v2452, %v2448
    %v3173 = vpack.c.b16 %v2453, %v2449
    %v3174 = vpack.c.b16 %v2454, %v2450
    %v3175 = vpack.c.b16 %v2459, %v2455
    %v3176 = vpack.c.b16 %v2460, %v2456
    %v3177 = vpack.c.b16 %v2461, %v2457
    %v3178 = vpack.c.b16 %v2462, %v2458
    %v3179 = vpack.c.b16 %v2467, %v2463
    %v3180 = vpack.c.b16 %v2468, %v2464
    %v3181 = vpack.c.b16 %v2469, %v2465
    %v3182 = vpack.c.b16 %v2470, %v2466
    %v3183 = vpack.c.b16 %v2475, %v2471
    %v3184 = vpack.c.b16 %v2476, %v2472
    %v3185 = vpack.c.b16 %v2477, %v2473
    %v3186 = vpack.c.b16 %v2478, %v2474
    %v3187 = vpack.c.b16 %v2483, %v2479
    %v3188 = vpack.c.b16 %v2484, %v2480
    %v3189 = vpack.c.b16 %v2485, %v2481
    %v3190 = vpack.c.b16 %v2486, %v2482
    %v3191 = vpack.c.b16 %v2491, %v2487
    %v3192 = vpack.c.b16 %v2492, %v2488
    %v3193 = vpack.c.b16 %v2493, %v2489
    %v3194 = vpack.c.b16 %v2494, %v2490
    %v3195 = vpack.c.b16 %v2499, %v2495
    %v3196 = vpack.c.b16 %v2500, %v2496
    %v3197 = vpack.c.b16 %v2501, %v2497
    %v3198 = vpack.c.b16 %v2502, %v2498
    %v3199 = vpack.c.b16 %v2507, %v2503
    %v3200 = vpack.c.b16 %v2508, %v2504
    %v3201 = vpack.c.b16 %v2509, %v2505
    %v3202 = vpack.c.b16 %v2510, %v2506
    %v3203 = vpack.c.b16 %v2515, %v2511
    %v3204 = vpack.c.b16 %v2516, %v2512
    %v3205 = vpack.c.b16 %v2517, %v2513
    %v3206 = vpack.c.b16 %v2518, %v2514
    %v3207 = vpack.c.b16 %v2523, %v2519
    %v3208 = vpack.c.b16 %v2524, %v2520
    %v3209 = vpack.c.b16 %v2525, %v2521
    %v3210 = vpack.c.b16 %v2526, %v2522
    %v3211 = vpack.c.b16 %v2531, %v2527
    %v3212 = vpack.c.b16 %v2532, %v2528
    %v3213 = vpack.c.b16 %v2533, %v2529
    %v3214 = vpack.c.b16 %v2534, %v2530
    %v3215 = vpack.c.b16 %v2539, %v2535
    %v3216 = vpack.c.b16 %v2540, %v2536
    %v3217 = vpack.c.b16 %v2541, %v2537
    %v3218 = vpack.c.b16 %v2542, %v2538
    %v3219 = vpack.c.b16 %v2547, %v2543
    %v3220 = vpack.c.b16 %v2548, %v2544
    %v3221 = vpack.c.b16 %v2549, %v2545
    %v3222 = vpack.c.b16 %v2550, %v2546
    %v3223 = vpack.c.b16 %v2555, %v2551
    %v3224 = vpack.c.b16 %v2556, %v2552
    %v3225 = vpack.c.b16 %v2557, %v2553
    %v3226 = vpack.c.b16 %v2558, %v2554
    %v3227 = vpack.c.b16 %v2563, %v2559
    %v3228 = vpack.c.b16 %v2564, %v2560
    %v3229 = vpack.c.b16 %v2565, %v2561
    %v3230 = vpack.c.b16 %v2566, %v2562
    %v3231 = vpack.c.b16 %v2571, %v2567
    %v3232 = vpack.c.b16 %v2572, %v2568
    %v3233 = vpack.c.b16 %v2573, %v2569
    %v3234 = vpack.c.b16 %v2574, %v2570
    %v3235 = vpack.c.b16 %v2579, %v2575
    %v3236 = vpack.c.b16 %v2580, %v2576
    %v3237 = vpack.c.b16 %v2581, %v2577
    %v3238 = vpack.c.b16 %v2582, %v2578
    %v3239 = vpack.c.b16 %v2587, %v2583
    %v3240 = vpack.c.b16 %v2588, %v2584
    %v3241 = vpack.c.b16 %v2589, %v2585
    %v3242 = vpack.c.b16 %v2590, %v2586
    %v3243 = vpack.c.b16 %v2595, %v2591
    %v3244 = vpack.c.b16 %v2596, %v2592
    %v3245 = vpack.c.b16 %v2597, %v2593
    %v3246 = vpack.c.b16 %v2598, %v2594
    %v3247 = vpack.c.b16 %v2603, %v2599
    %v3248 = vpack.c.b16 %v2604, %v2600
    %v3249 = vpack.c.b16 %v2605, %v2601
    %v3250 = vpack.c.b16 %v2606, %v2602
    %v3251 = vpack.c.b16 %v2611, %v2607
    %v3252 = vpack.c.b16 %v2612, %v2608
    %v3253 = vpack.c.b16 %v2613, %v2609
    %v3254 = vpack.c.b16 %v2614, %v2610
    %v3255 = vpack.c.b16 %v2619, %v2615
    %v3256 = vpack.c.b16 %v2620, %v2616
    %v3257 = vpack.c.b16 %v2621, %v2617
    %v3258 = vpack.c.b16 %v2622, %v2618
    %v3259 = vpack.c.b16 %v2627, %v2623
    %v3260 = vpack.c.b16 %v2628, %v2624
    %v3261 = vpack.c.b16 %v2629, %v2625
    %v3262 = vpack.c.b16 %v2630, %v2626
    %v3263 = vpack.c.b16 %v2635, %v2631
    %v3264 = vpack.c.b16 %v2636, %v2632
    %v3265 = vpack.c.b16 %v2637, %v2633
    %v3266 = vpack.c.b16 %v2638, %v2634
    %v3267 = vpack.c.b16 %v2643, %v2639
    %v3268 = vpack.c.b16 %v2644, %v2640
    %v3269 = vpack.c.b16 %v2645, %v2641
    %v3270 = vpack.c.b16 %v2646, %v2642
    %v3271 = vpack.c.b16 %v2651, %v2647
    %v3272 = vpack.c.b16 %v2652, %v2648
    %v3273 = vpack.c.b16 %v2653, %v2649
    %v3274 = vpack.c.b16 %v2654, %v2650
    %v3275 = vpack.c.b16 %v2659, %v2655
    %v3276 = vpack.c.b16 %v2660, %v2656
    %v3277 = vpack.c.b16 %v2661, %v2657
    %v3278 = vpack.c.b16 %v2662, %v2658
    %v3279 = vpack.c.b16 %v2667, %v2663
    %v3280 = vpack.c.b16 %v2668, %v2664
    %v3281 = vpack.c.b16 %v2669, %v2665
    %v3282 = vpack.c.b16 %v2670, %v2666
    %v3283 = vpack.c.b16 %v2675, %v2671
    %v3284 = vpack.c.b16 %v2676, %v2672
    %v3285 = vpack.c.b16 %v2677, %v2673
    %v3286 = vpack.c.b16 %v2678, %v2674
    %v3287 = vpack.c.b16 %v2683, %v2679
    %v3288 = vpack.c.b16 %v2684, %v2680
    %v3289 = vpack.c.b16 %v2685, %v2681
    %v3290 = vpack.c.b16 %v2686, %v2682
    %v3291 = vpack.c.b16 %v2691, %v2687
    %v3292 = vpack.c.b16 %v2692, %v2688
    %v3293 = vpack.c.b16 %v2693, %v2689
    %v3294 = vpack.c.b16 %v2694, %v2690
    %v3295 = vpack.c.b16 %v2699, %v2695
    %v3296 = vpack.c.b16 %v2700, %v2696
    %v3297 = vpack.c.b16 %v2701, %v2697
    %v3298 = vpack.c.b16 %v2702, %v2698
    %v3299 = vpack.c.b16 %v2707, %v2703
    %v3300 = vpack.c.b16 %v2708, %v2704
    %v3301 = vpack.c.b16 %v2709, %v2705
    %v3302 = vpack.c.b16 %v2710, %v2706
    %v3303 = vpack.c.b16 %v2715, %v2711
    %v3304 = vpack.c.b16 %v2716, %v2712
    %v3305 = vpack.c.b16 %v2717, %v2713
    %v3306 = vpack.c.b16 %v2718, %v2714
    %vm3895 = vcmask 392192
    %v3897 = vsel %vm3895, %v287, 0
    %v3900 = vsel %vm3895, %v306, 0
    %v3903 = vsel %vm3895, %v325, 0
    %v3906 = vsel %vm3895, %v344, 0
    %3908 = vmatprep.subr.bf16.mxu0 %v2720
    %3909 = vmatpush1.bf16.msra.mxu0 %v2719
    %3910 = vmatprep.subr.bf16.mxu0 %v2724
    %3911 = vmatpush1.bf16.msra.mxu0 %v2723
    %3912 = vmatprep.subr.bf16.mxu0 %v2728
    %3913 = vmatpush1.bf16.msra.mxu0 %v2727
    %3914 = vmatprep.subr.bf16.mxu0 %v2732
    %3915 = vmatpush1.bf16.msra.mxu0 %v2731
    %3916 = vmatprep.subr.bf16.mxu0 %v2736
    %3917 = vmatpush1.bf16.msra.mxu0 %v2735
    %3918 = vmatprep.subr.bf16.mxu0 %v2740
    %3919 = vmatpush1.bf16.msra.mxu0 %v2739
    %3920 = vmatprep.subr.bf16.mxu0 %v2744
    %3921 = vmatpush1.bf16.msra.mxu0 %v2743
    %3922 = vmatprep.subr.bf16.mxu0 %v2748
    %3923 = vmatpush1.bf16.msra.mxu0 %v2747
    %3924 = vmatprep.subr.bf16.mxu0 %v2752
    %3925 = vmatpush1.bf16.msra.mxu0 %v2751
    %3926 = vmatprep.subr.bf16.mxu0 %v2756
    %3927 = vmatpush1.bf16.msra.mxu0 %v2755
    %3928 = vmatprep.subr.bf16.mxu0 %v2760
    %3929 = vmatpush1.bf16.msra.mxu0 %v2759
    %3930 = vmatprep.subr.bf16.mxu0 %v2764
    %3931 = vmatpush1.bf16.msra.mxu0 %v2763
    %3932 = vmatprep.subr.bf16.mxu0 %v2768
    %3933 = vmatpush1.bf16.msra.mxu0 %v2767
    %3934 = vmatprep.subr.bf16.mxu0 %v2772
    %3935 = vmatpush1.bf16.msra.mxu0 %v2771
    %3936 = vmatprep.subr.bf16.mxu0 %v2776
    %3937 = vmatpush1.bf16.msra.mxu0 %v2775
    %3938 = vmatprep.subr.bf16.mxu0 %v2780
    %3939 = vmatpush1.bf16.msra.mxu0 %v2779
    %3940 = vmatprep.mubr.bf16.mxu0 %v270
    %3941 = vmatmul.mubr.bf16.gmra.mrb[0].mxu0 %v269
    %v3942 = vpop.f32.mrb[0].mxu0
    %v3943 = vadd.f32 %v938, %v3942
    %v3944 = vpop.f32.mrb[0].mxu0
    %v3945 = vadd.f32 %v942, %v3944
    %v3946 = vpop.f32.mrb[0].mxu0
    %v3947 = vadd.f32 %v938, %v3946
    %v3948 = vpop.f32.mrb[0].mxu0
    %v3949 = vadd.f32 %v942, %v3948
    %3950 = vmatprep.mubr.bf16.mxu0 %v289
    %3951 = vmatmul.mubr.bf16.gmra.mrb[0].mxu0 %v288
    %v3952 = vpop.f32.mrb[0].mxu0
    %v3953 = vadd.f32 %v938, %v3952
    %v3954 = vpop.f32.mrb[0].mxu0
    %v3955 = vadd.f32 %v942, %v3954
    %v3956 = vpop.f32.mrb[0].mxu0
    %v3957 = vadd.f32 %v938, %v3956
    %v3958 = vpop.f32.mrb[0].mxu0
    %v3959 = vadd.f32 %v942, %v3958
    %3960 = vmatprep.mubr.bf16.mxu0 %v308
    %3961 = vmatmul.mubr.bf16.gmra.mrb[0].mxu0 %v307
    %v3962 = vpop.f32.mrb[0].mxu0
    %v3963 = vadd.f32 %v938, %v3962
    %v3964 = vpop.f32.mrb[0].mxu0
    %v3965 = vadd.f32 %v942, %v3964
    %v3966 = vpop.f32.mrb[0].mxu0
    %v3967 = vadd.f32 %v938, %v3966
    %v3968 = vpop.f32.mrb[0].mxu0
    %v3969 = vadd.f32 %v942, %v3968
    %3970 = vmatprep.mubr.bf16.mxu0 %v327
    %3971 = vmatmul.mubr.bf16.gmra.mrb[0].mxu0 %v326
    %v3972 = vpop.f32.mrb[0].mxu0
    %v3973 = vadd.f32 %v938, %v3972
    %v3974 = vpop.f32.mrb[0].mxu0
    %v3975 = vadd.f32 %v942, %v3974
    %v3976 = vpop.f32.mrb[0].mxu0
    %v3977 = vadd.f32 %v938, %v3976
    %v3978 = vpop.f32.mrb[0].mxu0
    %v3979 = vadd.f32 %v942, %v3978
    %3980 = vdwg.mxu0
    %3981 = vmatprep.subr.bf16.mxu0 %v2784
    %3982 = vmatpush1.bf16.msra.mxu0 %v2783
    %3983 = vmatprep.subr.bf16.mxu0 %v2788
    %3984 = vmatpush1.bf16.msra.mxu0 %v2787
    %3985 = vmatprep.subr.bf16.mxu0 %v2792
    %3986 = vmatpush1.bf16.msra.mxu0 %v2791
    %3987 = vmatprep.subr.bf16.mxu0 %v2796
    %3988 = vmatpush1.bf16.msra.mxu0 %v2795
    %3989 = vmatprep.subr.bf16.mxu0 %v2800
    %3990 = vmatpush1.bf16.msra.mxu0 %v2799
    %3991 = vmatprep.subr.bf16.mxu0 %v2804
    %3992 = vmatpush1.bf16.msra.mxu0 %v2803
    %3993 = vmatprep.subr.bf16.mxu0 %v2808
    %3994 = vmatpush1.bf16.msra.mxu0 %v2807
    %3995 = vmatprep.subr.bf16.mxu0 %v2812
    %3996 = vmatpush1.bf16.msra.mxu0 %v2811
    %3997 = vmatprep.subr.bf16.mxu0 %v2816
    %3998 = vmatpush1.bf16.msra.mxu0 %v2815
    %3999 = vmatprep.subr.bf16.mxu0 %v2820
    %4000 = vmatpush1.bf16.msra.mxu0 %v2819
    %4001 = vmatprep.subr.bf16.mxu0 %v2824
    %4002 = vmatpush1.bf16.msra.mxu0 %v2823
    %4003 = vmatprep.subr.bf16.mxu0 %v2828
    %4004 = vmatpush1.bf16.msra.mxu0 %v2827
    %4005 = vmatprep.subr.bf16.mxu0 %v2832
    %4006 = vmatpush1.bf16.msra.mxu0 %v2831
    %4007 = vmatprep.subr.bf16.mxu0 %v2836
    %4008 = vmatpush1.bf16.msra.mxu0 %v2835
    %4009 = vmatprep.subr.bf16.mxu0 %v2840
    %4010 = vmatpush1.bf16.msra.mxu0 %v2839
    %4011 = vmatprep.subr.bf16.mxu0 %v2844
    %4012 = vmatpush1.bf16.msra.mxu0 %v2843
    %4013 = vmatprep.mubr.bf16.mxu0 %v272
    %4014 = vmatmul.mubr.bf16.gmra.mrb[0].mxu0 %v271
    %v4015 = vpop.f32.mrb[0].mxu0
    %v4016 = vadd.f32 %v3943, %v4015
    %v4017 = vpop.f32.mrb[0].mxu0
    %v4018 = vadd.f32 %v3945, %v4017
    %v4019 = vpop.f32.mrb[0].mxu0
    %v4020 = vadd.f32 %v3947, %v4019
    %v4021 = vpop.f32.mrb[0].mxu0
    %v4022 = vadd.f32 %v3949, %v4021
    %4023 = vmatprep.mubr.bf16.mxu0 %v291
    %4024 = vmatmul.mubr.bf16.gmra.mrb[0].mxu0 %v290
    %v4025 = vpop.f32.mrb[0].mxu0
    %v4026 = vadd.f32 %v3953, %v4025
    %v4027 = vpop.f32.mrb[0].mxu0
    %v4028 = vadd.f32 %v3955, %v4027
    %v4029 = vpop.f32.mrb[0].mxu0
    %v4030 = vadd.f32 %v3957, %v4029
    %v4031 = vpop.f32.mrb[0].mxu0
    %v4032 = vadd.f32 %v3959, %v4031
    %4033 = vmatprep.mubr.bf16.mxu0 %v310
    %4034 = vmatmul.mubr.bf16.gmra.mrb[0].mxu0 %v309
    %v4035 = vpop.f32.mrb[0].mxu0
    %v4036 = vadd.f32 %v3963, %v4035
    %v4037 = vpop.f32.mrb[0].mxu0
    %v4038 = vadd.f32 %v3965, %v4037
    %v4039 = vpop.f32.mrb[0].mxu0
    %v4040 = vadd.f32 %v3967, %v4039
    %v4041 = vpop.f32.mrb[0].mxu0
    %v4042 = vadd.f32 %v3969, %v4041
    %4043 = vmatprep.mubr.bf16.mxu0 %v329
    %4044 = vmatmul.mubr.bf16.gmra.mrb[0].mxu0 %v328
    %v4045 = vpop.f32.mrb[0].mxu0
    %v4046 = vadd.f32 %v3973, %v4045
    %v4047 = vpop.f32.mrb[0].mxu0
    %v4048 = vadd.f32 %v3975, %v4047
    %v4049 = vpop.f32.mrb[0].mxu0
    %v4050 = vadd.f32 %v3977, %v4049
    %v4051 = vpop.f32.mrb[0].mxu0
    %v4052 = vadd.f32 %v3979, %v4051
    %4053 = vdwg.mxu0
    %4054 = vmatprep.subr.bf16.mxu0 %v2848
    %4055 = vmatpush1.bf16.msra.mxu0 %v2847
    %4056 = vmatprep.subr.bf16.mxu0 %v2852
    %4057 = vmatpush1.bf16.msra.mxu0 %v2851
    %4058 = vmatprep.subr.bf16.mxu0 %v2856
    %4059 = vmatpush1.bf16.msra.mxu0 %v2855
    %4060 = vmatprep.subr.bf16.mxu0 %v2860
    %4061 = vmatpush1.bf16.msra.mxu0 %v2859
    %4062 = vmatprep.subr.bf16.mxu0 %v2864
    %4063 = vmatpush1.bf16.msra.mxu0 %v2863
    %4064 = vmatprep.subr.bf16.mxu0 %v2868
    %4065 = vmatpush1.bf16.msra.mxu0 %v2867
    %4066 = vmatprep.subr.bf16.mxu0 %v2872
    %4067 = vmatpush1.bf16.msra.mxu0 %v2871
    %4068 = vmatprep.subr.bf16.mxu0 %v2876
    %4069 = vmatpush1.bf16.msra.mxu0 %v2875
    %4070 = vmatprep.subr.bf16.mxu0 %v2880
    %4071 = vmatpush1.bf16.msra.mxu0 %v2879
    %4072 = vmatprep.subr.bf16.mxu0 %v2884
    %4073 = vmatpush1.bf16.msra.mxu0 %v2883
    %4074 = vmatprep.subr.bf16.mxu0 %v2888
    %4075 = vmatpush1.bf16.msra.mxu0 %v2887
    %4076 = vmatprep.subr.bf16.mxu0 %v2892
    %4077 = vmatpush1.bf16.msra.mxu0 %v2891
    %4078 = vmatprep.subr.bf16.mxu0 %v2896
    %4079 = vmatpush1.bf16.msra.mxu0 %v2895
    %4080 = vmatprep.subr.bf16.mxu0 %v2900
    %4081 = vmatpush1.bf16.msra.mxu0 %v2899
    %4082 = vmatprep.subr.bf16.mxu0 %v2904
    %4083 = vmatpush1.bf16.msra.mxu0 %v2903
    %4084 = vmatprep.subr.bf16.mxu0 %v2908
    %4085 = vmatpush1.bf16.msra.mxu0 %v2907
    %4086 = vmatprep.mubr.bf16.mxu0 %v274
    %4087 = vmatmul.mubr.bf16.gmra.mrb[0].mxu0 %v273
    %v4088 = vpop.f32.mrb[0].mxu0
    %v4089 = vadd.f32 %v4016, %v4088
    %v4090 = vpop.f32.mrb[0].mxu0
    %v4091 = vadd.f32 %v4018, %v4090
    %v4092 = vpop.f32.mrb[0].mxu0
    %v4093 = vadd.f32 %v4020, %v4092
    %v4094 = vpop.f32.mrb[0].mxu0
    %v4095 = vadd.f32 %v4022, %v4094
    %4096 = vmatprep.mubr.bf16.mxu0 %v293
    %4097 = vmatmul.mubr.bf16.gmra.mrb[0].mxu0 %v292
    %v4098 = vpop.f32.mrb[0].mxu0
    %v4099 = vadd.f32 %v4026, %v4098
    %v4100 = vpop.f32.mrb[0].mxu0
    %v4101 = vadd.f32 %v4028, %v4100
    %v4102 = vpop.f32.mrb[0].mxu0
    %v4103 = vadd.f32 %v4030, %v4102
    %v4104 = vpop.f32.mrb[0].mxu0
    %v4105 = vadd.f32 %v4032, %v4104
    %4106 = vmatprep.mubr.bf16.mxu0 %v312
    %4107 = vmatmul.mubr.bf16.gmra.mrb[0].mxu0 %v311
    %v4108 = vpop.f32.mrb[0].mxu0
    %v4109 = vadd.f32 %v4036, %v4108
    %v4110 = vpop.f32.mrb[0].mxu0
    %v4111 = vadd.f32 %v4038, %v4110
    %v4112 = vpop.f32.mrb[0].mxu0
    %v4113 = vadd.f32 %v4040, %v4112
    %v4114 = vpop.f32.mrb[0].mxu0
    %v4115 = vadd.f32 %v4042, %v4114
    %4116 = vmatprep.mubr.bf16.mxu0 %v331
    %4117 = vmatmul.mubr.bf16.gmra.mrb[0].mxu0 %v330
    %v4118 = vpop.f32.mrb[0].mxu0
    %v4119 = vadd.f32 %v4046, %v4118
    %v4120 = vpop.f32.mrb[0].mxu0
    %v4121 = vadd.f32 %v4048, %v4120
    %v4122 = vpop.f32.mrb[0].mxu0
    %v4123 = vadd.f32 %v4050, %v4122
    %v4124 = vpop.f32.mrb[0].mxu0
    %v4125 = vadd.f32 %v4052, %v4124
    %4126 = vdwg.mxu0
    %4127 = vmatprep.subr.bf16.mxu0 %v2912
    %4128 = vmatpush1.bf16.msra.mxu0 %v2911
    %4129 = vmatprep.subr.bf16.mxu0 %v2916
    %4130 = vmatpush1.bf16.msra.mxu0 %v2915
    %4131 = vmatprep.subr.bf16.mxu0 %v2920
    %4132 = vmatpush1.bf16.msra.mxu0 %v2919
    %4133 = vmatprep.subr.bf16.mxu0 %v2924
    %4134 = vmatpush1.bf16.msra.mxu0 %v2923
    %4135 = vmatprep.subr.bf16.mxu0 %v2928
    %4136 = vmatpush1.bf16.msra.mxu0 %v2927
    %4137 = vmatprep.subr.bf16.mxu0 %v2932
    %4138 = vmatpush1.bf16.msra.mxu0 %v2931
    %4139 = vmatprep.subr.bf16.mxu0 %v2936
    %4140 = vmatpush1.bf16.msra.mxu0 %v2935
    %4141 = vmatprep.subr.bf16.mxu0 %v2940
    %4142 = vmatpush1.bf16.msra.mxu0 %v2939
    %4143 = vmatprep.subr.bf16.mxu0 %v2944
    %4144 = vmatpush1.bf16.msra.mxu0 %v2943
    %4145 = vmatprep.subr.bf16.mxu0 %v2948
    %4146 = vmatpush1.bf16.msra.mxu0 %v2947
    %4147 = vmatprep.subr.bf16.mxu0 %v2952
    %4148 = vmatpush1.bf16.msra.mxu0 %v2951
    %4149 = vmatprep.subr.bf16.mxu0 %v2956
    %4150 = vmatpush1.bf16.msra.mxu0 %v2955
    %4151 = vmatprep.subr.bf16.mxu0 %v2960
    %4152 = vmatpush1.bf16.msra.mxu0 %v2959
    %4153 = vmatprep.subr.bf16.mxu0 %v2964
    %4154 = vmatpush1.bf16.msra.mxu0 %v2963
    %4155 = vmatprep.subr.bf16.mxu0 %v2968
    %4156 = vmatpush1.bf16.msra.mxu0 %v2967
    %4157 = vmatprep.subr.bf16.mxu0 %v2972
    %4158 = vmatpush1.bf16.msra.mxu0 %v2971
    %4159 = vmatprep.mubr.bf16.mxu0 %v276
    %4160 = vmatmul.mubr.bf16.gmra.mrb[0].mxu0 %v275
    %v4161 = vpop.f32.mrb[0].mxu0
    %v4162 = vadd.f32 %v4089, %v4161
    %v4163 = vpop.f32.mrb[0].mxu0
    %v4164 = vadd.f32 %v4091, %v4163
    %v4165 = vpop.f32.mrb[0].mxu0
    %v4166 = vadd.f32 %v4093, %v4165
    %v4167 = vpop.f32.mrb[0].mxu0
    %v4168 = vadd.f32 %v4095, %v4167
    %4169 = vmatprep.mubr.bf16.mxu0 %v295
    %4170 = vmatmul.mubr.bf16.gmra.mrb[0].mxu0 %v294
    %v4171 = vpop.f32.mrb[0].mxu0
    %v4172 = vadd.f32 %v4099, %v4171
    %v4173 = vpop.f32.mrb[0].mxu0
    %v4174 = vadd.f32 %v4101, %v4173
    %v4175 = vpop.f32.mrb[0].mxu0
    %v4176 = vadd.f32 %v4103, %v4175
    %v4177 = vpop.f32.mrb[0].mxu0
    %v4178 = vadd.f32 %v4105, %v4177
    %4179 = vmatprep.mubr.bf16.mxu0 %v314
    %4180 = vmatmul.mubr.bf16.gmra.mrb[0].mxu0 %v313
    %v4181 = vpop.f32.mrb[0].mxu0
    %v4182 = vadd.f32 %v4109, %v4181
    %v4183 = vpop.f32.mrb[0].mxu0
    %v4184 = vadd.f32 %v4111, %v4183
    %v4185 = vpop.f32.mrb[0].mxu0
    %v4186 = vadd.f32 %v4113, %v4185
    %v4187 = vpop.f32.mrb[0].mxu0
    %v4188 = vadd.f32 %v4115, %v4187
    %4189 = vmatprep.mubr.bf16.mxu0 %v333
    %4190 = vmatmul.mubr.bf16.gmra.mrb[0].mxu0 %v332
    %v4191 = vpop.f32.mrb[0].mxu0
    %v4192 = vadd.f32 %v4119, %v4191
    %v4193 = vpop.f32.mrb[0].mxu0
    %v4194 = vadd.f32 %v4121, %v4193
    %v4195 = vpop.f32.mrb[0].mxu0
    %v4196 = vadd.f32 %v4123, %v4195
    %v4197 = vpop.f32.mrb[0].mxu0
    %v4198 = vadd.f32 %v4125, %v4197
    %4199 = vdwg.mxu0
    %4200 = vmatprep.subr.bf16.mxu0 %v2976
    %4201 = vmatpush1.bf16.msra.mxu0 %v2975
    %4202 = vmatprep.subr.bf16.mxu0 %v2980
    %4203 = vmatpush1.bf16.msra.mxu0 %v2979
    %4204 = vmatprep.subr.bf16.mxu0 %v2984
    %4205 = vmatpush1.bf16.msra.mxu0 %v2983
    %4206 = vmatprep.subr.bf16.mxu0 %v2988
    %4207 = vmatpush1.bf16.msra.mxu0 %v2987
    %4208 = vmatprep.subr.bf16.mxu0 %v2992
    %4209 = vmatpush1.bf16.msra.mxu0 %v2991
    %4210 = vmatprep.subr.bf16.mxu0 %v2996
    %4211 = vmatpush1.bf16.msra.mxu0 %v2995
    %4212 = vmatprep.subr.bf16.mxu0 %v3000
    %4213 = vmatpush1.bf16.msra.mxu0 %v2999
    %4214 = vmatprep.subr.bf16.mxu0 %v3004
    %4215 = vmatpush1.bf16.msra.mxu0 %v3003
    %4216 = vmatprep.subr.bf16.mxu0 %v3008
    %4217 = vmatpush1.bf16.msra.mxu0 %v3007
    %4218 = vmatprep.subr.bf16.mxu0 %v3012
    %4219 = vmatpush1.bf16.msra.mxu0 %v3011
    %4220 = vmatprep.subr.bf16.mxu0 %v3016
    %4221 = vmatpush1.bf16.msra.mxu0 %v3015
    %4222 = vmatprep.subr.bf16.mxu0 %v3020
    %4223 = vmatpush1.bf16.msra.mxu0 %v3019
    %4224 = vmatprep.subr.bf16.mxu0 %v3024
    %4225 = vmatpush1.bf16.msra.mxu0 %v3023
    %4226 = vmatprep.subr.bf16.mxu0 %v3028
    %4227 = vmatpush1.bf16.msra.mxu0 %v3027
    %4228 = vmatprep.subr.bf16.mxu0 %v3032
    %4229 = vmatpush1.bf16.msra.mxu0 %v3031
    %4230 = vmatprep.subr.bf16.mxu0 %v3036
    %4231 = vmatpush1.bf16.msra.mxu0 %v3035
    %4232 = vmatprep.mubr.bf16.mxu0 %v278
    %4233 = vmatmul.mubr.bf16.gmra.mrb[0].mxu0 %v277
    %v4234 = vpop.f32.mrb[0].mxu0
    %v4235 = vadd.f32 %v4162, %v4234
    %v4236 = vpop.f32.mrb[0].mxu0
    %v4237 = vadd.f32 %v4164, %v4236
    %v4238 = vpop.f32.mrb[0].mxu0
    %v4239 = vadd.f32 %v4166, %v4238
    %v4240 = vpop.f32.mrb[0].mxu0
    %v4241 = vadd.f32 %v4168, %v4240
    %4242 = vmatprep.mubr.bf16.mxu0 %v297
    %4243 = vmatmul.mubr.bf16.gmra.mrb[0].mxu0 %v296
    %v4244 = vpop.f32.mrb[0].mxu0
    %v4245 = vadd.f32 %v4172, %v4244
    %v4246 = vpop.f32.mrb[0].mxu0
    %v4247 = vadd.f32 %v4174, %v4246
    %v4248 = vpop.f32.mrb[0].mxu0
    %v4249 = vadd.f32 %v4176, %v4248
    %v4250 = vpop.f32.mrb[0].mxu0
    %v4251 = vadd.f32 %v4178, %v4250
    %4252 = vmatprep.mubr.bf16.mxu0 %v316
    %4253 = vmatmul.mubr.bf16.gmra.mrb[0].mxu0 %v315
    %v4254 = vpop.f32.mrb[0].mxu0
    %v4255 = vadd.f32 %v4182, %v4254
    %v4256 = vpop.f32.mrb[0].mxu0
    %v4257 = vadd.f32 %v4184, %v4256
    %v4258 = vpop.f32.mrb[0].mxu0
    %v4259 = vadd.f32 %v4186, %v4258
    %v4260 = vpop.f32.mrb[0].mxu0
    %v4261 = vadd.f32 %v4188, %v4260
    %4262 = vmatprep.mubr.bf16.mxu0 %v335
    %4263 = vmatmul.mubr.bf16.gmra.mrb[0].mxu0 %v334
    %v4264 = vpop.f32.mrb[0].mxu0
    %v4265 = vadd.f32 %v4192, %v4264
    %v4266 = vpop.f32.mrb[0].mxu0
    %v4267 = vadd.f32 %v4194, %v4266
    %v4268 = vpop.f32.mrb[0].mxu0
    %v4269 = vadd.f32 %v4196, %v4268
    %v4270 = vpop.f32.mrb[0].mxu0
    %v4271 = vadd.f32 %v4198, %v4270
    %4272 = vdwg.mxu0
    %4273 = vmatprep.subr.bf16.mxu0 %v3040
    %4274 = vmatpush1.bf16.msra.mxu0 %v3039
    %4275 = vmatprep.subr.bf16.mxu0 %v3044
    %4276 = vmatpush1.bf16.msra.mxu0 %v3043
    %4277 = vmatprep.subr.bf16.mxu0 %v3048
    %4278 = vmatpush1.bf16.msra.mxu0 %v3047
    %4279 = vmatprep.subr.bf16.mxu0 %v3052
    %4280 = vmatpush1.bf16.msra.mxu0 %v3051
    %4281 = vmatprep.subr.bf16.mxu0 %v3056
    %4282 = vmatpush1.bf16.msra.mxu0 %v3055
    %4283 = vmatprep.subr.bf16.mxu0 %v3060
    %4284 = vmatpush1.bf16.msra.mxu0 %v3059
    %4285 = vmatprep.subr.bf16.mxu0 %v3064
    %4286 = vmatpush1.bf16.msra.mxu0 %v3063
    %4287 = vmatprep.subr.bf16.mxu0 %v3068
    %4288 = vmatpush1.bf16.msra.mxu0 %v3067
    %4289 = vmatprep.subr.bf16.mxu0 %v3072
    %4290 = vmatpush1.bf16.msra.mxu0 %v3071
    %4291 = vmatprep.subr.bf16.mxu0 %v3076
    %4292 = vmatpush1.bf16.msra.mxu0 %v3075
    %4293 = vmatprep.subr.bf16.mxu0 %v3080
    %4294 = vmatpush1.bf16.msra.mxu0 %v3079
    %4295 = vmatprep.subr.bf16.mxu0 %v3084
    %4296 = vmatpush1.bf16.msra.mxu0 %v3083
    %4297 = vmatprep.subr.bf16.mxu0 %v3088
    %4298 = vmatpush1.bf16.msra.mxu0 %v3087
    %4299 = vmatprep.subr.bf16.mxu0 %v3092
    %4300 = vmatpush1.bf16.msra.mxu0 %v3091
    %4301 = vmatprep.subr.bf16.mxu0 %v3096
    %4302 = vmatpush1.bf16.msra.mxu0 %v3095
    %4303 = vmatprep.subr.bf16.mxu0 %v3100
    %4304 = vmatpush1.bf16.msra.mxu0 %v3099
    %4305 = vmatprep.mubr.bf16.mxu0 %v280
    %4306 = vmatmul.mubr.bf16.gmra.mrb[0].mxu0 %v279
    %v4307 = vpop.f32.mrb[0].mxu0
    %v4308 = vadd.f32 %v4235, %v4307
    %v4309 = vpop.f32.mrb[0].mxu0
    %v4310 = vadd.f32 %v4237, %v4309
    %v4311 = vpop.f32.mrb[0].mxu0
    %v4312 = vadd.f32 %v4239, %v4311
    %v4313 = vpop.f32.mrb[0].mxu0
    %v4314 = vadd.f32 %v4241, %v4313
    %4315 = vmatprep.mubr.bf16.mxu0 %v299
    %4316 = vmatmul.mubr.bf16.gmra.mrb[0].mxu0 %v298
    %v4317 = vpop.f32.mrb[0].mxu0
    %v4318 = vadd.f32 %v4245, %v4317
    %v4319 = vpop.f32.mrb[0].mxu0
    %v4320 = vadd.f32 %v4247, %v4319
    %v4321 = vpop.f32.mrb[0].mxu0
    %v4322 = vadd.f32 %v4249, %v4321
    %v4323 = vpop.f32.mrb[0].mxu0
    %v4324 = vadd.f32 %v4251, %v4323
    %4325 = vmatprep.mubr.bf16.mxu0 %v318
    %4326 = vmatmul.mubr.bf16.gmra.mrb[0].mxu0 %v317
    %v4327 = vpop.f32.mrb[0].mxu0
    %v4328 = vadd.f32 %v4255, %v4327
    %v4329 = vpop.f32.mrb[0].mxu0
    %v4330 = vadd.f32 %v4257, %v4329
    %v4331 = vpop.f32.mrb[0].mxu0
    %v4332 = vadd.f32 %v4259, %v4331
    %v4333 = vpop.f32.mrb[0].mxu0
    %v4334 = vadd.f32 %v4261, %v4333
    %4335 = vmatprep.mubr.bf16.mxu0 %v337
    %4336 = vmatmul.mubr.bf16.gmra.mrb[0].mxu0 %v336
    %v4337 = vpop.f32.mrb[0].mxu0
    %v4338 = vadd.f32 %v4265, %v4337
    %v4339 = vpop.f32.mrb[0].mxu0
    %v4340 = vadd.f32 %v4267, %v4339
    %v4341 = vpop.f32.mrb[0].mxu0
    %v4342 = vadd.f32 %v4269, %v4341
    %v4343 = vpop.f32.mrb[0].mxu0
    %v4344 = vadd.f32 %v4271, %v4343
    %4345 = vdwg.mxu0
    %4346 = vmatprep.subr.bf16.mxu0 %v3104
    %4347 = vmatpush1.bf16.msra.mxu0 %v3103
    %4348 = vmatprep.subr.bf16.mxu0 %v3108
    %4349 = vmatpush1.bf16.msra.mxu0 %v3107
    %4350 = vmatprep.subr.bf16.mxu0 %v3112
    %4351 = vmatpush1.bf16.msra.mxu0 %v3111
    %4352 = vmatprep.subr.bf16.mxu0 %v3116
    %4353 = vmatpush1.bf16.msra.mxu0 %v3115
    %4354 = vmatprep.subr.bf16.mxu0 %v3120
    %4355 = vmatpush1.bf16.msra.mxu0 %v3119
    %4356 = vmatprep.subr.bf16.mxu0 %v3124
    %4357 = vmatpush1.bf16.msra.mxu0 %v3123
    %4358 = vmatprep.subr.bf16.mxu0 %v3128
    %4359 = vmatpush1.bf16.msra.mxu0 %v3127
    %4360 = vmatprep.subr.bf16.mxu0 %v3132
    %4361 = vmatpush1.bf16.msra.mxu0 %v3131
    %4362 = vmatprep.subr.bf16.mxu0 %v3136
    %4363 = vmatpush1.bf16.msra.mxu0 %v3135
    %4364 = vmatprep.subr.bf16.mxu0 %v3140
    %4365 = vmatpush1.bf16.msra.mxu0 %v3139
    %4366 = vmatprep.subr.bf16.mxu0 %v3144
    %4367 = vmatpush1.bf16.msra.mxu0 %v3143
    %4368 = vmatprep.subr.bf16.mxu0 %v3148
    %4369 = vmatpush1.bf16.msra.mxu0 %v3147
    %4370 = vmatprep.subr.bf16.mxu0 %v3152
    %4371 = vmatpush1.bf16.msra.mxu0 %v3151
    %4372 = vmatprep.subr.bf16.mxu0 %v3156
    %4373 = vmatpush1.bf16.msra.mxu0 %v3155
    %4374 = vmatprep.subr.bf16.mxu0 %v3160
    %4375 = vmatpush1.bf16.msra.mxu0 %v3159
    %4376 = vmatprep.subr.bf16.mxu0 %v3164
    %4377 = vmatpush1.bf16.msra.mxu0 %v3163
    %4378 = vmatprep.mubr.bf16.mxu0 %v282
    %4379 = vmatmul.mubr.bf16.gmra.mrb[0].mxu0 %v281
    %v4380 = vpop.f32.mrb[0].mxu0
    %v4381 = vadd.f32 %v4308, %v4380
    %v4382 = vpop.f32.mrb[0].mxu0
    %v4383 = vadd.f32 %v4310, %v4382
    %v4384 = vpop.f32.mrb[0].mxu0
    %v4385 = vadd.f32 %v4312, %v4384
    %v4386 = vpop.f32.mrb[0].mxu0
    %v4387 = vadd.f32 %v4314, %v4386
    %4388 = vmatprep.mubr.bf16.mxu0 %v301
    %4389 = vmatmul.mubr.bf16.gmra.mrb[0].mxu0 %v300
    %v4390 = vpop.f32.mrb[0].mxu0
    %v4391 = vadd.f32 %v4318, %v4390
    %v4392 = vpop.f32.mrb[0].mxu0
    %v4393 = vadd.f32 %v4320, %v4392
    %v4394 = vpop.f32.mrb[0].mxu0
    %v4395 = vadd.f32 %v4322, %v4394
    %v4396 = vpop.f32.mrb[0].mxu0
    %v4397 = vadd.f32 %v4324, %v4396
    %4398 = vmatprep.mubr.bf16.mxu0 %v320
    %4399 = vmatmul.mubr.bf16.gmra.mrb[0].mxu0 %v319
    %v4400 = vpop.f32.mrb[0].mxu0
    %v4401 = vadd.f32 %v4328, %v4400
    %v4402 = vpop.f32.mrb[0].mxu0
    %v4403 = vadd.f32 %v4330, %v4402
    %v4404 = vpop.f32.mrb[0].mxu0
    %v4405 = vadd.f32 %v4332, %v4404
    %v4406 = vpop.f32.mrb[0].mxu0
    %v4407 = vadd.f32 %v4334, %v4406
    %4408 = vmatprep.mubr.bf16.mxu0 %v339
    %4409 = vmatmul.mubr.bf16.gmra.mrb[0].mxu0 %v338
    %v4410 = vpop.f32.mrb[0].mxu0
    %v4411 = vadd.f32 %v4338, %v4410
    %v4412 = vpop.f32.mrb[0].mxu0
    %v4413 = vadd.f32 %v4340, %v4412
    %v4414 = vpop.f32.mrb[0].mxu0
    %v4415 = vadd.f32 %v4342, %v4414
    %v4416 = vpop.f32.mrb[0].mxu0
    %v4417 = vadd.f32 %v4344, %v4416
    %4418 = vdwg.mxu0
    %4419 = vmatprep.subr.bf16.mxu0 %v3168
    %4420 = vmatpush1.bf16.msra.mxu0 %v3167
    %4421 = vmatprep.subr.bf16.mxu0 %v3172
    %4422 = vmatpush1.bf16.msra.mxu0 %v3171
    %4423 = vmatprep.subr.bf16.mxu0 %v3176
    %4424 = vmatpush1.bf16.msra.mxu0 %v3175
    %4425 = vmatprep.subr.bf16.mxu0 %v3180
    %4426 = vmatpush1.bf16.msra.mxu0 %v3179
    %4427 = vmatprep.subr.bf16.mxu0 %v3184
    %4428 = vmatpush1.bf16.msra.mxu0 %v3183
    %4429 = vmatprep.subr.bf16.mxu0 %v3188
    %4430 = vmatpush1.bf16.msra.mxu0 %v3187
    %4431 = vmatprep.subr.bf16.mxu0 %v3192
    %4432 = vmatpush1.bf16.msra.mxu0 %v3191
    %4433 = vmatprep.subr.bf16.mxu0 %v3196
    %4434 = vmatpush1.bf16.msra.mxu0 %v3195
    %4435 = vmatprep.subr.bf16.mxu0 %v3200
    %4436 = vmatpush1.bf16.msra.mxu0 %v3199
    %4437 = vmatprep.subr.bf16.mxu0 %v3204
    %4438 = vmatpush1.bf16.msra.mxu0 %v3203
    %4439 = vmatprep.subr.bf16.mxu0 %v3208
    %4440 = vmatpush1.bf16.msra.mxu0 %v3207
    %4441 = vmatprep.subr.bf16.mxu0 %v3212
    %4442 = vmatpush1.bf16.msra.mxu0 %v3211
    %4443 = vmatprep.subr.bf16.mxu0 %v3216
    %4444 = vmatpush1.bf16.msra.mxu0 %v3215
    %4445 = vmatprep.subr.bf16.mxu0 %v3220
    %4446 = vmatpush1.bf16.msra.mxu0 %v3219
    %4447 = vmatprep.subr.bf16.mxu0 %v3224
    %4448 = vmatpush1.bf16.msra.mxu0 %v3223
    %4449 = vmatprep.subr.bf16.mxu0 %v3228
    %4450 = vmatpush1.bf16.msra.mxu0 %v3227
    %4451 = vmatprep.mubr.bf16.mxu0 %v284
    %4452 = vmatmul.mubr.bf16.gmra.mrb[0].mxu0 %v283
    %v4453 = vpop.f32.mrb[0].mxu0
    %v4454 = vadd.f32 %v4381, %v4453
    %v4455 = vpop.f32.mrb[0].mxu0
    %v4456 = vadd.f32 %v4383, %v4455
    %v4457 = vpop.f32.mrb[0].mxu0
    %v4458 = vadd.f32 %v4385, %v4457
    %v4459 = vpop.f32.mrb[0].mxu0
    %v4460 = vadd.f32 %v4387, %v4459
    %4461 = vmatprep.mubr.bf16.mxu0 %v303
    %4462 = vmatmul.mubr.bf16.gmra.mrb[0].mxu0 %v302
    %v4463 = vpop.f32.mrb[0].mxu0
    %v4464 = vadd.f32 %v4391, %v4463
    %v4465 = vpop.f32.mrb[0].mxu0
    %v4466 = vadd.f32 %v4393, %v4465
    %v4467 = vpop.f32.mrb[0].mxu0
    %v4468 = vadd.f32 %v4395, %v4467
    %v4469 = vpop.f32.mrb[0].mxu0
    %v4470 = vadd.f32 %v4397, %v4469
    %4471 = vmatprep.mubr.bf16.mxu0 %v322
    %4472 = vmatmul.mubr.bf16.gmra.mrb[0].mxu0 %v321
    %v4473 = vpop.f32.mrb[0].mxu0
    %v4474 = vadd.f32 %v4401, %v4473
    %v4475 = vpop.f32.mrb[0].mxu0
    %v4476 = vadd.f32 %v4403, %v4475
    %v4477 = vpop.f32.mrb[0].mxu0
    %v4478 = vadd.f32 %v4405, %v4477
    %v4479 = vpop.f32.mrb[0].mxu0
    %v4480 = vadd.f32 %v4407, %v4479
    %4481 = vmatprep.mubr.bf16.mxu0 %v341
    %4482 = vmatmul.mubr.bf16.gmra.mrb[0].mxu0 %v340
    %v4483 = vpop.f32.mrb[0].mxu0
    %v4484 = vadd.f32 %v4411, %v4483
    %v4485 = vpop.f32.mrb[0].mxu0
    %v4486 = vadd.f32 %v4413, %v4485
    %v4487 = vpop.f32.mrb[0].mxu0
    %v4488 = vadd.f32 %v4415, %v4487
    %v4489 = vpop.f32.mrb[0].mxu0
    %v4490 = vadd.f32 %v4417, %v4489
    %4491 = vdwg.mxu0
    %4492 = vmatprep.subr.bf16.mxu0 %v3232
    %4493 = vmatpush1.bf16.msra.mxu0 %v3231
    %4494 = vmatprep.subr.bf16.mxu0 %v3236
    %4495 = vmatpush1.bf16.msra.mxu0 %v3235
    %4496 = vmatprep.subr.bf16.mxu0 %v3240
    %4497 = vmatpush1.bf16.msra.mxu0 %v3239
    %4498 = vmatprep.subr.bf16.mxu0 %v3244
    %4499 = vmatpush1.bf16.msra.mxu0 %v3243
    %4500 = vmatprep.subr.bf16.mxu0 %v3248
    %4501 = vmatpush1.bf16.msra.mxu0 %v3247
    %4502 = vmatprep.subr.bf16.mxu0 %v3252
    %4503 = vmatpush1.bf16.msra.mxu0 %v3251
    %4504 = vmatprep.subr.bf16.mxu0 %v3256
    %4505 = vmatpush1.bf16.msra.mxu0 %v3255
    %4506 = vmatprep.subr.bf16.mxu0 %v3260
    %4507 = vmatpush1.bf16.msra.mxu0 %v3259
    %4508 = vmatprep.subr.bf16.mxu0 %v3264
    %4509 = vmatpush1.bf16.msra.mxu0 %v3263
    %4510 = vmatprep.subr.bf16.mxu0 %v3268
    %4511 = vmatpush1.bf16.msra.mxu0 %v3267
    %4512 = vmatprep.subr.bf16.mxu0 %v3272
    %4513 = vmatpush1.bf16.msra.mxu0 %v3271
    %4514 = vmatprep.subr.bf16.mxu0 %v3276
    %4515 = vmatpush1.bf16.msra.mxu0 %v3275
    %4516 = vmatprep.subr.bf16.mxu0 %v3280
    %4517 = vmatpush1.bf16.msra.mxu0 %v3279
    %4518 = vmatprep.subr.bf16.mxu0 %v3284
    %4519 = vmatpush1.bf16.msra.mxu0 %v3283
    %4520 = vmatprep.subr.bf16.mxu0 %v3288
    %4521 = vmatpush1.bf16.msra.mxu0 %v3287
    %4522 = vmatprep.subr.bf16.mxu0 %v3292
    %4523 = vmatpush1.bf16.msra.mxu0 %v3291
    %4524 = vmatprep.mubr.bf16.mxu0 %v286
    %4525 = vmatmul.mubr.bf16.gmra.mrb[0].mxu0 %v285
    %v4526 = vpop.f32.mrb[0].mxu0
    %v4527 = vadd.f32 %v4454, %v4526
    %v4528 = vpop.f32.mrb[0].mxu0
    %v4529 = vadd.f32 %v4456, %v4528
    %v4530 = vpop.f32.mrb[0].mxu0
    %v4531 = vadd.f32 %v4458, %v4530
    %v4532 = vpop.f32.mrb[0].mxu0
    %v4533 = vadd.f32 %v4460, %v4532
    %4534 = vmatprep.mubr.bf16.mxu0 %v305
    %4535 = vmatmul.mubr.bf16.gmra.mrb[0].mxu0 %v304
    %v4536 = vpop.f32.mrb[0].mxu0
    %v4537 = vadd.f32 %v4464, %v4536
    %v4538 = vpop.f32.mrb[0].mxu0
    %v4539 = vadd.f32 %v4466, %v4538
    %v4540 = vpop.f32.mrb[0].mxu0
    %v4541 = vadd.f32 %v4468, %v4540
    %v4542 = vpop.f32.mrb[0].mxu0
    %v4543 = vadd.f32 %v4470, %v4542
    %4544 = vmatprep.mubr.bf16.mxu0 %v324
    %4545 = vmatmul.mubr.bf16.gmra.mrb[0].mxu0 %v323
    %v4546 = vpop.f32.mrb[0].mxu0
    %v4547 = vadd.f32 %v4474, %v4546
    %v4548 = vpop.f32.mrb[0].mxu0
    %v4549 = vadd.f32 %v4476, %v4548
    %v4550 = vpop.f32.mrb[0].mxu0
    %v4551 = vadd.f32 %v4478, %v4550
    %v4552 = vpop.f32.mrb[0].mxu0
    %v4553 = vadd.f32 %v4480, %v4552
    %4554 = vmatprep.mubr.bf16.mxu0 %v343
    %4555 = vmatmul.mubr.bf16.gmra.mrb[0].mxu0 %v342
    %v4556 = vpop.f32.mrb[0].mxu0
    %v4557 = vadd.f32 %v4484, %v4556
    %v4558 = vpop.f32.mrb[0].mxu0
    %v4559 = vadd.f32 %v4486, %v4558
    %v4560 = vpop.f32.mrb[0].mxu0
    %v4561 = vadd.f32 %v4488, %v4560
    %v4562 = vpop.f32.mrb[0].mxu0
    %v4563 = vadd.f32 %v4490, %v4562
    %4564 = vdwg.mxu0
    %4565 = vmatprep.subr.bf16.mxu0 %v3296
    %4566 = vmatpush1.bf16.msra.mxu0 %v3295
    %4567 = vmatprep.subr.bf16.mxu0 %v3300
    %4568 = vmatpush1.bf16.msra.mxu0 %v3299
    %4569 = vmatprep.subr.bf16.mxu0 %v3304
    %4570 = vmatpush1.bf16.msra.mxu0 %v3303
    %4571 = vmatprep.subr.bf16.mxu0 0
    %4572 = vmatpush1.bf16.msra.mxu0 0
    %4573 = vmatprep.subr.bf16.mxu0 0
    %4574 = vmatpush1.bf16.msra.mxu0 0
    %4575 = vmatprep.subr.bf16.mxu0 0
    %4576 = vmatpush1.bf16.msra.mxu0 0
    %4577 = vmatprep.subr.bf16.mxu0 0
    %4578 = vmatpush1.bf16.msra.mxu0 0
    %4579 = vmatprep.subr.bf16.mxu0 0
    %4580 = vmatpush1.bf16.msra.mxu0 0
    %4581 = vmatprep.subr.bf16.mxu0 0
    %4582 = vmatpush1.bf16.msra.mxu0 0
    %4583 = vmatprep.subr.bf16.mxu0 0
    %4584 = vmatpush1.bf16.msra.mxu0 0
    %4585 = vmatprep.subr.bf16.mxu0 0
    %4586 = vmatpush1.bf16.msra.mxu0 0
    %4587 = vmatprep.subr.bf16.mxu0 0
    %4588 = vmatpush1.bf16.msra.mxu0 0
    %4589 = vmatprep.subr.bf16.mxu0 0
    %4590 = vmatpush1.bf16.msra.mxu0 0
    %4591 = vmatprep.subr.bf16.mxu0 0
    %4592 = vmatpush1.bf16.msra.mxu0 0
    %4593 = vmatprep.subr.bf16.mxu0 0
    %4594 = vmatpush1.bf16.msra.mxu0 0
    %4595 = vmatprep.subr.bf16.mxu0 0
    %4596 = vmatpush1.bf16.msra.mxu0 0
    %4597 = vmatprep.mubr.bf16.mxu0 0
    %4598 = vmatmul.mubr.bf16.gmra.mrb[0].mxu0 %v3897
    %v4599 = vpop.f32.mrb[0].mxu0
    %v4600 = vadd.f32 %v4527, %v4599
    %v4601 = vpop.f32.mrb[0].mxu0
    %v4602 = vadd.f32 %v4529, %v4601
    %v4603 = vpop.f32.mrb[0].mxu0
    %v4604 = vadd.f32 %v4531, %v4603
    %v4605 = vpop.f32.mrb[0].mxu0
    %v4606 = vadd.f32 %v4533, %v4605
    %4607 = vmatprep.mubr.bf16.mxu0 0
    %4608 = vmatmul.mubr.bf16.gmra.mrb[0].mxu0 %v3900
    %v4609 = vpop.f32.mrb[0].mxu0
    %v4610 = vadd.f32 %v4537, %v4609
    %v4611 = vpop.f32.mrb[0].mxu0
    %v4612 = vadd.f32 %v4539, %v4611
    %v4613 = vpop.f32.mrb[0].mxu0
    %v4614 = vadd.f32 %v4541, %v4613
    %v4615 = vpop.f32.mrb[0].mxu0
    %v4616 = vadd.f32 %v4543, %v4615
    %4617 = vmatprep.mubr.bf16.mxu0 0
    %4618 = vmatmul.mubr.bf16.gmra.mrb[0].mxu0 %v3903
    %v4619 = vpop.f32.mrb[0].mxu0
    %v4620 = vadd.f32 %v4547, %v4619
    %v4621 = vpop.f32.mrb[0].mxu0
    %v4622 = vadd.f32 %v4549, %v4621
    %v4623 = vpop.f32.mrb[0].mxu0
    %v4624 = vadd.f32 %v4551, %v4623
    %v4625 = vpop.f32.mrb[0].mxu0
    %v4626 = vadd.f32 %v4553, %v4625
    %4627 = vmatprep.mubr.bf16.mxu0 0
    %4628 = vmatmul.mubr.bf16.gmra.mrb[0].mxu0 %v3906
    %v4629 = vpop.f32.mrb[0].mxu0
    %v4630 = vadd.f32 %v4557, %v4629
    %v4631 = vpop.f32.mrb[0].mxu0
    %v4632 = vadd.f32 %v4559, %v4631
    %v4633 = vpop.f32.mrb[0].mxu0
    %v4634 = vadd.f32 %v4561, %v4633
    %v4635 = vpop.f32.mrb[0].mxu0
    %v4636 = vadd.f32 %v4563, %v4635
    %4637 = vdwg.mxu0
    %4638 = vmatprep.subr.bf16.mxu0 %v2722
    %4639 = vmatpush1.bf16.msra.mxu0 %v2721
    %4640 = vmatprep.subr.bf16.mxu0 %v2726
    %4641 = vmatpush1.bf16.msra.mxu0 %v2725
    %4642 = vmatprep.subr.bf16.mxu0 %v2730
    %4643 = vmatpush1.bf16.msra.mxu0 %v2729
    %4644 = vmatprep.subr.bf16.mxu0 %v2734
    %4645 = vmatpush1.bf16.msra.mxu0 %v2733
    %4646 = vmatprep.subr.bf16.mxu0 %v2738
    %4647 = vmatpush1.bf16.msra.mxu0 %v2737
    %4648 = vmatprep.subr.bf16.mxu0 %v2742
    %4649 = vmatpush1.bf16.msra.mxu0 %v2741
    %4650 = vmatprep.subr.bf16.mxu0 %v2746
    %4651 = vmatpush1.bf16.msra.mxu0 %v2745
    %4652 = vmatprep.subr.bf16.mxu0 %v2750
    %4653 = vmatpush1.bf16.msra.mxu0 %v2749
    %4654 = vmatprep.subr.bf16.mxu0 %v2754
    %4655 = vmatpush1.bf16.msra.mxu0 %v2753
    %4656 = vmatprep.subr.bf16.mxu0 %v2758
    %4657 = vmatpush1.bf16.msra.mxu0 %v2757
    %4658 = vmatprep.subr.bf16.mxu0 %v2762
    %4659 = vmatpush1.bf16.msra.mxu0 %v2761
    %4660 = vmatprep.subr.bf16.mxu0 %v2766
    %4661 = vmatpush1.bf16.msra.mxu0 %v2765
    %4662 = vmatprep.subr.bf16.mxu0 %v2770
    %4663 = vmatpush1.bf16.msra.mxu0 %v2769
    %4664 = vmatprep.subr.bf16.mxu0 %v2774
    %4665 = vmatpush1.bf16.msra.mxu0 %v2773
    %4666 = vmatprep.subr.bf16.mxu0 %v2778
    %4667 = vmatpush1.bf16.msra.mxu0 %v2777
    %4668 = vmatprep.subr.bf16.mxu0 %v2782
    %4669 = vmatpush1.bf16.msra.mxu0 %v2781
    %4670 = vmatprep.mubr.bf16.mxu0 %v270
    %4671 = vmatmul.mubr.bf16.gmra.mrb[0].mxu0 %v269
    %v4672 = vpop.f32.mrb[0].mxu0
    %v4673 = vadd.f32 %v946, %v4672
    %v4674 = vpop.f32.mrb[0].mxu0
    %v4675 = vadd.f32 %v950, %v4674
    %v4676 = vpop.f32.mrb[0].mxu0
    %v4677 = vadd.f32 %v946, %v4676
    %v4678 = vpop.f32.mrb[0].mxu0
    %v4679 = vadd.f32 %v950, %v4678
    %4680 = vmatprep.mubr.bf16.mxu0 %v289
    %4681 = vmatmul.mubr.bf16.gmra.mrb[0].mxu0 %v288
    %v4682 = vpop.f32.mrb[0].mxu0
    %v4683 = vadd.f32 %v946, %v4682
    %v4684 = vpop.f32.mrb[0].mxu0
    %v4685 = vadd.f32 %v950, %v4684
    %v4686 = vpop.f32.mrb[0].mxu0
    %v4687 = vadd.f32 %v946, %v4686
    %v4688 = vpop.f32.mrb[0].mxu0
    %v4689 = vadd.f32 %v950, %v4688
    %4690 = vmatprep.mubr.bf16.mxu0 %v308
    %4691 = vmatmul.mubr.bf16.gmra.mrb[0].mxu0 %v307
    %v4692 = vpop.f32.mrb[0].mxu0
    %v4693 = vadd.f32 %v946, %v4692
    %v4694 = vpop.f32.mrb[0].mxu0
    %v4695 = vadd.f32 %v950, %v4694
    %v4696 = vpop.f32.mrb[0].mxu0
    %v4697 = vadd.f32 %v946, %v4696
    %v4698 = vpop.f32.mrb[0].mxu0
    %v4699 = vadd.f32 %v950, %v4698
    %4700 = vmatprep.mubr.bf16.mxu0 %v327
    %4701 = vmatmul.mubr.bf16.gmra.mrb[0].mxu0 %v326
    %v4702 = vpop.f32.mrb[0].mxu0
    %v4703 = vadd.f32 %v946, %v4702
    %v4704 = vpop.f32.mrb[0].mxu0
    %v4705 = vadd.f32 %v950, %v4704
    %v4706 = vpop.f32.mrb[0].mxu0
    %v4707 = vadd.f32 %v946, %v4706
    %v4708 = vpop.f32.mrb[0].mxu0
    %v4709 = vadd.f32 %v950, %v4708
    %4710 = vdwg.mxu0
    %4711 = vmatprep.subr.bf16.mxu0 %v2786
    %4712 = vmatpush1.bf16.msra.mxu0 %v2785
    %4713 = vmatprep.subr.bf16.mxu0 %v2790
    %4714 = vmatpush1.bf16.msra.mxu0 %v2789
    %4715 = vmatprep.subr.bf16.mxu0 %v2794
    %4716 = vmatpush1.bf16.msra.mxu0 %v2793
    %4717 = vmatprep.subr.bf16.mxu0 %v2798
    %4718 = vmatpush1.bf16.msra.mxu0 %v2797
    %4719 = vmatprep.subr.bf16.mxu0 %v2802
    %4720 = vmatpush1.bf16.msra.mxu0 %v2801
    %4721 = vmatprep.subr.bf16.mxu0 %v2806
    %4722 = vmatpush1.bf16.msra.mxu0 %v2805
    %4723 = vmatprep.subr.bf16.mxu0 %v2810
    %4724 = vmatpush1.bf16.msra.mxu0 %v2809
    %4725 = vmatprep.subr.bf16.mxu0 %v2814
    %4726 = vmatpush1.bf16.msra.mxu0 %v2813
    %4727 = vmatprep.subr.bf16.mxu0 %v2818
    %4728 = vmatpush1.bf16.msra.mxu0 %v2817
    %4729 = vmatprep.subr.bf16.mxu0 %v2822
    %4730 = vmatpush1.bf16.msra.mxu0 %v2821
    %4731 = vmatprep.subr.bf16.mxu0 %v2826
    %4732 = vmatpush1.bf16.msra.mxu0 %v2825
    %4733 = vmatprep.subr.bf16.mxu0 %v2830
    %4734 = vmatpush1.bf16.msra.mxu0 %v2829
    %4735 = vmatprep.subr.bf16.mxu0 %v2834
    %4736 = vmatpush1.bf16.msra.mxu0 %v2833
    %4737 = vmatprep.subr.bf16.mxu0 %v2838
    %4738 = vmatpush1.bf16.msra.mxu0 %v2837
    %4739 = vmatprep.subr.bf16.mxu0 %v2842
    %4740 = vmatpush1.bf16.msra.mxu0 %v2841
    %4741 = vmatprep.subr.bf16.mxu0 %v2846
    %4742 = vmatpush1.bf16.msra.mxu0 %v2845
    %4743 = vmatprep.mubr.bf16.mxu0 %v272
    %4744 = vmatmul.mubr.bf16.gmra.mrb[0].mxu0 %v271
    %v4745 = vpop.f32.mrb[0].mxu0
    %v4746 = vadd.f32 %v4673, %v4745
    %v4747 = vpop.f32.mrb[0].mxu0
    %v4748 = vadd.f32 %v4675, %v4747
    %v4749 = vpop.f32.mrb[0].mxu0
    %v4750 = vadd.f32 %v4677, %v4749
    %v4751 = vpop.f32.mrb[0].mxu0
    %v4752 = vadd.f32 %v4679, %v4751
    %4753 = vmatprep.mubr.bf16.mxu0 %v291
    %4754 = vmatmul.mubr.bf16.gmra.mrb[0].mxu0 %v290
    %v4755 = vpop.f32.mrb[0].mxu0
    %v4756 = vadd.f32 %v4683, %v4755
    %v4757 = vpop.f32.mrb[0].mxu0
    %v4758 = vadd.f32 %v4685, %v4757
    %v4759 = vpop.f32.mrb[0].mxu0
    %v4760 = vadd.f32 %v4687, %v4759
    %v4761 = vpop.f32.mrb[0].mxu0
    %v4762 = vadd.f32 %v4689, %v4761
    %4763 = vmatprep.mubr.bf16.mxu0 %v310
    %4764 = vmatmul.mubr.bf16.gmra.mrb[0].mxu0 %v309
    %v4765 = vpop.f32.mrb[0].mxu0
    %v4766 = vadd.f32 %v4693, %v4765
    %v4767 = vpop.f32.mrb[0].mxu0
    %v4768 = vadd.f32 %v4695, %v4767
    %v4769 = vpop.f32.mrb[0].mxu0
    %v4770 = vadd.f32 %v4697, %v4769
    %v4771 = vpop.f32.mrb[0].mxu0
    %v4772 = vadd.f32 %v4699, %v4771
    %4773 = vmatprep.mubr.bf16.mxu0 %v329
    %4774 = vmatmul.mubr.bf16.gmra.mrb[0].mxu0 %v328
    %v4775 = vpop.f32.mrb[0].mxu0
    %v4776 = vadd.f32 %v4703, %v4775
    %v4777 = vpop.f32.mrb[0].mxu0
    %v4778 = vadd.f32 %v4705, %v4777
    %v4779 = vpop.f32.mrb[0].mxu0
    %v4780 = vadd.f32 %v4707, %v4779
    %v4781 = vpop.f32.mrb[0].mxu0
    %v4782 = vadd.f32 %v4709, %v4781
    %4783 = vdwg.mxu0
    %4784 = vmatprep.subr.bf16.mxu0 %v2850
    %4785 = vmatpush1.bf16.msra.mxu0 %v2849
    %4786 = vmatprep.subr.bf16.mxu0 %v2854
    %4787 = vmatpush1.bf16.msra.mxu0 %v2853
    %4788 = vmatprep.subr.bf16.mxu0 %v2858
    %4789 = vmatpush1.bf16.msra.mxu0 %v2857
    %4790 = vmatprep.subr.bf16.mxu0 %v2862
    %4791 = vmatpush1.bf16.msra.mxu0 %v2861
    %4792 = vmatprep.subr.bf16.mxu0 %v2866
    %4793 = vmatpush1.bf16.msra.mxu0 %v2865
    %4794 = vmatprep.subr.bf16.mxu0 %v2870
    %4795 = vmatpush1.bf16.msra.mxu0 %v2869
    %4796 = vmatprep.subr.bf16.mxu0 %v2874
    %4797 = vmatpush1.bf16.msra.mxu0 %v2873
    %4798 = vmatprep.subr.bf16.mxu0 %v2878
    %4799 = vmatpush1.bf16.msra.mxu0 %v2877
    %4800 = vmatprep.subr.bf16.mxu0 %v2882
    %4801 = vmatpush1.bf16.msra.mxu0 %v2881
    %4802 = vmatprep.subr.bf16.mxu0 %v2886
    %4803 = vmatpush1.bf16.msra.mxu0 %v2885
    %4804 = vmatprep.subr.bf16.mxu0 %v2890
    %4805 = vmatpush1.bf16.msra.mxu0 %v2889
    %4806 = vmatprep.subr.bf16.mxu0 %v2894
    %4807 = vmatpush1.bf16.msra.mxu0 %v2893
    %4808 = vmatprep.subr.bf16.mxu0 %v2898
    %4809 = vmatpush1.bf16.msra.mxu0 %v2897
    %4810 = vmatprep.subr.bf16.mxu0 %v2902
    %4811 = vmatpush1.bf16.msra.mxu0 %v2901
    %4812 = vmatprep.subr.bf16.mxu0 %v2906
    %4813 = vmatpush1.bf16.msra.mxu0 %v2905
    %4814 = vmatprep.subr.bf16.mxu0 %v2910
    %4815 = vmatpush1.bf16.msra.mxu0 %v2909
    %4816 = vmatprep.mubr.bf16.mxu0 %v274
    %4817 = vmatmul.mubr.bf16.gmra.mrb[0].mxu0 %v273
    %v4818 = vpop.f32.mrb[0].mxu0
    %v4819 = vadd.f32 %v4746, %v4818
    %v4820 = vpop.f32.mrb[0].mxu0
    %v4821 = vadd.f32 %v4748, %v4820
    %v4822 = vpop.f32.mrb[0].mxu0
    %v4823 = vadd.f32 %v4750, %v4822
    %v4824 = vpop.f32.mrb[0].mxu0
    %v4825 = vadd.f32 %v4752, %v4824
    %4826 = vmatprep.mubr.bf16.mxu0 %v293
    %4827 = vmatmul.mubr.bf16.gmra.mrb[0].mxu0 %v292
    %v4828 = vpop.f32.mrb[0].mxu0
    %v4829 = vadd.f32 %v4756, %v4828
    %v4830 = vpop.f32.mrb[0].mxu0
    %v4831 = vadd.f32 %v4758, %v4830
    %v4832 = vpop.f32.mrb[0].mxu0
    %v4833 = vadd.f32 %v4760, %v4832
    %v4834 = vpop.f32.mrb[0].mxu0
    %v4835 = vadd.f32 %v4762, %v4834
    %4836 = vmatprep.mubr.bf16.mxu0 %v312
    %4837 = vmatmul.mubr.bf16.gmra.mrb[0].mxu0 %v311
    %v4838 = vpop.f32.mrb[0].mxu0
    %v4839 = vadd.f32 %v4766, %v4838
    %v4840 = vpop.f32.mrb[0].mxu0
    %v4841 = vadd.f32 %v4768, %v4840
    %v4842 = vpop.f32.mrb[0].mxu0
    %v4843 = vadd.f32 %v4770, %v4842
    %v4844 = vpop.f32.mrb[0].mxu0
    %v4845 = vadd.f32 %v4772, %v4844
    %4846 = vmatprep.mubr.bf16.mxu0 %v331
    %4847 = vmatmul.mubr.bf16.gmra.mrb[0].mxu0 %v330
    %v4848 = vpop.f32.mrb[0].mxu0
    %v4849 = vadd.f32 %v4776, %v4848
    %v4850 = vpop.f32.mrb[0].mxu0
    %v4851 = vadd.f32 %v4778, %v4850
    %v4852 = vpop.f32.mrb[0].mxu0
    %v4853 = vadd.f32 %v4780, %v4852
    %v4854 = vpop.f32.mrb[0].mxu0
    %v4855 = vadd.f32 %v4782, %v4854
    %4856 = vdwg.mxu0
    %4857 = vmatprep.subr.bf16.mxu0 %v2914
    %4858 = vmatpush1.bf16.msra.mxu0 %v2913
    %4859 = vmatprep.subr.bf16.mxu0 %v2918
    %4860 = vmatpush1.bf16.msra.mxu0 %v2917
    %4861 = vmatprep.subr.bf16.mxu0 %v2922
    %4862 = vmatpush1.bf16.msra.mxu0 %v2921
    %4863 = vmatprep.subr.bf16.mxu0 %v2926
    %4864 = vmatpush1.bf16.msra.mxu0 %v2925
    %4865 = vmatprep.subr.bf16.mxu0 %v2930
    %4866 = vmatpush1.bf16.msra.mxu0 %v2929
    %4867 = vmatprep.subr.bf16.mxu0 %v2934
    %4868 = vmatpush1.bf16.msra.mxu0 %v2933
    %4869 = vmatprep.subr.bf16.mxu0 %v2938
    %4870 = vmatpush1.bf16.msra.mxu0 %v2937
    %4871 = vmatprep.subr.bf16.mxu0 %v2942
    %4872 = vmatpush1.bf16.msra.mxu0 %v2941
    %4873 = vmatprep.subr.bf16.mxu0 %v2946
    %4874 = vmatpush1.bf16.msra.mxu0 %v2945
    %4875 = vmatprep.subr.bf16.mxu0 %v2950
    %4876 = vmatpush1.bf16.msra.mxu0 %v2949
    %4877 = vmatprep.subr.bf16.mxu0 %v2954
    %4878 = vmatpush1.bf16.msra.mxu0 %v2953
    %4879 = vmatprep.subr.bf16.mxu0 %v2958
    %4880 = vmatpush1.bf16.msra.mxu0 %v2957
    %4881 = vmatprep.subr.bf16.mxu0 %v2962
    %4882 = vmatpush1.bf16.msra.mxu0 %v2961
    %4883 = vmatprep.subr.bf16.mxu0 %v2966
    %4884 = vmatpush1.bf16.msra.mxu0 %v2965
    %4885 = vmatprep.subr.bf16.mxu0 %v2970
    %4886 = vmatpush1.bf16.msra.mxu0 %v2969
    %4887 = vmatprep.subr.bf16.mxu0 %v2974
    %4888 = vmatpush1.bf16.msra.mxu0 %v2973
    %4889 = vmatprep.mubr.bf16.mxu0 %v276
    %4890 = vmatmul.mubr.bf16.gmra.mrb[0].mxu0 %v275
    %v4891 = vpop.f32.mrb[0].mxu0
    %v4892 = vadd.f32 %v4819, %v4891
    %v4893 = vpop.f32.mrb[0].mxu0
    %v4894 = vadd.f32 %v4821, %v4893
    %v4895 = vpop.f32.mrb[0].mxu0
    %v4896 = vadd.f32 %v4823, %v4895
    %v4897 = vpop.f32.mrb[0].mxu0
    %v4898 = vadd.f32 %v4825, %v4897
    %4899 = vmatprep.mubr.bf16.mxu0 %v295
    %4900 = vmatmul.mubr.bf16.gmra.mrb[0].mxu0 %v294
    %v4901 = vpop.f32.mrb[0].mxu0
    %v4902 = vadd.f32 %v4829, %v4901
    %v4903 = vpop.f32.mrb[0].mxu0
    %v4904 = vadd.f32 %v4831, %v4903
    %v4905 = vpop.f32.mrb[0].mxu0
    %v4906 = vadd.f32 %v4833, %v4905
    %v4907 = vpop.f32.mrb[0].mxu0
    %v4908 = vadd.f32 %v4835, %v4907
    %4909 = vmatprep.mubr.bf16.mxu0 %v314
    %4910 = vmatmul.mubr.bf16.gmra.mrb[0].mxu0 %v313
    %v4911 = vpop.f32.mrb[0].mxu0
    %v4912 = vadd.f32 %v4839, %v4911
    %v4913 = vpop.f32.mrb[0].mxu0
    %v4914 = vadd.f32 %v4841, %v4913
    %v4915 = vpop.f32.mrb[0].mxu0
    %v4916 = vadd.f32 %v4843, %v4915
    %v4917 = vpop.f32.mrb[0].mxu0
    %v4918 = vadd.f32 %v4845, %v4917
    %4919 = vmatprep.mubr.bf16.mxu0 %v333
    %4920 = vmatmul.mubr.bf16.gmra.mrb[0].mxu0 %v332
    %v4921 = vpop.f32.mrb[0].mxu0
    %v4922 = vadd.f32 %v4849, %v4921
    %v4923 = vpop.f32.mrb[0].mxu0
    %v4924 = vadd.f32 %v4851, %v4923
    %v4925 = vpop.f32.mrb[0].mxu0
    %v4926 = vadd.f32 %v4853, %v4925
    %v4927 = vpop.f32.mrb[0].mxu0
    %v4928 = vadd.f32 %v4855, %v4927
    %4929 = vdwg.mxu0
    %4930 = vmatprep.subr.bf16.mxu0 %v2978
    %4931 = vmatpush1.bf16.msra.mxu0 %v2977
    %4932 = vmatprep.subr.bf16.mxu0 %v2982
    %4933 = vmatpush1.bf16.msra.mxu0 %v2981
    %4934 = vmatprep.subr.bf16.mxu0 %v2986
    %4935 = vmatpush1.bf16.msra.mxu0 %v2985
    %4936 = vmatprep.subr.bf16.mxu0 %v2990
    %4937 = vmatpush1.bf16.msra.mxu0 %v2989
    %4938 = vmatprep.subr.bf16.mxu0 %v2994
    %4939 = vmatpush1.bf16.msra.mxu0 %v2993
    %4940 = vmatprep.subr.bf16.mxu0 %v2998
    %4941 = vmatpush1.bf16.msra.mxu0 %v2997
    %4942 = vmatprep.subr.bf16.mxu0 %v3002
    %4943 = vmatpush1.bf16.msra.mxu0 %v3001
    %4944 = vmatprep.subr.bf16.mxu0 %v3006
    %4945 = vmatpush1.bf16.msra.mxu0 %v3005
    %4946 = vmatprep.subr.bf16.mxu0 %v3010
    %4947 = vmatpush1.bf16.msra.mxu0 %v3009
    %4948 = vmatprep.subr.bf16.mxu0 %v3014
    %4949 = vmatpush1.bf16.msra.mxu0 %v3013
    %4950 = vmatprep.subr.bf16.mxu0 %v3018
    %4951 = vmatpush1.bf16.msra.mxu0 %v3017
    %4952 = vmatprep.subr.bf16.mxu0 %v3022
    %4953 = vmatpush1.bf16.msra.mxu0 %v3021
    %4954 = vmatprep.subr.bf16.mxu0 %v3026
    %4955 = vmatpush1.bf16.msra.mxu0 %v3025
    %4956 = vmatprep.subr.bf16.mxu0 %v3030
    %4957 = vmatpush1.bf16.msra.mxu0 %v3029
    %4958 = vmatprep.subr.bf16.mxu0 %v3034
    %4959 = vmatpush1.bf16.msra.mxu0 %v3033
    %4960 = vmatprep.subr.bf16.mxu0 %v3038
    %4961 = vmatpush1.bf16.msra.mxu0 %v3037
    %4962 = vmatprep.mubr.bf16.mxu0 %v278
    %4963 = vmatmul.mubr.bf16.gmra.mrb[0].mxu0 %v277
    %v4964 = vpop.f32.mrb[0].mxu0
    %v4965 = vadd.f32 %v4892, %v4964
    %v4966 = vpop.f32.mrb[0].mxu0
    %v4967 = vadd.f32 %v4894, %v4966
    %v4968 = vpop.f32.mrb[0].mxu0
    %v4969 = vadd.f32 %v4896, %v4968
    %v4970 = vpop.f32.mrb[0].mxu0
    %v4971 = vadd.f32 %v4898, %v4970
    %4972 = vmatprep.mubr.bf16.mxu0 %v297
    %4973 = vmatmul.mubr.bf16.gmra.mrb[0].mxu0 %v296
    %v4974 = vpop.f32.mrb[0].mxu0
    %v4975 = vadd.f32 %v4902, %v4974
    %v4976 = vpop.f32.mrb[0].mxu0
    %v4977 = vadd.f32 %v4904, %v4976
    %v4978 = vpop.f32.mrb[0].mxu0
    %v4979 = vadd.f32 %v4906, %v4978
    %v4980 = vpop.f32.mrb[0].mxu0
    %v4981 = vadd.f32 %v4908, %v4980
    %4982 = vmatprep.mubr.bf16.mxu0 %v316
    %4983 = vmatmul.mubr.bf16.gmra.mrb[0].mxu0 %v315
    %v4984 = vpop.f32.mrb[0].mxu0
    %v4985 = vadd.f32 %v4912, %v4984
    %v4986 = vpop.f32.mrb[0].mxu0
    %v4987 = vadd.f32 %v4914, %v4986
    %v4988 = vpop.f32.mrb[0].mxu0
    %v4989 = vadd.f32 %v4916, %v4988
    %v4990 = vpop.f32.mrb[0].mxu0
    %v4991 = vadd.f32 %v4918, %v4990
    %4992 = vmatprep.mubr.bf16.mxu0 %v335
    %4993 = vmatmul.mubr.bf16.gmra.mrb[0].mxu0 %v334
    %v4994 = vpop.f32.mrb[0].mxu0
    %v4995 = vadd.f32 %v4922, %v4994
    %v4996 = vpop.f32.mrb[0].mxu0
    %v4997 = vadd.f32 %v4924, %v4996
    %v4998 = vpop.f32.mrb[0].mxu0
    %v4999 = vadd.f32 %v4926, %v4998
    %v5000 = vpop.f32.mrb[0].mxu0
    %v5001 = vadd.f32 %v4928, %v5000
    %5002 = vdwg.mxu0
    %5003 = vmatprep.subr.bf16.mxu0 %v3042
    %5004 = vmatpush1.bf16.msra.mxu0 %v3041
    %5005 = vmatprep.subr.bf16.mxu0 %v3046
    %5006 = vmatpush1.bf16.msra.mxu0 %v3045
    %5007 = vmatprep.subr.bf16.mxu0 %v3050
    %5008 = vmatpush1.bf16.msra.mxu0 %v3049
    %5009 = vmatprep.subr.bf16.mxu0 %v3054
    %5010 = vmatpush1.bf16.msra.mxu0 %v3053
    %5011 = vmatprep.subr.bf16.mxu0 %v3058
    %5012 = vmatpush1.bf16.msra.mxu0 %v3057
    %5013 = vmatprep.subr.bf16.mxu0 %v3062
    %5014 = vmatpush1.bf16.msra.mxu0 %v3061
    %5015 = vmatprep.subr.bf16.mxu0 %v3066
    %5016 = vmatpush1.bf16.msra.mxu0 %v3065
    %5017 = vmatprep.subr.bf16.mxu0 %v3070
    %5018 = vmatpush1.bf16.msra.mxu0 %v3069
    %5019 = vmatprep.subr.bf16.mxu0 %v3074
    %5020 = vmatpush1.bf16.msra.mxu0 %v3073
    %5021 = vmatprep.subr.bf16.mxu0 %v3078
    %5022 = vmatpush1.bf16.msra.mxu0 %v3077
    %5023 = vmatprep.subr.bf16.mxu0 %v3082
    %5024 = vmatpush1.bf16.msra.mxu0 %v3081
    %5025 = vmatprep.subr.bf16.mxu0 %v3086
    %5026 = vmatpush1.bf16.msra.mxu0 %v3085
    %5027 = vmatprep.subr.bf16.mxu0 %v3090
    %5028 = vmatpush1.bf16.msra.mxu0 %v3089
    %5029 = vmatprep.subr.bf16.mxu0 %v3094
    %5030 = vmatpush1.bf16.msra.mxu0 %v3093
    %5031 = vmatprep.subr.bf16.mxu0 %v3098
    %5032 = vmatpush1.bf16.msra.mxu0 %v3097
    %5033 = vmatprep.subr.bf16.mxu0 %v3102
    %5034 = vmatpush1.bf16.msra.mxu0 %v3101
    %5035 = vmatprep.mubr.bf16.mxu0 %v280
    %5036 = vmatmul.mubr.bf16.gmra.mrb[0].mxu0 %v279
    %v5037 = vpop.f32.mrb[0].mxu0
    %v5038 = vadd.f32 %v4965, %v5037
    %v5039 = vpop.f32.mrb[0].mxu0
    %v5040 = vadd.f32 %v4967, %v5039
    %v5041 = vpop.f32.mrb[0].mxu0
    %v5042 = vadd.f32 %v4969, %v5041
    %v5043 = vpop.f32.mrb[0].mxu0
    %v5044 = vadd.f32 %v4971, %v5043
    %5045 = vmatprep.mubr.bf16.mxu0 %v299
    %5046 = vmatmul.mubr.bf16.gmra.mrb[0].mxu0 %v298
    %v5047 = vpop.f32.mrb[0].mxu0
    %v5048 = vadd.f32 %v4975, %v5047
    %v5049 = vpop.f32.mrb[0].mxu0
    %v5050 = vadd.f32 %v4977, %v5049
    %v5051 = vpop.f32.mrb[0].mxu0
    %v5052 = vadd.f32 %v4979, %v5051
    %v5053 = vpop.f32.mrb[0].mxu0
    %v5054 = vadd.f32 %v4981, %v5053
    %5055 = vmatprep.mubr.bf16.mxu0 %v318
    %5056 = vmatmul.mubr.bf16.gmra.mrb[0].mxu0 %v317
    %v5057 = vpop.f32.mrb[0].mxu0
    %v5058 = vadd.f32 %v4985, %v5057
    %v5059 = vpop.f32.mrb[0].mxu0
    %v5060 = vadd.f32 %v4987, %v5059
    %v5061 = vpop.f32.mrb[0].mxu0
    %v5062 = vadd.f32 %v4989, %v5061
    %v5063 = vpop.f32.mrb[0].mxu0
    %v5064 = vadd.f32 %v4991, %v5063
    %5065 = vmatprep.mubr.bf16.mxu0 %v337
    %5066 = vmatmul.mubr.bf16.gmra.mrb[0].mxu0 %v336
    %v5067 = vpop.f32.mrb[0].mxu0
    %v5068 = vadd.f32 %v4995, %v5067
    %v5069 = vpop.f32.mrb[0].mxu0
    %v5070 = vadd.f32 %v4997, %v5069
    %v5071 = vpop.f32.mrb[0].mxu0
    %v5072 = vadd.f32 %v4999, %v5071
    %v5073 = vpop.f32.mrb[0].mxu0
    %v5074 = vadd.f32 %v5001, %v5073
    %5075 = vdwg.mxu0
    %5076 = vmatprep.subr.bf16.mxu0 %v3106
    %5077 = vmatpush1.bf16.msra.mxu0 %v3105
    %5078 = vmatprep.subr.bf16.mxu0 %v3110
    %5079 = vmatpush1.bf16.msra.mxu0 %v3109
    %5080 = vmatprep.subr.bf16.mxu0 %v3114
    %5081 = vmatpush1.bf16.msra.mxu0 %v3113
    %5082 = vmatprep.subr.bf16.mxu0 %v3118
    %5083 = vmatpush1.bf16.msra.mxu0 %v3117
    %5084 = vmatprep.subr.bf16.mxu0 %v3122
    %5085 = vmatpush1.bf16.msra.mxu0 %v3121
    %5086 = vmatprep.subr.bf16.mxu0 %v3126
    %5087 = vmatpush1.bf16.msra.mxu0 %v3125
    %5088 = vmatprep.subr.bf16.mxu0 %v3130
    %5089 = vmatpush1.bf16.msra.mxu0 %v3129
    %5090 = vmatprep.subr.bf16.mxu0 %v3134
    %5091 = vmatpush1.bf16.msra.mxu0 %v3133
    %5092 = vmatprep.subr.bf16.mxu0 %v3138
    %5093 = vmatpush1.bf16.msra.mxu0 %v3137
    %5094 = vmatprep.subr.bf16.mxu0 %v3142
    %5095 = vmatpush1.bf16.msra.mxu0 %v3141
    %5096 = vmatprep.subr.bf16.mxu0 %v3146
    %5097 = vmatpush1.bf16.msra.mxu0 %v3145
    %5098 = vmatprep.subr.bf16.mxu0 %v3150
    %5099 = vmatpush1.bf16.msra.mxu0 %v3149
    %5100 = vmatprep.subr.bf16.mxu0 %v3154
    %5101 = vmatpush1.bf16.msra.mxu0 %v3153
    %5102 = vmatprep.subr.bf16.mxu0 %v3158
    %5103 = vmatpush1.bf16.msra.mxu0 %v3157
    %5104 = vmatprep.subr.bf16.mxu0 %v3162
    %5105 = vmatpush1.bf16.msra.mxu0 %v3161
    %5106 = vmatprep.subr.bf16.mxu0 %v3166
    %5107 = vmatpush1.bf16.msra.mxu0 %v3165
    %5108 = vmatprep.mubr.bf16.mxu0 %v282
    %5109 = vmatmul.mubr.bf16.gmra.mrb[0].mxu0 %v281
    %v5110 = vpop.f32.mrb[0].mxu0
    %v5111 = vadd.f32 %v5038, %v5110
    %v5112 = vpop.f32.mrb[0].mxu0
    %v5113 = vadd.f32 %v5040, %v5112
    %v5114 = vpop.f32.mrb[0].mxu0
    %v5115 = vadd.f32 %v5042, %v5114
    %v5116 = vpop.f32.mrb[0].mxu0
    %v5117 = vadd.f32 %v5044, %v5116
    %5118 = vmatprep.mubr.bf16.mxu0 %v301
    %5119 = vmatmul.mubr.bf16.gmra.mrb[0].mxu0 %v300
    %v5120 = vpop.f32.mrb[0].mxu0
    %v5121 = vadd.f32 %v5048, %v5120
    %v5122 = vpop.f32.mrb[0].mxu0
    %v5123 = vadd.f32 %v5050, %v5122
    %v5124 = vpop.f32.mrb[0].mxu0
    %v5125 = vadd.f32 %v5052, %v5124
    %v5126 = vpop.f32.mrb[0].mxu0
    %v5127 = vadd.f32 %v5054, %v5126
    %5128 = vmatprep.mubr.bf16.mxu0 %v320
    %5129 = vmatmul.mubr.bf16.gmra.mrb[0].mxu0 %v319
    %v5130 = vpop.f32.mrb[0].mxu0
    %v5131 = vadd.f32 %v5058, %v5130
    %v5132 = vpop.f32.mrb[0].mxu0
    %v5133 = vadd.f32 %v5060, %v5132
    %v5134 = vpop.f32.mrb[0].mxu0
    %v5135 = vadd.f32 %v5062, %v5134
    %v5136 = vpop.f32.mrb[0].mxu0
    %v5137 = vadd.f32 %v5064, %v5136
    %5138 = vmatprep.mubr.bf16.mxu0 %v339
    %5139 = vmatmul.mubr.bf16.gmra.mrb[0].mxu0 %v338
    %v5140 = vpop.f32.mrb[0].mxu0
    %v5141 = vadd.f32 %v5068, %v5140
    %v5142 = vpop.f32.mrb[0].mxu0
    %v5143 = vadd.f32 %v5070, %v5142
    %v5144 = vpop.f32.mrb[0].mxu0
    %v5145 = vadd.f32 %v5072, %v5144
    %v5146 = vpop.f32.mrb[0].mxu0
    %v5147 = vadd.f32 %v5074, %v5146
    %5148 = vdwg.mxu0
    %5149 = vmatprep.subr.bf16.mxu0 %v3170
    %5150 = vmatpush1.bf16.msra.mxu0 %v3169
    %5151 = vmatprep.subr.bf16.mxu0 %v3174
    %5152 = vmatpush1.bf16.msra.mxu0 %v3173
    %5153 = vmatprep.subr.bf16.mxu0 %v3178
    %5154 = vmatpush1.bf16.msra.mxu0 %v3177
    %5155 = vmatprep.subr.bf16.mxu0 %v3182
    %5156 = vmatpush1.bf16.msra.mxu0 %v3181
    %5157 = vmatprep.subr.bf16.mxu0 %v3186
    %5158 = vmatpush1.bf16.msra.mxu0 %v3185
    %5159 = vmatprep.subr.bf16.mxu0 %v3190
    %5160 = vmatpush1.bf16.msra.mxu0 %v3189
    %5161 = vmatprep.subr.bf16.mxu0 %v3194
    %5162 = vmatpush1.bf16.msra.mxu0 %v3193
    %5163 = vmatprep.subr.bf16.mxu0 %v3198
    %5164 = vmatpush1.bf16.msra.mxu0 %v3197
    %5165 = vmatprep.subr.bf16.mxu0 %v3202
    %5166 = vmatpush1.bf16.msra.mxu0 %v3201
    %5167 = vmatprep.subr.bf16.mxu0 %v3206
    %5168 = vmatpush1.bf16.msra.mxu0 %v3205
    %5169 = vmatprep.subr.bf16.mxu0 %v3210
    %5170 = vmatpush1.bf16.msra.mxu0 %v3209
    %5171 = vmatprep.subr.bf16.mxu0 %v3214
    %5172 = vmatpush1.bf16.msra.mxu0 %v3213
    %5173 = vmatprep.subr.bf16.mxu0 %v3218
    %5174 = vmatpush1.bf16.msra.mxu0 %v3217
    %5175 = vmatprep.subr.bf16.mxu0 %v3222
    %5176 = vmatpush1.bf16.msra.mxu0 %v3221
    %5177 = vmatprep.subr.bf16.mxu0 %v3226
    %5178 = vmatpush1.bf16.msra.mxu0 %v3225
    %5179 = vmatprep.subr.bf16.mxu0 %v3230
    %5180 = vmatpush1.bf16.msra.mxu0 %v3229
    %5181 = vmatprep.mubr.bf16.mxu0 %v284
    %5182 = vmatmul.mubr.bf16.gmra.mrb[0].mxu0 %v283
    %v5183 = vpop.f32.mrb[0].mxu0
    %v5184 = vadd.f32 %v5111, %v5183
    %v5185 = vpop.f32.mrb[0].mxu0
    %v5186 = vadd.f32 %v5113, %v5185
    %v5187 = vpop.f32.mrb[0].mxu0
    %v5188 = vadd.f32 %v5115, %v5187
    %v5189 = vpop.f32.mrb[0].mxu0
    %v5190 = vadd.f32 %v5117, %v5189
    %5191 = vmatprep.mubr.bf16.mxu0 %v303
    %5192 = vmatmul.mubr.bf16.gmra.mrb[0].mxu0 %v302
    %v5193 = vpop.f32.mrb[0].mxu0
    %v5194 = vadd.f32 %v5121, %v5193
    %v5195 = vpop.f32.mrb[0].mxu0
    %v5196 = vadd.f32 %v5123, %v5195
    %v5197 = vpop.f32.mrb[0].mxu0
    %v5198 = vadd.f32 %v5125, %v5197
    %v5199 = vpop.f32.mrb[0].mxu0
    %v5200 = vadd.f32 %v5127, %v5199
    %5201 = vmatprep.mubr.bf16.mxu0 %v322
    %5202 = vmatmul.mubr.bf16.gmra.mrb[0].mxu0 %v321
    %v5203 = vpop.f32.mrb[0].mxu0
    %v5204 = vadd.f32 %v5131, %v5203
    %v5205 = vpop.f32.mrb[0].mxu0
    %v5206 = vadd.f32 %v5133, %v5205
    %v5207 = vpop.f32.mrb[0].mxu0
    %v5208 = vadd.f32 %v5135, %v5207
    %v5209 = vpop.f32.mrb[0].mxu0
    %v5210 = vadd.f32 %v5137, %v5209
    %5211 = vmatprep.mubr.bf16.mxu0 %v341
    %5212 = vmatmul.mubr.bf16.gmra.mrb[0].mxu0 %v340
    %v5213 = vpop.f32.mrb[0].mxu0
    %v5214 = vadd.f32 %v5141, %v5213
    %v5215 = vpop.f32.mrb[0].mxu0
    %v5216 = vadd.f32 %v5143, %v5215
    %v5217 = vpop.f32.mrb[0].mxu0
    %v5218 = vadd.f32 %v5145, %v5217
    %v5219 = vpop.f32.mrb[0].mxu0
    %v5220 = vadd.f32 %v5147, %v5219
    %5221 = vdwg.mxu0
    %5222 = vmatprep.subr.bf16.mxu0 %v3234
    %5223 = vmatpush1.bf16.msra.mxu0 %v3233
    %5224 = vmatprep.subr.bf16.mxu0 %v3238
    %5225 = vmatpush1.bf16.msra.mxu0 %v3237
    %5226 = vmatprep.subr.bf16.mxu0 %v3242
    %5227 = vmatpush1.bf16.msra.mxu0 %v3241
    %5228 = vmatprep.subr.bf16.mxu0 %v3246
    %5229 = vmatpush1.bf16.msra.mxu0 %v3245
    %5230 = vmatprep.subr.bf16.mxu0 %v3250
    %5231 = vmatpush1.bf16.msra.mxu0 %v3249
    %5232 = vmatprep.subr.bf16.mxu0 %v3254
    %5233 = vmatpush1.bf16.msra.mxu0 %v3253
    %5234 = vmatprep.subr.bf16.mxu0 %v3258
    %5235 = vmatpush1.bf16.msra.mxu0 %v3257
    %5236 = vmatprep.subr.bf16.mxu0 %v3262
    %5237 = vmatpush1.bf16.msra.mxu0 %v3261
    %5238 = vmatprep.subr.bf16.mxu0 %v3266
    %5239 = vmatpush1.bf16.msra.mxu0 %v3265
    %5240 = vmatprep.subr.bf16.mxu0 %v3270
    %5241 = vmatpush1.bf16.msra.mxu0 %v3269
    %5242 = vmatprep.subr.bf16.mxu0 %v3274
    %5243 = vmatpush1.bf16.msra.mxu0 %v3273
    %5244 = vmatprep.subr.bf16.mxu0 %v3278
    %5245 = vmatpush1.bf16.msra.mxu0 %v3277
    %5246 = vmatprep.subr.bf16.mxu0 %v3282
    %5247 = vmatpush1.bf16.msra.mxu0 %v3281
    %5248 = vmatprep.subr.bf16.mxu0 %v3286
    %5249 = vmatpush1.bf16.msra.mxu0 %v3285
    %5250 = vmatprep.subr.bf16.mxu0 %v3290
    %5251 = vmatpush1.bf16.msra.mxu0 %v3289
    %5252 = vmatprep.subr.bf16.mxu0 %v3294
    %5253 = vmatpush1.bf16.msra.mxu0 %v3293
    %5254 = vmatprep.mubr.bf16.mxu0 %v286
    %5255 = vmatmul.mubr.bf16.gmra.mrb[0].mxu0 %v285
    %v5256 = vpop.f32.mrb[0].mxu0
    %v5257 = vadd.f32 %v5184, %v5256
    %v5258 = vpop.f32.mrb[0].mxu0
    %v5259 = vadd.f32 %v5186, %v5258
    %v5260 = vpop.f32.mrb[0].mxu0
    %v5261 = vadd.f32 %v5188, %v5260
    %v5262 = vpop.f32.mrb[0].mxu0
    %v5263 = vadd.f32 %v5190, %v5262
    %5264 = vmatprep.mubr.bf16.mxu0 %v305
    %5265 = vmatmul.mubr.bf16.gmra.mrb[0].mxu0 %v304
    %v5266 = vpop.f32.mrb[0].mxu0
    %v5267 = vadd.f32 %v5194, %v5266
    %v5268 = vpop.f32.mrb[0].mxu0
    %v5269 = vadd.f32 %v5196, %v5268
    %v5270 = vpop.f32.mrb[0].mxu0
    %v5271 = vadd.f32 %v5198, %v5270
    %v5272 = vpop.f32.mrb[0].mxu0
    %v5273 = vadd.f32 %v5200, %v5272
    %5274 = vmatprep.mubr.bf16.mxu0 %v324
    %5275 = vmatmul.mubr.bf16.gmra.mrb[0].mxu0 %v323
    %v5276 = vpop.f32.mrb[0].mxu0
    %v5277 = vadd.f32 %v5204, %v5276
    %v5278 = vpop.f32.mrb[0].mxu0
    %v5279 = vadd.f32 %v5206, %v5278
    %v5280 = vpop.f32.mrb[0].mxu0
    %v5281 = vadd.f32 %v5208, %v5280
    %v5282 = vpop.f32.mrb[0].mxu0
    %v5283 = vadd.f32 %v5210, %v5282
    %5284 = vmatprep.mubr.bf16.mxu0 %v343
    %5285 = vmatmul.mubr.bf16.gmra.mrb[0].mxu0 %v342
    %v5286 = vpop.f32.mrb[0].mxu0
    %v5287 = vadd.f32 %v5214, %v5286
    %v5288 = vpop.f32.mrb[0].mxu0
    %v5289 = vadd.f32 %v5216, %v5288
    %v5290 = vpop.f32.mrb[0].mxu0
    %v5291 = vadd.f32 %v5218, %v5290
    %v5292 = vpop.f32.mrb[0].mxu0
    %v5293 = vadd.f32 %v5220, %v5292
    %5294 = vdwg.mxu0
    %5295 = vmatprep.subr.bf16.mxu0 %v3298
    %5296 = vmatpush1.bf16.msra.mxu0 %v3297
    %5297 = vmatprep.subr.bf16.mxu0 %v3302
    %5298 = vmatpush1.bf16.msra.mxu0 %v3301
    %5299 = vmatprep.subr.bf16.mxu0 %v3306
    %5300 = vmatpush1.bf16.msra.mxu0 %v3305
    %5301 = vmatprep.subr.bf16.mxu0 0
    %5302 = vmatpush1.bf16.msra.mxu0 0
    %5303 = vmatprep.subr.bf16.mxu0 0
    %5304 = vmatpush1.bf16.msra.mxu0 0
    %5305 = vmatprep.subr.bf16.mxu0 0
    %5306 = vmatpush1.bf16.msra.mxu0 0
    %5307 = vmatprep.subr.bf16.mxu0 0
    %5308 = vmatpush1.bf16.msra.mxu0 0
    %5309 = vmatprep.subr.bf16.mxu0 0
    %5310 = vmatpush1.bf16.msra.mxu0 0
    %5311 = vmatprep.subr.bf16.mxu0 0
    %5312 = vmatpush1.bf16.msra.mxu0 0
    %5313 = vmatprep.subr.bf16.mxu0 0
    %5314 = vmatpush1.bf16.msra.mxu0 0
    %5315 = vmatprep.subr.bf16.mxu0 0
    %5316 = vmatpush1.bf16.msra.mxu0 0
    %5317 = vmatprep.subr.bf16.mxu0 0
    %5318 = vmatpush1.bf16.msra.mxu0 0
    %5319 = vmatprep.subr.bf16.mxu0 0
    %5320 = vmatpush1.bf16.msra.mxu0 0
    %5321 = vmatprep.subr.bf16.mxu0 0
    %5322 = vmatpush1.bf16.msra.mxu0 0
    %5323 = vmatprep.subr.bf16.mxu0 0
    %5324 = vmatpush1.bf16.msra.mxu0 0
    %5325 = vmatprep.subr.bf16.mxu0 0
    %5326 = vmatpush1.bf16.msra.mxu0 0
    %5327 = vmatprep.mubr.bf16.mxu0 0
    %5328 = vmatmul.mubr.bf16.gmra.mrb[0].mxu0 %v3897
    %v5329 = vpop.f32.mrb[0].mxu0
    %v5330 = vadd.f32 %v5257, %v5329
    %v5331 = vpop.f32.mrb[0].mxu0
    %v5332 = vadd.f32 %v5259, %v5331
    %v5333 = vpop.f32.mrb[0].mxu0
    %v5334 = vadd.f32 %v5261, %v5333
    %v5335 = vpop.f32.mrb[0].mxu0
    %v5336 = vadd.f32 %v5263, %v5335
    %5337 = vmatprep.mubr.bf16.mxu0 0
    %5338 = vmatmul.mubr.bf16.gmra.mrb[0].mxu0 %v3900
    %v5339 = vpop.f32.mrb[0].mxu0
    %v5340 = vadd.f32 %v5267, %v5339
    %v5341 = vpop.f32.mrb[0].mxu0
    %v5342 = vadd.f32 %v5269, %v5341
    %v5343 = vpop.f32.mrb[0].mxu0
    %v5344 = vadd.f32 %v5271, %v5343
    %v5345 = vpop.f32.mrb[0].mxu0
    %v5346 = vadd.f32 %v5273, %v5345
    %5347 = vmatprep.mubr.bf16.mxu0 0
    %5348 = vmatmul.mubr.bf16.gmra.mrb[0].mxu0 %v3903
    %v5349 = vpop.f32.mrb[0].mxu0
    %v5350 = vadd.f32 %v5277, %v5349
    %v5351 = vpop.f32.mrb[0].mxu0
    %v5352 = vadd.f32 %v5279, %v5351
    %v5353 = vpop.f32.mrb[0].mxu0
    %v5354 = vadd.f32 %v5281, %v5353
    %v5355 = vpop.f32.mrb[0].mxu0
    %v5356 = vadd.f32 %v5283, %v5355
    %5357 = vmatprep.mubr.bf16.mxu0 0
    %5358 = vmatmul.mubr.bf16.gmra.mrb[0].mxu0 %v3906
    %v5359 = vpop.f32.mrb[0].mxu0
    %v5360 = vadd.f32 %v5287, %v5359
    %v5361 = vpop.f32.mrb[0].mxu0
    %v5362 = vadd.f32 %v5289, %v5361
    %v5363 = vpop.f32.mrb[0].mxu0
    %v5364 = vadd.f32 %v5291, %v5363
    %v5365 = vpop.f32.mrb[0].mxu0
    %v5366 = vadd.f32 %v5293, %v5365
    %5367 = vdwg.mxu0
    %v5368 = vmax.f32 %v4600, 0.0
    %v5369 = vmax.f32 %v4602, 0.0
    %v5370 = vmax.f32 %v5330, 0.0
    %v5371 = vmax.f32 %v5332, 0.0
    %v5372 = vmax.f32 %v4604, 0.0
    %v5373 = vmax.f32 %v4606, 0.0
    %v5374 = vmax.f32 %v5334, 0.0
    %v5375 = vmax.f32 %v5336, 0.0
    %v5376 = vmax.f32 %v4610, 0.0
    %v5377 = vmax.f32 %v4612, 0.0
    %v5378 = vmax.f32 %v5340, 0.0
    %v5379 = vmax.f32 %v5342, 0.0
    %v5380 = vmax.f32 %v4614, 0.0
    %v5381 = vmax.f32 %v4616, 0.0
    %v5382 = vmax.f32 %v5344, 0.0
    %v5383 = vmax.f32 %v5346, 0.0
    %v5384 = vmax.f32 %v4620, 0.0
    %v5385 = vmax.f32 %v4622, 0.0
    %v5386 = vmax.f32 %v5350, 0.0
    %v5387 = vmax.f32 %v5352, 0.0
    %v5388 = vmax.f32 %v4624, 0.0
    %v5389 = vmax.f32 %v4626, 0.0
    %v5390 = vmax.f32 %v5354, 0.0
    %v5391 = vmax.f32 %v5356, 0.0
    %v5392 = vmax.f32 %v4630, 0.0
    %v5393 = vmax.f32 %v4632, 0.0
    %v5394 = vmax.f32 %v5360, 0.0
    %v5395 = vmax.f32 %v5362, 0.0
    %v5396 = vmax.f32 %v4634, 0.0
    %v5397 = vmax.f32 %v4636, 0.0
    %v5398 = vmax.f32 %v5364, 0.0
    %v5399 = vmax.f32 %v5366, 0.0
    %v5400 = vpack.c.bf16 %v5372, %v5368
    %v5401 = vpack.c.bf16 %v5373, %v5369
    %v5402 = vpack.c.bf16 %v5374, %v5370
    %v5403 = vpack.c.bf16 %v5375, %v5371
    %v5404 = vpack.c.bf16 %v5380, %v5376
    %v5405 = vpack.c.bf16 %v5381, %v5377
    %v5406 = vpack.c.bf16 %v5382, %v5378
    %v5407 = vpack.c.bf16 %v5383, %v5379
    %v5408 = vpack.c.bf16 %v5388, %v5384
    %v5409 = vpack.c.bf16 %v5389, %v5385
    %v5410 = vpack.c.bf16 %v5390, %v5386
    %v5411 = vpack.c.bf16 %v5391, %v5387
    %v5412 = vpack.c.bf16 %v5396, %v5392
    %v5413 = vpack.c.bf16 %v5397, %v5393
    %v5414 = vpack.c.bf16 %v5398, %v5394
    %v5415 = vpack.c.bf16 %v5399, %v5395
    %v5416 = vld [vmem:[#allocation8] sm:$0xff]
    %v5417 = vld [vmem:[#allocation8 + $0x8] sm:$0xff]
    %v5418 = vld [vmem:[#allocation8 + $0x10] sm:$0xff]
    %v5419 = vld [vmem:[#allocation8 + $0x18] sm:$0xff]
    %v5420 = vld [vmem:[#allocation8 + $0x20] sm:$0xff]
    %v5421 = vld [vmem:[#allocation8 + $0x28] sm:$0xff]
    %v5422 = vld [vmem:[#allocation8 + $0x30] sm:$0xff]
    %v5423 = vld [vmem:[#allocation8 + $0x38] sm:$0xff]
    %v5424 = vld [vmem:[#allocation8 + $0x40] sm:$0xff]
    %v5425 = vld [vmem:[#allocation8 + $0x48] sm:$0xff]
    %v5426 = vld [vmem:[#allocation8 + $0x50] sm:$0xff]
    %v5427 = vld [vmem:[#allocation8 + $0x58] sm:$0xff]
    %v5428 = vld [vmem:[#allocation8 + $0x60] sm:$0xff]
    %v5429 = vld [vmem:[#allocation8 + $0x68] sm:$0xff]
    %v5430 = vld [vmem:[#allocation8 + $0x70] sm:$0xff]
    %v5431 = vld [vmem:[#allocation8 + $0x78] sm:$0xff]
    %v5432 = vld [vmem:[#allocation8 + $0x80] sm:$0xff]
    %v5433 = vld [vmem:[#allocation8 + $0x88] sm:$0xff]
    %v5434 = vld [vmem:[#allocation8 + $0x90] sm:$0xff]
    %v5435 = vld [vmem:[#allocation8 + $0x98] sm:$0xff]
    %v5436 = vld [vmem:[#allocation8 + $0xa0] sm:$0xff]
    %v5437 = vld [vmem:[#allocation8 + $0xa8] sm:$0xff]
    %v5438 = vld [vmem:[#allocation8 + $0xb0] sm:$0xff]
    %v5439 = vld [vmem:[#allocation8 + $0xb8] sm:$0xff]
    %v5440 = vld [vmem:[#allocation8 + $0xc0] sm:$0xff]
    %v5441 = vld [vmem:[#allocation8 + $0xc8] sm:$0xff]
    %v5442 = vld [vmem:[#allocation8 + $0xd0] sm:$0xff]
    %v5443 = vld [vmem:[#allocation8 + $0xd8] sm:$0xff]
    %v5444 = vld [vmem:[#allocation8 + $0xe0] sm:$0xff]
    %v5445 = vld [vmem:[#allocation8 + $0xe8] sm:$0xff]
    %v5446 = vld [vmem:[#allocation8 + $0xf0] sm:$0xff]
    %v5447 = vld [vmem:[#allocation8 + $0xf8] sm:$0xff]
    %v5448 = vld [vmem:[#allocation8 + $0x100] sm:$0xff]
    %v5449 = vld [vmem:[#allocation8 + $0x108] sm:$0xff]
    %v5450 = vld [vmem:[#allocation8 + $0x110] sm:$0xff]
    %v5451 = vld [vmem:[#allocation8 + $0x118] sm:$0xff]
    %v5452 = vld [vmem:[#allocation8 + $0x120] sm:$0xff]
    %v5453 = vld [vmem:[#allocation8 + $0x128] sm:$0xff]
    %v5454 = vld [vmem:[#allocation8 + $0x130] sm:$0xff]
    %v5455 = vld [vmem:[#allocation8 + $0x138] sm:$0xff]
    %v5456 = vld [vmem:[#allocation8 + $0x140] sm:$0xff]
    %v5457 = vld [vmem:[#allocation8 + $0x148] sm:$0xff]
    %v5458 = vld [vmem:[#allocation8 + $0x150] sm:$0xff]
    %v5459 = vld [vmem:[#allocation8 + $0x158] sm:$0xff]
    %v5460 = vld [vmem:[#allocation8 + $0x160] sm:$0xff]
    %v5461 = vld [vmem:[#allocation8 + $0x168] sm:$0xff]
    %v5462 = vld [vmem:[#allocation8 + $0x170] sm:$0xff]
    %v5463 = vld [vmem:[#allocation8 + $0x178] sm:$0xff]
    %v5464 = vld [vmem:[#allocation8 + $0x180] sm:$0xff]
    %v5465 = vld [vmem:[#allocation8 + $0x188] sm:$0xff]
    %v5466 = vld [vmem:[#allocation8 + $0x190] sm:$0xff]
    %v5467 = vld [vmem:[#allocation8 + $0x198] sm:$0xff]
    %v5468 = vld [vmem:[#allocation8 + $0x1a0] sm:$0xff]
    %v5469 = vld [vmem:[#allocation8 + $0x1a8] sm:$0xff]
    %v5470 = vld [vmem:[#allocation8 + $0x1b0] sm:$0xff]
    %v5471 = vld [vmem:[#allocation8 + $0x1b8] sm:$0xff]
    %v5472 = vld [vmem:[#allocation8 + $0x1c0] sm:$0xff]
    %v5473 = vld [vmem:[#allocation8 + $0x1c8] sm:$0xff]
    %v5474 = vld [vmem:[#allocation8 + $0x1d0] sm:$0xff]
    %v5475 = vld [vmem:[#allocation8 + $0x1d8] sm:$0xff]
    %v5476 = vld [vmem:[#allocation8 + $0x1e0] sm:$0xff]
    %v5477 = vld [vmem:[#allocation8 + $0x1e8] sm:$0xff]
    %v5478 = vld [vmem:[#allocation8 + $0x1f0] sm:$0xff]
    %v5479 = vld [vmem:[#allocation8 + $0x1f8] sm:$0xff]
    %v5480 = vld [vmem:[#allocation10] sm:$0x3]
    %v5482 = vlaneseq
    %v5483 = vshrl.u32 %v5482, 7
    %v5484 = vsub.s32 0, %v5483
    %v5485 = vrot.slane %v5480, %v5484
    %v5486 = vlaneseq
    %v5487 = vshrl.u32 %v5486, 7
    %v5488 = vsub.s32 1, %v5487
    %v5489 = vrot.slane %v5480, %v5488
    %v5556 = vunpack.c.l.b16 %v5416
    %v5557 = vunpack.c.h.b16 %v5416
    %v5558 = vunpack.c.l.b16 %v5417
    %v5559 = vunpack.c.h.b16 %v5417
    %v5560 = vunpack.c.l.b16 %v5418
    %v5561 = vunpack.c.h.b16 %v5418
    %v5562 = vunpack.c.l.b16 %v5419
    %v5563 = vunpack.c.h.b16 %v5419
    %v5564 = vunpack.c.l.b16 %v5420
    %v5565 = vunpack.c.h.b16 %v5420
    %v5566 = vunpack.c.l.b16 %v5421
    %v5567 = vunpack.c.h.b16 %v5421
    %v5568 = vunpack.c.l.b16 %v5422
    %v5569 = vunpack.c.h.b16 %v5422
    %v5570 = vunpack.c.l.b16 %v5423
    %v5571 = vunpack.c.h.b16 %v5423
    %v5572 = vunpack.c.l.b16 %v5424
    %v5573 = vunpack.c.h.b16 %v5424
    %v5574 = vunpack.c.l.b16 %v5425
    %v5575 = vunpack.c.h.b16 %v5425
    %v5576 = vunpack.c.l.b16 %v5426
    %v5577 = vunpack.c.h.b16 %v5426
    %v5578 = vunpack.c.l.b16 %v5427
    %v5579 = vunpack.c.h.b16 %v5427
    %v5580 = vunpack.c.l.b16 %v5428
    %v5581 = vunpack.c.h.b16 %v5428
    %v5582 = vunpack.c.l.b16 %v5429
    %v5583 = vunpack.c.h.b16 %v5429
    %v5584 = vunpack.c.l.b16 %v5430
    %v5585 = vunpack.c.h.b16 %v5430
    %v5586 = vunpack.c.l.b16 %v5431
    %v5587 = vunpack.c.h.b16 %v5431
    %v5588 = vunpack.c.l.b16 %v5432
    %v5589 = vunpack.c.h.b16 %v5432
    %v5590 = vunpack.c.l.b16 %v5433
    %v5591 = vunpack.c.h.b16 %v5433
    %v5592 = vunpack.c.l.b16 %v5434
    %v5593 = vunpack.c.h.b16 %v5434
    %v5594 = vunpack.c.l.b16 %v5435
    %v5595 = vunpack.c.h.b16 %v5435
    %v5596 = vunpack.c.l.b16 %v5436
    %v5597 = vunpack.c.h.b16 %v5436
    %v5598 = vunpack.c.l.b16 %v5437
    %v5599 = vunpack.c.h.b16 %v5437
    %v5600 = vunpack.c.l.b16 %v5438
    %v5601 = vunpack.c.h.b16 %v5438
    %v5602 = vunpack.c.l.b16 %v5439
    %v5603 = vunpack.c.h.b16 %v5439
    %v5604 = vunpack.c.l.b16 %v5440
    %v5605 = vunpack.c.h.b16 %v5440
    %v5606 = vunpack.c.l.b16 %v5441
    %v5607 = vunpack.c.h.b16 %v5441
    %v5608 = vunpack.c.l.b16 %v5442
    %v5609 = vunpack.c.h.b16 %v5442
    %v5610 = vunpack.c.l.b16 %v5443
    %v5611 = vunpack.c.h.b16 %v5443
    %v5612 = vunpack.c.l.b16 %v5444
    %v5613 = vunpack.c.h.b16 %v5444
    %v5614 = vunpack.c.l.b16 %v5445
    %v5615 = vunpack.c.h.b16 %v5445
    %v5616 = vunpack.c.l.b16 %v5446
    %v5617 = vunpack.c.h.b16 %v5446
    %v5618 = vunpack.c.l.b16 %v5447
    %v5619 = vunpack.c.h.b16 %v5447
    %v5620 = vunpack.c.l.b16 %v5448
    %v5621 = vunpack.c.h.b16 %v5448
    %v5622 = vunpack.c.l.b16 %v5449
    %v5623 = vunpack.c.h.b16 %v5449
    %v5624 = vunpack.c.l.b16 %v5450
    %v5625 = vunpack.c.h.b16 %v5450
    %v5626 = vunpack.c.l.b16 %v5451
    %v5627 = vunpack.c.h.b16 %v5451
    %v5628 = vunpack.c.l.b16 %v5452
    %v5629 = vunpack.c.h.b16 %v5452
    %v5630 = vunpack.c.l.b16 %v5453
    %v5631 = vunpack.c.h.b16 %v5453
    %v5632 = vunpack.c.l.b16 %v5454
    %v5633 = vunpack.c.h.b16 %v5454
    %v5634 = vunpack.c.l.b16 %v5455
    %v5635 = vunpack.c.h.b16 %v5455
    %v5636 = vunpack.c.l.b16 %v5456
    %v5637 = vunpack.c.h.b16 %v5456
    %v5638 = vunpack.c.l.b16 %v5457
    %v5639 = vunpack.c.h.b16 %v5457
    %v5640 = vunpack.c.l.b16 %v5458
    %v5641 = vunpack.c.h.b16 %v5458
    %v5642 = vunpack.c.l.b16 %v5459
    %v5643 = vunpack.c.h.b16 %v5459
    %v5644 = vunpack.c.l.b16 %v5460
    %v5645 = vunpack.c.h.b16 %v5460
    %v5646 = vunpack.c.l.b16 %v5461
    %v5647 = vunpack.c.h.b16 %v5461
    %v5648 = vunpack.c.l.b16 %v5462
    %v5649 = vunpack.c.h.b16 %v5462
    %v5650 = vunpack.c.l.b16 %v5463
    %v5651 = vunpack.c.h.b16 %v5463
    %v5652 = vunpack.c.l.b16 %v5464
    %v5653 = vunpack.c.h.b16 %v5464
    %v5654 = vunpack.c.l.b16 %v5465
    %v5655 = vunpack.c.h.b16 %v5465
    %v5656 = vunpack.c.l.b16 %v5466
    %v5657 = vunpack.c.h.b16 %v5466
    %v5658 = vunpack.c.l.b16 %v5467
    %v5659 = vunpack.c.h.b16 %v5467
    %v5660 = vunpack.c.l.b16 %v5468
    %v5661 = vunpack.c.h.b16 %v5468
    %v5662 = vunpack.c.l.b16 %v5469
    %v5663 = vunpack.c.h.b16 %v5469
    %v5664 = vunpack.c.l.b16 %v5470
    %v5665 = vunpack.c.h.b16 %v5470
    %v5666 = vunpack.c.l.b16 %v5471
    %v5667 = vunpack.c.h.b16 %v5471
    %v5668 = vunpack.c.l.b16 %v5472
    %v5669 = vunpack.c.h.b16 %v5472
    %v5670 = vunpack.c.l.b16 %v5473
    %v5671 = vunpack.c.h.b16 %v5473
    %v5672 = vunpack.c.l.b16 %v5474
    %v5673 = vunpack.c.h.b16 %v5474
    %v5674 = vunpack.c.l.b16 %v5475
    %v5675 = vunpack.c.h.b16 %v5475
    %v5676 = vunpack.c.l.b16 %v5476
    %v5677 = vunpack.c.h.b16 %v5476
    %v5678 = vunpack.c.l.b16 %v5477
    %v5679 = vunpack.c.h.b16 %v5477
    %v5680 = vunpack.c.l.b16 %v5478
    %v5681 = vunpack.c.h.b16 %v5478
    %v5682 = vunpack.c.l.b16 %v5479
    %v5683 = vunpack.c.h.b16 %v5479
    %v5684 = vpack.c.b16 %v5558, %v5556
    %v5685 = vpack.c.b16 %v5559, %v5557
    %v5686 = vpack.c.b16 %v5562, %v5560
    %v5687 = vpack.c.b16 %v5563, %v5561
    %v5688 = vpack.c.b16 %v5566, %v5564
    %v5689 = vpack.c.b16 %v5567, %v5565
    %v5690 = vpack.c.b16 %v5570, %v5568
    %v5691 = vpack.c.b16 %v5571, %v5569
    %v5692 = vpack.c.b16 %v5574, %v5572
    %v5693 = vpack.c.b16 %v5575, %v5573
    %v5694 = vpack.c.b16 %v5578, %v5576
    %v5695 = vpack.c.b16 %v5579, %v5577
    %v5696 = vpack.c.b16 %v5582, %v5580
    %v5697 = vpack.c.b16 %v5583, %v5581
    %v5698 = vpack.c.b16 %v5586, %v5584
    %v5699 = vpack.c.b16 %v5587, %v5585
    %v5700 = vpack.c.b16 %v5590, %v5588
    %v5701 = vpack.c.b16 %v5591, %v5589
    %v5702 = vpack.c.b16 %v5594, %v5592
    %v5703 = vpack.c.b16 %v5595, %v5593
    %v5704 = vpack.c.b16 %v5598, %v5596
    %v5705 = vpack.c.b16 %v5599, %v5597
    %v5706 = vpack.c.b16 %v5602, %v5600
    %v5707 = vpack.c.b16 %v5603, %v5601
    %v5708 = vpack.c.b16 %v5606, %v5604
    %v5709 = vpack.c.b16 %v5607, %v5605
    %v5710 = vpack.c.b16 %v5610, %v5608
    %v5711 = vpack.c.b16 %v5611, %v5609
    %v5712 = vpack.c.b16 %v5614, %v5612
    %v5713 = vpack.c.b16 %v5615, %v5613
    %v5714 = vpack.c.b16 %v5618, %v5616
    %v5715 = vpack.c.b16 %v5619, %v5617
    %v5716 = vpack.c.b16 %v5622, %v5620
    %v5717 = vpack.c.b16 %v5623, %v5621
    %v5718 = vpack.c.b16 %v5626, %v5624
    %v5719 = vpack.c.b16 %v5627, %v5625
    %v5720 = vpack.c.b16 %v5630, %v5628
    %v5721 = vpack.c.b16 %v5631, %v5629
    %v5722 = vpack.c.b16 %v5634, %v5632
    %v5723 = vpack.c.b16 %v5635, %v5633
    %v5724 = vpack.c.b16 %v5638, %v5636
    %v5725 = vpack.c.b16 %v5639, %v5637
    %v5726 = vpack.c.b16 %v5642, %v5640
    %v5727 = vpack.c.b16 %v5643, %v5641
    %v5728 = vpack.c.b16 %v5646, %v5644
    %v5729 = vpack.c.b16 %v5647, %v5645
    %v5730 = vpack.c.b16 %v5650, %v5648
    %v5731 = vpack.c.b16 %v5651, %v5649
    %v5732 = vpack.c.b16 %v5654, %v5652
    %v5733 = vpack.c.b16 %v5655, %v5653
    %v5734 = vpack.c.b16 %v5658, %v5656
    %v5735 = vpack.c.b16 %v5659, %v5657
    %v5736 = vpack.c.b16 %v5662, %v5660
    %v5737 = vpack.c.b16 %v5663, %v5661
    %v5738 = vpack.c.b16 %v5666, %v5664
    %v5739 = vpack.c.b16 %v5667, %v5665
    %v5740 = vpack.c.b16 %v5670, %v5668
    %v5741 = vpack.c.b16 %v5671, %v5669
    %v5742 = vpack.c.b16 %v5674, %v5672
    %v5743 = vpack.c.b16 %v5675, %v5673
    %v5744 = vpack.c.b16 %v5678, %v5676
    %v5745 = vpack.c.b16 %v5679, %v5677
    %v5746 = vpack.c.b16 %v5682, %v5680
    %v5747 = vpack.c.b16 %v5683, %v5681
    %5812 = vmatprep.subr.bf16.mxu0 %v5685
    %5813 = vmatpush1.bf16.msra.mxu0 %v5684
    %5814 = vmatprep.subr.bf16.mxu0 %v5687
    %5815 = vmatpush1.bf16.msra.mxu0 %v5686
    %5816 = vmatprep.subr.bf16.mxu0 %v5689
    %5817 = vmatpush1.bf16.msra.mxu0 %v5688
    %5818 = vmatprep.subr.bf16.mxu0 %v5691
    %5819 = vmatpush1.bf16.msra.mxu0 %v5690
    %5820 = vmatprep.subr.bf16.mxu0 %v5693
    %5821 = vmatpush1.bf16.msra.mxu0 %v5692
    %5822 = vmatprep.subr.bf16.mxu0 %v5695
    %5823 = vmatpush1.bf16.msra.mxu0 %v5694
    %5824 = vmatprep.subr.bf16.mxu0 %v5697
    %5825 = vmatpush1.bf16.msra.mxu0 %v5696
    %5826 = vmatprep.subr.bf16.mxu0 %v5699
    %5827 = vmatpush1.bf16.msra.mxu0 %v5698
    %5828 = vmatprep.subr.bf16.mxu0 %v5701
    %5829 = vmatpush1.bf16.msra.mxu0 %v5700
    %5830 = vmatprep.subr.bf16.mxu0 %v5703
    %5831 = vmatpush1.bf16.msra.mxu0 %v5702
    %5832 = vmatprep.subr.bf16.mxu0 %v5705
    %5833 = vmatpush1.bf16.msra.mxu0 %v5704
    %5834 = vmatprep.subr.bf16.mxu0 %v5707
    %5835 = vmatpush1.bf16.msra.mxu0 %v5706
    %5836 = vmatprep.subr.bf16.mxu0 %v5709
    %5837 = vmatpush1.bf16.msra.mxu0 %v5708
    %5838 = vmatprep.subr.bf16.mxu0 %v5711
    %5839 = vmatpush1.bf16.msra.mxu0 %v5710
    %5840 = vmatprep.subr.bf16.mxu0 %v5713
    %5841 = vmatpush1.bf16.msra.mxu0 %v5712
    %5842 = vmatprep.subr.bf16.mxu0 %v5715
    %5843 = vmatpush1.bf16.msra.mxu0 %v5714
    %5844 = vmatprep.mubr.bf16.mxu0 %v5401
    %5845 = vmatmul.mubr.bf16.gmra.mrb[0].mxu0 %v5400
    %v5846 = vpop.f32.mrb[0].mxu0
    %v5847 = vadd.f32 %v5485, %v5846
    %v5848 = vpop.f32.mrb[0].mxu0
    %v5849 = vadd.f32 %v5489, %v5848
    %v5850 = vpop.f32.mrb[0].mxu0
    %v5851 = vadd.f32 %v5485, %v5850
    %v5852 = vpop.f32.mrb[0].mxu0
    %v5853 = vadd.f32 %v5489, %v5852
    %5854 = vmatprep.mubr.bf16.mxu0 %v5405
    %5855 = vmatmul.mubr.bf16.gmra.mrb[0].mxu0 %v5404
    %v5856 = vpop.f32.mrb[0].mxu0
    %v5857 = vadd.f32 %v5485, %v5856
    %v5858 = vpop.f32.mrb[0].mxu0
    %v5859 = vadd.f32 %v5489, %v5858
    %v5860 = vpop.f32.mrb[0].mxu0
    %v5861 = vadd.f32 %v5485, %v5860
    %v5862 = vpop.f32.mrb[0].mxu0
    %v5863 = vadd.f32 %v5489, %v5862
    %5864 = vmatprep.mubr.bf16.mxu0 %v5409
    %5865 = vmatmul.mubr.bf16.gmra.mrb[0].mxu0 %v5408
    %v5866 = vpop.f32.mrb[0].mxu0
    %v5867 = vadd.f32 %v5485, %v5866
    %v5868 = vpop.f32.mrb[0].mxu0
    %v5869 = vadd.f32 %v5489, %v5868
    %v5870 = vpop.f32.mrb[0].mxu0
    %v5871 = vadd.f32 %v5485, %v5870
    %v5872 = vpop.f32.mrb[0].mxu0
    %v5873 = vadd.f32 %v5489, %v5872
    %5874 = vmatprep.mubr.bf16.mxu0 %v5413
    %5875 = vmatmul.mubr.bf16.gmra.mrb[0].mxu0 %v5412
    %v5876 = vpop.f32.mrb[0].mxu0
    %v5877 = vadd.f32 %v5485, %v5876
    %v5878 = vpop.f32.mrb[0].mxu0
    %v5879 = vadd.f32 %v5489, %v5878
    %v5880 = vpop.f32.mrb[0].mxu0
    %v5881 = vadd.f32 %v5485, %v5880
    %v5882 = vpop.f32.mrb[0].mxu0
    %v5883 = vadd.f32 %v5489, %v5882
    %5884 = vdwg.mxu0
    %5885 = vmatprep.subr.bf16.mxu0 %v5717
    %5886 = vmatpush1.bf16.msra.mxu0 %v5716
    %5887 = vmatprep.subr.bf16.mxu0 %v5719
    %5888 = vmatpush1.bf16.msra.mxu0 %v5718
    %5889 = vmatprep.subr.bf16.mxu0 %v5721
    %5890 = vmatpush1.bf16.msra.mxu0 %v5720
    %5891 = vmatprep.subr.bf16.mxu0 %v5723
    %5892 = vmatpush1.bf16.msra.mxu0 %v5722
    %5893 = vmatprep.subr.bf16.mxu0 %v5725
    %5894 = vmatpush1.bf16.msra.mxu0 %v5724
    %5895 = vmatprep.subr.bf16.mxu0 %v5727
    %5896 = vmatpush1.bf16.msra.mxu0 %v5726
    %5897 = vmatprep.subr.bf16.mxu0 %v5729
    %5898 = vmatpush1.bf16.msra.mxu0 %v5728
    %5899 = vmatprep.subr.bf16.mxu0 %v5731
    %5900 = vmatpush1.bf16.msra.mxu0 %v5730
    %5901 = vmatprep.subr.bf16.mxu0 %v5733
    %5902 = vmatpush1.bf16.msra.mxu0 %v5732
    %5903 = vmatprep.subr.bf16.mxu0 %v5735
    %5904 = vmatpush1.bf16.msra.mxu0 %v5734
    %5905 = vmatprep.subr.bf16.mxu0 %v5737
    %5906 = vmatpush1.bf16.msra.mxu0 %v5736
    %5907 = vmatprep.subr.bf16.mxu0 %v5739
    %5908 = vmatpush1.bf16.msra.mxu0 %v5738
    %5909 = vmatprep.subr.bf16.mxu0 %v5741
    %5910 = vmatpush1.bf16.msra.mxu0 %v5740
    %5911 = vmatprep.subr.bf16.mxu0 %v5743
    %5912 = vmatpush1.bf16.msra.mxu0 %v5742
    %5913 = vmatprep.subr.bf16.mxu0 %v5745
    %5914 = vmatpush1.bf16.msra.mxu0 %v5744
    %5915 = vmatprep.subr.bf16.mxu0 %v5747
    %5916 = vmatpush1.bf16.msra.mxu0 %v5746
    %5917 = vmatprep.mubr.bf16.mxu0 %v5403
    %5918 = vmatmul.mubr.bf16.gmra.mrb[0].mxu0 %v5402
    %v5919 = vpop.f32.mrb[0].mxu0
    %v5920 = vadd.f32 %v5847, %v5919
    %v5921 = vpop.f32.mrb[0].mxu0
    %v5922 = vadd.f32 %v5849, %v5921
    %v5923 = vpop.f32.mrb[0].mxu0
    %v5924 = vadd.f32 %v5851, %v5923
    %v5925 = vpop.f32.mrb[0].mxu0
    %v5926 = vadd.f32 %v5853, %v5925
    %5927 = vmatprep.mubr.bf16.mxu0 %v5407
    %5928 = vmatmul.mubr.bf16.gmra.mrb[0].mxu0 %v5406
    %v5929 = vpop.f32.mrb[0].mxu0
    %v5930 = vadd.f32 %v5857, %v5929
    %v5931 = vpop.f32.mrb[0].mxu0
    %v5932 = vadd.f32 %v5859, %v5931
    %v5933 = vpop.f32.mrb[0].mxu0
    %v5934 = vadd.f32 %v5861, %v5933
    %v5935 = vpop.f32.mrb[0].mxu0
    %v5936 = vadd.f32 %v5863, %v5935
    %5937 = vmatprep.mubr.bf16.mxu0 %v5411
    %5938 = vmatmul.mubr.bf16.gmra.mrb[0].mxu0 %v5410
    %v5939 = vpop.f32.mrb[0].mxu0
    %v5940 = vadd.f32 %v5867, %v5939
    %v5941 = vpop.f32.mrb[0].mxu0
    %v5942 = vadd.f32 %v5869, %v5941
    %v5943 = vpop.f32.mrb[0].mxu0
    %v5944 = vadd.f32 %v5871, %v5943
    %v5945 = vpop.f32.mrb[0].mxu0
    %v5946 = vadd.f32 %v5873, %v5945
    %5947 = vmatprep.mubr.bf16.mxu0 %v5415
    %5948 = vmatmul.mubr.bf16.gmra.mrb[0].mxu0 %v5414
    %v5949 = vpop.f32.mrb[0].mxu0
    %v5950 = vadd.f32 %v5877, %v5949
    %v5951 = vpop.f32.mrb[0].mxu0
    %v5952 = vadd.f32 %v5879, %v5951
    %v5953 = vpop.f32.mrb[0].mxu0
    %v5954 = vadd.f32 %v5881, %v5953
    %v5955 = vpop.f32.mrb[0].mxu0
    %v5956 = vadd.f32 %v5883, %v5955
    %5957 = vdwg.mxu0
    %v5958 = vmax.f32 %v5920, 0.0
    %v5959 = vmax.f32 %v5922, 0.0
    %v5960 = vmax.f32 %v5924, 0.0
    %v5961 = vmax.f32 %v5926, 0.0
    %v5962 = vmax.f32 %v5930, 0.0
    %v5963 = vmax.f32 %v5932, 0.0
    %v5964 = vmax.f32 %v5934, 0.0
    %v5965 = vmax.f32 %v5936, 0.0
    %v5966 = vmax.f32 %v5940, 0.0
    %v5967 = vmax.f32 %v5942, 0.0
    %v5968 = vmax.f32 %v5944, 0.0
    %v5969 = vmax.f32 %v5946, 0.0
    %v5970 = vmax.f32 %v5950, 0.0
    %v5971 = vmax.f32 %v5952, 0.0
    %v5972 = vmax.f32 %v5954, 0.0
    %v5973 = vmax.f32 %v5956, 0.0
    %v5974 = vpack.c.bf16 %v5960, %v5958
    %v5975 = vpack.c.bf16 %v5961, %v5959
    %v5976 = vpack.c.bf16 %v5964, %v5962
    %v5977 = vpack.c.bf16 %v5965, %v5963
    %v5978 = vpack.c.bf16 %v5968, %v5966
    %v5979 = vpack.c.bf16 %v5969, %v5967
    %v5980 = vpack.c.bf16 %v5972, %v5970
    %v5981 = vpack.c.bf16 %v5973, %v5971
    %v5982 = vld [vmem:[#allocation11] sm:$0xf]
    %v5983 = vld [vmem:[#allocation11 + $0x4] sm:$0xf]
    %v5984 = vld [vmem:[#allocation11 + $0x8] sm:$0xf]
    %v5985 = vld [vmem:[#allocation11 + $0xc] sm:$0xf]
    %v5986 = vld [vmem:[#allocation11 + $0x10] sm:$0xf]
    %v5987 = vld [vmem:[#allocation11 + $0x14] sm:$0xf]
    %v5988 = vld [vmem:[#allocation11 + $0x18] sm:$0xf]
    %v5989 = vld [vmem:[#allocation11 + $0x1c] sm:$0xf]
    %v5990 = vld [vmem:[#allocation11 + $0x20] sm:$0xf]
    %v5991 = vld [vmem:[#allocation11 + $0x24] sm:$0xf]
    %v5992 = vld [vmem:[#allocation11 + $0x28] sm:$0xf]
    %v5993 = vld [vmem:[#allocation11 + $0x2c] sm:$0xf]
    %v5994 = vld [vmem:[#allocation11 + $0x30] sm:$0xf]
    %v5995 = vld [vmem:[#allocation11 + $0x34] sm:$0xf]
    %v5996 = vld [vmem:[#allocation11 + $0x38] sm:$0xf]
    %v5997 = vld [vmem:[#allocation11 + $0x3c] sm:$0xf]
    %v5998 = vld [vmem:[#allocation11 + $0x40] sm:$0xf]
    %v5999 = vld [vmem:[#allocation11 + $0x44] sm:$0xf]
    %v6000 = vld [vmem:[#allocation11 + $0x48] sm:$0xf]
    %v6001 = vld [vmem:[#allocation11 + $0x4c] sm:$0xf]
    %v6002 = vld [vmem:[#allocation11 + $0x50] sm:$0xf]
    %v6003 = vld [vmem:[#allocation11 + $0x54] sm:$0xf]
    %v6004 = vld [vmem:[#allocation11 + $0x58] sm:$0xf]
    %v6005 = vld [vmem:[#allocation11 + $0x5c] sm:$0xf]
    %v6006 = vld [vmem:[#allocation11 + $0x60] sm:$0xf]
    %v6007 = vld [vmem:[#allocation11 + $0x64] sm:$0xf]
    %v6008 = vld [vmem:[#allocation11 + $0x68] sm:$0xf]
    %v6009 = vld [vmem:[#allocation11 + $0x6c] sm:$0xf]
    %v6010 = vld [vmem:[#allocation11 + $0x70] sm:$0xf]
    %v6011 = vld [vmem:[#allocation11 + $0x74] sm:$0xf]
    %v6012 = vld [vmem:[#allocation11 + $0x78] sm:$0xf]
    %v6013 = vld [vmem:[#allocation11 + $0x7c] sm:$0xf]
    %v6014 = vld [vmem:[#allocation13] sm:$0x1]
    %v6016 = vlaneseq
    %v6017 = vshrl.u32 %v6016, 7
    %v6018 = vsub.s32 0, %v6017
    %v6019 = vrot.slane %v6014, %v6018
    %v6053 = vunpack.c.l.b16 %v5982
    %v6054 = vunpack.c.l.b16 %v5983
    %v6055 = vunpack.c.l.b16 %v5984
    %v6056 = vunpack.c.l.b16 %v5985
    %v6057 = vunpack.c.l.b16 %v5986
    %v6058 = vunpack.c.l.b16 %v5987
    %v6059 = vunpack.c.l.b16 %v5988
    %v6060 = vunpack.c.l.b16 %v5989
    %v6061 = vunpack.c.l.b16 %v5990
    %v6062 = vunpack.c.l.b16 %v5991
    %v6063 = vunpack.c.l.b16 %v5992
    %v6064 = vunpack.c.l.b16 %v5993
    %v6065 = vunpack.c.l.b16 %v5994
    %v6066 = vunpack.c.l.b16 %v5995
    %v6067 = vunpack.c.l.b16 %v5996
    %v6068 = vunpack.c.l.b16 %v5997
    %v6069 = vunpack.c.l.b16 %v5998
    %v6070 = vunpack.c.l.b16 %v5999
    %v6071 = vunpack.c.l.b16 %v6000
    %v6072 = vunpack.c.l.b16 %v6001
    %v6073 = vunpack.c.l.b16 %v6002
    %v6074 = vunpack.c.l.b16 %v6003
    %v6075 = vunpack.c.l.b16 %v6004
    %v6076 = vunpack.c.l.b16 %v6005
    %v6077 = vunpack.c.l.b16 %v6006
    %v6078 = vunpack.c.l.b16 %v6007
    %v6079 = vunpack.c.l.b16 %v6008
    %v6080 = vunpack.c.l.b16 %v6009
    %v6081 = vunpack.c.l.b16 %v6010
    %v6082 = vunpack.c.l.b16 %v6011
    %v6083 = vunpack.c.l.b16 %v6012
    %v6084 = vunpack.c.l.b16 %v6013
    %v6085 = vpack.c.b16 %v6054, %v6053
    %v6086 = vpack.c.b16 %v6056, %v6055
    %v6087 = vpack.c.b16 %v6058, %v6057
    %v6088 = vpack.c.b16 %v6060, %v6059
    %v6089 = vpack.c.b16 %v6062, %v6061
    %v6090 = vpack.c.b16 %v6064, %v6063
    %v6091 = vpack.c.b16 %v6066, %v6065
    %v6092 = vpack.c.b16 %v6068, %v6067
    %v6093 = vpack.c.b16 %v6070, %v6069
    %v6094 = vpack.c.b16 %v6072, %v6071
    %v6095 = vpack.c.b16 %v6074, %v6073
    %v6096 = vpack.c.b16 %v6076, %v6075
    %v6097 = vpack.c.b16 %v6078, %v6077
    %v6098 = vpack.c.b16 %v6080, %v6079
    %v6099 = vpack.c.b16 %v6082, %v6081
    %v6100 = vpack.c.b16 %v6084, %v6083
    %6117 = vmatprep.subr.bf16.mxu0 0
    %6118 = vmatpush1.bf16.msra.mxu0 %v6085
    %6119 = vmatprep.subr.bf16.mxu0 0
    %6120 = vmatpush1.bf16.msra.mxu0 %v6086
    %6121 = vmatprep.subr.bf16.mxu0 0
    %6122 = vmatpush1.bf16.msra.mxu0 %v6087
    %6123 = vmatprep.subr.bf16.mxu0 0
    %6124 = vmatpush1.bf16.msra.mxu0 %v6088
    %6125 = vmatprep.subr.bf16.mxu0 0
    %6126 = vmatpush1.bf16.msra.mxu0 %v6089
    %6127 = vmatprep.subr.bf16.mxu0 0
    %6128 = vmatpush1.bf16.msra.mxu0 %v6090
    %6129 = vmatprep.subr.bf16.mxu0 0
    %6130 = vmatpush1.bf16.msra.mxu0 %v6091
    %6131 = vmatprep.subr.bf16.mxu0 0
    %6132 = vmatpush1.bf16.msra.mxu0 %v6092
    %6133 = vmatprep.subr.bf16.mxu0 0
    %6134 = vmatpush1.bf16.msra.mxu0 %v6093
    %6135 = vmatprep.subr.bf16.mxu0 0
    %6136 = vmatpush1.bf16.msra.mxu0 %v6094
    %6137 = vmatprep.subr.bf16.mxu0 0
    %6138 = vmatpush1.bf16.msra.mxu0 %v6095
    %6139 = vmatprep.subr.bf16.mxu0 0
    %6140 = vmatpush1.bf16.msra.mxu0 %v6096
    %6141 = vmatprep.subr.bf16.mxu0 0
    %6142 = vmatpush1.bf16.msra.mxu0 %v6097
    %6143 = vmatprep.subr.bf16.mxu0 0
    %6144 = vmatpush1.bf16.msra.mxu0 %v6098
    %6145 = vmatprep.subr.bf16.mxu0 0
    %6146 = vmatpush1.bf16.msra.mxu0 %v6099
    %6147 = vmatprep.subr.bf16.mxu0 0
    %6148 = vmatpush1.bf16.msra.mxu0 %v6100
    %6149 = vmatprep.mubr.bf16.mxu0 %v5975
    %6150 = vmatmul.mubr.bf16.gmra.mrb[0].mxu0 %v5974
    %v6151 = vpop.f32.mrb[0].mxu0
    %v6152 = vadd.f32 %v6019, %v6151
    %v6153 = vpop.f32.mrb[0].mxu0
    %v6154 = vpop.f32.mrb[0].mxu0
    %v6155 = vadd.f32 %v6019, %v6154
    %v6156 = vpop.f32.mrb[0].mxu0
    %6157 = vmatprep.mubr.bf16.mxu0 %v5977
    %6158 = vmatmul.mubr.bf16.gmra.mrb[0].mxu0 %v5976
    %v6159 = vpop.f32.mrb[0].mxu0
    %v6160 = vadd.f32 %v6019, %v6159
    %v6161 = vpop.f32.mrb[0].mxu0
    %v6162 = vpop.f32.mrb[0].mxu0
    %v6163 = vadd.f32 %v6019, %v6162
    %v6164 = vpop.f32.mrb[0].mxu0
    %6165 = vmatprep.mubr.bf16.mxu0 %v5979
    %6166 = vmatmul.mubr.bf16.gmra.mrb[0].mxu0 %v5978
    %v6167 = vpop.f32.mrb[0].mxu0
    %v6168 = vadd.f32 %v6019, %v6167
    %v6169 = vpop.f32.mrb[0].mxu0
    %v6170 = vpop.f32.mrb[0].mxu0
    %v6171 = vadd.f32 %v6019, %v6170
    %v6172 = vpop.f32.mrb[0].mxu0
    %6173 = vmatprep.mubr.bf16.mxu0 %v5981
    %6174 = vmatmul.mubr.bf16.gmra.mrb[0].mxu0 %v5980
    %v6175 = vpop.f32.mrb[0].mxu0
    %v6176 = vadd.f32 %v6019, %v6175
    %v6177 = vpop.f32.mrb[0].mxu0
    %v6178 = vpop.f32.mrb[0].mxu0
    %v6179 = vadd.f32 %v6019, %v6178
    %v6180 = vpop.f32.mrb[0].mxu0
    %6181 = vdwg.mxu0
    %6182 = vmax.xlane.f32.xlu0 %v6152
    %v6183 = vpop.xlane.xlu0 %6182
    %6184 = vmax.xlane.f32.xlu0 %v6155
    %v6185 = vpop.xlane.xlu0 %6184
    %6186 = vmax.xlane.f32.xlu0 %v6160
    %v6187 = vpop.xlane.xlu0 %6186
    %6188 = vmax.xlane.f32.xlu0 %v6163
    %v6189 = vpop.xlane.xlu0 %6188
    %6190 = vmax.xlane.f32.xlu0 %v6168
    %v6191 = vpop.xlane.xlu0 %6190
    %6192 = vmax.xlane.f32.xlu0 %v6171
    %v6193 = vpop.xlane.xlu0 %6192
    %6194 = vmax.xlane.f32.xlu0 %v6176
    %v6195 = vpop.xlane.xlu0 %6194
    %6196 = vmax.xlane.f32.xlu0 %v6179
    %v6197 = vpop.xlane.xlu0 %6196
    %v6198 = vsub.f32 %v6152, %v6183
    %v6199 = vsub.f32 %v6155, %v6185
    %v6200 = vsub.f32 %v6160, %v6187
    %v6201 = vsub.f32 %v6163, %v6189
    %v6202 = vsub.f32 %v6168, %v6191
    %v6203 = vsub.f32 %v6171, %v6193
    %v6204 = vsub.f32 %v6176, %v6195
    %v6205 = vsub.f32 %v6179, %v6197
    %v6206 = vmul.f32 %v6198, 1.442695
    %v6207 = vpow.pop %v6206
    %v6208 = vmul.f32 %v6199, 1.442695
    %v6209 = vpow.pop %v6208
    %v6210 = vmul.f32 %v6200, 1.442695
    %v6211 = vpow.pop %v6210
    %v6212 = vmul.f32 %v6201, 1.442695
    %v6213 = vpow.pop %v6212
    %v6214 = vmul.f32 %v6202, 1.442695
    %v6215 = vpow.pop %v6214
    %v6216 = vmul.f32 %v6203, 1.442695
    %v6217 = vpow.pop %v6216
    %v6218 = vmul.f32 %v6204, 1.442695
    %v6219 = vpow.pop %v6218
    %v6220 = vmul.f32 %v6205, 1.442695
    %v6221 = vpow.pop %v6220
    %6222 = vadd.xlane.f32.xlu0 %v6207
    %v6223 = vpop.xlane.xlu0 %6222
    %6224 = vadd.xlane.f32.xlu0 %v6209
    %v6225 = vpop.xlane.xlu0 %6224
    %6226 = vadd.xlane.f32.xlu0 %v6211
    %v6227 = vpop.xlane.xlu0 %6226
    %6228 = vadd.xlane.f32.xlu0 %v6213
    %v6229 = vpop.xlane.xlu0 %6228
    %6230 = vadd.xlane.f32.xlu0 %v6215
    %v6231 = vpop.xlane.xlu0 %6230
    %6232 = vadd.xlane.f32.xlu0 %v6217
    %v6233 = vpop.xlane.xlu0 %6232
    %6234 = vadd.xlane.f32.xlu0 %v6219
    %v6235 = vpop.xlane.xlu0 %6234
    %6236 = vadd.xlane.f32.xlu0 %v6221
    %v6237 = vpop.xlane.xlu0 %6236
    %v6238 = vlog2.pop %v6223
    %v6239 = vmul.f32 %v6238, 0.6931472
    %v6240 = vlog2.pop %v6225
    %v6241 = vmul.f32 %v6240, 0.6931472
    %v6242 = vlog2.pop %v6227
    %v6243 = vmul.f32 %v6242, 0.6931472
    %v6244 = vlog2.pop %v6229
    %v6245 = vmul.f32 %v6244, 0.6931472
    %v6246 = vlog2.pop %v6231
    %v6247 = vmul.f32 %v6246, 0.6931472
    %v6248 = vlog2.pop %v6233
    %v6249 = vmul.f32 %v6248, 0.6931472
    %v6250 = vlog2.pop %v6235
    %v6251 = vmul.f32 %v6250, 0.6931472
    %v6252 = vlog2.pop %v6237
    %v6253 = vmul.f32 %v6252, 0.6931472
    %v6254 = vsub.f32 %v6198, %v6239
    %v6255 = vsub.f32 %v6199, %v6241
    %v6256 = vsub.f32 %v6200, %v6243
    %v6257 = vsub.f32 %v6201, %v6245
    %v6258 = vsub.f32 %v6202, %v6247
    %v6259 = vsub.f32 %v6203, %v6249
    %v6260 = vsub.f32 %v6204, %v6251
    %v6261 = vsub.f32 %v6205, %v6253
    %6262 = vst [vmem:[#allocation14] sm:$0xff] %v6254
    %6263 = vst [vmem:[#allocation14 + $0x8] sm:$0xff] %v6255
    %6264 = vst [vmem:[#allocation14 + $0x10] sm:$0xff] %v6256
    %6265 = vst [vmem:[#allocation14 + $0x18] sm:$0xff] %v6257
    %6266 = vst [vmem:[#allocation14 + $0x20] sm:$0xff] %v6258
    %6267 = vst [vmem:[#allocation14 + $0x28] sm:$0xff] %v6259
    %6268 = vst [vmem:[#allocation14 + $0x30] sm:$0xff] %v6260
    %6269 = vst [vmem:[#allocation14 + $0x38] sm:$0xff] %v6261
    // Predicated region
    $region58: #{tpu_custom_call.1} parent=1 // pred_check
      _
    $region59: #{tpu_custom_call.1} parent=1 // pred_check_branch
      %6271 = sbr.rel (0) target = $region61
    $region60: #{tpu_custom_call.1} parent=1 // pred_region
      %s6273 = ssub.s32 1024, 1024
      %6274 = vsyncadd [#allocation4], %s6273
      %s6275 = sshll.u32 [#allocation14], 4
      %s6276 = int_to_ptr.vmem [resolvable:$true] %s6275
      %6281 = dma.vmem_to_hbm [thread:$0]  %s6276, 1024, %s7, [#allocation4], 128, 128, 8
    $region61: #{tpu_custom_call.1} parent=1 // pred_fallthru
      _
    // Predicated region
    $region62: #{tpu_custom_call.1} parent=1 // pred_check
      _
    $region63: #{tpu_custom_call.1} parent=1 // pred_check_branch
      %6283 = sbr.rel (0) target = $region65
    $region64: #{tpu_custom_call.1} parent=1 // pred_region
      %6284 = dma.done [#allocation4], 1024
    $region65: #{tpu_custom_call.1} parent=1 // pred_fallthru
      _
    %6285 = vsyncpa [#allocation3], 1
    %6286 = vsyncpa [#allocation6], 1
    %6287 = vsyncpa [#allocation9], 1
    %6288 = vsyncpa [#allocation12], 1
    %6289 = vsyncpa [#allocation4], 1

// kernel: tpu_custom_call.1
$region0: #{tpu_custom_call.1}
  #allocation0 [shape = 'u32[]', space=smem, size = 0x4, offset = 0x4, fixed_abs, tag = 'smem constant byte address 0x4 - core index']
  #allocation1 [shape = 'u32[144,128]{1,0:T(1,128)}', space=vmem, size = 0x12000, scoped, tag = 'internal scratch']
  %s0 = inlined_call_operand.hbm [shape: f32[64,2352], index: 0, kind: input, shape index: {}]
  %s1 = inlined_call_operand.hbm [shape: bf16[2352,512], index: 1, kind: input, shape index: {}]
  %s2 = inlined_call_operand.hbm [shape: f32[1,512], index: 2, kind: input, shape index: {}]
  %s3 = inlined_call_operand.hbm [shape: bf16[512,256], index: 3, kind: input, shape index: {}]
  %s4 = inlined_call_operand.hbm [shape: f32[1,256], index: 4, kind: input, shape index: {}]
  %s5 = inlined_call_operand.hbm [shape: bf16[256,128], index: 5, kind: input, shape index: {}]
  %s6 = inlined_call_operand.hbm [shape: f32[1,128], index: 6, kind: input, shape index: {}]
  %s7 = inlined_call_operand.hbm [shape: f32[64,128], index: 7, kind: output, shape index: {}]
  %s8 = sld [smem:[#allocation0]]
  $region66: #{tpu_custom_call.1} parent=0
    _
  %s10 = ssub.s32 1, %s8
  %s11 = scalar_select 0, %s10, %s8
  $region1: #{tpu_custom_call.1} parent=0
    #allocation2 [shape = 'u8[622592]{0}', space=vmem, size = 0x98000, scoped, tag = 'input window, operand 0, single buffered']
    #allocation3 [shape = 's32[1]{0}', space=sflag, size = 0x4, scoped, tag = 'scoped memory for tpu_custom_call.1']
    #allocation4 [shape = 's32[1]{0}', space=sflag, size = 0x4, scoped, tag = 'scoped memory for tpu_custom_call.1']
    #allocation5 [shape = 'u8[2408448]{0}', space=vmem, size = 0x24c000, scoped, tag = 'input window, operand 1, single buffered']
    #allocation6 [shape = 's32[1]{0}', space=sflag, size = 0x4, scoped, tag = 'scoped memory for tpu_custom_call.1']
    #allocation7 [shape = 'u8[2048]{0}', space=vmem, size = 0x800, scoped, tag = 'input window, operand 2, single buffered']
    #allocation8 [shape = 'u8[262144]{0}', space=vmem, size = 0x40000, scoped, tag = 'input window, operand 3, single buffered']
    #allocation9 [shape = 's32[1]{0}', space=sflag, size = 0x4, scoped, tag = 'scoped memory for tpu_custom_call.1']
    #allocation10 [shape = 'u8[1024]{0}', space=vmem, size = 0x400, scoped, tag = 'input window, operand 4, single buffered']
    #allocation11 [shape = 'u8[65536]{0}', space=vmem, size = 0x10000, scoped, tag = 'input window, operand 5, single buffered']
    #allocation12 [shape = 's32[1]{0}', space=sflag, size = 0x4, scoped, tag = 'scoped memory for tpu_custom_call.1']
    #allocation13 [shape = 'u8[512]{0}', space=vmem, size = 0x400, scoped, tag = 'input window, operand 6, single buffered']
    #allocation14 [shape = 'u8[32768]{0}', space=vmem, size = 0x8000, scoped, tag = 'output window, operand 0, single buffered']
    %12 = vsyncpa [#allocation3], 0
    %13 = vsyncpa [#allocation6], 0
    %14 = vsyncpa [#allocation9], 0
    %15 = vsyncpa [#allocation12], 0
    %16 = vsyncpa [#allocation4], 0
    // Predicated region
    $region2: #{tpu_custom_call.1} parent=1 // pred_check
      _
    $region3: #{tpu_custom_call.1} parent=1 // pred_check_branch
      %18 = sbr.rel (0) target = $region5
    $region4: #{tpu_custom_call.1} parent=1 // pred_region
      %s20 = ssub.s32 19456, 19456
      %21 = vsyncadd [#allocation3], %s20
      %s22 = sshll.u32 [#allocation2], 4
      %s23 = int_to_ptr.vmem [resolvable:$true] %s22
      %28 = dma.hbm_to_vmem [thread:$0]  %s0, 19456, %s23, [#allocation3], 2432, 2432, 152
    $region5: #{tpu_custom_call.1} parent=1 // pred_fallthru
      _
    // Predicated region
    $region6: #{tpu_custom_call.1} parent=1 // pred_check
      _
    $region7: #{tpu_custom_call.1} parent=1 // pred_check_branch
      %30 = sbr.rel (0) target = $region9
    $region8: #{tpu_custom_call.1} parent=1 // pred_region
      %s32 = ssub.s32 75264, 75264
      %33 = vsyncadd [#allocation6], %s32
      %s34 = sshll.u32 [#allocation5], 4
      %s35 = int_to_ptr.vmem [resolvable:$true] %s34
      %40 = dma.hbm_to_vmem [thread:$0]  %s1, 75264, %s35, [#allocation6], 256, 256, 16
    $region9: #{tpu_custom_call.1} parent=1 // pred_fallthru
      _
    // Predicated region
    $region10: #{tpu_custom_call.1} parent=1 // pred_check
      _
    $region11: #{tpu_custom_call.1} parent=1 // pred_check_branch
      %42 = sbr.rel (0) target = $region13
    $region12: #{tpu_custom_call.1} parent=1 // pred_region
      %s44 = ssub.s32 64, 64
      %45 = vsyncadd [#allocation6], %s44
      %s47 = sshll.u32 [#allocation7], 4
      %s48 = int_to_ptr.vmem [resolvable:$true] %s47
      %50 = dma.hbm_to_vmem [thread:$0]  %s2, 64, %s48, [#allocation6]
    $region13: #{tpu_custom_call.1} parent=1 // pred_fallthru
      _
    // Predicated region
    $region14: #{tpu_custom_call.1} parent=1 // pred_check
      _
    $region15: #{tpu_custom_call.1} parent=1 // pred_check_branch
      %52 = sbr.rel (0) target = $region17
    $region16: #{tpu_custom_call.1} parent=1 // pred_region
      %s54 = ssub.s32 8192, 8192
      %55 = vsyncadd [#allocation9], %s54
      %s56 = sshll.u32 [#allocation8], 4
      %s57 = int_to_ptr.vmem [resolvable:$true] %s56
      %62 = dma.hbm_to_vmem [thread:$0]  %s3, 8192, %s57, [#allocation9], 128, 128, 8
    $region17: #{tpu_custom_call.1} parent=1 // pred_fallthru
      _
    // Predicated region
    $region18: #{tpu_custom_call.1} parent=1 // pred_check
      _
    $region19: #{tpu_custom_call.1} parent=1 // pred_check_branch
      %64 = sbr.rel (0) target = $region21
    $region20: #{tpu_custom_call.1} parent=1 // pred_region
      %s66 = ssub.s32 32, 32
      %67 = vsyncadd [#allocation9], %s66
      %s69 = sshll.u32 [#allocation10], 4
      %s70 = int_to_ptr.vmem [resolvable:$true] %s69
      %72 = dma.hbm_to_vmem [thread:$0]  %s4, 32, %s70, [#allocation9]
    $region21: #{tpu_custom_call.1} parent=1 // pred_fallthru
      _
    // Predicated region
    $region22: #{tpu_custom_call.1} parent=1 // pred_check
      _
    $region23: #{tpu_custom_call.1} parent=1 // pred_check_branch
      %74 = sbr.rel (0) target = $region25
    $region24: #{tpu_custom_call.1} parent=1 // pred_region
      %s76 = ssub.s32 2048, 2048
      %77 = vsyncadd [#allocation12], %s76
      %s78 = sshll.u32 [#allocation11], 4
      %s79 = int_to_ptr.vmem [resolvable:$true] %s78
      %84 = dma.hbm_to_vmem [thread:$0]  %s5, 2048, %s79, [#allocation12], 64, 64, 4
    $region25: #{tpu_custom_call.1} parent=1 // pred_fallthru
      _
    // Predicated region
    $region26: #{tpu_custom_call.1} parent=1 // pred_check
      _
    $region27: #{tpu_custom_call.1} parent=1 // pred_check_branch
      %86 = sbr.rel (0) target = $region29
    $region28: #{tpu_custom_call.1} parent=1 // pred_region
      %s88 = ssub.s32 16, 16
      %89 = vsyncadd [#allocation12], %s88
      %s91 = sshll.u32 [#allocation13], 4
      %s92 = int_to_ptr.vmem [resolvable:$true] %s91
      %94 = dma.hbm_to_vmem [thread:$0]  %s6, 16, %s92, [#allocation12]
    $region29: #{tpu_custom_call.1} parent=1 // pred_fallthru
      _
    // Predicated region
    $region30: #{tpu_custom_call.1} parent=1 // pred_check
      _
    $region31: #{tpu_custom_call.1} parent=1 // pred_check_branch
      %96 = sbr.rel (0) target = $region33
    $region32: #{tpu_custom_call.1} parent=1 // pred_region
      %97 = dma.done [#allocation3], 19456
    $region33: #{tpu_custom_call.1} parent=1 // pred_fallthru
      _
    // Predicated region
    $region34: #{tpu_custom_call.1} parent=1 // pred_check
      _
    $region35: #{tpu_custom_call.1} parent=1 // pred_check_branch
      %99 = sbr.rel (0) target = $region37
    $region36: #{tpu_custom_call.1} parent=1 // pred_region
      %100 = dma.done [#allocation6], 75264
    $region37: #{tpu_custom_call.1} parent=1 // pred_fallthru
      _
    // Predicated region
    $region38: #{tpu_custom_call.1} parent=1 // pred_check
      _
    $region39: #{tpu_custom_call.1} parent=1 // pred_check_branch
      %102 = sbr.rel (0) target = $region41
    $region40: #{tpu_custom_call.1} parent=1 // pred_region
      %103 = dma.done [#allocation6], 64
    $region41: #{tpu_custom_call.1} parent=1 // pred_fallthru
      _
    // Predicated region
    $region42: #{tpu_custom_call.1} parent=1 // pred_check
      _
    $region43: #{tpu_custom_call.1} parent=1 // pred_check_branch
      %105 = sbr.rel (0) target = $region45
    $region44: #{tpu_custom_call.1} parent=1 // pred_region
      %106 = dma.done [#allocation9], 8192
    $region45: #{tpu_custom_call.1} parent=1 // pred_fallthru
      _
    // Predicated region
    $region46: #{tpu_custom_call.1} parent=1 // pred_check
      _
    $region47: #{tpu_custom_call.1} parent=1 // pred_check_branch
      %108 = sbr.rel (0) target = $region49
    $region48: #{tpu_custom_call.1} parent=1 // pred_region
      %109 = dma.done [#allocation9], 32
    $region49: #{tpu_custom_call.1} parent=1 // pred_fallthru
      _
    // Predicated region
    $region50: #{tpu_custom_call.1} parent=1 // pred_check
      _
    $region51: #{tpu_custom_call.1} parent=1 // pred_check_branch
      %111 = sbr.rel (0) target = $region53
    $region52: #{tpu_custom_call.1} parent=1 // pred_region
      %112 = dma.done [#allocation12], 2048
    $region53: #{tpu_custom_call.1} parent=1 // pred_fallthru
      _
    // Predicated region
    $region54: #{tpu_custom_call.1} parent=1 // pred_check
      _
    $region55: #{tpu_custom_call.1} parent=1 // pred_check_branch
      %114 = sbr.rel (0) target = $region57
    $region56: #{tpu_custom_call.1} parent=1 // pred_region
      %115 = dma.done [#allocation12], 16
    $region57: #{tpu_custom_call.1} parent=1 // pred_fallthru
      _
    %v117 = vld [vmem:[#allocation2] sm:$0xff]
    %v118 = vld [vmem:[#allocation2 + $0x8] sm:$0xff]
    %v119 = vld [vmem:[#allocation2 + $0x10] sm:$0xff]
    %v120 = vld [vmem:[#allocation2 + $0x18] sm:$0xff]
    %v121 = vld [vmem:[#allocation2 + $0x20] sm:$0xff]
    %v122 = vld [vmem:[#allocation2 + $0x28] sm:$0xff]
    %v123 = vld [vmem:[#allocation2 + $0x30] sm:$0xff]
    %v124 = vld [vmem:[#allocation2 + $0x38] sm:$0xff]
    %v125 = vld [vmem:[#allocation2 + $0x40] sm:$0xff]
    %v126 = vld [vmem:[#allocation2 + $0x48] sm:$0xff]
    %v127 = vld [vmem:[#allocation2 + $0x50] sm:$0xff]
    %v128 = vld [vmem:[#allocation2 + $0x58] sm:$0xff]
    %v129 = vld [vmem:[#allocation2 + $0x60] sm:$0xff]
    %v130 = vld [vmem:[#allocation2 + $0x68] sm:$0xff]
    %v131 = vld [vmem:[#allocation2 + $0x70] sm:$0xff]
    %v132 = vld [vmem:[#allocation2 + $0x78] sm:$0xff]
    %v133 = vld [vmem:[#allocation2 + $0x80] sm:$0xff]
    %v134 = vld [vmem:[#allocation2 + $0x88] sm:$0xff]
    %v135 = vld [vmem:[#allocation2 + $0x90] sm:$0xff]
    %v136 = vld [vmem:[#allocation2 + $0x98] sm:$0xff]
    %v137 = vld [vmem:[#allocation2 + $0xa0] sm:$0xff]
    %v138 = vld [vmem:[#allocation2 + $0xa8] sm:$0xff]
    %v139 = vld [vmem:[#allocation2 + $0xb0] sm:$0xff]
    %v140 = vld [vmem:[#allocation2 + $0xb8] sm:$0xff]
    %v141 = vld [vmem:[#allocation2 + $0xc0] sm:$0xff]
    %v142 = vld [vmem:[#allocation2 + $0xc8] sm:$0xff]
    %v143 = vld [vmem:[#allocation2 + $0xd0] sm:$0xff]
    %v144 = vld [vmem:[#allocation2 + $0xd8] sm:$0xff]
    %v145 = vld [vmem:[#allocation2 + $0xe0] sm:$0xff]
    %v146 = vld [vmem:[#allocation2 + $0xe8] sm:$0xff]
    %v147 = vld [vmem:[#allocation2 + $0xf0] sm:$0xff]
    %v148 = vld [vmem:[#allocation2 + $0xf8] sm:$0xff]
    %v149 = vld [vmem:[#allocation2 + $0x100] sm:$0xff]
    %v150 = vld [vmem:[#allocation2 + $0x108] sm:$0xff]
    %v151 = vld [vmem:[#allocation2 + $0x110] sm:$0xff]
    %v152 = vld [vmem:[#allocation2 + $0x118] sm:$0xff]
    %v153 = vld [vmem:[#allocation2 + $0x120] sm:$0xff]
    %v154 = vld [vmem:[#allocation2 + $0x128] sm:$0xff]
    %v155 = vld [vmem:[#allocation2 + $0x130] sm:$0xff]
    %v156 = vld [vmem:[#allocation2 + $0x138] sm:$0xff]
    %v157 = vld [vmem:[#allocation2 + $0x140] sm:$0xff]
    %v158 = vld [vmem:[#allocation2 + $0x148] sm:$0xff]
    %v159 = vld [vmem:[#allocation2 + $0x150] sm:$0xff]
    %v160 = vld [vmem:[#allocation2 + $0x158] sm:$0xff]
    %v161 = vld [vmem:[#allocation2 + $0x160] sm:$0xff]
    %v162 = vld [vmem:[#allocation2 + $0x168] sm:$0xff]
    %v163 = vld [vmem:[#allocation2 + $0x170] sm:$0xff]
    %v164 = vld [vmem:[#allocation2 + $0x178] sm:$0xff]
    %v165 = vld [vmem:[#allocation2 + $0x180] sm:$0xff]
    %v166 = vld [vmem:[#allocation2 + $0x188] sm:$0xff]
    %v167 = vld [vmem:[#allocation2 + $0x190] sm:$0xff]
    %v168 = vld [vmem:[#allocation2 + $0x198] sm:$0xff]
    %v169 = vld [vmem:[#allocation2 + $0x1a0] sm:$0xff]
    %v170 = vld [vmem:[#allocation2 + $0x1a8] sm:$0xff]
    %v171 = vld [vmem:[#allocation2 + $0x1b0] sm:$0xff]
    %v172 = vld [vmem:[#allocation2 + $0x1b8] sm:$0xff]
    %v173 = vld [vmem:[#allocation2 + $0x1c0] sm:$0xff]
    %v174 = vld [vmem:[#allocation2 + $0x1c8] sm:$0xff]
    %v175 = vld [vmem:[#allocation2 + $0x1d0] sm:$0xff]
    %v176 = vld [vmem:[#allocation2 + $0x1d8] sm:$0xff]
    %v177 = vld [vmem:[#allocation2 + $0x1e0] sm:$0xff]
    %v178 = vld [vmem:[#allocation2 + $0x1e8] sm:$0xff]
    %v179 = vld [vmem:[#allocation2 + $0x1f0] sm:$0xff]
    %v180 = vld [vmem:[#allocation2 + $0x1f8] sm:$0xff]
    %v181 = vld [vmem:[#allocation2 + $0x200] sm:$0xff]
    %v182 = vld [vmem:[#allocation2 + $0x208] sm:$0xff]
    %v183 = vld [vmem:[#allocation2 + $0x210] sm:$0xff]
    %v184 = vld [vmem:[#allocation2 + $0x218] sm:$0xff]
    %v185 = vld [vmem:[#allocation2 + $0x220] sm:$0xff]
    %v186 = vld [vmem:[#allocation2 + $0x228] sm:$0xff]
    %v187 = vld [vmem:[#allocation2 + $0x230] sm:$0xff]
    %v188 = vld [vmem:[#allocation2 + $0x238] sm:$0xff]
    %v189 = vld [vmem:[#allocation2 + $0x240] sm:$0xff]
    %v190 = vld [vmem:[#allocation2 + $0x248] sm:$0xff]
    %v191 = vld [vmem:[#allocation2 + $0x250] sm:$0xff]
    %v192 = vld [vmem:[#allocation2 + $0x258] sm:$0xff]
    %v193 = vld [vmem:[#allocation2 + $0x260] sm:$0xff]
    %v194 = vld [vmem:[#allocation2 + $0x268] sm:$0xff]
    %v195 = vld [vmem:[#allocation2 + $0x270] sm:$0xff]
    %v196 = vld [vmem:[#allocation2 + $0x278] sm:$0xff]
    %v197 = vld [vmem:[#allocation2 + $0x280] sm:$0xff]
    %v198 = vld [vmem:[#allocation2 + $0x288] sm:$0xff]
    %v199 = vld [vmem:[#allocation2 + $0x290] sm:$0xff]
    %v200 = vld [vmem:[#allocation2 + $0x298] sm:$0xff]
    %v201 = vld [vmem:[#allocation2 + $0x2a0] sm:$0xff]
    %v202 = vld [vmem:[#allocation2 + $0x2a8] sm:$0xff]
    %v203 = vld [vmem:[#allocation2 + $0x2b0] sm:$0xff]
    %v204 = vld [vmem:[#allocation2 + $0x2b8] sm:$0xff]
    %v205 = vld [vmem:[#allocation2 + $0x2c0] sm:$0xff]
    %v206 = vld [vmem:[#allocation2 + $0x2c8] sm:$0xff]
    %v207 = vld [vmem:[#allocation2 + $0x2d0] sm:$0xff]
    %v208 = vld [vmem:[#allocation2 + $0x2d8] sm:$0xff]
    %v209 = vld [vmem:[#allocation2 + $0x2e0] sm:$0xff]
    %v210 = vld [vmem:[#allocation2 + $0x2e8] sm:$0xff]
    %v211 = vld [vmem:[#allocation2 + $0x2f0] sm:$0xff]
    %v212 = vld [vmem:[#allocation2 + $0x2f8] sm:$0xff]
    %v213 = vld [vmem:[#allocation2 + $0x300] sm:$0xff]
    %v214 = vld [vmem:[#allocation2 + $0x308] sm:$0xff]
    %v215 = vld [vmem:[#allocation2 + $0x310] sm:$0xff]
    %v216 = vld [vmem:[#allocation2 + $0x318] sm:$0xff]
    %v217 = vld [vmem:[#allocation2 + $0x320] sm:$0xff]
    %v218 = vld [vmem:[#allocation2 + $0x328] sm:$0xff]
    %v219 = vld [vmem:[#allocation2 + $0x330] sm:$0xff]
    %v220 = vld [vmem:[#allocation2 + $0x338] sm:$0xff]
    %v221 = vld [vmem:[#allocation2 + $0x340] sm:$0xff]
    %v222 = vld [vmem:[#allocation2 + $0x348] sm:$0xff]
    %v223 = vld [vmem:[#allocation2 + $0x350] sm:$0xff]
    %v224 = vld [vmem:[#allocation2 + $0x358] sm:$0xff]
    %v225 = vld [vmem:[#allocation2 + $0x360] sm:$0xff]
    %v226 = vld [vmem:[#allocation2 + $0x368] sm:$0xff]
    %v227 = vld [vmem:[#allocation2 + $0x370] sm:$0xff]
    %v228 = vld [vmem:[#allocation2 + $0x378] sm:$0xff]
    %v229 = vld [vmem:[#allocation2 + $0x380] sm:$0xff]
    %v230 = vld [vmem:[#allocation2 + $0x388] sm:$0xff]
    %v231 = vld [vmem:[#allocation2 + $0x390] sm:$0xff]
    %v232 = vld [vmem:[#allocation2 + $0x398] sm:$0xff]
    %v233 = vld [vmem:[#allocation2 + $0x3a0] sm:$0xff]
    %v234 = vld [vmem:[#allocation2 + $0x3a8] sm:$0xff]
    %v235 = vld [vmem:[#allocation2 + $0x3b0] sm:$0xff]
    %v236 = vld [vmem:[#allocation2 + $0x3b8] sm:$0xff]
    %v237 = vld [vmem:[#allocation2 + $0x3c0] sm:$0xff]
    %v238 = vld [vmem:[#allocation2 + $0x3c8] sm:$0xff]
    %v239 = vld [vmem:[#allocation2 + $0x3d0] sm:$0xff]
    %v240 = vld [vmem:[#allocation2 + $0x3d8] sm:$0xff]
    %v241 = vld [vmem:[#allocation2 + $0x3e0] sm:$0xff]
    %v242 = vld [vmem:[#allocation2 + $0x3e8] sm:$0xff]
    %v243 = vld [vmem:[#allocation2 + $0x3f0] sm:$0xff]
    %v244 = vld [vmem:[#allocation2 + $0x3f8] sm:$0xff]
    %v245 = vld [vmem:[#allocation2 + $0x400] sm:$0xff]
    %v246 = vld [vmem:[#allocation2 + $0x408] sm:$0xff]
    %v247 = vld [vmem:[#allocation2 + $0x410] sm:$0xff]
    %v248 = vld [vmem:[#allocation2 + $0x418] sm:$0xff]
    %v249 = vld [vmem:[#allocation2 + $0x420] sm:$0xff]
    %v250 = vld [vmem:[#allocation2 + $0x428] sm:$0xff]
    %v251 = vld [vmem:[#allocation2 + $0x430] sm:$0xff]
    %v252 = vld [vmem:[#allocation2 + $0x438] sm:$0xff]
    %v253 = vld [vmem:[#allocation2 + $0x440] sm:$0xff]
    %v254 = vld [vmem:[#allocation2 + $0x448] sm:$0xff]
    %v255 = vld [vmem:[#allocation2 + $0x450] sm:$0xff]
    %v256 = vld [vmem:[#allocation2 + $0x458] sm:$0xff]
    %v257 = vld [vmem:[#allocation2 + $0x460] sm:$0xff]
    %v258 = vld [vmem:[#allocation2 + $0x468] sm:$0xff]
    %v259 = vld [vmem:[#allocation2 + $0x470] sm:$0xff]
    %v260 = vld [vmem:[#allocation2 + $0x478] sm:$0xff]
    %v261 = vld [vmem:[#allocation2 + $0x480] sm:$0xff]
    %v262 = vld [vmem:[#allocation2 + $0x488] sm:$0xff]
    %v263 = vld [vmem:[#allocation2 + $0x490] sm:$0xff]
    %v264 = vld [vmem:[#allocation2 + $0x498] sm:$0xff]
    %v265 = vld [vmem:[#allocation2 + $0x4a0] sm:$0xff]
    %v266 = vld [vmem:[#allocation2 + $0x4a8] sm:$0xff]
    %v267 = vld [vmem:[#allocation2 + $0x4b0] sm:$0xff]
    %v268 = vld [vmem:[#allocation2 + $0x4b8] sm:$0xff]
    %v269 = vpack.c.bf16 %v136, %v117
    %v270 = vpack.c.bf16 %v137, %v118
    %v271 = vpack.c.bf16 %v138, %v119
    %v272 = vpack.c.bf16 %v139, %v120
    %v273 = vpack.c.bf16 %v140, %v121
    %v274 = vpack.c.bf16 %v141, %v122
    %v275 = vpack.c.bf16 %v142, %v123
    %v276 = vpack.c.bf16 %v143, %v124
    %v277 = vpack.c.bf16 %v144, %v125
    %v278 = vpack.c.bf16 %v145, %v126
    %v279 = vpack.c.bf16 %v146, %v127
    %v280 = vpack.c.bf16 %v147, %v128
    %v281 = vpack.c.bf16 %v148, %v129
    %v282 = vpack.c.bf16 %v149, %v130
    %v283 = vpack.c.bf16 %v150, %v131
    %v284 = vpack.c.bf16 %v151, %v132
    %v285 = vpack.c.bf16 %v152, %v133
    %v286 = vpack.c.bf16 %v153, %v134
    %v287 = vpack.c.bf16 %v154, %v135
    %v288 = vpack.c.bf16 %v174, %v155
    %v289 = vpack.c.bf16 %v175, %v156
    %v290 = vpack.c.bf16 %v176, %v157
    %v291 = vpack.c.bf16 %v177, %v158
    %v292 = vpack.c.bf16 %v178, %v159
    %v293 = vpack.c.bf16 %v179, %v160
    %v294 = vpack.c.bf16 %v180, %v161
    %v295 = vpack.c.bf16 %v181, %v162
    %v296 = vpack.c.bf16 %v182, %v163
    %v297 = vpack.c.bf16 %v183, %v164
    %v298 = vpack.c.bf16 %v184, %v165
    %v299 = vpack.c.bf16 %v185, %v166
    %v300 = vpack.c.bf16 %v186, %v167
    %v301 = vpack.c.bf16 %v187, %v168
    %v302 = vpack.c.bf16 %v188, %v169
    %v303 = vpack.c.bf16 %v189, %v170
    %v304 = vpack.c.bf16 %v190, %v171
    %v305 = vpack.c.bf16 %v191, %v172
    %v306 = vpack.c.bf16 %v192, %v173
    %v307 = vpack.c.bf16 %v212, %v193
    %v308 = vpack.c.bf16 %v213, %v194
    %v309 = vpack.c.bf16 %v214, %v195
    %v310 = vpack.c.bf16 %v215, %v196
    %v311 = vpack.c.bf16 %v216, %v197
    %v312 = vpack.c.bf16 %v217, %v198
    %v313 = vpack.c.bf16 %v218, %v199
    %v314 = vpack.c.bf16 %v219, %v200
    %v315 = vpack.c.bf16 %v220, %v201
    %v316 = vpack.c.bf16 %v221, %v202
    %v317 = vpack.c.bf16 %v222, %v203
    %v318 = vpack.c.bf16 %v223, %v204
    %v319 = vpack.c.bf16 %v224, %v205
    %v320 = vpack.c.bf16 %v225, %v206
    %v321 = vpack.c.bf16 %v226, %v207
    %v322 = vpack.c.bf16 %v227, %v208
    %v323 = vpack.c.bf16 %v228, %v209
    %v324 = vpack.c.bf16 %v229, %v210
    %v325 = vpack.c.bf16 %v230, %v211
    %v326 = vpack.c.bf16 %v250, %v231
    %v327 = vpack.c.bf16 %v251, %v232
    %v328 = vpack.c.bf16 %v252, %v233
    %v329 = vpack.c.bf16 %v253, %v234
    %v330 = vpack.c.bf16 %v254, %v235
    %v331 = vpack.c.bf16 %v255, %v236
    %v332 = vpack.c.bf16 %v256, %v237
    %v333 = vpack.c.bf16 %v257, %v238
    %v334 = vpack.c.bf16 %v258, %v239
    %v335 = vpack.c.bf16 %v259, %v240
    %v336 = vpack.c.bf16 %v260, %v241
    %v337 = vpack.c.bf16 %v261, %v242
    %v338 = vpack.c.bf16 %v262, %v243
    %v339 = vpack.c.bf16 %v263, %v244
    %v340 = vpack.c.bf16 %v264, %v245
    %v341 = vpack.c.bf16 %v265, %v246
    %v342 = vpack.c.bf16 %v266, %v247
    %v343 = vpack.c.bf16 %v267, %v248
    %v344 = vpack.c.bf16 %v268, %v249
    %v345 = vld [vmem:[#allocation5] sm:$0xff]
    %v346 = vld [vmem:[#allocation5 + $0x8] sm:$0xff]
    %v347 = vld [vmem:[#allocation5 + $0x10] sm:$0xff]
    %v348 = vld [vmem:[#allocation5 + $0x18] sm:$0xff]
    %v349 = vld [vmem:[#allocation5 + $0x20] sm:$0xff]
    %v350 = vld [vmem:[#allocation5 + $0x28] sm:$0xff]
    %v351 = vld [vmem:[#allocation5 + $0x30] sm:$0xff]
    %v352 = vld [vmem:[#allocation5 + $0x38] sm:$0xff]
    %v353 = vld [vmem:[#allocation5 + $0x40] sm:$0xff]
    %v354 = vld [vmem:[#allocation5 + $0x48] sm:$0xff]
    %v355 = vld [vmem:[#allocation5 + $0x50] sm:$0xff]
    %v356 = vld [vmem:[#allocation5 + $0x58] sm:$0xff]
    %v357 = vld [vmem:[#allocation5 + $0x60] sm:$0xff]
    %v358 = vld [vmem:[#allocation5 + $0x68] sm:$0xff]
    %v359 = vld [vmem:[#allocation5 + $0x70] sm:$0xff]
    %v360 = vld [vmem:[#allocation5 + $0x78] sm:$0xff]
    %v361 = vld [vmem:[#allocation5 + $0x80] sm:$0xff]
    %v362 = vld [vmem:[#allocation5 + $0x88] sm:$0xff]
    %v363 = vld [vmem:[#allocation5 + $0x90] sm:$0xff]
    %v364 = vld [vmem:[#allocation5 + $0x98] sm:$0xff]
    %v365 = vld [vmem:[#allocation5 + $0xa0] sm:$0xff]
    %v366 = vld [vmem:[#allocation5 + $0xa8] sm:$0xff]
    %v367 = vld [vmem:[#allocation5 + $0xb0] sm:$0xff]
    %v368 = vld [vmem:[#allocation5 + $0xb8] sm:$0xff]
    %v369 = vld [vmem:[#allocation5 + $0xc0] sm:$0xff]
    %v370 = vld [vmem:[#allocation5 + $0xc8] sm:$0xff]
    %v371 = vld [vmem:[#allocation5 + $0xd0] sm:$0xff]
    %v372 = vld [vmem:[#allocation5 + $0xd8] sm:$0xff]
    %v373 = vld [vmem:[#allocation5 + $0xe0] sm:$0xff]
    %v374 = vld [vmem:[#allocation5 + $0xe8] sm:$0xff]
    %v375 = vld [vmem:[#allocation5 + $0xf0] sm:$0xff]
    %v376 = vld [vmem:[#allocation5 + $0xf8] sm:$0xff]
    %v377 = vld [vmem:[#allocation5 + $0x100] sm:$0xff]
    %v378 = vld [vmem:[#allocation5 + $0x108] sm:$0xff]
    %v379 = vld [vmem:[#allocation5 + $0x110] sm:$0xff]
    %v380 = vld [vmem:[#allocation5 + $0x118] sm:$0xff]
    %v381 = vld [vmem:[#allocation5 + $0x120] sm:$0xff]
    %v382 = vld [vmem:[#allocation5 + $0x128] sm:$0xff]
    %v383 = vld [vmem:[#allocation5 + $0x130] sm:$0xff]
    %v384 = vld [vmem:[#allocation5 + $0x138] sm:$0xff]
    %v385 = vld [vmem:[#allocation5 + $0x140] sm:$0xff]
    %v386 = vld [vmem:[#allocation5 + $0x148] sm:$0xff]
    %v387 = vld [vmem:[#allocation5 + $0x150] sm:$0xff]
    %v388 = vld [vmem:[#allocation5 + $0x158] sm:$0xff]
    %v389 = vld [vmem:[#allocation5 + $0x160] sm:$0xff]
    %v390 = vld [vmem:[#allocation5 + $0x168] sm:$0xff]
    %v391 = vld [vmem:[#allocation5 + $0x170] sm:$0xff]
    %v392 = vld [vmem:[#allocation5 + $0x178] sm:$0xff]
    %v393 = vld [vmem:[#allocation5 + $0x180] sm:$0xff]
    %v394 = vld [vmem:[#allocation5 + $0x188] sm:$0xff]
    %v395 = vld [vmem:[#allocation5 + $0x190] sm:$0xff]
    %v396 = vld [vmem:[#allocation5 + $0x198] sm:$0xff]
    %v397 = vld [vmem:[#allocation5 + $0x1a0] sm:$0xff]
    %v398 = vld [vmem:[#allocation5 + $0x1a8] sm:$0xff]
    %v399 = vld [vmem:[#allocation5 + $0x1b0] sm:$0xff]
    %v400 = vld [vmem:[#allocation5 + $0x1b8] sm:$0xff]
    %v401 = vld [vmem:[#allocation5 + $0x1c0] sm:$0xff]
    %v402 = vld [vmem:[#allocation5 + $0x1c8] sm:$0xff]
    %v403 = vld [vmem:[#allocation5 + $0x1d0] sm:$0xff]
    %v404 = vld [vmem:[#allocation5 + $0x1d8] sm:$0xff]
    %v405 = vld [vmem:[#allocation5 + $0x1e0] sm:$0xff]
    %v406 = vld [vmem:[#allocation5 + $0x1e8] sm:$0xff]
    %v407 = vld [vmem:[#allocation5 + $0x1f0] sm:$0xff]
    %v408 = vld [vmem:[#allocation5 + $0x1f8] sm:$0xff]
    %v409 = vld [vmem:[#allocation5 + $0x200] sm:$0xff]
    %v410 = vld [vmem:[#allocation5 + $0x208] sm:$0xff]
    %v411 = vld [vmem:[#allocation5 + $0x210] sm:$0xff]
    %v412 = vld [vmem:[#allocation5 + $0x218] sm:$0xff]
    %v413 = vld [vmem:[#allocation5 + $0x220] sm:$0xff]
    %v414 = vld [vmem:[#allocation5 + $0x228] sm:$0xff]
    %v415 = vld [vmem:[#allocation5 + $0x230] sm:$0xff]
    %v416 = vld [vmem:[#allocation5 + $0x238] sm:$0xff]
    %v417 = vld [vmem:[#allocation5 + $0x240] sm:$0xff]
    %v418 = vld [vmem:[#allocation5 + $0x248] sm:$0xff]
    %v419 = vld [vmem:[#allocation5 + $0x250] sm:$0xff]
    %v420 = vld [vmem:[#allocation5 + $0x258] sm:$0xff]
    %v421 = vld [vmem:[#allocation5 + $0x260] sm:$0xff]
    %v422 = vld [vmem:[#allocation5 + $0x268] sm:$0xff]
    %v423 = vld [vmem:[#allocation5 + $0x270] sm:$0xff]
    %v424 = vld [vmem:[#allocation5 + $0x278] sm:$0xff]
    %v425 = vld [vmem:[#allocation5 + $0x280] sm:$0xff]
    %v426 = vld [vmem:[#allocation5 + $0x288] sm:$0xff]
    %v427 = vld [vmem:[#allocation5 + $0x290] sm:$0xff]
    %v428 = vld [vmem:[#allocation5 + $0x298] sm:$0xff]
    %v429 = vld [vmem:[#allocation5 + $0x2a0] sm:$0xff]
    %v430 = vld [vmem:[#allocation5 + $0x2a8] sm:$0xff]
    %v431 = vld [vmem:[#allocation5 + $0x2b0] sm:$0xff]
    %v432 = vld [vmem:[#allocation5 + $0x2b8] sm:$0xff]
    %v433 = vld [vmem:[#allocation5 + $0x2c0] sm:$0xff]
    %v434 = vld [vmem:[#allocation5 + $0x2c8] sm:$0xff]
    %v435 = vld [vmem:[#allocation5 + $0x2d0] sm:$0xff]
    %v436 = vld [vmem:[#allocation5 + $0x2d8] sm:$0xff]
    %v437 = vld [vmem:[#allocation5 + $0x2e0] sm:$0xff]
    %v438 = vld [vmem:[#allocation5 + $0x2e8] sm:$0xff]
    %v439 = vld [vmem:[#allocation5 + $0x2f0] sm:$0xff]
    %v440 = vld [vmem:[#allocation5 + $0x2f8] sm:$0xff]
    %v441 = vld [vmem:[#allocation5 + $0x300] sm:$0xff]
    %v442 = vld [vmem:[#allocation5 + $0x308] sm:$0xff]
    %v443 = vld [vmem:[#allocation5 + $0x310] sm:$0xff]
    %v444 = vld [vmem:[#allocation5 + $0x318] sm:$0xff]
    %v445 = vld [vmem:[#allocation5 + $0x320] sm:$0xff]
    %v446 = vld [vmem:[#allocation5 + $0x328] sm:$0xff]
    %v447 = vld [vmem:[#allocation5 + $0x330] sm:$0xff]
    %v448 = vld [vmem:[#allocation5 + $0x338] sm:$0xff]
    %v449 = vld [vmem:[#allocation5 + $0x340] sm:$0xff]
    %v450 = vld [vmem:[#allocation5 + $0x348] sm:$0xff]
    %v451 = vld [vmem:[#allocation5 + $0x350] sm:$0xff]
    %v452 = vld [vmem:[#allocation5 + $0x358] sm:$0xff]
    %v453 = vld [vmem:[#allocation5 + $0x360] sm:$0xff]
    %v454 = vld [vmem:[#allocation5 + $0x368] sm:$0xff]
    %v455 = vld [vmem:[#allocation5 + $0x370] sm:$0xff]
    %v456 = vld [vmem:[#allocation5 + $0x378] sm:$0xff]
    %v457 = vld [vmem:[#allocation5 + $0x380] sm:$0xff]
    %v458 = vld [vmem:[#allocation5 + $0x388] sm:$0xff]
    %v459 = vld [vmem:[#allocation5 + $0x390] sm:$0xff]
    %v460 = vld [vmem:[#allocation5 + $0x398] sm:$0xff]
    %v461 = vld [vmem:[#allocation5 + $0x3a0] sm:$0xff]
    %v462 = vld [vmem:[#allocation5 + $0x3a8] sm:$0xff]
    %v463 = vld [vmem:[#allocation5 + $0x3b0] sm:$0xff]
    %v464 = vld [vmem:[#allocation5 + $0x3b8] sm:$0xff]
    %v465 = vld [vmem:[#allocation5 + $0x3c0] sm:$0xff]
    %v466 = vld [vmem:[#allocation5 + $0x3c8] sm:$0xff]
    %v467 = vld [vmem:[#allocation5 + $0x3d0] sm:$0xff]
    %v468 = vld [vmem:[#allocation5 + $0x3d8] sm:$0xff]
    %v469 = vld [vmem:[#allocation5 + $0x3e0] sm:$0xff]
    %v470 = vld [vmem:[#allocation5 + $0x3e8] sm:$0xff]
    %v471 = vld [vmem:[#allocation5 + $0x3f0] sm:$0xff]
    %v472 = vld [vmem:[#allocation5 + $0x3f8] sm:$0xff]
    %v473 = vld [vmem:[#allocation5 + $0x400] sm:$0xff]
    %v474 = vld [vmem:[#allocation5 + $0x408] sm:$0xff]
    %v475 = vld [vmem:[#allocation5 + $0x410] sm:$0xff]
    %v476 = vld [vmem:[#allocation5 + $0x418] sm:$0xff]
    %v477 = vld [vmem:[#allocation5 + $0x420] sm:$0xff]
    %v478 = vld [vmem:[#allocation5 + $0x428] sm:$0xff]
    %v479 = vld [vmem:[#allocation5 + $0x430] sm:$0xff]
    %v480 = vld [vmem:[#allocation5 + $0x438] sm:$0xff]
    %v481 = vld [vmem:[#allocation5 + $0x440] sm:$0xff]
    %v482 = vld [vmem:[#allocation5 + $0x448] sm:$0xff]
    %v483 = vld [vmem:[#allocation5 + $0x450] sm:$0xff]
    %v484 = vld [vmem:[#allocation5 + $0x458] sm:$0xff]
    %v485 = vld [vmem:[#allocation5 + $0x460] sm:$0xff]
    %v486 = vld [vmem:[#allocation5 + $0x468] sm:$0xff]
    %v487 = vld [vmem:[#allocation5 + $0x470] sm:$0xff]
    %v488 = vld [vmem:[#allocation5 + $0x478] sm:$0xff]
    %v489 = vld [vmem:[#allocation5 + $0x480] sm:$0xff]
    %v490 = vld [vmem:[#allocation5 + $0x488] sm:$0xff]
    %v491 = vld [vmem:[#allocation5 + $0x490] sm:$0xff]
    %v492 = vld [vmem:[#allocation5 + $0x498] sm:$0xff]
    %v493 = vld [vmem:[#allocation5 + $0x4a0] sm:$0xff]
    %v494 = vld [vmem:[#allocation5 + $0x4a8] sm:$0xff]
    %v495 = vld [vmem:[#allocation5 + $0x4b0] sm:$0xff]
    %v496 = vld [vmem:[#allocation5 + $0x4b8] sm:$0xff]
    %v497 = vld [vmem:[#allocation5 + $0x4c0] sm:$0xff]
    %v498 = vld [vmem:[#allocation5 + $0x4c8] sm:$0xff]
    %v499 = vld [vmem:[#allocation5 + $0x4d0] sm:$0xff]
    %v500 = vld [vmem:[#allocation5 + $0x4d8] sm:$0xff]
    %v501 = vld [vmem:[#allocation5 + $0x4e0] sm:$0xff]
    %v502 = vld [vmem:[#allocation5 + $0x4e8] sm:$0xff]
    %v503 = vld [vmem:[#allocation5 + $0x4f0] sm:$0xff]
    %v504 = vld [vmem:[#allocation5 + $0x4f8] sm:$0xff]
    %v505 = vld [vmem:[#allocation5 + $0x500] sm:$0xff]
    %v506 = vld [vmem:[#allocation5 + $0x508] sm:$0xff]
    %v507 = vld [vmem:[#allocation5 + $0x510] sm:$0xff]
    %v508 = vld [vmem:[#allocation5 + $0x518] sm:$0xff]
    %v509 = vld [vmem:[#allocation5 + $0x520] sm:$0xff]
    %v510 = vld [vmem:[#allocation5 + $0x528] sm:$0xff]
    %v511 = vld [vmem:[#allocation5 + $0x530] sm:$0xff]
    %v512 = vld [vmem:[#allocation5 + $0x538] sm:$0xff]
    %v513 = vld [vmem:[#allocation5 + $0x540] sm:$0xff]
    %v514 = vld [vmem:[#allocation5 + $0x548] sm:$0xff]
    %v515 = vld [vmem:[#allocation5 + $0x550] sm:$0xff]
    %v516 = vld [vmem:[#allocation5 + $0x558] sm:$0xff]
    %v517 = vld [vmem:[#allocation5 + $0x560] sm:$0xff]
    %v518 = vld [vmem:[#allocation5 + $0x568] sm:$0xff]
    %v519 = vld [vmem:[#allocation5 + $0x570] sm:$0xff]
    %v520 = vld [vmem:[#allocation5 + $0x578] sm:$0xff]
    %v521 = vld [vmem:[#allocation5 + $0x580] sm:$0xff]
    %v522 = vld [vmem:[#allocation5 + $0x588] sm:$0xff]
    %v523 = vld [vmem:[#allocation5 + $0x590] sm:$0xff]
    %v524 = vld [vmem:[#allocation5 + $0x598] sm:$0xff]
    %v525 = vld [vmem:[#allocation5 + $0x5a0] sm:$0xff]
    %v526 = vld [vmem:[#allocation5 + $0x5a8] sm:$0xff]
    %v527 = vld [vmem:[#allocation5 + $0x5b0] sm:$0xff]
    %v528 = vld [vmem:[#allocation5 + $0x5b8] sm:$0xff]
    %v529 = vld [vmem:[#allocation5 + $0x5c0] sm:$0xff]
    %v530 = vld [vmem:[#allocation5 + $0x5c8] sm:$0xff]
    %v531 = vld [vmem:[#allocation5 + $0x5d0] sm:$0xff]
    %v532 = vld [vmem:[#allocation5 + $0x5d8] sm:$0xff]
    %v533 = vld [vmem:[#allocation5 + $0x5e0] sm:$0xff]
    %v534 = vld [vmem:[#allocation5 + $0x5e8] sm:$0xff]
    %v535 = vld [vmem:[#allocation5 + $0x5f0] sm:$0xff]
    %v536 = vld [vmem:[#allocation5 + $0x5f8] sm:$0xff]
    %v537 = vld [vmem:[#allocation5 + $0x600] sm:$0xff]
    %v538 = vld [vmem:[#allocation5 + $0x608] sm:$0xff]
    %v539 = vld [vmem:[#allocation5 + $0x610] sm:$0xff]
    %v540 = vld [vmem:[#allocation5 + $0x618] sm:$0xff]
    %v541 = vld [vmem:[#allocation5 + $0x620] sm:$0xff]
    %v542 = vld [vmem:[#allocation5 + $0x628] sm:$0xff]
    %v543 = vld [vmem:[#allocation5 + $0x630] sm:$0xff]
    %v544 = vld [vmem:[#allocation5 + $0x638] sm:$0xff]
    %v545 = vld [vmem:[#allocation5 + $0x640] sm:$0xff]
    %v546 = vld [vmem:[#allocation5 + $0x648] sm:$0xff]
    %v547 = vld [vmem:[#allocation5 + $0x650] sm:$0xff]
    %v548 = vld [vmem:[#allocation5 + $0x658] sm:$0xff]
    %v549 = vld [vmem:[#allocation5 + $0x660] sm:$0xff]
    %v550 = vld [vmem:[#allocation5 + $0x668] sm:$0xff]
    %v551 = vld [vmem:[#allocation5 + $0x670] sm:$0xff]
    %v552 = vld [vmem:[#allocation5 + $0x678] sm:$0xff]
    %v553 = vld [vmem:[#allocation5 + $0x680] sm:$0xff]
    %v554 = vld [vmem:[#allocation5 + $0x688] sm:$0xff]
    %v555 = vld [vmem:[#allocation5 + $0x690] sm:$0xff]
    %v556 = vld [vmem:[#allocation5 + $0x698] sm:$0xff]
    %v557 = vld [vmem:[#allocation5 + $0x6a0] sm:$0xff]
    %v558 = vld [vmem:[#allocation5 + $0x6a8] sm:$0xff]
    %v559 = vld [vmem:[#allocation5 + $0x6b0] sm:$0xff]
    %v560 = vld [vmem:[#allocation5 + $0x6b8] sm:$0xff]
    %v561 = vld [vmem:[#allocation5 + $0x6c0] sm:$0xff]
    %v562 = vld [vmem:[#allocation5 + $0x6c8] sm:$0xff]
    %v563 = vld [vmem:[#allocation5 + $0x6d0] sm:$0xff]
    %v564 = vld [vmem:[#allocation5 + $0x6d8] sm:$0xff]
    %v565 = vld [vmem:[#allocation5 + $0x6e0] sm:$0xff]
    %v566 = vld [vmem:[#allocation5 + $0x6e8] sm:$0xff]
    %v567 = vld [vmem:[#allocation5 + $0x6f0] sm:$0xff]
    %v568 = vld [vmem:[#allocation5 + $0x6f8] sm:$0xff]
    %v569 = vld [vmem:[#allocation5 + $0x700] sm:$0xff]
    %v570 = vld [vmem:[#allocation5 + $0x708] sm:$0xff]
    %v571 = vld [vmem:[#allocation5 + $0x710] sm:$0xff]
    %v572 = vld [vmem:[#allocation5 + $0x718] sm:$0xff]
    %v573 = vld [vmem:[#allocation5 + $0x720] sm:$0xff]
    %v574 = vld [vmem:[#allocation5 + $0x728] sm:$0xff]
    %v575 = vld [vmem:[#allocation5 + $0x730] sm:$0xff]
    %v576 = vld [vmem:[#allocation5 + $0x738] sm:$0xff]
    %v577 = vld [vmem:[#allocation5 + $0x740] sm:$0xff]
    %v578 = vld [vmem:[#allocation5 + $0x748] sm:$0xff]
    %v579 = vld [vmem:[#allocation5 + $0x750] sm:$0xff]
    %v580 = vld [vmem:[#allocation5 + $0x758] sm:$0xff]
    %v581 = vld [vmem:[#allocation5 + $0x760] sm:$0xff]
    %v582 = vld [vmem:[#allocation5 + $0x768] sm:$0xff]
    %v583 = vld [vmem:[#allocation5 + $0x770] sm:$0xff]
    %v584 = vld [vmem:[#allocation5 + $0x778] sm:$0xff]
    %v585 = vld [vmem:[#allocation5 + $0x780] sm:$0xff]
    %v586 = vld [vmem:[#allocation5 + $0x788] sm:$0xff]
    %v587 = vld [vmem:[#allocation5 + $0x790] sm:$0xff]
    %v588 = vld [vmem:[#allocation5 + $0x798] sm:$0xff]
    %v589 = vld [vmem:[#allocation5 + $0x7a0] sm:$0xff]
    %v590 = vld [vmem:[#allocation5 + $0x7a8] sm:$0xff]
    %v591 = vld [vmem:[#allocation5 + $0x7b0] sm:$0xff]
    %v592 = vld [vmem:[#allocation5 + $0x7b8] sm:$0xff]
    %v593 = vld [vmem:[#allocation5 + $0x7c0] sm:$0xff]
    %v594 = vld [vmem:[#allocation5 + $0x7c8] sm:$0xff]
    %v595 = vld [vmem:[#allocation5 + $0x7d0] sm:$0xff]
    %v596 = vld [vmem:[#allocation5 + $0x7d8] sm:$0xff]
    %v597 = vld [vmem:[#allocation5 + $0x7e0] sm:$0xff]
    %v598 = vld [vmem:[#allocation5 + $0x7e8] sm:$0xff]
    %v599 = vld [vmem:[#allocation5 + $0x7f0] sm:$0xff]
    %v600 = vld [vmem:[#allocation5 + $0x7f8] sm:$0xff]
    %v601 = vld [vmem:[#allocation5 + $0x800] sm:$0xff]
    %v602 = vld [vmem:[#allocation5 + $0x808] sm:$0xff]
    %v603 = vld [vmem:[#allocation5 + $0x810] sm:$0xff]
    %v604 = vld [vmem:[#allocation5 + $0x818] sm:$0xff]
    %v605 = vld [vmem:[#allocation5 + $0x820] sm:$0xff]
    %v606 = vld [vmem:[#allocation5 + $0x828] sm:$0xff]
    %v607 = vld [vmem:[#allocation5 + $0x830] sm:$0xff]
    %v608 = vld [vmem:[#allocation5 + $0x838] sm:$0xff]
    %v609 = vld [vmem:[#allocation5 + $0x840] sm:$0xff]
    %v610 = vld [vmem:[#allocation5 + $0x848] sm:$0xff]
    %v611 = vld [vmem:[#allocation5 + $0x850] sm:$0xff]
    %v612 = vld [vmem:[#allocation5 + $0x858] sm:$0xff]
    %v613 = vld [vmem:[#allocation5 + $0x860] sm:$0xff]
    %v614 = vld [vmem:[#allocation5 + $0x868] sm:$0xff]
    %v615 = vld [vmem:[#allocation5 + $0x870] sm:$0xff]
    %v616 = vld [vmem:[#allocation5 + $0x878] sm:$0xff]
    %v617 = vld [vmem:[#allocation5 + $0x880] sm:$0xff]
    %v618 = vld [vmem:[#allocation5 + $0x888] sm:$0xff]
    %v619 = vld [vmem:[#allocation5 + $0x890] sm:$0xff]
    %v620 = vld [vmem:[#allocation5 + $0x898] sm:$0xff]
    %v621 = vld [vmem:[#allocation5 + $0x8a0] sm:$0xff]
    %v622 = vld [vmem:[#allocation5 + $0x8a8] sm:$0xff]
    %v623 = vld [vmem:[#allocation5 + $0x8b0] sm:$0xff]
    %v624 = vld [vmem:[#allocation5 + $0x8b8] sm:$0xff]
    %v625 = vld [vmem:[#allocation5 + $0x8c0] sm:$0xff]
    %v626 = vld [vmem:[#allocation5 + $0x8c8] sm:$0xff]
    %v627 = vld [vmem:[#allocation5 + $0x8d0] sm:$0xff]
    %v628 = vld [vmem:[#allocation5 + $0x8d8] sm:$0xff]
    %v629 = vld [vmem:[#allocation5 + $0x8e0] sm:$0xff]
    %v630 = vld [vmem:[#allocation5 + $0x8e8] sm:$0xff]
    %v631 = vld [vmem:[#allocation5 + $0x8f0] sm:$0xff]
    %v632 = vld [vmem:[#allocation5 + $0x8f8] sm:$0xff]
    %v633 = vld [vmem:[#allocation5 + $0x900] sm:$0xff]
    %v634 = vld [vmem:[#allocation5 + $0x908] sm:$0xff]
    %v635 = vld [vmem:[#allocation5 + $0x910] sm:$0xff]
    %v636 = vld [vmem:[#allocation5 + $0x918] sm:$0xff]
    %v637 = vld [vmem:[#allocation5 + $0x920] sm:$0xff]
    %v638 = vld [vmem:[#allocation5 + $0x928] sm:$0xff]
    %v639 = vld [vmem:[#allocation5 + $0x930] sm:$0xff]
    %v640 = vld [vmem:[#allocation5 + $0x938] sm:$0xff]
    %v641 = vld [vmem:[#allocation5 + $0x940] sm:$0xff]
    %v642 = vld [vmem:[#allocation5 + $0x948] sm:$0xff]
    %v643 = vld [vmem:[#allocation5 + $0x950] sm:$0xff]
    %v644 = vld [vmem:[#allocation5 + $0x958] sm:$0xff]
    %v645 = vld [vmem:[#allocation5 + $0x960] sm:$0xff]
    %v646 = vld [vmem:[#allocation5 + $0x968] sm:$0xff]
    %v647 = vld [vmem:[#allocation5 + $0x970] sm:$0xff]
    %v648 = vld [vmem:[#allocation5 + $0x978] sm:$0xff]
    %v649 = vld [vmem:[#allocation5 + $0x980] sm:$0xff]
    %v650 = vld [vmem:[#allocation5 + $0x988] sm:$0xff]
    %v651 = vld [vmem:[#allocation5 + $0x990] sm:$0xff]
    %v652 = vld [vmem:[#allocation5 + $0x998] sm:$0xff]
    %v653 = vld [vmem:[#allocation5 + $0x9a0] sm:$0xff]
    %v654 = vld [vmem:[#allocation5 + $0x9a8] sm:$0xff]
    %v655 = vld [vmem:[#allocation5 + $0x9b0] sm:$0xff]
    %v656 = vld [vmem:[#allocation5 + $0x9b8] sm:$0xff]
    %v657 = vld [vmem:[#allocation5 + $0x9c0] sm:$0xff]
    %v658 = vld [vmem:[#allocation5 + $0x9c8] sm:$0xff]
    %v659 = vld [vmem:[#allocation5 + $0x9d0] sm:$0xff]
    %v660 = vld [vmem:[#allocation5 + $0x9d8] sm:$0xff]
    %v661 = vld [vmem:[#allocation5 + $0x9e0] sm:$0xff]
    %v662 = vld [vmem:[#allocation5 + $0x9e8] sm:$0xff]
    %v663 = vld [vmem:[#allocation5 + $0x9f0] sm:$0xff]
    %v664 = vld [vmem:[#allocation5 + $0x9f8] sm:$0xff]
    %v665 = vld [vmem:[#allocation5 + $0xa00] sm:$0xff]
    %v666 = vld [vmem:[#allocation5 + $0xa08] sm:$0xff]
    %v667 = vld [vmem:[#allocation5 + $0xa10] sm:$0xff]
    %v668 = vld [vmem:[#allocation5 + $0xa18] sm:$0xff]
    %v669 = vld [vmem:[#allocation5 + $0xa20] sm:$0xff]
    %v670 = vld [vmem:[#allocation5 + $0xa28] sm:$0xff]
    %v671 = vld [vmem:[#allocation5 + $0xa30] sm:$0xff]
    %v672 = vld [vmem:[#allocation5 + $0xa38] sm:$0xff]
    %v673 = vld [vmem:[#allocation5 + $0xa40] sm:$0xff]
    %v674 = vld [vmem:[#allocation5 + $0xa48] sm:$0xff]
    %v675 = vld [vmem:[#allocation5 + $0xa50] sm:$0xff]
    %v676 = vld [vmem:[#allocation5 + $0xa58] sm:$0xff]
    %v677 = vld [vmem:[#allocation5 + $0xa60] sm:$0xff]
    %v678 = vld [vmem:[#allocation5 + $0xa68] sm:$0xff]
    %v679 = vld [vmem:[#allocation5 + $0xa70] sm:$0xff]
    %v680 = vld [vmem:[#allocation5 + $0xa78] sm:$0xff]
    %v681 = vld [vmem:[#allocation5 + $0xa80] sm:$0xff]
    %v682 = vld [vmem:[#allocation5 + $0xa88] sm:$0xff]
    %v683 = vld [vmem:[#allocation5 + $0xa90] sm:$0xff]
    %v684 = vld [vmem:[#allocation5 + $0xa98] sm:$0xff]
    %v685 = vld [vmem:[#allocation5 + $0xaa0] sm:$0xff]
    %v686 = vld [vmem:[#allocation5 + $0xaa8] sm:$0xff]
    %v687 = vld [vmem:[#allocation5 + $0xab0] sm:$0xff]
    %v688 = vld [vmem:[#allocation5 + $0xab8] sm:$0xff]
    %v689 = vld [vmem:[#allocation5 + $0xac0] sm:$0xff]
    %v690 = vld [vmem:[#allocation5 + $0xac8] sm:$0xff]
    %v691 = vld [vmem:[#allocation5 + $0xad0] sm:$0xff]
    %v692 = vld [vmem:[#allocation5 + $0xad8] sm:$0xff]
    %v693 = vld [vmem:[#allocation5 + $0xae0] sm:$0xff]
    %v694 = vld [vmem:[#allocation5 + $0xae8] sm:$0xff]
    %v695 = vld [vmem:[#allocation5 + $0xaf0] sm:$0xff]
    %v696 = vld [vmem:[#allocation5 + $0xaf8] sm:$0xff]
    %v697 = vld [vmem:[#allocation5 + $0xb00] sm:$0xff]
    %v698 = vld [vmem:[#allocation5 + $0xb08] sm:$0xff]
    %v699 = vld [vmem:[#allocation5 + $0xb10] sm:$0xff]
    %v700 = vld [vmem:[#allocation5 + $0xb18] sm:$0xff]
    %v701 = vld [vmem:[#allocation5 + $0xb20] sm:$0xff]
    %v702 = vld [vmem:[#allocation5 + $0xb28] sm:$0xff]
    %v703 = vld [vmem:[#allocation5 + $0xb30] sm:$0xff]
    %v704 = vld [vmem:[#allocation5 + $0xb38] sm:$0xff]
    %v705 = vld [vmem:[#allocation5 + $0xb40] sm:$0xff]
    %v706 = vld [vmem:[#allocation5 + $0xb48] sm:$0xff]
    %v707 = vld [vmem:[#allocation5 + $0xb50] sm:$0xff]
    %v708 = vld [vmem:[#allocation5 + $0xb58] sm:$0xff]
    %v709 = vld [vmem:[#allocation5 + $0xb60] sm:$0xff]
    %v710 = vld [vmem:[#allocation5 + $0xb68] sm:$0xff]
    %v711 = vld [vmem:[#allocation5 + $0xb70] sm:$0xff]
    %v712 = vld [vmem:[#allocation5 + $0xb78] sm:$0xff]
    %v713 = vld [vmem:[#allocation5 + $0xb80] sm:$0xff]
    %v714 = vld [vmem:[#allocation5 + $0xb88] sm:$0xff]
    %v715 = vld [vmem:[#allocation5 + $0xb90] sm:$0xff]
    %v716 = vld [vmem:[#allocation5 + $0xb98] sm:$0xff]
    %v717 = vld [vmem:[#allocation5 + $0xba0] sm:$0xff]
    %v718 = vld [vmem:[#allocation5 + $0xba8] sm:$0xff]
    %v719 = vld [vmem:[#allocation5 + $0xbb0] sm:$0xff]
    %v720 = vld [vmem:[#allocation5 + $0xbb8] sm:$0xff]
    %v721 = vld [vmem:[#allocation5 + $0xbc0] sm:$0xff]
    %v722 = vld [vmem:[#allocation5 + $0xbc8] sm:$0xff]
    %v723 = vld [vmem:[#allocation5 + $0xbd0] sm:$0xff]
    %v724 = vld [vmem:[#allocation5 + $0xbd8] sm:$0xff]
    %v725 = vld [vmem:[#allocation5 + $0xbe0] sm:$0xff]
    %v726 = vld [vmem:[#allocation5 + $0xbe8] sm:$0xff]
    %v727 = vld [vmem:[#allocation5 + $0xbf0] sm:$0xff]
    %v728 = vld [vmem:[#allocation5 + $0xbf8] sm:$0xff]
    %v729 = vld [vmem:[#allocation5 + $0xc00] sm:$0xff]
    %v730 = vld [vmem:[#allocation5 + $0xc08] sm:$0xff]
    %v731 = vld [vmem:[#allocation5 + $0xc10] sm:$0xff]
    %v732 = vld [vmem:[#allocation5 + $0xc18] sm:$0xff]
    %v733 = vld [vmem:[#allocation5 + $0xc20] sm:$0xff]
    %v734 = vld [vmem:[#allocation5 + $0xc28] sm:$0xff]
    %v735 = vld [vmem:[#allocation5 + $0xc30] sm:$0xff]
    %v736 = vld [vmem:[#allocation5 + $0xc38] sm:$0xff]
    %v737 = vld [vmem:[#allocation5 + $0xc40] sm:$0xff]
    %v738 = vld [vmem:[#allocation5 + $0xc48] sm:$0xff]
    %v739 = vld [vmem:[#allocation5 + $0xc50] sm:$0xff]
    %v740 = vld [vmem:[#allocation5 + $0xc58] sm:$0xff]
    %v741 = vld [vmem:[#allocation5 + $0xc60] sm:$0xff]
    %v742 = vld [vmem:[#allocation5 + $0xc68] sm:$0xff]
    %v743 = vld [vmem:[#allocation5 + $0xc70] sm:$0xff]
    %v744 = vld [vmem:[#allocation5 + $0xc78] sm:$0xff]
    %v745 = vld [vmem:[#allocation5 + $0xc80] sm:$0xff]
    %v746 = vld [vmem:[#allocation5 + $0xc88] sm:$0xff]
    %v747 = vld [vmem:[#allocation5 + $0xc90] sm:$0xff]
    %v748 = vld [vmem:[#allocation5 + $0xc98] sm:$0xff]
    %v749 = vld [vmem:[#allocation5 + $0xca0] sm:$0xff]
    %v750 = vld [vmem:[#allocation5 + $0xca8] sm:$0xff]
    %v751 = vld [vmem:[#allocation5 + $0xcb0] sm:$0xff]
    %v752 = vld [vmem:[#allocation5 + $0xcb8] sm:$0xff]
    %v753 = vld [vmem:[#allocation5 + $0xcc0] sm:$0xff]
    %v754 = vld [vmem:[#allocation5 + $0xcc8] sm:$0xff]
    %v755 = vld [vmem:[#allocation5 + $0xcd0] sm:$0xff]
    %v756 = vld [vmem:[#allocation5 + $0xcd8] sm:$0xff]
    %v757 = vld [vmem:[#allocation5 + $0xce0] sm:$0xff]
    %v758 = vld [vmem:[#allocation5 + $0xce8] sm:$0xff]
    %v759 = vld [vmem:[#allocation5 + $0xcf0] sm:$0xff]
    %v760 = vld [vmem:[#allocation5 + $0xcf8] sm:$0xff]
    %v761 = vld [vmem:[#allocation5 + $0xd00] sm:$0xff]
    %v762 = vld [vmem:[#allocation5 + $0xd08] sm:$0xff]
    %v763 = vld [vmem:[#allocation5 + $0xd10] sm:$0xff]
    %v764 = vld [vmem:[#allocation5 + $0xd18] sm:$0xff]
    %v765 = vld [vmem:[#allocation5 + $0xd20] sm:$0xff]
    %v766 = vld [vmem:[#allocation5 + $0xd28] sm:$0xff]
    %v767 = vld [vmem:[#allocation5 + $0xd30] sm:$0xff]
    %v768 = vld [vmem:[#allocation5 + $0xd38] sm:$0xff]
    %v769 = vld [vmem:[#allocation5 + $0xd40] sm:$0xff]
    %v770 = vld [vmem:[#allocation5 + $0xd48] sm:$0xff]
    %v771 = vld [vmem:[#allocation5 + $0xd50] sm:$0xff]
    %v772 = vld [vmem:[#allocation5 + $0xd58] sm:$0xff]
    %v773 = vld [vmem:[#allocation5 + $0xd60] sm:$0xff]
    %v774 = vld [vmem:[#allocation5 + $0xd68] sm:$0xff]
    %v775 = vld [vmem:[#allocation5 + $0xd70] sm:$0xff]
    %v776 = vld [vmem:[#allocation5 + $0xd78] sm:$0xff]
    %v777 = vld [vmem:[#allocation5 + $0xd80] sm:$0xff]
    %v778 = vld [vmem:[#allocation5 + $0xd88] sm:$0xff]
    %v779 = vld [vmem:[#allocation5 + $0xd90] sm:$0xff]
    %v780 = vld [vmem:[#allocation5 + $0xd98] sm:$0xff]
    %v781 = vld [vmem:[#allocation5 + $0xda0] sm:$0xff]
    %v782 = vld [vmem:[#allocation5 + $0xda8] sm:$0xff]
    %v783 = vld [vmem:[#allocation5 + $0xdb0] sm:$0xff]
    %v784 = vld [vmem:[#allocation5 + $0xdb8] sm:$0xff]
    %v785 = vld [vmem:[#allocation5 + $0xdc0] sm:$0xff]
    %v786 = vld [vmem:[#allocation5 + $0xdc8] sm:$0xff]
    %v787 = vld [vmem:[#allocation5 + $0xdd0] sm:$0xff]
    %v788 = vld [vmem:[#allocation5 + $0xdd8] sm:$0xff]
    %v789 = vld [vmem:[#allocation5 + $0xde0] sm:$0xff]
    %v790 = vld [vmem:[#allocation5 + $0xde8] sm:$0xff]
    %v791 = vld [vmem:[#allocation5 + $0xdf0] sm:$0xff]
    %v792 = vld [vmem:[#allocation5 + $0xdf8] sm:$0xff]
    %v793 = vld [vmem:[#allocation5 + $0xe00] sm:$0xff]
    %v794 = vld [vmem:[#allocation5 + $0xe08] sm:$0xff]
    %v795 = vld [vmem:[#allocation5 + $0xe10] sm:$0xff]
    %v796 = vld [vmem:[#allocation5 + $0xe18] sm:$0xff]
    %v797 = vld [vmem:[#allocation5 + $0xe20] sm:$0xff]
    %v798 = vld [vmem:[#allocation5 + $0xe28] sm:$0xff]
    %v799 = vld [vmem:[#allocation5 + $0xe30] sm:$0xff]
    %v800 = vld [vmem:[#allocation5 + $0xe38] sm:$0xff]
    %v801 = vld [vmem:[#allocation5 + $0xe40] sm:$0xff]
    %v802 = vld [vmem:[#allocation5 + $0xe48] sm:$0xff]
    %v803 = vld [vmem:[#allocation5 + $0xe50] sm:$0xff]
    %v804 = vld [vmem:[#allocation5 + $0xe58] sm:$0xff]
    %v805 = vld [vmem:[#allocation5 + $0xe60] sm:$0xff]
    %v806 = vld [vmem:[#allocation5 + $0xe68] sm:$0xff]
    %v807 = vld [vmem:[#allocation5 + $0xe70] sm:$0xff]
    %v808 = vld [vmem:[#allocation5 + $0xe78] sm:$0xff]
    %v809 = vld [vmem:[#allocation5 + $0xe80] sm:$0xff]
    %v810 = vld [vmem:[#allocation5 + $0xe88] sm:$0xff]
    %v811 = vld [vmem:[#allocation5 + $0xe90] sm:$0xff]
    %v812 = vld [vmem:[#allocation5 + $0xe98] sm:$0xff]
    %v813 = vld [vmem:[#allocation5 + $0xea0] sm:$0xff]
    %v814 = vld [vmem:[#allocation5 + $0xea8] sm:$0xff]
    %v815 = vld [vmem:[#allocation5 + $0xeb0] sm:$0xff]
    %v816 = vld [vmem:[#allocation5 + $0xeb8] sm:$0xff]
    %v817 = vld [vmem:[#allocation5 + $0xec0] sm:$0xff]
    %v818 = vld [vmem:[#allocation5 + $0xec8] sm:$0xff]
    %v819 = vld [vmem:[#allocation5 + $0xed0] sm:$0xff]
    %v820 = vld [vmem:[#allocation5 + $0xed8] sm:$0xff]
    %v821 = vld [vmem:[#allocation5 + $0xee0] sm:$0xff]
    %v822 = vld [vmem:[#allocation5 + $0xee8] sm:$0xff]
    %v823 = vld [vmem:[#allocation5 + $0xef0] sm:$0xff]
    %v824 = vld [vmem:[#allocation5 + $0xef8] sm:$0xff]
    %v825 = vld [vmem:[#allocation5 + $0xf00] sm:$0xff]
    %v826 = vld [vmem:[#allocation5 + $0xf08] sm:$0xff]
    %v827 = vld [vmem:[#allocation5 + $0xf10] sm:$0xff]
    %v828 = vld [vmem:[#allocation5 + $0xf18] sm:$0xff]
    %v829 = vld [vmem:[#allocation5 + $0xf20] sm:$0xff]
    %v830 = vld [vmem:[#allocation5 + $0xf28] sm:$0xff]
    %v831 = vld [vmem:[#allocation5 + $0xf30] sm:$0xff]
    %v832 = vld [vmem:[#allocation5 + $0xf38] sm:$0xff]
    %v833 = vld [vmem:[#allocation5 + $0xf40] sm:$0xff]
    %v834 = vld [vmem:[#allocation5 + $0xf48] sm:$0xff]
    %v835 = vld [vmem:[#allocation5 + $0xf50] sm:$0xff]
    %v836 = vld [vmem:[#allocation5 + $0xf58] sm:$0xff]
    %v837 = vld [vmem:[#allocation5 + $0xf60] sm:$0xff]
    %v838 = vld [vmem:[#allocation5 + $0xf68] sm:$0xff]
    %v839 = vld [vmem:[#allocation5 + $0xf70] sm:$0xff]
    %v840 = vld [vmem:[#allocation5 + $0xf78] sm:$0xff]
    %v841 = vld [vmem:[#allocation5 + $0xf80] sm:$0xff]
    %v842 = vld [vmem:[#allocation5 + $0xf88] sm:$0xff]
    %v843 = vld [vmem:[#allocation5 + $0xf90] sm:$0xff]
    %v844 = vld [vmem:[#allocation5 + $0xf98] sm:$0xff]
    %v845 = vld [vmem:[#allocation5 + $0xfa0] sm:$0xff]
    %v846 = vld [vmem:[#allocation5 + $0xfa8] sm:$0xff]
    %v847 = vld [vmem:[#allocation5 + $0xfb0] sm:$0xff]
    %v848 = vld [vmem:[#allocation5 + $0xfb8] sm:$0xff]
    %v849 = vld [vmem:[#allocation5 + $0xfc0] sm:$0xff]
    %v850 = vld [vmem:[#allocation5 + $0xfc8] sm:$0xff]
    %v851 = vld [vmem:[#allocation5 + $0xfd0] sm:$0xff]
    %v852 = vld [vmem:[#allocation5 + $0xfd8] sm:$0xff]
    %v853 = vld [vmem:[#allocation5 + $0xfe0] sm:$0xff]
    %v854 = vld [vmem:[#allocation5 + $0xfe8] sm:$0xff]
    %v855 = vld [vmem:[#allocation5 + $0xff0] sm:$0xff]
    %v856 = vld [vmem:[#allocation5 + $0xff8] sm:$0xff]
    %v857 = vld [vmem:[#allocation5 + $0x1000] sm:$0xff]
    %v858 = vld [vmem:[#allocation5 + $0x1008] sm:$0xff]
    %v859 = vld [vmem:[#allocation5 + $0x1010] sm:$0xff]
    %v860 = vld [vmem:[#allocation5 + $0x1018] sm:$0xff]
    %v861 = vld [vmem:[#allocation5 + $0x1020] sm:$0xff]
    %v862 = vld [vmem:[#allocation5 + $0x1028] sm:$0xff]
    %v863 = vld [vmem:[#allocation5 + $0x1030] sm:$0xff]
    %v864 = vld [vmem:[#allocation5 + $0x1038] sm:$0xff]
    %v865 = vld [vmem:[#allocation5 + $0x1040] sm:$0xff]
    %v866 = vld [vmem:[#allocation5 + $0x1048] sm:$0xff]
    %v867 = vld [vmem:[#allocation5 + $0x1050] sm:$0xff]
    %v868 = vld [vmem:[#allocation5 + $0x1058] sm:$0xff]
    %v869 = vld [vmem:[#allocation5 + $0x1060] sm:$0xff]
    %v870 = vld [vmem:[#allocation5 + $0x1068] sm:$0xff]
    %v871 = vld [vmem:[#allocation5 + $0x1070] sm:$0xff]
    %v872 = vld [vmem:[#allocation5 + $0x1078] sm:$0xff]
    %v873 = vld [vmem:[#allocation5 + $0x1080] sm:$0xff]
    %v874 = vld [vmem:[#allocation5 + $0x1088] sm:$0xff]
    %v875 = vld [vmem:[#allocation5 + $0x1090] sm:$0xff]
    %v876 = vld [vmem:[#allocation5 + $0x1098] sm:$0xff]
    %v877 = vld [vmem:[#allocation5 + $0x10a0] sm:$0xff]
    %v878 = vld [vmem:[#allocation5 + $0x10a8] sm:$0xff]
    %v879 = vld [vmem:[#allocation5 + $0x10b0] sm:$0xff]
    %v880 = vld [vmem:[#allocation5 + $0x10b8] sm:$0xff]
    %v881 = vld [vmem:[#allocation5 + $0x10c0] sm:$0xff]
    %v882 = vld [vmem:[#allocation5 + $0x10c8] sm:$0xff]
    %v883 = vld [vmem:[#allocation5 + $0x10d0] sm:$0xff]
    %v884 = vld [vmem:[#allocation5 + $0x10d8] sm:$0xff]
    %v885 = vld [vmem:[#allocation5 + $0x10e0] sm:$0xff]
    %v886 = vld [vmem:[#allocation5 + $0x10e8] sm:$0xff]
    %v887 = vld [vmem:[#allocation5 + $0x10f0] sm:$0xff]
    %v888 = vld [vmem:[#allocation5 + $0x10f8] sm:$0xff]
    %v889 = vld [vmem:[#allocation5 + $0x1100] sm:$0xff]
    %v890 = vld [vmem:[#allocation5 + $0x1108] sm:$0xff]
    %v891 = vld [vmem:[#allocation5 + $0x1110] sm:$0xff]
    %v892 = vld [vmem:[#allocation5 + $0x1118] sm:$0xff]
    %v893 = vld [vmem:[#allocation5 + $0x1120] sm:$0xff]
    %v894 = vld [vmem:[#allocation5 + $0x1128] sm:$0xff]
    %v895 = vld [vmem:[#allocation5 + $0x1130] sm:$0xff]
    %v896 = vld [vmem:[#allocation5 + $0x1138] sm:$0xff]
    %v897 = vld [vmem:[#allocation5 + $0x1140] sm:$0xff]
    %v898 = vld [vmem:[#allocation5 + $0x1148] sm:$0xff]
    %v899 = vld [vmem:[#allocation5 + $0x1150] sm:$0xff]
    %v900 = vld [vmem:[#allocation5 + $0x1158] sm:$0xff]
    %v901 = vld [vmem:[#allocation5 + $0x1160] sm:$0xff]
    %v902 = vld [vmem:[#allocation5 + $0x1168] sm:$0xff]
    %v903 = vld [vmem:[#allocation5 + $0x1170] sm:$0xff]
    %v904 = vld [vmem:[#allocation5 + $0x1178] sm:$0xff]
    %v905 = vld [vmem:[#allocation5 + $0x1180] sm:$0xff]
    %v906 = vld [vmem:[#allocation5 + $0x1188] sm:$0xff]
    %v907 = vld [vmem:[#allocation5 + $0x1190] sm:$0xff]
    %v908 = vld [vmem:[#allocation5 + $0x1198] sm:$0xff]
    %v909 = vld [vmem:[#allocation5 + $0x11a0] sm:$0xff]
    %v910 = vld [vmem:[#allocation5 + $0x11a8] sm:$0xff]
    %v911 = vld [vmem:[#allocation5 + $0x11b0] sm:$0xff]
    %v912 = vld [vmem:[#allocation5 + $0x11b8] sm:$0xff]
    %v913 = vld [vmem:[#allocation5 + $0x11c0] sm:$0xff]
    %v914 = vld [vmem:[#allocation5 + $0x11c8] sm:$0xff]
    %v915 = vld [vmem:[#allocation5 + $0x11d0] sm:$0xff]
    %v916 = vld [vmem:[#allocation5 + $0x11d8] sm:$0xff]
    %v917 = vld [vmem:[#allocation5 + $0x11e0] sm:$0xff]
    %v918 = vld [vmem:[#allocation5 + $0x11e8] sm:$0xff]
    %v919 = vld [vmem:[#allocation5 + $0x11f0] sm:$0xff]
    %v920 = vld [vmem:[#allocation5 + $0x11f8] sm:$0xff]
    %v921 = vld [vmem:[#allocation5 + $0x1200] sm:$0xff]
    %v922 = vld [vmem:[#allocation5 + $0x1208] sm:$0xff]
    %v923 = vld [vmem:[#allocation5 + $0x1210] sm:$0xff]
    %v924 = vld [vmem:[#allocation5 + $0x1218] sm:$0xff]
    %v925 = vld [vmem:[#allocation5 + $0x1220] sm:$0xff]
    %v926 = vld [vmem:[#allocation5 + $0x1228] sm:$0xff]
    %v927 = vld [vmem:[#allocation5 + $0x1230] sm:$0xff]
    %v928 = vld [vmem:[#allocation5 + $0x1238] sm:$0xff]
    %v929 = vld [vmem:[#allocation5 + $0x1240] sm:$0xff]
    %v930 = vld [vmem:[#allocation5 + $0x1248] sm:$0xff]
    %v931 = vld [vmem:[#allocation5 + $0x1250] sm:$0xff]
    %v932 = vld [vmem:[#allocation5 + $0x1258] sm:$0xff]
    %v933 = vld [vmem:[#allocation7] sm:$0xf]
    %v935 = vlaneseq
    %v936 = vshrl.u32 %v935, 7
    %v937 = vsub.s32 0, %v936
    %v938 = vrot.slane %v933, %v937
    %v939 = vlaneseq
    %v940 = vshrl.u32 %v939, 7
    %v941 = vsub.s32 1, %v940
    %v942 = vrot.slane %v933, %v941
    %v943 = vlaneseq
    %v944 = vshrl.u32 %v943, 7
    %v945 = vsub.s32 2, %v944
    %v946 = vrot.slane %v933, %v945
    %v947 = vlaneseq
    %v948 = vshrl.u32 %v947, 7
    %v949 = vsub.s32 3, %v948
    %v950 = vrot.slane %v933, %v949
    %v1543 = vunpack.c.l.b16 %v345
    %v1544 = vunpack.c.h.b16 %v345
    %v1545 = vunpack.c.l.b16 %v346
    %v1546 = vunpack.c.h.b16 %v346
    %v1547 = vunpack.c.l.b16 %v347
    %v1548 = vunpack.c.h.b16 %v347
    %v1549 = vunpack.c.l.b16 %v348
    %v1550 = vunpack.c.h.b16 %v348
    %v1551 = vunpack.c.l.b16 %v349
    %v1552 = vunpack.c.h.b16 %v349
    %v1553 = vunpack.c.l.b16 %v350
    %v1554 = vunpack.c.h.b16 %v350
    %v1555 = vunpack.c.l.b16 %v351
    %v1556 = vunpack.c.h.b16 %v351
    %v1557 = vunpack.c.l.b16 %v352
    %v1558 = vunpack.c.h.b16 %v352
    %v1559 = vunpack.c.l.b16 %v353
    %v1560 = vunpack.c.h.b16 %v353
    %v1561 = vunpack.c.l.b16 %v354
    %v1562 = vunpack.c.h.b16 %v354
    %v1563 = vunpack.c.l.b16 %v355
    %v1564 = vunpack.c.h.b16 %v355
    %v1565 = vunpack.c.l.b16 %v356
    %v1566 = vunpack.c.h.b16 %v356
    %v1567 = vunpack.c.l.b16 %v357
    %v1568 = vunpack.c.h.b16 %v357
    %v1569 = vunpack.c.l.b16 %v358
    %v1570 = vunpack.c.h.b16 %v358
    %v1571 = vunpack.c.l.b16 %v359
    %v1572 = vunpack.c.h.b16 %v359
    %v1573 = vunpack.c.l.b16 %v360
    %v1574 = vunpack.c.h.b16 %v360
    %v1575 = vunpack.c.l.b16 %v361
    %v1576 = vunpack.c.h.b16 %v361
    %v1577 = vunpack.c.l.b16 %v362
    %v1578 = vunpack.c.h.b16 %v362
    %v1579 = vunpack.c.l.b16 %v363
    %v1580 = vunpack.c.h.b16 %v363
    %v1581 = vunpack.c.l.b16 %v364
    %v1582 = vunpack.c.h.b16 %v364
    %v1583 = vunpack.c.l.b16 %v365
    %v1584 = vunpack.c.h.b16 %v365
    %v1585 = vunpack.c.l.b16 %v366
    %v1586 = vunpack.c.h.b16 %v366
    %v1587 = vunpack.c.l.b16 %v367
    %v1588 = vunpack.c.h.b16 %v367
    %v1589 = vunpack.c.l.b16 %v368
    %v1590 = vunpack.c.h.b16 %v368
    %v1591 = vunpack.c.l.b16 %v369
    %v1592 = vunpack.c.h.b16 %v369
    %v1593 = vunpack.c.l.b16 %v370
    %v1594 = vunpack.c.h.b16 %v370
    %v1595 = vunpack.c.l.b16 %v371
    %v1596 = vunpack.c.h.b16 %v371
    %v1597 = vunpack.c.l.b16 %v372
    %v1598 = vunpack.c.h.b16 %v372
    %v1599 = vunpack.c.l.b16 %v373
    %v1600 = vunpack.c.h.b16 %v373
    %v1601 = vunpack.c.l.b16 %v374
    %v1602 = vunpack.c.h.b16 %v374
    %v1603 = vunpack.c.l.b16 %v375
    %v1604 = vunpack.c.h.b16 %v375
    %v1605 = vunpack.c.l.b16 %v376
    %v1606 = vunpack.c.h.b16 %v376
    %v1607 = vunpack.c.l.b16 %v377
    %v1608 = vunpack.c.h.b16 %v377
    %v1609 = vunpack.c.l.b16 %v378
    %v1610 = vunpack.c.h.b16 %v378
    %v1611 = vunpack.c.l.b16 %v379
    %v1612 = vunpack.c.h.b16 %v379
    %v1613 = vunpack.c.l.b16 %v380
    %v1614 = vunpack.c.h.b16 %v380
    %v1615 = vunpack.c.l.b16 %v381
    %v1616 = vunpack.c.h.b16 %v381
    %v1617 = vunpack.c.l.b16 %v382
    %v1618 = vunpack.c.h.b16 %v382
    %v1619 = vunpack.c.l.b16 %v383
    %v1620 = vunpack.c.h.b16 %v383
    %v1621 = vunpack.c.l.b16 %v384
    %v1622 = vunpack.c.h.b16 %v384
    %v1623 = vunpack.c.l.b16 %v385
    %v1624 = vunpack.c.h.b16 %v385
    %v1625 = vunpack.c.l.b16 %v386
    %v1626 = vunpack.c.h.b16 %v386
    %v1627 = vunpack.c.l.b16 %v387
    %v1628 = vunpack.c.h.b16 %v387
    %v1629 = vunpack.c.l.b16 %v388
    %v1630 = vunpack.c.h.b16 %v388
    %v1631 = vunpack.c.l.b16 %v389
    %v1632 = vunpack.c.h.b16 %v389
    %v1633 = vunpack.c.l.b16 %v390
    %v1634 = vunpack.c.h.b16 %v390
    %v1635 = vunpack.c.l.b16 %v391
    %v1636 = vunpack.c.h.b16 %v391
    %v1637 = vunpack.c.l.b16 %v392
    %v1638 = vunpack.c.h.b16 %v392
    %v1639 = vunpack.c.l.b16 %v393
    %v1640 = vunpack.c.h.b16 %v393
    %v1641 = vunpack.c.l.b16 %v394
    %v1642 = vunpack.c.h.b16 %v394
    %v1643 = vunpack.c.l.b16 %v395
    %v1644 = vunpack.c.h.b16 %v395
    %v1645 = vunpack.c.l.b16 %v396
    %v1646 = vunpack.c.h.b16 %v396
    %v1647 = vunpack.c.l.b16 %v397
    %v1648 = vunpack.c.h.b16 %v397
    %v1649 = vunpack.c.l.b16 %v398
    %v1650 = vunpack.c.h.b16 %v398
    %v1651 = vunpack.c.l.b16 %v399
    %v1652 = vunpack.c.h.b16 %v399
    %v1653 = vunpack.c.l.b16 %v400
    %v1654 = vunpack.c.h.b16 %v400
    %v1655 = vunpack.c.l.b16 %v401
    %v1656 = vunpack.c.h.b16 %v401
    %v1657 = vunpack.c.l.b16 %v402
    %v1658 = vunpack.c.h.b16 %v402
    %v1659 = vunpack.c.l.b16 %v403
    %v1660 = vunpack.c.h.b16 %v403
    %v1661 = vunpack.c.l.b16 %v404
    %v1662 = vunpack.c.h.b16 %v404
    %v1663 = vunpack.c.l.b16 %v405
    %v1664 = vunpack.c.h.b16 %v405
    %v1665 = vunpack.c.l.b16 %v406
    %v1666 = vunpack.c.h.b16 %v406
    %v1667 = vunpack.c.l.b16 %v407
    %v1668 = vunpack.c.h.b16 %v407
    %v1669 = vunpack.c.l.b16 %v408
    %v1670 = vunpack.c.h.b16 %v408
    %v1671 = vunpack.c.l.b16 %v409
    %v1672 = vunpack.c.h.b16 %v409
    %v1673 = vunpack.c.l.b16 %v410
    %v1674 = vunpack.c.h.b16 %v410
    %v1675 = vunpack.c.l.b16 %v411
    %v1676 = vunpack.c.h.b16 %v411
    %v1677 = vunpack.c.l.b16 %v412
    %v1678 = vunpack.c.h.b16 %v412
    %v1679 = vunpack.c.l.b16 %v413
    %v1680 = vunpack.c.h.b16 %v413
    %v1681 = vunpack.c.l.b16 %v414
    %v1682 = vunpack.c.h.b16 %v414
    %v1683 = vunpack.c.l.b16 %v415
    %v1684 = vunpack.c.h.b16 %v415
    %v1685 = vunpack.c.l.b16 %v416
    %v1686 = vunpack.c.h.b16 %v416
    %v1687 = vunpack.c.l.b16 %v417
    %v1688 = vunpack.c.h.b16 %v417
    %v1689 = vunpack.c.l.b16 %v418
    %v1690 = vunpack.c.h.b16 %v418
    %v1691 = vunpack.c.l.b16 %v419
    %v1692 = vunpack.c.h.b16 %v419
    %v1693 = vunpack.c.l.b16 %v420
    %v1694 = vunpack.c.h.b16 %v420
    %v1695 = vunpack.c.l.b16 %v421
    %v1696 = vunpack.c.h.b16 %v421
    %v1697 = vunpack.c.l.b16 %v422
    %v1698 = vunpack.c.h.b16 %v422
    %v1699 = vunpack.c.l.b16 %v423
    %v1700 = vunpack.c.h.b16 %v423
    %v1701 = vunpack.c.l.b16 %v424
    %v1702 = vunpack.c.h.b16 %v424
    %v1703 = vunpack.c.l.b16 %v425
    %v1704 = vunpack.c.h.b16 %v425
    %v1705 = vunpack.c.l.b16 %v426
    %v1706 = vunpack.c.h.b16 %v426
    %v1707 = vunpack.c.l.b16 %v427
    %v1708 = vunpack.c.h.b16 %v427
    %v1709 = vunpack.c.l.b16 %v428
    %v1710 = vunpack.c.h.b16 %v428
    %v1711 = vunpack.c.l.b16 %v429
    %v1712 = vunpack.c.h.b16 %v429
    %v1713 = vunpack.c.l.b16 %v430
    %v1714 = vunpack.c.h.b16 %v430
    %v1715 = vunpack.c.l.b16 %v431
    %v1716 = vunpack.c.h.b16 %v431
    %v1717 = vunpack.c.l.b16 %v432
    %v1718 = vunpack.c.h.b16 %v432
    %v1719 = vunpack.c.l.b16 %v433
    %v1720 = vunpack.c.h.b16 %v433
    %v1721 = vunpack.c.l.b16 %v434
    %v1722 = vunpack.c.h.b16 %v434
    %v1723 = vunpack.c.l.b16 %v435
    %v1724 = vunpack.c.h.b16 %v435
    %v1725 = vunpack.c.l.b16 %v436
    %v1726 = vunpack.c.h.b16 %v436
    %v1727 = vunpack.c.l.b16 %v437
    %v1728 = vunpack.c.h.b16 %v437
    %v1729 = vunpack.c.l.b16 %v438
    %v1730 = vunpack.c.h.b16 %v438
    %v1731 = vunpack.c.l.b16 %v439
    %v1732 = vunpack.c.h.b16 %v439
    %v1733 = vunpack.c.l.b16 %v440
    %v1734 = vunpack.c.h.b16 %v440
    %v1735 = vunpack.c.l.b16 %v441
    %v1736 = vunpack.c.h.b16 %v441
    %v1737 = vunpack.c.l.b16 %v442
    %v1738 = vunpack.c.h.b16 %v442
    %v1739 = vunpack.c.l.b16 %v443
    %v1740 = vunpack.c.h.b16 %v443
    %v1741 = vunpack.c.l.b16 %v444
    %v1742 = vunpack.c.h.b16 %v444
    %v1743 = vunpack.c.l.b16 %v445
    %v1744 = vunpack.c.h.b16 %v445
    %v1745 = vunpack.c.l.b16 %v446
    %v1746 = vunpack.c.h.b16 %v446
    %v1747 = vunpack.c.l.b16 %v447
    %v1748 = vunpack.c.h.b16 %v447
    %v1749 = vunpack.c.l.b16 %v448
    %v1750 = vunpack.c.h.b16 %v448
    %v1751 = vunpack.c.l.b16 %v449
    %v1752 = vunpack.c.h.b16 %v449
    %v1753 = vunpack.c.l.b16 %v450
    %v1754 = vunpack.c.h.b16 %v450
    %v1755 = vunpack.c.l.b16 %v451
    %v1756 = vunpack.c.h.b16 %v451
    %v1757 = vunpack.c.l.b16 %v452
    %v1758 = vunpack.c.h.b16 %v452
    %v1759 = vunpack.c.l.b16 %v453
    %v1760 = vunpack.c.h.b16 %v453
    %v1761 = vunpack.c.l.b16 %v454
    %v1762 = vunpack.c.h.b16 %v454
    %v1763 = vunpack.c.l.b16 %v455
    %v1764 = vunpack.c.h.b16 %v455
    %v1765 = vunpack.c.l.b16 %v456
    %v1766 = vunpack.c.h.b16 %v456
    %v1767 = vunpack.c.l.b16 %v457
    %v1768 = vunpack.c.h.b16 %v457
    %v1769 = vunpack.c.l.b16 %v458
    %v1770 = vunpack.c.h.b16 %v458
    %v1771 = vunpack.c.l.b16 %v459
    %v1772 = vunpack.c.h.b16 %v459
    %v1773 = vunpack.c.l.b16 %v460
    %v1774 = vunpack.c.h.b16 %v460
    %v1775 = vunpack.c.l.b16 %v461
    %v1776 = vunpack.c.h.b16 %v461
    %v1777 = vunpack.c.l.b16 %v462
    %v1778 = vunpack.c.h.b16 %v462
    %v1779 = vunpack.c.l.b16 %v463
    %v1780 = vunpack.c.h.b16 %v463
    %v1781 = vunpack.c.l.b16 %v464
    %v1782 = vunpack.c.h.b16 %v464
    %v1783 = vunpack.c.l.b16 %v465
    %v1784 = vunpack.c.h.b16 %v465
    %v1785 = vunpack.c.l.b16 %v466
    %v1786 = vunpack.c.h.b16 %v466
    %v1787 = vunpack.c.l.b16 %v467
    %v1788 = vunpack.c.h.b16 %v467
    %v1789 = vunpack.c.l.b16 %v468
    %v1790 = vunpack.c.h.b16 %v468
    %v1791 = vunpack.c.l.b16 %v469
    %v1792 = vunpack.c.h.b16 %v469
    %v1793 = vunpack.c.l.b16 %v470
    %v1794 = vunpack.c.h.b16 %v470
    %v1795 = vunpack.c.l.b16 %v471
    %v1796 = vunpack.c.h.b16 %v471
    %v1797 = vunpack.c.l.b16 %v472
    %v1798 = vunpack.c.h.b16 %v472
    %v1799 = vunpack.c.l.b16 %v473
    %v1800 = vunpack.c.h.b16 %v473
    %v1801 = vunpack.c.l.b16 %v474
    %v1802 = vunpack.c.h.b16 %v474
    %v1803 = vunpack.c.l.b16 %v475
    %v1804 = vunpack.c.h.b16 %v475
    %v1805 = vunpack.c.l.b16 %v476
    %v1806 = vunpack.c.h.b16 %v476
    %v1807 = vunpack.c.l.b16 %v477
    %v1808 = vunpack.c.h.b16 %v477
    %v1809 = vunpack.c.l.b16 %v478
    %v1810 = vunpack.c.h.b16 %v478
    %v1811 = vunpack.c.l.b16 %v479
    %v1812 = vunpack.c.h.b16 %v479
    %v1813 = vunpack.c.l.b16 %v480
    %v1814 = vunpack.c.h.b16 %v480
    %v1815 = vunpack.c.l.b16 %v481
    %v1816 = vunpack.c.h.b16 %v481
    %v1817 = vunpack.c.l.b16 %v482
    %v1818 = vunpack.c.h.b16 %v482
    %v1819 = vunpack.c.l.b16 %v483
    %v1820 = vunpack.c.h.b16 %v483
    %v1821 = vunpack.c.l.b16 %v484
    %v1822 = vunpack.c.h.b16 %v484
    %v1823 = vunpack.c.l.b16 %v485
    %v1824 = vunpack.c.h.b16 %v485
    %v1825 = vunpack.c.l.b16 %v486
    %v1826 = vunpack.c.h.b16 %v486
    %v1827 = vunpack.c.l.b16 %v487
    %v1828 = vunpack.c.h.b16 %v487
    %v1829 = vunpack.c.l.b16 %v488
    %v1830 = vunpack.c.h.b16 %v488
    %v1831 = vunpack.c.l.b16 %v489
    %v1832 = vunpack.c.h.b16 %v489
    %v1833 = vunpack.c.l.b16 %v490
    %v1834 = vunpack.c.h.b16 %v490
    %v1835 = vunpack.c.l.b16 %v491
    %v1836 = vunpack.c.h.b16 %v491
    %v1837 = vunpack.c.l.b16 %v492
    %v1838 = vunpack.c.h.b16 %v492
    %v1839 = vunpack.c.l.b16 %v493
    %v1840 = vunpack.c.h.b16 %v493
    %v1841 = vunpack.c.l.b16 %v494
    %v1842 = vunpack.c.h.b16 %v494
    %v1843 = vunpack.c.l.b16 %v495
    %v1844 = vunpack.c.h.b16 %v495
    %v1845 = vunpack.c.l.b16 %v496
    %v1846 = vunpack.c.h.b16 %v496
    %v1847 = vunpack.c.l.b16 %v497
    %v1848 = vunpack.c.h.b16 %v497
    %v1849 = vunpack.c.l.b16 %v498
    %v1850 = vunpack.c.h.b16 %v498
    %v1851 = vunpack.c.l.b16 %v499
    %v1852 = vunpack.c.h.b16 %v499
    %v1853 = vunpack.c.l.b16 %v500
    %v1854 = vunpack.c.h.b16 %v500
    %v1855 = vunpack.c.l.b16 %v501
    %v1856 = vunpack.c.h.b16 %v501
    %v1857 = vunpack.c.l.b16 %v502
    %v1858 = vunpack.c.h.b16 %v502
    %v1859 = vunpack.c.l.b16 %v503
    %v1860 = vunpack.c.h.b16 %v503
    %v1861 = vunpack.c.l.b16 %v504
    %v1862 = vunpack.c.h.b16 %v504
    %v1863 = vunpack.c.l.b16 %v505
    %v1864 = vunpack.c.h.b16 %v505
    %v1865 = vunpack.c.l.b16 %v506
    %v1866 = vunpack.c.h.b16 %v506
    %v1867 = vunpack.c.l.b16 %v507
    %v1868 = vunpack.c.h.b16 %v507
    %v1869 = vunpack.c.l.b16 %v508
    %v1870 = vunpack.c.h.b16 %v508
    %v1871 = vunpack.c.l.b16 %v509
    %v1872 = vunpack.c.h.b16 %v509
    %v1873 = vunpack.c.l.b16 %v510
    %v1874 = vunpack.c.h.b16 %v510
    %v1875 = vunpack.c.l.b16 %v511
    %v1876 = vunpack.c.h.b16 %v511
    %v1877 = vunpack.c.l.b16 %v512
    %v1878 = vunpack.c.h.b16 %v512
    %v1879 = vunpack.c.l.b16 %v513
    %v1880 = vunpack.c.h.b16 %v513
    %v1881 = vunpack.c.l.b16 %v514
    %v1882 = vunpack.c.h.b16 %v514
    %v1883 = vunpack.c.l.b16 %v515
    %v1884 = vunpack.c.h.b16 %v515
    %v1885 = vunpack.c.l.b16 %v516
    %v1886 = vunpack.c.h.b16 %v516
    %v1887 = vunpack.c.l.b16 %v517
    %v1888 = vunpack.c.h.b16 %v517
    %v1889 = vunpack.c.l.b16 %v518
    %v1890 = vunpack.c.h.b16 %v518
    %v1891 = vunpack.c.l.b16 %v519
    %v1892 = vunpack.c.h.b16 %v519
    %v1893 = vunpack.c.l.b16 %v520
    %v1894 = vunpack.c.h.b16 %v520
    %v1895 = vunpack.c.l.b16 %v521
    %v1896 = vunpack.c.h.b16 %v521
    %v1897 = vunpack.c.l.b16 %v522
    %v1898 = vunpack.c.h.b16 %v522
    %v1899 = vunpack.c.l.b16 %v523
    %v1900 = vunpack.c.h.b16 %v523
    %v1901 = vunpack.c.l.b16 %v524
    %v1902 = vunpack.c.h.b16 %v524
    %v1903 = vunpack.c.l.b16 %v525
    %v1904 = vunpack.c.h.b16 %v525
    %v1905 = vunpack.c.l.b16 %v526
    %v1906 = vunpack.c.h.b16 %v526
    %v1907 = vunpack.c.l.b16 %v527
    %v1908 = vunpack.c.h.b16 %v527
    %v1909 = vunpack.c.l.b16 %v528
    %v1910 = vunpack.c.h.b16 %v528
    %v1911 = vunpack.c.l.b16 %v529
    %v1912 = vunpack.c.h.b16 %v529
    %v1913 = vunpack.c.l.b16 %v530
    %v1914 = vunpack.c.h.b16 %v530
    %v1915 = vunpack.c.l.b16 %v531
    %v1916 = vunpack.c.h.b16 %v531
    %v1917 = vunpack.c.l.b16 %v532
    %v1918 = vunpack.c.h.b16 %v532
    %v1919 = vunpack.c.l.b16 %v533
    %v1920 = vunpack.c.h.b16 %v533
    %v1921 = vunpack.c.l.b16 %v534
    %v1922 = vunpack.c.h.b16 %v534
    %v1923 = vunpack.c.l.b16 %v535
    %v1924 = vunpack.c.h.b16 %v535
    %v1925 = vunpack.c.l.b16 %v536
    %v1926 = vunpack.c.h.b16 %v536
    %v1927 = vunpack.c.l.b16 %v537
    %v1928 = vunpack.c.h.b16 %v537
    %v1929 = vunpack.c.l.b16 %v538
    %v1930 = vunpack.c.h.b16 %v538
    %v1931 = vunpack.c.l.b16 %v539
    %v1932 = vunpack.c.h.b16 %v539
    %v1933 = vunpack.c.l.b16 %v540
    %v1934 = vunpack.c.h.b16 %v540
    %v1935 = vunpack.c.l.b16 %v541
    %v1936 = vunpack.c.h.b16 %v541
    %v1937 = vunpack.c.l.b16 %v542
    %v1938 = vunpack.c.h.b16 %v542
    %v1939 = vunpack.c.l.b16 %v543
    %v1940 = vunpack.c.h.b16 %v543
    %v1941 = vunpack.c.l.b16 %v544
    %v1942 = vunpack.c.h.b16 %v544
    %v1943 = vunpack.c.l.b16 %v545
    %v1944 = vunpack.c.h.b16 %v545
    %v1945 = vunpack.c.l.b16 %v546
    %v1946 = vunpack.c.h.b16 %v546
    %v1947 = vunpack.c.l.b16 %v547
    %v1948 = vunpack.c.h.b16 %v547
    %v1949 = vunpack.c.l.b16 %v548
    %v1950 = vunpack.c.h.b16 %v548
    %v1951 = vunpack.c.l.b16 %v549
    %v1952 = vunpack.c.h.b16 %v549
    %v1953 = vunpack.c.l.b16 %v550
    %v1954 = vunpack.c.h.b16 %v550
    %v1955 = vunpack.c.l.b16 %v551
    %v1956 = vunpack.c.h.b16 %v551
    %v1957 = vunpack.c.l.b16 %v552
    %v1958 = vunpack.c.h.b16 %v552
    %v1959 = vunpack.c.l.b16 %v553
    %v1960 = vunpack.c.h.b16 %v553
    %v1961 = vunpack.c.l.b16 %v554
    %v1962 = vunpack.c.h.b16 %v554
    %v1963 = vunpack.c.l.b16 %v555
    %v1964 = vunpack.c.h.b16 %v555
    %v1965 = vunpack.c.l.b16 %v556
    %v1966 = vunpack.c.h.b16 %v556
    %v1967 = vunpack.c.l.b16 %v557
    %v1968 = vunpack.c.h.b16 %v557
    %v1969 = vunpack.c.l.b16 %v558
    %v1970 = vunpack.c.h.b16 %v558
    %v1971 = vunpack.c.l.b16 %v559
    %v1972 = vunpack.c.h.b16 %v559
    %v1973 = vunpack.c.l.b16 %v560
    %v1974 = vunpack.c.h.b16 %v560
    %v1975 = vunpack.c.l.b16 %v561
    %v1976 = vunpack.c.h.b16 %v561
    %v1977 = vunpack.c.l.b16 %v562
    %v1978 = vunpack.c.h.b16 %v562
    %v1979 = vunpack.c.l.b16 %v563
    %v1980 = vunpack.c.h.b16 %v563
    %v1981 = vunpack.c.l.b16 %v564
    %v1982 = vunpack.c.h.b16 %v564
    %v1983 = vunpack.c.l.b16 %v565
    %v1984 = vunpack.c.h.b16 %v565
    %v1985 = vunpack.c.l.b16 %v566
    %v1986 = vunpack.c.h.b16 %v566
    %v1987 = vunpack.c.l.b16 %v567
    %v1988 = vunpack.c.h.b16 %v567
    %v1989 = vunpack.c.l.b16 %v568
    %v1990 = vunpack.c.h.b16 %v568
    %v1991 = vunpack.c.l.b16 %v569
    %v1992 = vunpack.c.h.b16 %v569
    %v1993 = vunpack.c.l.b16 %v570
    %v1994 = vunpack.c.h.b16 %v570
    %v1995 = vunpack.c.l.b16 %v571
    %v1996 = vunpack.c.h.b16 %v571
    %v1997 = vunpack.c.l.b16 %v572
    %v1998 = vunpack.c.h.b16 %v572
    %v1999 = vunpack.c.l.b16 %v573
    %v2000 = vunpack.c.h.b16 %v573
    %v2001 = vunpack.c.l.b16 %v574
    %v2002 = vunpack.c.h.b16 %v574
    %v2003 = vunpack.c.l.b16 %v575
    %v2004 = vunpack.c.h.b16 %v575
    %v2005 = vunpack.c.l.b16 %v576
    %v2006 = vunpack.c.h.b16 %v576
    %v2007 = vunpack.c.l.b16 %v577
    %v2008 = vunpack.c.h.b16 %v577
    %v2009 = vunpack.c.l.b16 %v578
    %v2010 = vunpack.c.h.b16 %v578
    %v2011 = vunpack.c.l.b16 %v579
    %v2012 = vunpack.c.h.b16 %v579
    %v2013 = vunpack.c.l.b16 %v580
    %v2014 = vunpack.c.h.b16 %v580
    %v2015 = vunpack.c.l.b16 %v581
    %v2016 = vunpack.c.h.b16 %v581
    %v2017 = vunpack.c.l.b16 %v582
    %v2018 = vunpack.c.h.b16 %v582
    %v2019 = vunpack.c.l.b16 %v583
    %v2020 = vunpack.c.h.b16 %v583
    %v2021 = vunpack.c.l.b16 %v584
    %v2022 = vunpack.c.h.b16 %v584
    %v2023 = vunpack.c.l.b16 %v585
    %v2024 = vunpack.c.h.b16 %v585
    %v2025 = vunpack.c.l.b16 %v586
    %v2026 = vunpack.c.h.b16 %v586
    %v2027 = vunpack.c.l.b16 %v587
    %v2028 = vunpack.c.h.b16 %v587
    %v2029 = vunpack.c.l.b16 %v588
    %v2030 = vunpack.c.h.b16 %v588
    %v2031 = vunpack.c.l.b16 %v589
    %v2032 = vunpack.c.h.b16 %v589
    %v2033 = vunpack.c.l.b16 %v590
    %v2034 = vunpack.c.h.b16 %v590
    %v2035 = vunpack.c.l.b16 %v591
    %v2036 = vunpack.c.h.b16 %v591
    %v2037 = vunpack.c.l.b16 %v592
    %v2038 = vunpack.c.h.b16 %v592
    %v2039 = vunpack.c.l.b16 %v593
    %v2040 = vunpack.c.h.b16 %v593
    %v2041 = vunpack.c.l.b16 %v594
    %v2042 = vunpack.c.h.b16 %v594
    %v2043 = vunpack.c.l.b16 %v595
    %v2044 = vunpack.c.h.b16 %v595
    %v2045 = vunpack.c.l.b16 %v596
    %v2046 = vunpack.c.h.b16 %v596
    %v2047 = vunpack.c.l.b16 %v597
    %v2048 = vunpack.c.h.b16 %v597
    %v2049 = vunpack.c.l.b16 %v598
    %v2050 = vunpack.c.h.b16 %v598
    %v2051 = vunpack.c.l.b16 %v599
    %v2052 = vunpack.c.h.b16 %v599
    %v2053 = vunpack.c.l.b16 %v600
    %v2054 = vunpack.c.h.b16 %v600
    %v2055 = vunpack.c.l.b16 %v601
    %v2056 = vunpack.c.h.b16 %v601
    %v2057 = vunpack.c.l.b16 %v602
    %v2058 = vunpack.c.h.b16 %v602
    %v2059 = vunpack.c.l.b16 %v603
    %v2060 = vunpack.c.h.b16 %v603
    %v2061 = vunpack.c.l.b16 %v604
    %v2062 = vunpack.c.h.b16 %v604
    %v2063 = vunpack.c.l.b16 %v605
    %v2064 = vunpack.c.h.b16 %v605
    %v2065 = vunpack.c.l.b16 %v606
    %v2066 = vunpack.c.h.b16 %v606
    %v2067 = vunpack.c.l.b16 %v607
    %v2068 = vunpack.c.h.b16 %v607
    %v2069 = vunpack.c.l.b16 %v608
    %v2070 = vunpack.c.h.b16 %v608
    %v2071 = vunpack.c.l.b16 %v609
    %v2072 = vunpack.c.h.b16 %v609
    %v2073 = vunpack.c.l.b16 %v610
    %v2074 = vunpack.c.h.b16 %v610
    %v2075 = vunpack.c.l.b16 %v611
    %v2076 = vunpack.c.h.b16 %v611
    %v2077 = vunpack.c.l.b16 %v612
    %v2078 = vunpack.c.h.b16 %v612
    %v2079 = vunpack.c.l.b16 %v613
    %v2080 = vunpack.c.h.b16 %v613
    %v2081 = vunpack.c.l.b16 %v614
    %v2082 = vunpack.c.h.b16 %v614
    %v2083 = vunpack.c.l.b16 %v615
    %v2084 = vunpack.c.h.b16 %v615
    %v2085 = vunpack.c.l.b16 %v616
    %v2086 = vunpack.c.h.b16 %v616
    %v2087 = vunpack.c.l.b16 %v617
    %v2088 = vunpack.c.h.b16 %v617
    %v2089 = vunpack.c.l.b16 %v618
    %v2090 = vunpack.c.h.b16 %v618
    %v2091 = vunpack.c.l.b16 %v619
    %v2092 = vunpack.c.h.b16 %v619
    %v2093 = vunpack.c.l.b16 %v620
    %v2094 = vunpack.c.h.b16 %v620
    %v2095 = vunpack.c.l.b16 %v621
    %v2096 = vunpack.c.h.b16 %v621
    %v2097 = vunpack.c.l.b16 %v622
    %v2098 = vunpack.c.h.b16 %v622
    %v2099 = vunpack.c.l.b16 %v623
    %v2100 = vunpack.c.h.b16 %v623
    %v2101 = vunpack.c.l.b16 %v624
    %v2102 = vunpack.c.h.b16 %v624
    %v2103 = vunpack.c.l.b16 %v625
    %v2104 = vunpack.c.h.b16 %v625
    %v2105 = vunpack.c.l.b16 %v626
    %v2106 = vunpack.c.h.b16 %v626
    %v2107 = vunpack.c.l.b16 %v627
    %v2108 = vunpack.c.h.b16 %v627
    %v2109 = vunpack.c.l.b16 %v628
    %v2110 = vunpack.c.h.b16 %v628
    %v2111 = vunpack.c.l.b16 %v629
    %v2112 = vunpack.c.h.b16 %v629
    %v2113 = vunpack.c.l.b16 %v630
    %v2114 = vunpack.c.h.b16 %v630
    %v2115 = vunpack.c.l.b16 %v631
    %v2116 = vunpack.c.h.b16 %v631
    %v2117 = vunpack.c.l.b16 %v632
    %v2118 = vunpack.c.h.b16 %v632
    %v2119 = vunpack.c.l.b16 %v633
    %v2120 = vunpack.c.h.b16 %v633
    %v2121 = vunpack.c.l.b16 %v634
    %v2122 = vunpack.c.h.b16 %v634
    %v2123 = vunpack.c.l.b16 %v635
    %v2124 = vunpack.c.h.b16 %v635
    %v2125 = vunpack.c.l.b16 %v636
    %v2126 = vunpack.c.h.b16 %v636
    %v2127 = vunpack.c.l.b16 %v637
    %v2128 = vunpack.c.h.b16 %v637
    %v2129 = vunpack.c.l.b16 %v638
    %v2130 = vunpack.c.h.b16 %v638
    %v2131 = vunpack.c.l.b16 %v639
    %v2132 = vunpack.c.h.b16 %v639
    %v2133 = vunpack.c.l.b16 %v640
    %v2134 = vunpack.c.h.b16 %v640
    %v2135 = vunpack.c.l.b16 %v641
    %v2136 = vunpack.c.h.b16 %v641
    %v2137 = vunpack.c.l.b16 %v642
    %v2138 = vunpack.c.h.b16 %v642
    %v2139 = vunpack.c.l.b16 %v643
    %v2140 = vunpack.c.h.b16 %v643
    %v2141 = vunpack.c.l.b16 %v644
    %v2142 = vunpack.c.h.b16 %v644
    %v2143 = vunpack.c.l.b16 %v645
    %v2144 = vunpack.c.h.b16 %v645
    %v2145 = vunpack.c.l.b16 %v646
    %v2146 = vunpack.c.h.b16 %v646
    %v2147 = vunpack.c.l.b16 %v647
    %v2148 = vunpack.c.h.b16 %v647
    %v2149 = vunpack.c.l.b16 %v648
    %v2150 = vunpack.c.h.b16 %v648
    %v2151 = vunpack.c.l.b16 %v649
    %v2152 = vunpack.c.h.b16 %v649
    %v2153 = vunpack.c.l.b16 %v650
    %v2154 = vunpack.c.h.b16 %v650
    %v2155 = vunpack.c.l.b16 %v651
    %v2156 = vunpack.c.h.b16 %v651
    %v2157 = vunpack.c.l.b16 %v652
    %v2158 = vunpack.c.h.b16 %v652
    %v2159 = vunpack.c.l.b16 %v653
    %v2160 = vunpack.c.h.b16 %v653
    %v2161 = vunpack.c.l.b16 %v654
    %v2162 = vunpack.c.h.b16 %v654
    %v2163 = vunpack.c.l.b16 %v655
    %v2164 = vunpack.c.h.b16 %v655
    %v2165 = vunpack.c.l.b16 %v656
    %v2166 = vunpack.c.h.b16 %v656
    %v2167 = vunpack.c.l.b16 %v657
    %v2168 = vunpack.c.h.b16 %v657
    %v2169 = vunpack.c.l.b16 %v658
    %v2170 = vunpack.c.h.b16 %v658
    %v2171 = vunpack.c.l.b16 %v659
    %v2172 = vunpack.c.h.b16 %v659
    %v2173 = vunpack.c.l.b16 %v660
    %v2174 = vunpack.c.h.b16 %v660
    %v2175 = vunpack.c.l.b16 %v661
    %v2176 = vunpack.c.h.b16 %v661
    %v2177 = vunpack.c.l.b16 %v662
    %v2178 = vunpack.c.h.b16 %v662
    %v2179 = vunpack.c.l.b16 %v663
    %v2180 = vunpack.c.h.b16 %v663
    %v2181 = vunpack.c.l.b16 %v664
    %v2182 = vunpack.c.h.b16 %v664
    %v2183 = vunpack.c.l.b16 %v665
    %v2184 = vunpack.c.h.b16 %v665
    %v2185 = vunpack.c.l.b16 %v666
    %v2186 = vunpack.c.h.b16 %v666
    %v2187 = vunpack.c.l.b16 %v667
    %v2188 = vunpack.c.h.b16 %v667
    %v2189 = vunpack.c.l.b16 %v668
    %v2190 = vunpack.c.h.b16 %v668
    %v2191 = vunpack.c.l.b16 %v669
    %v2192 = vunpack.c.h.b16 %v669
    %v2193 = vunpack.c.l.b16 %v670
    %v2194 = vunpack.c.h.b16 %v670
    %v2195 = vunpack.c.l.b16 %v671
    %v2196 = vunpack.c.h.b16 %v671
    %v2197 = vunpack.c.l.b16 %v672
    %v2198 = vunpack.c.h.b16 %v672
    %v2199 = vunpack.c.l.b16 %v673
    %v2200 = vunpack.c.h.b16 %v673
    %v2201 = vunpack.c.l.b16 %v674
    %v2202 = vunpack.c.h.b16 %v674
    %v2203 = vunpack.c.l.b16 %v675
    %v2204 = vunpack.c.h.b16 %v675
    %v2205 = vunpack.c.l.b16 %v676
    %v2206 = vunpack.c.h.b16 %v676
    %v2207 = vunpack.c.l.b16 %v677
    %v2208 = vunpack.c.h.b16 %v677
    %v2209 = vunpack.c.l.b16 %v678
    %v2210 = vunpack.c.h.b16 %v678
    %v2211 = vunpack.c.l.b16 %v679
    %v2212 = vunpack.c.h.b16 %v679
    %v2213 = vunpack.c.l.b16 %v680
    %v2214 = vunpack.c.h.b16 %v680
    %v2215 = vunpack.c.l.b16 %v681
    %v2216 = vunpack.c.h.b16 %v681
    %v2217 = vunpack.c.l.b16 %v682
    %v2218 = vunpack.c.h.b16 %v682
    %v2219 = vunpack.c.l.b16 %v683
    %v2220 = vunpack.c.h.b16 %v683
    %v2221 = vunpack.c.l.b16 %v684
    %v2222 = vunpack.c.h.b16 %v684
    %v2223 = vunpack.c.l.b16 %v685
    %v2224 = vunpack.c.h.b16 %v685
    %v2225 = vunpack.c.l.b16 %v686
    %v2226 = vunpack.c.h.b16 %v686
    %v2227 = vunpack.c.l.b16 %v687
    %v2228 = vunpack.c.h.b16 %v687
    %v2229 = vunpack.c.l.b16 %v688
    %v2230 = vunpack.c.h.b16 %v688
    %v2231 = vunpack.c.l.b16 %v689
    %v2232 = vunpack.c.h.b16 %v689
    %v2233 = vunpack.c.l.b16 %v690
    %v2234 = vunpack.c.h.b16 %v690
    %v2235 = vunpack.c.l.b16 %v691
    %v2236 = vunpack.c.h.b16 %v691
    %v2237 = vunpack.c.l.b16 %v692
    %v2238 = vunpack.c.h.b16 %v692
    %v2239 = vunpack.c.l.b16 %v693
    %v2240 = vunpack.c.h.b16 %v693
    %v2241 = vunpack.c.l.b16 %v694
    %v2242 = vunpack.c.h.b16 %v694
    %v2243 = vunpack.c.l.b16 %v695
    %v2244 = vunpack.c.h.b16 %v695
    %v2245 = vunpack.c.l.b16 %v696
    %v2246 = vunpack.c.h.b16 %v696
    %v2247 = vunpack.c.l.b16 %v697
    %v2248 = vunpack.c.h.b16 %v697
    %v2249 = vunpack.c.l.b16 %v698
    %v2250 = vunpack.c.h.b16 %v698
    %v2251 = vunpack.c.l.b16 %v699
    %v2252 = vunpack.c.h.b16 %v699
    %v2253 = vunpack.c.l.b16 %v700
    %v2254 = vunpack.c.h.b16 %v700
    %v2255 = vunpack.c.l.b16 %v701
    %v2256 = vunpack.c.h.b16 %v701
    %v2257 = vunpack.c.l.b16 %v702
    %v2258 = vunpack.c.h.b16 %v702
    %v2259 = vunpack.c.l.b16 %v703
    %v2260 = vunpack.c.h.b16 %v703
    %v2261 = vunpack.c.l.b16 %v704
    %v2262 = vunpack.c.h.b16 %v704
    %v2263 = vunpack.c.l.b16 %v705
    %v2264 = vunpack.c.h.b16 %v705
    %v2265 = vunpack.c.l.b16 %v706
    %v2266 = vunpack.c.h.b16 %v706
    %v2267 = vunpack.c.l.b16 %v707
    %v2268 = vunpack.c.h.b16 %v707
    %v2269 = vunpack.c.l.b16 %v708
    %v2270 = vunpack.c.h.b16 %v708
    %v2271 = vunpack.c.l.b16 %v709
    %v2272 = vunpack.c.h.b16 %v709
    %v2273 = vunpack.c.l.b16 %v710
    %v2274 = vunpack.c.h.b16 %v710
    %v2275 = vunpack.c.l.b16 %v711
    %v2276 = vunpack.c.h.b16 %v711
    %v2277 = vunpack.c.l.b16 %v712
    %v2278 = vunpack.c.h.b16 %v712
    %v2279 = vunpack.c.l.b16 %v713
    %v2280 = vunpack.c.h.b16 %v713
    %v2281 = vunpack.c.l.b16 %v714
    %v2282 = vunpack.c.h.b16 %v714
    %v2283 = vunpack.c.l.b16 %v715
    %v2284 = vunpack.c.h.b16 %v715
    %v2285 = vunpack.c.l.b16 %v716
    %v2286 = vunpack.c.h.b16 %v716
    %v2287 = vunpack.c.l.b16 %v717
    %v2288 = vunpack.c.h.b16 %v717
    %v2289 = vunpack.c.l.b16 %v718
    %v2290 = vunpack.c.h.b16 %v718
    %v2291 = vunpack.c.l.b16 %v719
    %v2292 = vunpack.c.h.b16 %v719
    %v2293 = vunpack.c.l.b16 %v720
    %v2294 = vunpack.c.h.b16 %v720
    %v2295 = vunpack.c.l.b16 %v721
    %v2296 = vunpack.c.h.b16 %v721
    %v2297 = vunpack.c.l.b16 %v722
    %v2298 = vunpack.c.h.b16 %v722
    %v2299 = vunpack.c.l.b16 %v723
    %v2300 = vunpack.c.h.b16 %v723
    %v2301 = vunpack.c.l.b16 %v724
    %v2302 = vunpack.c.h.b16 %v724
    %v2303 = vunpack.c.l.b16 %v725
    %v2304 = vunpack.c.h.b16 %v725
    %v2305 = vunpack.c.l.b16 %v726
    %v2306 = vunpack.c.h.b16 %v726
    %v2307 = vunpack.c.l.b16 %v727
    %v2308 = vunpack.c.h.b16 %v727
    %v2309 = vunpack.c.l.b16 %v728
    %v2310 = vunpack.c.h.b16 %v728
    %v2311 = vunpack.c.l.b16 %v729
    %v2312 = vunpack.c.h.b16 %v729
    %v2313 = vunpack.c.l.b16 %v730
    %v2314 = vunpack.c.h.b16 %v730
    %v2315 = vunpack.c.l.b16 %v731
    %v2316 = vunpack.c.h.b16 %v731
    %v2317 = vunpack.c.l.b16 %v732
    %v2318 = vunpack.c.h.b16 %v732
    %v2319 = vunpack.c.l.b16 %v733
    %v2320 = vunpack.c.h.b16 %v733
    %v2321 = vunpack.c.l.b16 %v734
    %v2322 = vunpack.c.h.b16 %v734
    %v2323 = vunpack.c.l.b16 %v735
    %v2324 = vunpack.c.h.b16 %v735
    %v2325 = vunpack.c.l.b16 %v736
    %v2326 = vunpack.c.h.b16 %v736
    %v2327 = vunpack.c.l.b16 %v737
    %v2328 = vunpack.c.h.b16 %v737
    %v2329 = vunpack.c.l.b16 %v738
    %v2330 = vunpack.c.h.b16 %v738
    %v2331 = vunpack.c.l.b16 %v739
    %v2332 = vunpack.c.h.b16 %v739
    %v2333 = vunpack.c.l.b16 %v740
    %v2334 = vunpack.c.h.b16 %v740
    %v2335 = vunpack.c.l.b16 %v741
    %v2336 = vunpack.c.h.b16 %v741
    %v2337 = vunpack.c.l.b16 %v742
    %v2338 = vunpack.c.h.b16 %v742
    %v2339 = vunpack.c.l.b16 %v743
    %v2340 = vunpack.c.h.b16 %v743
    %v2341 = vunpack.c.l.b16 %v744
    %v2342 = vunpack.c.h.b16 %v744
    %v2343 = vunpack.c.l.b16 %v745
    %v2344 = vunpack.c.h.b16 %v745
    %v2345 = vunpack.c.l.b16 %v746
    %v2346 = vunpack.c.h.b16 %v746
    %v2347 = vunpack.c.l.b16 %v747
    %v2348 = vunpack.c.h.b16 %v747
    %v2349 = vunpack.c.l.b16 %v748
    %v2350 = vunpack.c.h.b16 %v748
    %v2351 = vunpack.c.l.b16 %v749
    %v2352 = vunpack.c.h.b16 %v749
    %v2353 = vunpack.c.l.b16 %v750
    %v2354 = vunpack.c.h.b16 %v750
    %v2355 = vunpack.c.l.b16 %v751
    %v2356 = vunpack.c.h.b16 %v751
    %v2357 = vunpack.c.l.b16 %v752
    %v2358 = vunpack.c.h.b16 %v752
    %v2359 = vunpack.c.l.b16 %v753
    %v2360 = vunpack.c.h.b16 %v753
    %v2361 = vunpack.c.l.b16 %v754
    %v2362 = vunpack.c.h.b16 %v754
    %v2363 = vunpack.c.l.b16 %v755
    %v2364 = vunpack.c.h.b16 %v755
    %v2365 = vunpack.c.l.b16 %v756
    %v2366 = vunpack.c.h.b16 %v756
    %v2367 = vunpack.c.l.b16 %v757
    %v2368 = vunpack.c.h.b16 %v757
    %v2369 = vunpack.c.l.b16 %v758
    %v2370 = vunpack.c.h.b16 %v758
    %v2371 = vunpack.c.l.b16 %v759
    %v2372 = vunpack.c.h.b16 %v759
    %v2373 = vunpack.c.l.b16 %v760
    %v2374 = vunpack.c.h.b16 %v760
    %v2375 = vunpack.c.l.b16 %v761
    %v2376 = vunpack.c.h.b16 %v761
    %v2377 = vunpack.c.l.b16 %v762
    %v2378 = vunpack.c.h.b16 %v762
    %v2379 = vunpack.c.l.b16 %v763
    %v2380 = vunpack.c.h.b16 %v763
    %v2381 = vunpack.c.l.b16 %v764
    %v2382 = vunpack.c.h.b16 %v764
    %v2383 = vunpack.c.l.b16 %v765
    %v2384 = vunpack.c.h.b16 %v765
    %v2385 = vunpack.c.l.b16 %v766
    %v2386 = vunpack.c.h.b16 %v766
    %v2387 = vunpack.c.l.b16 %v767
    %v2388 = vunpack.c.h.b16 %v767
    %v2389 = vunpack.c.l.b16 %v768
    %v2390 = vunpack.c.h.b16 %v768
    %v2391 = vunpack.c.l.b16 %v769
    %v2392 = vunpack.c.h.b16 %v769
    %v2393 = vunpack.c.l.b16 %v770
    %v2394 = vunpack.c.h.b16 %v770
    %v2395 = vunpack.c.l.b16 %v771
    %v2396 = vunpack.c.h.b16 %v771
    %v2397 = vunpack.c.l.b16 %v772
    %v2398 = vunpack.c.h.b16 %v772
    %v2399 = vunpack.c.l.b16 %v773
    %v2400 = vunpack.c.h.b16 %v773
    %v2401 = vunpack.c.l.b16 %v774
    %v2402 = vunpack.c.h.b16 %v774
    %v2403 = vunpack.c.l.b16 %v775
    %v2404 = vunpack.c.h.b16 %v775
    %v2405 = vunpack.c.l.b16 %v776
    %v2406 = vunpack.c.h.b16 %v776
    %v2407 = vunpack.c.l.b16 %v777
    %v2408 = vunpack.c.h.b16 %v777
    %v2409 = vunpack.c.l.b16 %v778
    %v2410 = vunpack.c.h.b16 %v778
    %v2411 = vunpack.c.l.b16 %v779
    %v2412 = vunpack.c.h.b16 %v779
    %v2413 = vunpack.c.l.b16 %v780
    %v2414 = vunpack.c.h.b16 %v780
    %v2415 = vunpack.c.l.b16 %v781
    %v2416 = vunpack.c.h.b16 %v781
    %v2417 = vunpack.c.l.b16 %v782
    %v2418 = vunpack.c.h.b16 %v782
    %v2419 = vunpack.c.l.b16 %v783
    %v2420 = vunpack.c.h.b16 %v783
    %v2421 = vunpack.c.l.b16 %v784
    %v2422 = vunpack.c.h.b16 %v784
    %v2423 = vunpack.c.l.b16 %v785
    %v2424 = vunpack.c.h.b16 %v785
    %v2425 = vunpack.c.l.b16 %v786
    %v2426 = vunpack.c.h.b16 %v786
    %v2427 = vunpack.c.l.b16 %v787
    %v2428 = vunpack.c.h.b16 %v787
    %v2429 = vunpack.c.l.b16 %v788
    %v2430 = vunpack.c.h.b16 %v788
    %v2431 = vunpack.c.l.b16 %v789
    %v2432 = vunpack.c.h.b16 %v789
    %v2433 = vunpack.c.l.b16 %v790
    %v2434 = vunpack.c.h.b16 %v790
    %v2435 = vunpack.c.l.b16 %v791
    %v2436 = vunpack.c.h.b16 %v791
    %v2437 = vunpack.c.l.b16 %v792
    %v2438 = vunpack.c.h.b16 %v792
    %v2439 = vunpack.c.l.b16 %v793
    %v2440 = vunpack.c.h.b16 %v793
    %v2441 = vunpack.c.l.b16 %v794
    %v2442 = vunpack.c.h.b16 %v794
    %v2443 = vunpack.c.l.b16 %v795
    %v2444 = vunpack.c.h.b16 %v795
    %v2445 = vunpack.c.l.b16 %v796
    %v2446 = vunpack.c.h.b16 %v796
    %v2447 = vunpack.c.l.b16 %v797
    %v2448 = vunpack.c.h.b16 %v797
    %v2449 = vunpack.c.l.b16 %v798
    %v2450 = vunpack.c.h.b16 %v798
    %v2451 = vunpack.c.l.b16 %v799
    %v2452 = vunpack.c.h.b16 %v799
    %v2453 = vunpack.c.l.b16 %v800
    %v2454 = vunpack.c.h.b16 %v800
    %v2455 = vunpack.c.l.b16 %v801
    %v2456 = vunpack.c.h.b16 %v801
    %v2457 = vunpack.c.l.b16 %v802
    %v2458 = vunpack.c.h.b16 %v802
    %v2459 = vunpack.c.l.b16 %v803
    %v2460 = vunpack.c.h.b16 %v803
    %v2461 = vunpack.c.l.b16 %v804
    %v2462 = vunpack.c.h.b16 %v804
    %v2463 = vunpack.c.l.b16 %v805
    %v2464 = vunpack.c.h.b16 %v805
    %v2465 = vunpack.c.l.b16 %v806
    %v2466 = vunpack.c.h.b16 %v806
    %v2467 = vunpack.c.l.b16 %v807
    %v2468 = vunpack.c.h.b16 %v807
    %v2469 = vunpack.c.l.b16 %v808
    %v2470 = vunpack.c.h.b16 %v808
    %v2471 = vunpack.c.l.b16 %v809
    %v2472 = vunpack.c.h.b16 %v809
    %v2473 = vunpack.c.l.b16 %v810
    %v2474 = vunpack.c.h.b16 %v810
    %v2475 = vunpack.c.l.b16 %v811
    %v2476 = vunpack.c.h.b16 %v811
    %v2477 = vunpack.c.l.b16 %v812
    %v2478 = vunpack.c.h.b16 %v812
    %v2479 = vunpack.c.l.b16 %v813
    %v2480 = vunpack.c.h.b16 %v813
    %v2481 = vunpack.c.l.b16 %v814
    %v2482 = vunpack.c.h.b16 %v814
    %v2483 = vunpack.c.l.b16 %v815
    %v2484 = vunpack.c.h.b16 %v815
    %v2485 = vunpack.c.l.b16 %v816
    %v2486 = vunpack.c.h.b16 %v816
    %v2487 = vunpack.c.l.b16 %v817
    %v2488 = vunpack.c.h.b16 %v817
    %v2489 = vunpack.c.l.b16 %v818
    %v2490 = vunpack.c.h.b16 %v818
    %v2491 = vunpack.c.l.b16 %v819
    %v2492 = vunpack.c.h.b16 %v819
    %v2493 = vunpack.c.l.b16 %v820
    %v2494 = vunpack.c.h.b16 %v820
    %v2495 = vunpack.c.l.b16 %v821
    %v2496 = vunpack.c.h.b16 %v821
    %v2497 = vunpack.c.l.b16 %v822
    %v2498 = vunpack.c.h.b16 %v822
    %v2499 = vunpack.c.l.b16 %v823
    %v2500 = vunpack.c.h.b16 %v823
    %v2501 = vunpack.c.l.b16 %v824
    %v2502 = vunpack.c.h.b16 %v824
    %v2503 = vunpack.c.l.b16 %v825
    %v2504 = vunpack.c.h.b16 %v825
    %v2505 = vunpack.c.l.b16 %v826
    %v2506 = vunpack.c.h.b16 %v826
    %v2507 = vunpack.c.l.b16 %v827
    %v2508 = vunpack.c.h.b16 %v827
    %v2509 = vunpack.c.l.b16 %v828
    %v2510 = vunpack.c.h.b16 %v828
    %v2511 = vunpack.c.l.b16 %v829
    %v2512 = vunpack.c.h.b16 %v829
    %v2513 = vunpack.c.l.b16 %v830
    %v2514 = vunpack.c.h.b16 %v830
    %v2515 = vunpack.c.l.b16 %v831
    %v2516 = vunpack.c.h.b16 %v831
    %v2517 = vunpack.c.l.b16 %v832
    %v2518 = vunpack.c.h.b16 %v832
    %v2519 = vunpack.c.l.b16 %v833
    %v2520 = vunpack.c.h.b16 %v833
    %v2521 = vunpack.c.l.b16 %v834
    %v2522 = vunpack.c.h.b16 %v834
    %v2523 = vunpack.c.l.b16 %v835
    %v2524 = vunpack.c.h.b16 %v835
    %v2525 = vunpack.c.l.b16 %v836
    %v2526 = vunpack.c.h.b16 %v836
    %v2527 = vunpack.c.l.b16 %v837
    %v2528 = vunpack.c.h.b16 %v837
    %v2529 = vunpack.c.l.b16 %v838
    %v2530 = vunpack.c.h.b16 %v838
    %v2531 = vunpack.c.l.b16 %v839
    %v2532 = vunpack.c.h.b16 %v839
    %v2533 = vunpack.c.l.b16 %v840
    %v2534 = vunpack.c.h.b16 %v840
    %v2535 = vunpack.c.l.b16 %v841
    %v2536 = vunpack.c.h.b16 %v841
    %v2537 = vunpack.c.l.b16 %v842
    %v2538 = vunpack.c.h.b16 %v842
    %v2539 = vunpack.c.l.b16 %v843
    %v2540 = vunpack.c.h.b16 %v843
    %v2541 = vunpack.c.l.b16 %v844
    %v2542 = vunpack.c.h.b16 %v844
    %v2543 = vunpack.c.l.b16 %v845
    %v2544 = vunpack.c.h.b16 %v845
    %v2545 = vunpack.c.l.b16 %v846
    %v2546 = vunpack.c.h.b16 %v846
    %v2547 = vunpack.c.l.b16 %v847
    %v2548 = vunpack.c.h.b16 %v847
    %v2549 = vunpack.c.l.b16 %v848
    %v2550 = vunpack.c.h.b16 %v848
    %v2551 = vunpack.c.l.b16 %v849
    %v2552 = vunpack.c.h.b16 %v849
    %v2553 = vunpack.c.l.b16 %v850
    %v2554 = vunpack.c.h.b16 %v850
    %v2555 = vunpack.c.l.b16 %v851
    %v2556 = vunpack.c.h.b16 %v851
    %v2557 = vunpack.c.l.b16 %v852
    %v2558 = vunpack.c.h.b16 %v852
    %v2559 = vunpack.c.l.b16 %v853
    %v2560 = vunpack.c.h.b16 %v853
    %v2561 = vunpack.c.l.b16 %v854
    %v2562 = vunpack.c.h.b16 %v854
    %v2563 = vunpack.c.l.b16 %v855
    %v2564 = vunpack.c.h.b16 %v855
    %v2565 = vunpack.c.l.b16 %v856
    %v2566 = vunpack.c.h.b16 %v856
    %v2567 = vunpack.c.l.b16 %v857
    %v2568 = vunpack.c.h.b16 %v857
    %v2569 = vunpack.c.l.b16 %v858
    %v2570 = vunpack.c.h.b16 %v858
    %v2571 = vunpack.c.l.b16 %v859
    %v2572 = vunpack.c.h.b16 %v859
    %v2573 = vunpack.c.l.b16 %v860
    %v2574 = vunpack.c.h.b16 %v860
    %v2575 = vunpack.c.l.b16 %v861
    %v2576 = vunpack.c.h.b16 %v861
    %v2577 = vunpack.c.l.b16 %v862
    %v2578 = vunpack.c.h.b16 %v862
    %v2579 = vunpack.c.l.b16 %v863
    %v2580 = vunpack.c.h.b16 %v863
    %v2581 = vunpack.c.l.b16 %v864
    %v2582 = vunpack.c.h.b16 %v864
    %v2583 = vunpack.c.l.b16 %v865
    %v2584 = vunpack.c.h.b16 %v865
    %v2585 = vunpack.c.l.b16 %v866
    %v2586 = vunpack.c.h.b16 %v866
    %v2587 = vunpack.c.l.b16 %v867
    %v2588 = vunpack.c.h.b16 %v867
    %v2589 = vunpack.c.l.b16 %v868
    %v2590 = vunpack.c.h.b16 %v868
    %v2591 = vunpack.c.l.b16 %v869
    %v2592 = vunpack.c.h.b16 %v869
    %v2593 = vunpack.c.l.b16 %v870
    %v2594 = vunpack.c.h.b16 %v870
    %v2595 = vunpack.c.l.b16 %v871
    %v2596 = vunpack.c.h.b16 %v871
    %v2597 = vunpack.c.l.b16 %v872
    %v2598 = vunpack.c.h.b16 %v872
    %v2599 = vunpack.c.l.b16 %v873
    %v2600 = vunpack.c.h.b16 %v873
    %v2601 = vunpack.c.l.b16 %v874
    %v2602 = vunpack.c.h.b16 %v874
    %v2603 = vunpack.c.l.b16 %v875
    %v2604 = vunpack.c.h.b16 %v875
    %v2605 = vunpack.c.l.b16 %v876
    %v2606 = vunpack.c.h.b16 %v876
    %v2607 = vunpack.c.l.b16 %v877
    %v2608 = vunpack.c.h.b16 %v877
    %v2609 = vunpack.c.l.b16 %v878
    %v2610 = vunpack.c.h.b16 %v878
    %v2611 = vunpack.c.l.b16 %v879
    %v2612 = vunpack.c.h.b16 %v879
    %v2613 = vunpack.c.l.b16 %v880
    %v2614 = vunpack.c.h.b16 %v880
    %v2615 = vunpack.c.l.b16 %v881
    %v2616 = vunpack.c.h.b16 %v881
    %v2617 = vunpack.c.l.b16 %v882
    %v2618 = vunpack.c.h.b16 %v882
    %v2619 = vunpack.c.l.b16 %v883
    %v2620 = vunpack.c.h.b16 %v883
    %v2621 = vunpack.c.l.b16 %v884
    %v2622 = vunpack.c.h.b16 %v884
    %v2623 = vunpack.c.l.b16 %v885
    %v2624 = vunpack.c.h.b16 %v885
    %v2625 = vunpack.c.l.b16 %v886
    %v2626 = vunpack.c.h.b16 %v886
    %v2627 = vunpack.c.l.b16 %v887
    %v2628 = vunpack.c.h.b16 %v887
    %v2629 = vunpack.c.l.b16 %v888
    %v2630 = vunpack.c.h.b16 %v888
    %v2631 = vunpack.c.l.b16 %v889
    %v2632 = vunpack.c.h.b16 %v889
    %v2633 = vunpack.c.l.b16 %v890
    %v2634 = vunpack.c.h.b16 %v890
    %v2635 = vunpack.c.l.b16 %v891
    %v2636 = vunpack.c.h.b16 %v891
    %v2637 = vunpack.c.l.b16 %v892
    %v2638 = vunpack.c.h.b16 %v892
    %v2639 = vunpack.c.l.b16 %v893
    %v2640 = vunpack.c.h.b16 %v893
    %v2641 = vunpack.c.l.b16 %v894
    %v2642 = vunpack.c.h.b16 %v894
    %v2643 = vunpack.c.l.b16 %v895
    %v2644 = vunpack.c.h.b16 %v895
    %v2645 = vunpack.c.l.b16 %v896
    %v2646 = vunpack.c.h.b16 %v896
    %v2647 = vunpack.c.l.b16 %v897
    %v2648 = vunpack.c.h.b16 %v897
    %v2649 = vunpack.c.l.b16 %v898
    %v2650 = vunpack.c.h.b16 %v898
    %v2651 = vunpack.c.l.b16 %v899
    %v2652 = vunpack.c.h.b16 %v899
    %v2653 = vunpack.c.l.b16 %v900
    %v2654 = vunpack.c.h.b16 %v900
    %v2655 = vunpack.c.l.b16 %v901
    %v2656 = vunpack.c.h.b16 %v901
    %v2657 = vunpack.c.l.b16 %v902
    %v2658 = vunpack.c.h.b16 %v902
    %v2659 = vunpack.c.l.b16 %v903
    %v2660 = vunpack.c.h.b16 %v903
    %v2661 = vunpack.c.l.b16 %v904
    %v2662 = vunpack.c.h.b16 %v904
    %v2663 = vunpack.c.l.b16 %v905
    %v2664 = vunpack.c.h.b16 %v905
    %v2665 = vunpack.c.l.b16 %v906
    %v2666 = vunpack.c.h.b16 %v906
    %v2667 = vunpack.c.l.b16 %v907
    %v2668 = vunpack.c.h.b16 %v907
    %v2669 = vunpack.c.l.b16 %v908
    %v2670 = vunpack.c.h.b16 %v908
    %v2671 = vunpack.c.l.b16 %v909
    %v2672 = vunpack.c.h.b16 %v909
    %v2673 = vunpack.c.l.b16 %v910
    %v2674 = vunpack.c.h.b16 %v910
    %v2675 = vunpack.c.l.b16 %v911
    %v2676 = vunpack.c.h.b16 %v911
    %v2677 = vunpack.c.l.b16 %v912
    %v2678 = vunpack.c.h.b16 %v912
    %v2679 = vunpack.c.l.b16 %v913
    %v2680 = vunpack.c.h.b16 %v913
    %v2681 = vunpack.c.l.b16 %v914
    %v2682 = vunpack.c.h.b16 %v914
    %v2683 = vunpack.c.l.b16 %v915
    %v2684 = vunpack.c.h.b16 %v915
    %v2685 = vunpack.c.l.b16 %v916
    %v2686 = vunpack.c.h.b16 %v916
    %v2687 = vunpack.c.l.b16 %v917
    %v2688 = vunpack.c.h.b16 %v917
    %v2689 = vunpack.c.l.b16 %v918
    %v2690 = vunpack.c.h.b16 %v918
    %v2691 = vunpack.c.l.b16 %v919
    %v2692 = vunpack.c.h.b16 %v919
    %v2693 = vunpack.c.l.b16 %v920
    %v2694 = vunpack.c.h.b16 %v920
    %v2695 = vunpack.c.l.b16 %v921
    %v2696 = vunpack.c.h.b16 %v921
    %v2697 = vunpack.c.l.b16 %v922
    %v2698 = vunpack.c.h.b16 %v922
    %v2699 = vunpack.c.l.b16 %v923
    %v2700 = vunpack.c.h.b16 %v923
    %v2701 = vunpack.c.l.b16 %v924
    %v2702 = vunpack.c.h.b16 %v924
    %v2703 = vunpack.c.l.b16 %v925
    %v2704 = vunpack.c.h.b16 %v925
    %v2705 = vunpack.c.l.b16 %v926
    %v2706 = vunpack.c.h.b16 %v926
    %v2707 = vunpack.c.l.b16 %v927
    %v2708 = vunpack.c.h.b16 %v927
    %v2709 = vunpack.c.l.b16 %v928
    %v2710 = vunpack.c.h.b16 %v928
    %v2711 = vunpack.c.l.b16 %v929
    %v2712 = vunpack.c.h.b16 %v929
    %v2713 = vunpack.c.l.b16 %v930
    %v2714 = vunpack.c.h.b16 %v930
    %v2715 = vunpack.c.l.b16 %v931
    %v2716 = vunpack.c.h.b16 %v931
    %v2717 = vunpack.c.l.b16 %v932
    %v2718 = vunpack.c.h.b16 %v932
    %v2719 = vpack.c.b16 %v1547, %v1543
    %v2720 = vpack.c.b16 %v1548, %v1544
    %v2721 = vpack.c.b16 %v1549, %v1545
    %v2722 = vpack.c.b16 %v1550, %v1546
    %v2723 = vpack.c.b16 %v1555, %v1551
    %v2724 = vpack.c.b16 %v1556, %v1552
    %v2725 = vpack.c.b16 %v1557, %v1553
    %v2726 = vpack.c.b16 %v1558, %v1554
    %v2727 = vpack.c.b16 %v1563, %v1559
    %v2728 = vpack.c.b16 %v1564, %v1560
    %v2729 = vpack.c.b16 %v1565, %v1561
    %v2730 = vpack.c.b16 %v1566, %v1562
    %v2731 = vpack.c.b16 %v1571, %v1567
    %v2732 = vpack.c.b16 %v1572, %v1568
    %v2733 = vpack.c.b16 %v1573, %v1569
    %v2734 = vpack.c.b16 %v1574, %v1570
    %v2735 = vpack.c.b16 %v1579, %v1575
    %v2736 = vpack.c.b16 %v1580, %v1576
    %v2737 = vpack.c.b16 %v1581, %v1577
    %v2738 = vpack.c.b16 %v1582, %v1578
    %v2739 = vpack.c.b16 %v1587, %v1583
    %v2740 = vpack.c.b16 %v1588, %v1584
    %v2741 = vpack.c.b16 %v1589, %v1585
    %v2742 = vpack.c.b16 %v1590, %v1586
    %v2743 = vpack.c.b16 %v1595, %v1591
    %v2744 = vpack.c.b16 %v1596, %v1592
    %v2745 = vpack.c.b16 %v1597, %v1593
    %v2746 = vpack.c.b16 %v1598, %v1594
    %v2747 = vpack.c.b16 %v1603, %v1599
    %v2748 = vpack.c.b16 %v1604, %v1600
    %v2749 = vpack.c.b16 %v1605, %v1601
    %v2750 = vpack.c.b16 %v1606, %v1602
    %v2751 = vpack.c.b16 %v1611, %v1607
    %v2752 = vpack.c.b16 %v1612, %v1608
    %v2753 = vpack.c.b16 %v1613, %v1609
    %v2754 = vpack.c.b16 %v1614, %v1610
    %v2755 = vpack.c.b16 %v1619, %v1615
    %v2756 = vpack.c.b16 %v1620, %v1616
    %v2757 = vpack.c.b16 %v1621, %v1617
    %v2758 = vpack.c.b16 %v1622, %v1618
    %v2759 = vpack.c.b16 %v1627, %v1623
    %v2760 = vpack.c.b16 %v1628, %v1624
    %v2761 = vpack.c.b16 %v1629, %v1625
    %v2762 = vpack.c.b16 %v1630, %v1626
    %v2763 = vpack.c.b16 %v1635, %v1631
    %v2764 = vpack.c.b16 %v1636, %v1632
    %v2765 = vpack.c.b16 %v1637, %v1633
    %v2766 = vpack.c.b16 %v1638, %v1634
    %v2767 = vpack.c.b16 %v1643, %v1639
    %v2768 = vpack.c.b16 %v1644, %v1640
    %v2769 = vpack.c.b16 %v1645, %v1641
    %v2770 = vpack.c.b16 %v1646, %v1642
    %v2771 = vpack.c.b16 %v1651, %v1647
    %v2772 = vpack.c.b16 %v1652, %v1648
    %v2773 = vpack.c.b16 %v1653, %v1649
    %v2774 = vpack.c.b16 %v1654, %v1650
    %v2775 = vpack.c.b16 %v1659, %v1655
    %v2776 = vpack.c.b16 %v1660, %v1656
    %v2777 = vpack.c.b16 %v1661, %v1657
    %v2778 = vpack.c.b16 %v1662, %v1658
    %v2779 = vpack.c.b16 %v1667, %v1663
    %v2780 = vpack.c.b16 %v1668, %v1664
    %v2781 = vpack.c.b16 %v1669, %v1665
    %v2782 = vpack.c.b16 %v1670, %v1666
    %v2783 = vpack.c.b16 %v1675, %v1671
    %v2784 = vpack.c.b16 %v1676, %v1672
    %v2785 = vpack.c.b16 %v1677, %v1673
    %v2786 = vpack.c.b16 %v1678, %v1674
    %v2787 = vpack.c.b16 %v1683, %v1679
    %v2788 = vpack.c.b16 %v1684, %v1680
    %v2789 = vpack.c.b16 %v1685, %v1681
    %v2790 = vpack.c.b16 %v1686, %v1682
    %v2791 = vpack.c.b16 %v1691, %v1687
    %v2792 = vpack.c.b16 %v1692, %v1688
    %v2793 = vpack.c.b16 %v1693, %v1689
    %v2794 = vpack.c.b16 %v1694, %v1690
    %v2795 = vpack.c.b16 %v1699, %v1695
    %v2796 = vpack.c.b16 %v1700, %v1696
    %v2797 = vpack.c.b16 %v1701, %v1697
    %v2798 = vpack.c.b16 %v1702, %v1698
    %v2799 = vpack.c.b16 %v1707, %v1703
    %v2800 = vpack.c.b16 %v1708, %v1704
    %v2801 = vpack.c.b16 %v1709, %v1705
    %v2802 = vpack.c.b16 %v1710, %v1706
    %v2803 = vpack.c.b16 %v1715, %v1711
    %v2804 = vpack.c.b16 %v1716, %v1712
    %v2805 = vpack.c.b16 %v1717, %v1713
    %v2806 = vpack.c.b16 %v1718, %v1714
    %v2807 = vpack.c.b16 %v1723, %v1719
    %v2808 = vpack.c.b16 %v1724, %v1720
    %v2809 = vpack.c.b16 %v1725, %v1721
    %v2810 = vpack.c.b16 %v1726, %v1722
    %v2811 = vpack.c.b16 %v1731, %v1727
    %v2812 = vpack.c.b16 %v1732, %v1728
    %v2813 = vpack.c.b16 %v1733, %v1729
    %v2814 = vpack.c.b16 %v1734, %v1730
    %v2815 = vpack.c.b16 %v1739, %v1735
    %v2816 = vpack.c.b16 %v1740, %v1736
    %v2817 = vpack.c.b16 %v1741, %v1737
    %v2818 = vpack.c.b16 %v1742, %v1738
    %v2819 = vpack.c.b16 %v1747, %v1743
    %v2820 = vpack.c.b16 %v1748, %v1744
    %v2821 = vpack.c.b16 %v1749, %v1745
    %v2822 = vpack.c.b16 %v1750, %v1746
    %v2823 = vpack.c.b16 %v1755, %v1751
    %v2824 = vpack.c.b16 %v1756, %v1752
    %v2825 = vpack.c.b16 %v1757, %v1753
    %v2826 = vpack.c.b16 %v1758, %v1754
    %v2827 = vpack.c.b16 %v1763, %v1759
    %v2828 = vpack.c.b16 %v1764, %v1760
    %v2829 = vpack.c.b16 %v1765, %v1761
    %v2830 = vpack.c.b16 %v1766, %v1762
    %v2831 = vpack.c.b16 %v1771, %v1767
    %v2832 = vpack.c.b16 %v1772, %v1768
    %v2833 = vpack.c.b16 %v1773, %v1769
    %v2834 = vpack.c.b16 %v1774, %v1770
    %v2835 = vpack.c.b16 %v1779, %v1775
    %v2836 = vpack.c.b16 %v1780, %v1776
    %v2837 = vpack.c.b16 %v1781, %v1777
    %v2838 = vpack.c.b16 %v1782, %v1778
    %v2839 = vpack.c.b16 %v1787, %v1783
    %v2840 = vpack.c.b16 %v1788, %v1784
    %v2841 = vpack.c.b16 %v1789, %v1785
    %v2842 = vpack.c.b16 %v1790, %v1786
    %v2843 = vpack.c.b16 %v1795, %v1791
    %v2844 = vpack.c.b16 %v1796, %v1792
    %v2845 = vpack.c.b16 %v1797, %v1793
    %v2846 = vpack.c.b16 %v1798, %v1794
    %v2847 = vpack.c.b16 %v1803, %v1799
    %v2848 = vpack.c.b16 %v1804, %v1800
    %v2849 = vpack.c.b16 %v1805, %v1801
    %v2850 = vpack.c.b16 %v1806, %v1802
    %v2851 = vpack.c.b16 %v1811, %v1807
    %v2852 = vpack.c.b16 %v1812, %v1808
    %v2853 = vpack.c.b16 %v1813, %v1809
    %v2854 = vpack.c.b16 %v1814, %v1810
    %v2855 = vpack.c.b16 %v1819, %v1815
    %v2856 = vpack.c.b16 %v1820, %v1816
    %v2857 = vpack.c.b16 %v1821, %v1817
    %v2858 = vpack.c.b16 %v1822, %v1818
    %v2859 = vpack.c.b16 %v1827, %v1823
    %v2860 = vpack.c.b16 %v1828, %v1824
    %v2861 = vpack.c.b16 %v1829, %v1825
    %v2862 = vpack.c.b16 %v1830, %v1826
    %v2863 = vpack.c.b16 %v1835, %v1831
    %v2864 = vpack.c.b16 %v1836, %v1832
    %v2865 = vpack.c.b16 %v1837, %v1833
    %v2866 = vpack.c.b16 %v1838, %v1834
    %v2867 = vpack.c.b16 %v1843, %v1839
    %v2868 = vpack.c.b16 %v1844, %v1840
    %v2869 = vpack.c.b16 %v1845, %v1841
    %v2870 = vpack.c.b16 %v1846, %v1842
    %v2871 = vpack.c.b16 %v1851, %v1847
    %v2872 = vpack.c.b16 %v1852, %v1848
    %v2873 = vpack.c.b16 %v1853, %v1849
    %v2874 = vpack.c.b16 %v1854, %v1850
    %v2875 = vpack.c.b16 %v1859, %v1855
    %v2876 = vpack.c.b16 %v1860, %v1856
    %v2877 = vpack.c.b16 %v1861, %v1857
    %v2878 = vpack.c.b16 %v1862, %v1858
    %v2879 = vpack.c.b16 %v1867, %v1863
    %v2880 = vpack.c.b16 %v1868, %v1864
    %v2881 = vpack.c.b16 %v1869, %v1865
    %v2882 = vpack.c.b16 %v1870, %v1866
    %v2883 = vpack.c.b16 %v1875, %v1871
    %v2884 = vpack.c.b16 %v1876, %v1872
    %v2885 = vpack.c.b16 %v1877, %v1873
    %v2886 = vpack.c.b16 %v1878, %v1874
    %v2887 = vpack.c.b16 %v1883, %v1879
    %v2888 = vpack.c.b16 %v1884, %v1880
    %v2889 = vpack.c.b16 %v1885, %v1881
    %v2890 = vpack.c.b16 %v1886, %v1882
    %v2891 = vpack.c.b16 %v1891, %v1887
    %v2892 = vpack.c.b16 %v1892, %v1888
    %v2893 = vpack.c.b16 %v1893, %v1889
    %v2894 = vpack.c.b16 %v1894, %v1890
    %v2895 = vpack.c.b16 %v1899, %v1895
    %v2896 = vpack.c.b16 %v1900, %v1896
    %v2897 = vpack.c.b16 %v1901, %v1897
    %v2898 = vpack.c.b16 %v1902, %v1898
    %v2899 = vpack.c.b16 %v1907, %v1903
    %v2900 = vpack.c.b16 %v1908, %v1904
    %v2901 = vpack.c.b16 %v1909, %v1905
    %v2902 = vpack.c.b16 %v1910, %v1906
    %v2903 = vpack.c.b16 %v1915, %v1911
    %v2904 = vpack.c.b16 %v1916, %v1912
    %v2905 = vpack.c.b16 %v1917, %v1913
    %v2906 = vpack.c.b16 %v1918, %v1914
    %v2907 = vpack.c.b16 %v1923, %v1919
    %v2908 = vpack.c.b16 %v1924, %v1920
    %v2909 = vpack.c.b16 %v1925, %v1921
    %v2910 = vpack.c.b16 %v1926, %v1922
    %v2911 = vpack.c.b16 %v1931, %v1927
    %v2912 = vpack.c.b16 %v1932, %v1928
    %v2913 = vpack.c.b16 %v1933, %v1929
    %v2914 = vpack.c.b16 %v1934, %v1930
    %v2915 = vpack.c.b16 %v1939, %v1935
    %v2916 = vpack.c.b16 %v1940, %v1936
    %v2917 = vpack.c.b16 %v1941, %v1937
    %v2918 = vpack.c.b16 %v1942, %v1938
    %v2919 = vpack.c.b16 %v1947, %v1943
    %v2920 = vpack.c.b16 %v1948, %v1944
    %v2921 = vpack.c.b16 %v1949, %v1945
    %v2922 = vpack.c.b16 %v1950, %v1946
    %v2923 = vpack.c.b16 %v1955, %v1951
    %v2924 = vpack.c.b16 %v1956, %v1952
    %v2925 = vpack.c.b16 %v1957, %v1953
    %v2926 = vpack.c.b16 %v1958, %v1954
    %v2927 = vpack.c.b16 %v1963, %v1959
    %v2928 = vpack.c.b16 %v1964, %v1960
    %v2929 = vpack.c.b16 %v1965, %v1961
    %v2930 = vpack.c.b16 %v1966, %v1962
    %v2931 = vpack.c.b16 %v1971, %v1967
    %v2932 = vpack.c.b16 %v1972, %v1968
    %v2933 = vpack.c.b16 %v1973, %v1969
    %v2934 = vpack.c.b16 %v1974, %v1970
    %v2935 = vpack.c.b16 %v1979, %v1975
    %v2936 = vpack.c.b16 %v1980, %v1976
    %v2937 = vpack.c.b16 %v1981, %v1977
    %v2938 = vpack.c.b16 %v1982, %v1978
    %v2939 = vpack.c.b16 %v1987, %v1983
    %v2940 = vpack.c.b16 %v1988, %v1984
    %v2941 = vpack.c.b16 %v1989, %v1985
    %v2942 = vpack.c.b16 %v1990, %v1986
    %v2943 = vpack.c.b16 %v1995, %v1991
    %v2944 = vpack.c.b16 %v1996, %v1992
    %v2945 = vpack.c.b16 %v1997, %v1993
    %v2946 = vpack.c.b16 %v1998, %v1994
    %v2947 = vpack.c.b16 %v2003, %v1999
    %v2948 = vpack.c.b16 %v2004, %v2000
    %v2949 = vpack.c.b16 %v2005, %v2001
    %v2950 = vpack.c.b16 %v2006, %v2002
    %v2951 = vpack.c.b16 %v2011, %v2007
    %v2952 = vpack.c.b16 %v2012, %v2008
    %v2953 = vpack.c.b16 %v2013, %v2009
    %v2954 = vpack.c.b16 %v2014, %v2010
    %v2955 = vpack.c.b16 %v2019, %v2015
    %v2956 = vpack.c.b16 %v2020, %v2016
    %v2957 = vpack.c.b16 %v2021, %v2017
    %v2958 = vpack.c.b16 %v2022, %v2018
    %v2959 = vpack.c.b16 %v2027, %v2023
    %v2960 = vpack.c.b16 %v2028, %v2024
    %v2961 = vpack.c.b16 %v2029, %v2025
    %v2962 = vpack.c.b16 %v2030, %v2026
    %v2963 = vpack.c.b16 %v2035, %v2031
    %v2964 = vpack.c.b16 %v2036, %v2032
    %v2965 = vpack.c.b16 %v2037, %v2033
    %v2966 = vpack.c.b16 %v2038, %v2034
    %v2967 = vpack.c.b16 %v2043, %v2039
    %v2968 = vpack.c.b16 %v2044, %v2040
    %v2969 = vpack.c.b16 %v2045, %v2041
    %v2970 = vpack.c.b16 %v2046, %v2042
    %v2971 = vpack.c.b16 %v2051, %v2047
    %v2972 = vpack.c.b16 %v2052, %v2048
    %v2973 = vpack.c.b16 %v2053, %v2049
    %v2974 = vpack.c.b16 %v2054, %v2050
    %v2975 = vpack.c.b16 %v2059, %v2055
    %v2976 = vpack.c.b16 %v2060, %v2056
    %v2977 = vpack.c.b16 %v2061, %v2057
    %v2978 = vpack.c.b16 %v2062, %v2058
    %v2979 = vpack.c.b16 %v2067, %v2063
    %v2980 = vpack.c.b16 %v2068, %v2064
    %v2981 = vpack.c.b16 %v2069, %v2065
    %v2982 = vpack.c.b16 %v2070, %v2066
    %v2983 = vpack.c.b16 %v2075, %v2071
    %v2984 = vpack.c.b16 %v2076, %v2072
    %v2985 = vpack.c.b16 %v2077, %v2073
    %v2986 = vpack.c.b16 %v2078, %v2074
    %v2987 = vpack.c.b16 %v2083, %v2079
    %v2988 = vpack.c.b16 %v2084, %v2080
    %v2989 = vpack.c.b16 %v2085, %v2081
    %v2990 = vpack.c.b16 %v2086, %v2082
    %v2991 = vpack.c.b16 %v2091, %v2087
    %v2992 = vpack.c.b16 %v2092, %v2088
    %v2993 = vpack.c.b16 %v2093, %v2089
    %v2994 = vpack.c.b16 %v2094, %v2090
    %v2995 = vpack.c.b16 %v2099, %v2095
    %v2996 = vpack.c.b16 %v2100, %v2096
    %v2997 = vpack.c.b16 %v2101, %v2097
    %v2998 = vpack.c.b16 %v2102, %v2098
    %v2999 = vpack.c.b16 %v2107, %v2103
    %v3000 = vpack.c.b16 %v2108, %v2104
    %v3001 = vpack.c.b16 %v2109, %v2105
    %v3002 = vpack.c.b16 %v2110, %v2106
    %v3003 = vpack.c.b16 %v2115, %v2111
    %v3004 = vpack.c.b16 %v2116, %v2112
    %v3005 = vpack.c.b16 %v2117, %v2113
    %v3006 = vpack.c.b16 %v2118, %v2114
    %v3007 = vpack.c.b16 %v2123, %v2119
    %v3008 = vpack.c.b16 %v2124, %v2120
    %v3009 = vpack.c.b16 %v2125, %v2121
    %v3010 = vpack.c.b16 %v2126, %v2122
    %v3011 = vpack.c.b16 %v2131, %v2127
    %v3012 = vpack.c.b16 %v2132, %v2128
    %v3013 = vpack.c.b16 %v2133, %v2129
    %v3014 = vpack.c.b16 %v2134, %v2130
    %v3015 = vpack.c.b16 %v2139, %v2135
    %v3016 = vpack.c.b16 %v2140, %v2136
    %v3017 = vpack.c.b16 %v2141, %v2137
    %v3018 = vpack.c.b16 %v2142, %v2138
    %v3019 = vpack.c.b16 %v2147, %v2143
    %v3020 = vpack.c.b16 %v2148, %v2144
    %v3021 = vpack.c.b16 %v2149, %v2145
    %v3022 = vpack.c.b16 %v2150, %v2146
    %v3023 = vpack.c.b16 %v2155, %v2151
    %v3024 = vpack.c.b16 %v2156, %v2152
    %v3025 = vpack.c.b16 %v2157, %v2153
    %v3026 = vpack.c.b16 %v2158, %v2154
    %v3027 = vpack.c.b16 %v2163, %v2159
    %v3028 = vpack.c.b16 %v2164, %v2160
    %v3029 = vpack.c.b16 %v2165, %v2161
    %v3030 = vpack.c.b16 %v2166, %v2162
    %v3031 = vpack.c.b16 %v2171, %v2167
    %v3032 = vpack.c.b16 %v2172, %v2168
    %v3033 = vpack.c.b16 %v2173, %v2169
    %v3034 = vpack.c.b16 %v2174, %v2170
    %v3035 = vpack.c.b16 %v2179, %v2175
    %v3036 = vpack.c.b16 %v2180, %v2176
    %v3037 = vpack.c.b16 %v2181, %v2177
    %v3038 = vpack.c.b16 %v2182, %v2178
    %v3039 = vpack.c.b16 %v2187, %v2183
    %v3040 = vpack.c.b16 %v2188, %v2184
    %v3041 = vpack.c.b16 %v2189, %v2185
    %v3042 = vpack.c.b16 %v2190, %v2186
    %v3043 = vpack.c.b16 %v2195, %v2191
    %v3044 = vpack.c.b16 %v2196, %v2192
    %v3045 = vpack.c.b16 %v2197, %v2193
    %v3046 = vpack.c.b16 %v2198, %v2194
    %v3047 = vpack.c.b16 %v2203, %v2199
    %v3048 = vpack.c.b16 %v2204, %v2200
    %v3049 = vpack.c.b16 %v2205, %v2201
    %v3050 = vpack.c.b16 %v2206, %v2202
    %v3051 = vpack.c.b16 %v2211, %v2207
    %v3052 = vpack.c.b16 %v2212, %v2208
    %v3053 = vpack.c.b16 %v2213, %v2209
    %v3054 = vpack.c.b16 %v2214, %v2210
    %v3055 = vpack.c.b16 %v2219, %v2215
    %v3056 = vpack.c.b16 %v2220, %v2216
    %v3057 = vpack.c.b16 %v2221, %v2217
    %v3058 = vpack.c.b16 %v2222, %v2218
    %v3059 = vpack.c.b16 %v2227, %v2223
    %v3060 = vpack.c.b16 %v2228, %v2224
    %v3061 = vpack.c.b16 %v2229, %v2225
    %v3062 = vpack.c.b16 %v2230, %v2226
    %v3063 = vpack.c.b16 %v2235, %v2231
    %v3064 = vpack.c.b16 %v2236, %v2232
    %v3065 = vpack.c.b16 %v2237, %v2233
    %v3066 = vpack.c.b16 %v2238, %v2234
    %v3067 = vpack.c.b16 %v2243, %v2239
    %v3068 = vpack.c.b16 %v2244, %v2240
    %v3069 = vpack.c.b16 %v2245, %v2241
    %v3070 = vpack.c.b16 %v2246, %v2242
    %v3071 = vpack.c.b16 %v2251, %v2247
    %v3072 = vpack.c.b16 %v2252, %v2248
    %v3073 = vpack.c.b16 %v2253, %v2249
    %v3074 = vpack.c.b16 %v2254, %v2250
    %v3075 = vpack.c.b16 %v2259, %v2255
    %v3076 = vpack.c.b16 %v2260, %v2256
    %v3077 = vpack.c.b16 %v2261, %v2257
    %v3078 = vpack.c.b16 %v2262, %v2258
    %v3079 = vpack.c.b16 %v2267, %v2263
    %v3080 = vpack.c.b16 %v2268, %v2264
    %v3081 = vpack.c.b16 %v2269, %v2265
    %v3082 = vpack.c.b16 %v2270, %v2266
    %v3083 = vpack.c.b16 %v2275, %v2271
    %v3084 = vpack.c.b16 %v2276, %v2272
    %v3085 = vpack.c.b16 %v2277, %v2273
    %v3086 = vpack.c.b16 %v2278, %v2274
    %v3087 = vpack.c.b16 %v2283, %v2279
    %v3088 = vpack.c.b16 %v2284, %v2280
    %v3089 = vpack.c.b16 %v2285, %v2281
    %v3090 = vpack.c.b16 %v2286, %v2282
    %v3091 = vpack.c.b16 %v2291, %v2287
    %v3092 = vpack.c.b16 %v2292, %v2288
    %v3093 = vpack.c.b16 %v2293, %v2289
    %v3094 = vpack.c.b16 %v2294, %v2290
    %v3095 = vpack.c.b16 %v2299, %v2295
    %v3096 = vpack.c.b16 %v2300, %v2296
    %v3097 = vpack.c.b16 %v2301, %v2297
    %v3098 = vpack.c.b16 %v2302, %v2298
    %v3099 = vpack.c.b16 %v2307, %v2303
    %v3100 = vpack.c.b16 %v2308, %v2304
    %v3101 = vpack.c.b16 %v2309, %v2305
    %v3102 = vpack.c.b16 %v2310, %v2306
    %v3103 = vpack.c.b16 %v2315, %v2311
    %v3104 = vpack.c.b16 %v2316, %v2312
    %v3105 = vpack.c.b16 %v2317, %v2313
    %v3106 = vpack.c.b16 %v2318, %v2314
    %v3107 = vpack.c.b16 %v2323, %v2319
    %v3108 = vpack.c.b16 %v2324, %v2320
    %v3109 = vpack.c.b16 %v2325, %v2321
    %v3110 = vpack.c.b16 %v2326, %v2322
    %v3111 = vpack.c.b16 %v2331, %v2327
    %v3112 = vpack.c.b16 %v2332, %v2328
    %v3113 = vpack.c.b16 %v2333, %v2329
    %v3114 = vpack.c.b16 %v2334, %v2330
    %v3115 = vpack.c.b16 %v2339, %v2335
    %v3116 = vpack.c.b16 %v2340, %v2336
    %v3117 = vpack.c.b16 %v2341, %v2337
    %v3118 = vpack.c.b16 %v2342, %v2338
    %v3119 = vpack.c.b16 %v2347, %v2343
    %v3120 = vpack.c.b16 %v2348, %v2344
    %v3121 = vpack.c.b16 %v2349, %v2345
    %v3122 = vpack.c.b16 %v2350, %v2346
    %v3123 = vpack.c.b16 %v2355, %v2351
    %v3124 = vpack.c.b16 %v2356, %v2352
    %v3125 = vpack.c.b16 %v2357, %v2353
    %v3126 = vpack.c.b16 %v2358, %v2354
    %v3127 = vpack.c.b16 %v2363, %v2359
    %v3128 = vpack.c.b16 %v2364, %v2360
    %v3129 = vpack.c.b16 %v2365, %v2361
    %v3130 = vpack.c.b16 %v2366, %v2362
    %v3131 = vpack.c.b16 %v2371, %v2367
    %v3132 = vpack.c.b16 %v2372, %v2368
    %v3133 = vpack.c.b16 %v2373, %v2369
    %v3134 = vpack.c.b16 %v2374, %v2370
    %v3135 = vpack.c.b16 %v2379, %v2375
    %v3136 = vpack.c.b16 %v2380, %v2376
    %v3137 = vpack.c.b16 %v2381, %v2377
    %v3138 = vpack.c.b16 %v2382, %v2378
    %v3139 = vpack.c.b16 %v2387, %v2383
    %v3140 = vpack.c.b16 %v2388, %v2384
    %v3141 = vpack.c.b16 %v2389, %v2385
    %v3142 = vpack.c.b16 %v2390, %v2386
    %v3143 = vpack.c.b16 %v2395, %v2391
    %v3144 = vpack.c.b16 %v2396, %v2392
    %v3145 = vpack.c.b16 %v2397, %v2393
    %v3146 = vpack.c.b16 %v2398, %v2394
    %v3147 = vpack.c.b16 %v2403, %v2399
    %v3148 = vpack.c.b16 %v2404, %v2400
    %v3149 = vpack.c.b16 %v2405, %v2401
    %v3150 = vpack.c.b16 %v2406, %v2402
    %v3151 = vpack.c.b16 %v2411, %v2407
    %v3152 = vpack.c.b16 %v2412, %v2408
    %v3153 = vpack.c.b16 %v2413, %v2409
    %v3154 = vpack.c.b16 %v2414, %v2410
    %v3155 = vpack.c.b16 %v2419, %v2415
    %v3156 = vpack.c.b16 %v2420, %v2416
    %v3157 = vpack.c.b16 %v2421, %v2417
    %v3158 = vpack.c.b16 %v2422, %v2418
    %v3159 = vpack.c.b16 %v2427, %v2423
    %v3160 = vpack.c.b16 %v2428, %v2424
    %v3161 = vpack.c.b16 %v2429, %v2425
    %v3162 = vpack.c.b16 %v2430, %v2426
    %v3163 = vpack.c.b16 %v2435, %v2431
    %v3164 = vpack.c.b16 %v2436, %v2432
    %v3165 = vpack.c.b16 %v2437, %v2433
    %v3166 = vpack.c.b16 %v2438, %v2434
    %v3167 = vpack.c.b16 %v2443, %v2439
    %v3168 = vpack.c.b16 %v2444, %v2440
    %v3169 = vpack.c.b16 %v2445, %v2441
    %v3170 = vpack.c.b16 %v2446, %v2442
    %v3171 = vpack.c.b16 %v2451, %v2447
    %v3172 = vpack.c.b16 %v2452, %v2448
    %v3173 = vpack.c.b16 %v2453, %v2449
    %v3174 = vpack.c.b16 %v2454, %v2450
    %v3175 = vpack.c.b16 %v2459, %v2455
    %v3176 = vpack.c.b16 %v2460, %v2456
    %v3177 = vpack.c.b16 %v2461, %v2457
    %v3178 = vpack.c.b16 %v2462, %v2458
    %v3179 = vpack.c.b16 %v2467, %v2463
    %v3180 = vpack.c.b16 %v2468, %v2464
    %v3181 = vpack.c.b16 %v2469, %v2465
    %v3182 = vpack.c.b16 %v2470, %v2466
    %v3183 = vpack.c.b16 %v2475, %v2471
    %v3184 = vpack.c.b16 %v2476, %v2472
    %v3185 = vpack.c.b16 %v2477, %v2473
    %v3186 = vpack.c.b16 %v2478, %v2474
    %v3187 = vpack.c.b16 %v2483, %v2479
    %v3188 = vpack.c.b16 %v2484, %v2480
    %v3189 = vpack.c.b16 %v2485, %v2481
    %v3190 = vpack.c.b16 %v2486, %v2482
    %v3191 = vpack.c.b16 %v2491, %v2487
    %v3192 = vpack.c.b16 %v2492, %v2488
    %v3193 = vpack.c.b16 %v2493, %v2489
    %v3194 = vpack.c.b16 %v2494, %v2490
    %v3195 = vpack.c.b16 %v2499, %v2495
    %v3196 = vpack.c.b16 %v2500, %v2496
    %v3197 = vpack.c.b16 %v2501, %v2497
    %v3198 = vpack.c.b16 %v2502, %v2498
    %v3199 = vpack.c.b16 %v2507, %v2503
    %v3200 = vpack.c.b16 %v2508, %v2504
    %v3201 = vpack.c.b16 %v2509, %v2505
    %v3202 = vpack.c.b16 %v2510, %v2506
    %v3203 = vpack.c.b16 %v2515, %v2511
    %v3204 = vpack.c.b16 %v2516, %v2512
    %v3205 = vpack.c.b16 %v2517, %v2513
    %v3206 = vpack.c.b16 %v2518, %v2514
    %v3207 = vpack.c.b16 %v2523, %v2519
    %v3208 = vpack.c.b16 %v2524, %v2520
    %v3209 = vpack.c.b16 %v2525, %v2521
    %v3210 = vpack.c.b16 %v2526, %v2522
    %v3211 = vpack.c.b16 %v2531, %v2527
    %v3212 = vpack.c.b16 %v2532, %v2528
    %v3213 = vpack.c.b16 %v2533, %v2529
    %v3214 = vpack.c.b16 %v2534, %v2530
    %v3215 = vpack.c.b16 %v2539, %v2535
    %v3216 = vpack.c.b16 %v2540, %v2536
    %v3217 = vpack.c.b16 %v2541, %v2537
    %v3218 = vpack.c.b16 %v2542, %v2538
    %v3219 = vpack.c.b16 %v2547, %v2543
    %v3220 = vpack.c.b16 %v2548, %v2544
    %v3221 = vpack.c.b16 %v2549, %v2545
    %v3222 = vpack.c.b16 %v2550, %v2546
    %v3223 = vpack.c.b16 %v2555, %v2551
    %v3224 = vpack.c.b16 %v2556, %v2552
    %v3225 = vpack.c.b16 %v2557, %v2553
    %v3226 = vpack.c.b16 %v2558, %v2554
    %v3227 = vpack.c.b16 %v2563, %v2559
    %v3228 = vpack.c.b16 %v2564, %v2560
    %v3229 = vpack.c.b16 %v2565, %v2561
    %v3230 = vpack.c.b16 %v2566, %v2562
    %v3231 = vpack.c.b16 %v2571, %v2567
    %v3232 = vpack.c.b16 %v2572, %v2568
    %v3233 = vpack.c.b16 %v2573, %v2569
    %v3234 = vpack.c.b16 %v2574, %v2570
    %v3235 = vpack.c.b16 %v2579, %v2575
    %v3236 = vpack.c.b16 %v2580, %v2576
    %v3237 = vpack.c.b16 %v2581, %v2577
    %v3238 = vpack.c.b16 %v2582, %v2578
    %v3239 = vpack.c.b16 %v2587, %v2583
    %v3240 = vpack.c.b16 %v2588, %v2584
    %v3241 = vpack.c.b16 %v2589, %v2585
    %v3242 = vpack.c.b16 %v2590, %v2586
    %v3243 = vpack.c.b16 %v2595, %v2591
    %v3244 = vpack.c.b16 %v2596, %v2592
    %v3245 = vpack.c.b16 %v2597, %v2593
    %v3246 = vpack.c.b16 %v2598, %v2594
    %v3247 = vpack.c.b16 %v2603, %v2599
    %v3248 = vpack.c.b16 %v2604, %v2600
    %v3249 = vpack.c.b16 %v2605, %v2601
    %v3250 = vpack.c.b16 %v2606, %v2602
    %v3251 = vpack.c.b16 %v2611, %v2607
    %v3252 = vpack.c.b16 %v2612, %v2608
    %v3253 = vpack.c.b16 %v2613, %v2609
    %v3254 = vpack.c.b16 %v2614, %v2610
    %v3255 = vpack.c.b16 %v2619, %v2615
    %v3256 = vpack.c.b16 %v2620, %v2616
    %v3257 = vpack.c.b16 %v2621, %v2617
    %v3258 = vpack.c.b16 %v2622, %v2618
    %v3259 = vpack.c.b16 %v2627, %v2623
    %v3260 = vpack.c.b16 %v2628, %v2624
    %v3261 = vpack.c.b16 %v2629, %v2625
    %v3262 = vpack.c.b16 %v2630, %v2626
    %v3263 = vpack.c.b16 %v2635, %v2631
    %v3264 = vpack.c.b16 %v2636, %v2632
    %v3265 = vpack.c.b16 %v2637, %v2633
    %v3266 = vpack.c.b16 %v2638, %v2634
    %v3267 = vpack.c.b16 %v2643, %v2639
    %v3268 = vpack.c.b16 %v2644, %v2640
    %v3269 = vpack.c.b16 %v2645, %v2641
    %v3270 = vpack.c.b16 %v2646, %v2642
    %v3271 = vpack.c.b16 %v2651, %v2647
    %v3272 = vpack.c.b16 %v2652, %v2648
    %v3273 = vpack.c.b16 %v2653, %v2649
    %v3274 = vpack.c.b16 %v2654, %v2650
    %v3275 = vpack.c.b16 %v2659, %v2655
    %v3276 = vpack.c.b16 %v2660, %v2656
    %v3277 = vpack.c.b16 %v2661, %v2657
    %v3278 = vpack.c.b16 %v2662, %v2658
    %v3279 = vpack.c.b16 %v2667, %v2663
    %v3280 = vpack.c.b16 %v2668, %v2664
    %v3281 = vpack.c.b16 %v2669, %v2665
    %v3282 = vpack.c.b16 %v2670, %v2666
    %v3283 = vpack.c.b16 %v2675, %v2671
    %v3284 = vpack.c.b16 %v2676, %v2672
    %v3285 = vpack.c.b16 %v2677, %v2673
    %v3286 = vpack.c.b16 %v2678, %v2674
    %v3287 = vpack.c.b16 %v2683, %v2679
    %v3288 = vpack.c.b16 %v2684, %v2680
    %v3289 = vpack.c.b16 %v2685, %v2681
    %v3290 = vpack.c.b16 %v2686, %v2682
    %v3291 = vpack.c.b16 %v2691, %v2687
    %v3292 = vpack.c.b16 %v2692, %v2688
    %v3293 = vpack.c.b16 %v2693, %v2689
    %v3294 = vpack.c.b16 %v2694, %v2690
    %v3295 = vpack.c.b16 %v2699, %v2695
    %v3296 = vpack.c.b16 %v2700, %v2696
    %v3297 = vpack.c.b16 %v2701, %v2697
    %v3298 = vpack.c.b16 %v2702, %v2698
    %v3299 = vpack.c.b16 %v2707, %v2703
    %v3300 = vpack.c.b16 %v2708, %v2704
    %v3301 = vpack.c.b16 %v2709, %v2705
    %v3302 = vpack.c.b16 %v2710, %v2706
    %v3303 = vpack.c.b16 %v2715, %v2711
    %v3304 = vpack.c.b16 %v2716, %v2712
    %v3305 = vpack.c.b16 %v2717, %v2713
    %v3306 = vpack.c.b16 %v2718, %v2714
    %vm3895 = vcmask 392192
    %v3897 = vsel %vm3895, %v287, 0
    %v3900 = vsel %vm3895, %v306, 0
    %v3903 = vsel %vm3895, %v325, 0
    %v3906 = vsel %vm3895, %v344, 0
    %3908 = vmatprep.subr.bf16.mxu0 %v2720
    %3909 = vmatpush1.bf16.msra.mxu0 %v2719
    %3910 = vmatprep.subr.bf16.mxu0 %v2724
    %3911 = vmatpush1.bf16.msra.mxu0 %v2723
    %3912 = vmatprep.subr.bf16.mxu0 %v2728
    %3913 = vmatpush1.bf16.msra.mxu0 %v2727
    %3914 = vmatprep.subr.bf16.mxu0 %v2732
    %3915 = vmatpush1.bf16.msra.mxu0 %v2731
    %3916 = vmatprep.subr.bf16.mxu0 %v2736
    %3917 = vmatpush1.bf16.msra.mxu0 %v2735
    %3918 = vmatprep.subr.bf16.mxu0 %v2740
    %3919 = vmatpush1.bf16.msra.mxu0 %v2739
    %3920 = vmatprep.subr.bf16.mxu0 %v2744
    %3921 = vmatpush1.bf16.msra.mxu0 %v2743
    %3922 = vmatprep.subr.bf16.mxu0 %v2748
    %3923 = vmatpush1.bf16.msra.mxu0 %v2747
    %3924 = vmatprep.subr.bf16.mxu0 %v2752
    %3925 = vmatpush1.bf16.msra.mxu0 %v2751
    %3926 = vmatprep.subr.bf16.mxu0 %v2756
    %3927 = vmatpush1.bf16.msra.mxu0 %v2755
    %3928 = vmatprep.subr.bf16.mxu0 %v2760
    %3929 = vmatpush1.bf16.msra.mxu0 %v2759
    %3930 = vmatprep.subr.bf16.mxu0 %v2764
    %3931 = vmatpush1.bf16.msra.mxu0 %v2763
    %3932 = vmatprep.subr.bf16.mxu0 %v2768
    %3933 = vmatpush1.bf16.msra.mxu0 %v2767
    %3934 = vmatprep.subr.bf16.mxu0 %v2772
    %3935 = vmatpush1.bf16.msra.mxu0 %v2771
    %3936 = vmatprep.subr.bf16.mxu0 %v2776
    %3937 = vmatpush1.bf16.msra.mxu0 %v2775
    %3938 = vmatprep.subr.bf16.mxu0 %v2780
    %3939 = vmatpush1.bf16.msra.mxu0 %v2779
    %3940 = vmatprep.mubr.bf16.mxu0 %v270
    %3941 = vmatmul.mubr.bf16.gmra.mrb[0].mxu0 %v269
    %v3942 = vpop.f32.mrb[0].mxu0
    %v3943 = vadd.f32 %v938, %v3942
    %v3944 = vpop.f32.mrb[0].mxu0
    %v3945 = vadd.f32 %v942, %v3944
    %v3946 = vpop.f32.mrb[0].mxu0
    %v3947 = vadd.f32 %v938, %v3946
    %v3948 = vpop.f32.mrb[0].mxu0
    %v3949 = vadd.f32 %v942, %v3948
    %3950 = vmatprep.mubr.bf16.mxu0 %v289
    %3951 = vmatmul.mubr.bf16.gmra.mrb[0].mxu0 %v288
    %v3952 = vpop.f32.mrb[0].mxu0
    %v3953 = vadd.f32 %v938, %v3952
    %v3954 = vpop.f32.mrb[0].mxu0
    %v3955 = vadd.f32 %v942, %v3954
    %v3956 = vpop.f32.mrb[0].mxu0
    %v3957 = vadd.f32 %v938, %v3956
    %v3958 = vpop.f32.mrb[0].mxu0
    %v3959 = vadd.f32 %v942, %v3958
    %3960 = vmatprep.mubr.bf16.mxu0 %v308
    %3961 = vmatmul.mubr.bf16.gmra.mrb[0].mxu0 %v307
    %v3962 = vpop.f32.mrb[0].mxu0
    %v3963 = vadd.f32 %v938, %v3962
    %v3964 = vpop.f32.mrb[0].mxu0
    %v3965 = vadd.f32 %v942, %v3964
    %v3966 = vpop.f32.mrb[0].mxu0
    %v3967 = vadd.f32 %v938, %v3966
    %v3968 = vpop.f32.mrb[0].mxu0
    %v3969 = vadd.f32 %v942, %v3968
    %3970 = vmatprep.mubr.bf16.mxu0 %v327
    %3971 = vmatmul.mubr.bf16.gmra.mrb[0].mxu0 %v326
    %v3972 = vpop.f32.mrb[0].mxu0
    %v3973 = vadd.f32 %v938, %v3972
    %v3974 = vpop.f32.mrb[0].mxu0
    %v3975 = vadd.f32 %v942, %v3974
    %v3976 = vpop.f32.mrb[0].mxu0
    %v3977 = vadd.f32 %v938, %v3976
    %v3978 = vpop.f32.mrb[0].mxu0
    %v3979 = vadd.f32 %v942, %v3978
    %3980 = vdwg.mxu0
    %3981 = vmatprep.subr.bf16.mxu0 %v2784
    %3982 = vmatpush1.bf16.msra.mxu0 %v2783
    %3983 = vmatprep.subr.bf16.mxu0 %v2788
    %3984 = vmatpush1.bf16.msra.mxu0 %v2787
    %3985 = vmatprep.subr.bf16.mxu0 %v2792
    %3986 = vmatpush1.bf16.msra.mxu0 %v2791
    %3987 = vmatprep.subr.bf16.mxu0 %v2796
    %3988 = vmatpush1.bf16.msra.mxu0 %v2795
    %3989 = vmatprep.subr.bf16.mxu0 %v2800
    %3990 = vmatpush1.bf16.msra.mxu0 %v2799
    %3991 = vmatprep.subr.bf16.mxu0 %v2804
    %3992 = vmatpush1.bf16.msra.mxu0 %v2803
    %3993 = vmatprep.subr.bf16.mxu0 %v2808
    %3994 = vmatpush1.bf16.msra.mxu0 %v2807
    %3995 = vmatprep.subr.bf16.mxu0 %v2812
    %3996 = vmatpush1.bf16.msra.mxu0 %v2811
    %3997 = vmatprep.subr.bf16.mxu0 %v2816
    %3998 = vmatpush1.bf16.msra.mxu0 %v2815
    %3999 = vmatprep.subr.bf16.mxu0 %v2820
    %4000 = vmatpush1.bf16.msra.mxu0 %v2819
    %4001 = vmatprep.subr.bf16.mxu0 %v2824
    %4002 = vmatpush1.bf16.msra.mxu0 %v2823
    %4003 = vmatprep.subr.bf16.mxu0 %v2828
    %4004 = vmatpush1.bf16.msra.mxu0 %v2827
    %4005 = vmatprep.subr.bf16.mxu0 %v2832
    %4006 = vmatpush1.bf16.msra.mxu0 %v2831
    %4007 = vmatprep.subr.bf16.mxu0 %v2836
    %4008 = vmatpush1.bf16.msra.mxu0 %v2835
    %4009 = vmatprep.subr.bf16.mxu0 %v2840
    %4010 = vmatpush1.bf16.msra.mxu0 %v2839
    %4011 = vmatprep.subr.bf16.mxu0 %v2844
    %4012 = vmatpush1.bf16.msra.mxu0 %v2843
    %4013 = vmatprep.mubr.bf16.mxu0 %v272
    %4014 = vmatmul.mubr.bf16.gmra.mrb[0].mxu0 %v271
    %v4015 = vpop.f32.mrb[0].mxu0
    %v4016 = vadd.f32 %v3943, %v4015
    %v4017 = vpop.f32.mrb[0].mxu0
    %v4018 = vadd.f32 %v3945, %v4017
    %v4019 = vpop.f32.mrb[0].mxu0
    %v4020 = vadd.f32 %v3947, %v4019
    %v4021 = vpop.f32.mrb[0].mxu0
    %v4022 = vadd.f32 %v3949, %v4021
    %4023 = vmatprep.mubr.bf16.mxu0 %v291
    %4024 = vmatmul.mubr.bf16.gmra.mrb[0].mxu0 %v290
    %v4025 = vpop.f32.mrb[0].mxu0
    %v4026 = vadd.f32 %v3953, %v4025
    %v4027 = vpop.f32.mrb[0].mxu0
    %v4028 = vadd.f32 %v3955, %v4027
    %v4029 = vpop.f32.mrb[0].mxu0
    %v4030 = vadd.f32 %v3957, %v4029
    %v4031 = vpop.f32.mrb[0].mxu0
    %v4032 = vadd.f32 %v3959, %v4031
    %4033 = vmatprep.mubr.bf16.mxu0 %v310
    %4034 = vmatmul.mubr.bf16.gmra.mrb[0].mxu0 %v309
    %v4035 = vpop.f32.mrb[0].mxu0
    %v4036 = vadd.f32 %v3963, %v4035
    %v4037 = vpop.f32.mrb[0].mxu0
    %v4038 = vadd.f32 %v3965, %v4037
    %v4039 = vpop.f32.mrb[0].mxu0
    %v4040 = vadd.f32 %v3967, %v4039
    %v4041 = vpop.f32.mrb[0].mxu0
    %v4042 = vadd.f32 %v3969, %v4041
    %4043 = vmatprep.mubr.bf16.mxu0 %v329
    %4044 = vmatmul.mubr.bf16.gmra.mrb[0].mxu0 %v328
    %v4045 = vpop.f32.mrb[0].mxu0
    %v4046 = vadd.f32 %v3973, %v4045
    %v4047 = vpop.f32.mrb[0].mxu0
    %v4048 = vadd.f32 %v3975, %v4047
    %v4049 = vpop.f32.mrb[0].mxu0
    %v4050 = vadd.f32 %v3977, %v4049
    %v4051 = vpop.f32.mrb[0].mxu0
    %v4052 = vadd.f32 %v3979, %v4051
    %4053 = vdwg.mxu0
    %4054 = vmatprep.subr.bf16.mxu0 %v2848
    %4055 = vmatpush1.bf16.msra.mxu0 %v2847
    %4056 = vmatprep.subr.bf16.mxu0 %v2852
    %4057 = vmatpush1.bf16.msra.mxu0 %v2851
    %4058 = vmatprep.subr.bf16.mxu0 %v2856
    %4059 = vmatpush1.bf16.msra.mxu0 %v2855
    %4060 = vmatprep.subr.bf16.mxu0 %v2860
    %4061 = vmatpush1.bf16.msra.mxu0 %v2859
    %4062 = vmatprep.subr.bf16.mxu0 %v2864
    %4063 = vmatpush1.bf16.msra.mxu0 %v2863
    %4064 = vmatprep.subr.bf16.mxu0 %v2868
    %4065 = vmatpush1.bf16.msra.mxu0 %v2867
    %4066 = vmatprep.subr.bf16.mxu0 %v2872
    %4067 = vmatpush1.bf16.msra.mxu0 %v2871
    %4068 = vmatprep.subr.bf16.mxu0 %v2876
    %4069 = vmatpush1.bf16.msra.mxu0 %v2875
    %4070 = vmatprep.subr.bf16.mxu0 %v2880
    %4071 = vmatpush1.bf16.msra.mxu0 %v2879
    %4072 = vmatprep.subr.bf16.mxu0 %v2884
    %4073 = vmatpush1.bf16.msra.mxu0 %v2883
    %4074 = vmatprep.subr.bf16.mxu0 %v2888
    %4075 = vmatpush1.bf16.msra.mxu0 %v2887
    %4076 = vmatprep.subr.bf16.mxu0 %v2892
    %4077 = vmatpush1.bf16.msra.mxu0 %v2891
    %4078 = vmatprep.subr.bf16.mxu0 %v2896
    %4079 = vmatpush1.bf16.msra.mxu0 %v2895
    %4080 = vmatprep.subr.bf16.mxu0 %v2900
    %4081 = vmatpush1.bf16.msra.mxu0 %v2899
    %4082 = vmatprep.subr.bf16.mxu0 %v2904
    %4083 = vmatpush1.bf16.msra.mxu0 %v2903
    %4084 = vmatprep.subr.bf16.mxu0 %v2908
    %4085 = vmatpush1.bf16.msra.mxu0 %v2907
    %4086 = vmatprep.mubr.bf16.mxu0 %v274
    %4087 = vmatmul.mubr.bf16.gmra.mrb[0].mxu0 %v273
    %v4088 = vpop.f32.mrb[0].mxu0
    %v4089 = vadd.f32 %v4016, %v4088
    %v4090 = vpop.f32.mrb[0].mxu0
    %v4091 = vadd.f32 %v4018, %v4090
    %v4092 = vpop.f32.mrb[0].mxu0
    %v4093 = vadd.f32 %v4020, %v4092
    %v4094 = vpop.f32.mrb[0].mxu0
    %v4095 = vadd.f32 %v4022, %v4094
    %4096 = vmatprep.mubr.bf16.mxu0 %v293
    %4097 = vmatmul.mubr.bf16.gmra.mrb[0].mxu0 %v292
    %v4098 = vpop.f32.mrb[0].mxu0
    %v4099 = vadd.f32 %v4026, %v4098
    %v4100 = vpop.f32.mrb[0].mxu0
    %v4101 = vadd.f32 %v4028, %v4100
    %v4102 = vpop.f32.mrb[0].mxu0
    %v4103 = vadd.f32 %v4030, %v4102
    %v4104 = vpop.f32.mrb[0].mxu0
    %v4105 = vadd.f32 %v4032, %v4104
    %4106 = vmatprep.mubr.bf16.mxu0 %v312
    %4107 = vmatmul.mubr.bf16.gmra.mrb[0].mxu0 %v311
    %v4108 = vpop.f32.mrb[0].mxu0
    %v4109 = vadd.f32 %v4036, %v4108
    %v4110 = vpop.f32.mrb[0].mxu0
    %v4111 = vadd.f32 %v4038, %v4110
    %v4112 = vpop.f32.mrb[0].mxu0
    %v4113 = vadd.f32 %v4040, %v4112
    %v4114 = vpop.f32.mrb[0].mxu0
    %v4115 = vadd.f32 %v4042, %v4114
    %4116 = vmatprep.mubr.bf16.mxu0 %v331
    %4117 = vmatmul.mubr.bf16.gmra.mrb[0].mxu0 %v330
    %v4118 = vpop.f32.mrb[0].mxu0
    %v4119 = vadd.f32 %v4046, %v4118
    %v4120 = vpop.f32.mrb[0].mxu0
    %v4121 = vadd.f32 %v4048, %v4120
    %v4122 = vpop.f32.mrb[0].mxu0
    %v4123 = vadd.f32 %v4050, %v4122
    %v4124 = vpop.f32.mrb[0].mxu0
    %v4125 = vadd.f32 %v4052, %v4124
    %4126 = vdwg.mxu0
    %4127 = vmatprep.subr.bf16.mxu0 %v2912
    %4128 = vmatpush1.bf16.msra.mxu0 %v2911
    %4129 = vmatprep.subr.bf16.mxu0 %v2916
    %4130 = vmatpush1.bf16.msra.mxu0 %v2915
    %4131 = vmatprep.subr.bf16.mxu0 %v2920
    %4132 = vmatpush1.bf16.msra.mxu0 %v2919
    %4133 = vmatprep.subr.bf16.mxu0 %v2924
    %4134 = vmatpush1.bf16.msra.mxu0 %v2923
    %4135 = vmatprep.subr.bf16.mxu0 %v2928
    %4136 = vmatpush1.bf16.msra.mxu0 %v2927
    %4137 = vmatprep.subr.bf16.mxu0 %v2932
    %4138 = vmatpush1.bf16.msra.mxu0 %v2931
    %4139 = vmatprep.subr.bf16.mxu0 %v2936
    %4140 = vmatpush1.bf16.msra.mxu0 %v2935
    %4141 = vmatprep.subr.bf16.mxu0 %v2940
    %4142 = vmatpush1.bf16.msra.mxu0 %v2939
    %4143 = vmatprep.subr.bf16.mxu0 %v2944
    %4144 = vmatpush1.bf16.msra.mxu0 %v2943
    %4145 = vmatprep.subr.bf16.mxu0 %v2948
    %4146 = vmatpush1.bf16.msra.mxu0 %v2947
    %4147 = vmatprep.subr.bf16.mxu0 %v2952
    %4148 = vmatpush1.bf16.msra.mxu0 %v2951
    %4149 = vmatprep.subr.bf16.mxu0 %v2956
    %4150 = vmatpush1.bf16.msra.mxu0 %v2955
    %4151 = vmatprep.subr.bf16.mxu0 %v2960
    %4152 = vmatpush1.bf16.msra.mxu0 %v2959
    %4153 = vmatprep.subr.bf16.mxu0 %v2964
    %4154 = vmatpush1.bf16.msra.mxu0 %v2963
    %4155 = vmatprep.subr.bf16.mxu0 %v2968
    %4156 = vmatpush1.bf16.msra.mxu0 %v2967
    %4157 = vmatprep.subr.bf16.mxu0 %v2972
    %4158 = vmatpush1.bf16.msra.mxu0 %v2971
    %4159 = vmatprep.mubr.bf16.mxu0 %v276
    %4160 = vmatmul.mubr.bf16.gmra.mrb[0].mxu0 %v275
    %v4161 = vpop.f32.mrb[0].mxu0
    %v4162 = vadd.f32 %v4089, %v4161
    %v4163 = vpop.f32.mrb[0].mxu0
    %v4164 = vadd.f32 %v4091, %v4163
    %v4165 = vpop.f32.mrb[0].mxu0
    %v4166 = vadd.f32 %v4093, %v4165
    %v4167 = vpop.f32.mrb[0].mxu0
    %v4168 = vadd.f32 %v4095, %v4167
    %4169 = vmatprep.mubr.bf16.mxu0 %v295
    %4170 = vmatmul.mubr.bf16.gmra.mrb[0].mxu0 %v294
    %v4171 = vpop.f32.mrb[0].mxu0
    %v4172 = vadd.f32 %v4099, %v4171
    %v4173 = vpop.f32.mrb[0].mxu0
    %v4174 = vadd.f32 %v4101, %v4173
    %v4175 = vpop.f32.mrb[0].mxu0
    %v4176 = vadd.f32 %v4103, %v4175
    %v4177 = vpop.f32.mrb[0].mxu0
    %v4178 = vadd.f32 %v4105, %v4177
    %4179 = vmatprep.mubr.bf16.mxu0 %v314
    %4180 = vmatmul.mubr.bf16.gmra.mrb[0].mxu0 %v313
    %v4181 = vpop.f32.mrb[0].mxu0
    %v4182 = vadd.f32 %v4109, %v4181
    %v4183 = vpop.f32.mrb[0].mxu0
    %v4184 = vadd.f32 %v4111, %v4183
    %v4185 = vpop.f32.mrb[0].mxu0
    %v4186 = vadd.f32 %v4113, %v4185
    %v4187 = vpop.f32.mrb[0].mxu0
    %v4188 = vadd.f32 %v4115, %v4187
    %4189 = vmatprep.mubr.bf16.mxu0 %v333
    %4190 = vmatmul.mubr.bf16.gmra.mrb[0].mxu0 %v332
    %v4191 = vpop.f32.mrb[0].mxu0
    %v4192 = vadd.f32 %v4119, %v4191
    %v4193 = vpop.f32.mrb[0].mxu0
    %v4194 = vadd.f32 %v4121, %v4193
    %v4195 = vpop.f32.mrb[0].mxu0
    %v4196 = vadd.f32 %v4123, %v4195
    %v4197 = vpop.f32.mrb[0].mxu0
    %v4198 = vadd.f32 %v4125, %v4197
    %4199 = vdwg.mxu0
    %4200 = vmatprep.subr.bf16.mxu0 %v2976
    %4201 = vmatpush1.bf16.msra.mxu0 %v2975
    %4202 = vmatprep.subr.bf16.mxu0 %v2980
    %4203 = vmatpush1.bf16.msra.mxu0 %v2979
    %4204 = vmatprep.subr.bf16.mxu0 %v2984
    %4205 = vmatpush1.bf16.msra.mxu0 %v2983
    %4206 = vmatprep.subr.bf16.mxu0 %v2988
    %4207 = vmatpush1.bf16.msra.mxu0 %v2987
    %4208 = vmatprep.subr.bf16.mxu0 %v2992
    %4209 = vmatpush1.bf16.msra.mxu0 %v2991
    %4210 = vmatprep.subr.bf16.mxu0 %v2996
    %4211 = vmatpush1.bf16.msra.mxu0 %v2995
    %4212 = vmatprep.subr.bf16.mxu0 %v3000
    %4213 = vmatpush1.bf16.msra.mxu0 %v2999
    %4214 = vmatprep.subr.bf16.mxu0 %v3004
    %4215 = vmatpush1.bf16.msra.mxu0 %v3003
    %4216 = vmatprep.subr.bf16.mxu0 %v3008
    %4217 = vmatpush1.bf16.msra.mxu0 %v3007
    %4218 = vmatprep.subr.bf16.mxu0 %v3012
    %4219 = vmatpush1.bf16.msra.mxu0 %v3011
    %4220 = vmatprep.subr.bf16.mxu0 %v3016
    %4221 = vmatpush1.bf16.msra.mxu0 %v3015
    %4222 = vmatprep.subr.bf16.mxu0 %v3020
    %4223 = vmatpush1.bf16.msra.mxu0 %v3019
    %4224 = vmatprep.subr.bf16.mxu0 %v3024
    %4225 = vmatpush1.bf16.msra.mxu0 %v3023
    %4226 = vmatprep.subr.bf16.mxu0 %v3028
    %4227 = vmatpush1.bf16.msra.mxu0 %v3027
    %4228 = vmatprep.subr.bf16.mxu0 %v3032
    %4229 = vmatpush1.bf16.msra.mxu0 %v3031
    %4230 = vmatprep.subr.bf16.mxu0 %v3036
    %4231 = vmatpush1.bf16.msra.mxu0 %v3035
    %4232 = vmatprep.mubr.bf16.mxu0 %v278
    %4233 = vmatmul.mubr.bf16.gmra.mrb[0].mxu0 %v277
    %v4234 = vpop.f32.mrb[0].mxu0
    %v4235 = vadd.f32 %v4162, %v4234
    %v4236 = vpop.f32.mrb[0].mxu0
    %v4237 = vadd.f32 %v4164, %v4236
    %v4238 = vpop.f32.mrb[0].mxu0
    %v4239 = vadd.f32 %v4166, %v4238
    %v4240 = vpop.f32.mrb[0].mxu0
    %v4241 = vadd.f32 %v4168, %v4240
    %4242 = vmatprep.mubr.bf16.mxu0 %v297
    %4243 = vmatmul.mubr.bf16.gmra.mrb[0].mxu0 %v296
    %v4244 = vpop.f32.mrb[0].mxu0
    %v4245 = vadd.f32 %v4172, %v4244
    %v4246 = vpop.f32.mrb[0].mxu0
    %v4247 = vadd.f32 %v4174, %v4246
    %v4248 = vpop.f32.mrb[0].mxu0
    %v4249 = vadd.f32 %v4176, %v4248
    %v4250 = vpop.f32.mrb[0].mxu0
    %v4251 = vadd.f32 %v4178, %v4250
    %4252 = vmatprep.mubr.bf16.mxu0 %v316
    %4253 = vmatmul.mubr.bf16.gmra.mrb[0].mxu0 %v315
    %v4254 = vpop.f32.mrb[0].mxu0
    %v4255 = vadd.f32 %v4182, %v4254
    %v4256 = vpop.f32.mrb[0].mxu0
    %v4257 = vadd.f32 %v4184, %v4256
    %v4258 = vpop.f32.mrb[0].mxu0
    %v4259 = vadd.f32 %v4186, %v4258
    %v4260 = vpop.f32.mrb[0].mxu0
    %v4261 = vadd.f32 %v4188, %v4260
    %4262 = vmatprep.mubr.bf16.mxu0 %v335
    %4263 = vmatmul.mubr.bf16.gmra.mrb[0].mxu0 %v334
    %v4264 = vpop.f32.mrb[0].mxu0
    %v4265 = vadd.f32 %v4192, %v4264
    %v4266 = vpop.f32.mrb[0].mxu0
    %v4267 = vadd.f32 %v4194, %v4266
    %v4268 = vpop.f32.mrb[0].mxu0
    %v4269 = vadd.f32 %v4196, %v4268
    %v4270 = vpop.f32.mrb[0].mxu0
    %v4271 = vadd.f32 %v4198, %v4270
    %4272 = vdwg.mxu0
    %4273 = vmatprep.subr.bf16.mxu0 %v3040
    %4274 = vmatpush1.bf16.msra.mxu0 %v3039
    %4275 = vmatprep.subr.bf16.mxu0 %v3044
    %4276 = vmatpush1.bf16.msra.mxu0 %v3043
    %4277 = vmatprep.subr.bf16.mxu0 %v3048
    %4278 = vmatpush1.bf16.msra.mxu0 %v3047
    %4279 = vmatprep.subr.bf16.mxu0 %v3052
    %4280 = vmatpush1.bf16.msra.mxu0 %v3051
    %4281 = vmatprep.subr.bf16.mxu0 %v3056
    %4282 = vmatpush1.bf16.msra.mxu0 %v3055
    %4283 = vmatprep.subr.bf16.mxu0 %v3060
    %4284 = vmatpush1.bf16.msra.mxu0 %v3059
    %4285 = vmatprep.subr.bf16.mxu0 %v3064
    %4286 = vmatpush1.bf16.msra.mxu0 %v3063
    %4287 = vmatprep.subr.bf16.mxu0 %v3068
    %4288 = vmatpush1.bf16.msra.mxu0 %v3067
    %4289 = vmatprep.subr.bf16.mxu0 %v3072
    %4290 = vmatpush1.bf16.msra.mxu0 %v3071
    %4291 = vmatprep.subr.bf16.mxu0 %v3076
    %4292 = vmatpush1.bf16.msra.mxu0 %v3075
    %4293 = vmatprep.subr.bf16.mxu0 %v3080
    %4294 = vmatpush1.bf16.msra.mxu0 %v3079
    %4295 = vmatprep.subr.bf16.mxu0 %v3084
    %4296 = vmatpush1.bf16.msra.mxu0 %v3083
    %4297 = vmatprep.subr.bf16.mxu0 %v3088
    %4298 = vmatpush1.bf16.msra.mxu0 %v3087
    %4299 = vmatprep.subr.bf16.mxu0 %v3092
    %4300 = vmatpush1.bf16.msra.mxu0 %v3091
    %4301 = vmatprep.subr.bf16.mxu0 %v3096
    %4302 = vmatpush1.bf16.msra.mxu0 %v3095
    %4303 = vmatprep.subr.bf16.mxu0 %v3100
    %4304 = vmatpush1.bf16.msra.mxu0 %v3099
    %4305 = vmatprep.mubr.bf16.mxu0 %v280
    %4306 = vmatmul.mubr.bf16.gmra.mrb[0].mxu0 %v279
    %v4307 = vpop.f32.mrb[0].mxu0
    %v4308 = vadd.f32 %v4235, %v4307
    %v4309 = vpop.f32.mrb[0].mxu0
    %v4310 = vadd.f32 %v4237, %v4309
    %v4311 = vpop.f32.mrb[0].mxu0
    %v4312 = vadd.f32 %v4239, %v4311
    %v4313 = vpop.f32.mrb[0].mxu0
    %v4314 = vadd.f32 %v4241, %v4313
    %4315 = vmatprep.mubr.bf16.mxu0 %v299
    %4316 = vmatmul.mubr.bf16.gmra.mrb[0].mxu0 %v298
    %v4317 = vpop.f32.mrb[0].mxu0
    %v4318 = vadd.f32 %v4245, %v4317
    %v4319 = vpop.f32.mrb[0].mxu0
    %v4320 = vadd.f32 %v4247, %v4319
    %v4321 = vpop.f32.mrb[0].mxu0
    %v4322 = vadd.f32 %v4249, %v4321
    %v4323 = vpop.f32.mrb[0].mxu0
    %v4324 = vadd.f32 %v4251, %v4323
    %4325 = vmatprep.mubr.bf16.mxu0 %v318
    %4326 = vmatmul.mubr.bf16.gmra.mrb[0].mxu0 %v317
    %v4327 = vpop.f32.mrb[0].mxu0
    %v4328 = vadd.f32 %v4255, %v4327
    %v4329 = vpop.f32.mrb[0].mxu0
    %v4330 = vadd.f32 %v4257, %v4329
    %v4331 = vpop.f32.mrb[0].mxu0
    %v4332 = vadd.f32 %v4259, %v4331
    %v4333 = vpop.f32.mrb[0].mxu0
    %v4334 = vadd.f32 %v4261, %v4333
    %4335 = vmatprep.mubr.bf16.mxu0 %v337
    %4336 = vmatmul.mubr.bf16.gmra.mrb[0].mxu0 %v336
    %v4337 = vpop.f32.mrb[0].mxu0
    %v4338 = vadd.f32 %v4265, %v4337
    %v4339 = vpop.f32.mrb[0].mxu0
    %v4340 = vadd.f32 %v4267, %v4339
    %v4341 = vpop.f32.mrb[0].mxu0
    %v4342 = vadd.f32 %v4269, %v4341
    %v4343 = vpop.f32.mrb[0].mxu0
    %v4344 = vadd.f32 %v4271, %v4343
    %4345 = vdwg.mxu0
    %4346 = vmatprep.subr.bf16.mxu0 %v3104
    %4347 = vmatpush1.bf16.msra.mxu0 %v3103
    %4348 = vmatprep.subr.bf16.mxu0 %v3108
    %4349 = vmatpush1.bf16.msra.mxu0 %v3107
    %4350 = vmatprep.subr.bf16.mxu0 %v3112
    %4351 = vmatpush1.bf16.msra.mxu0 %v3111
    %4352 = vmatprep.subr.bf16.mxu0 %v3116
    %4353 = vmatpush1.bf16.msra.mxu0 %v3115
    %4354 = vmatprep.subr.bf16.mxu0 %v3120
    %4355 = vmatpush1.bf16.msra.mxu0 %v3119
    %4356 = vmatprep.subr.bf16.mxu0 %v3124
    %4357 = vmatpush1.bf16.msra.mxu0 %v3123
    %4358 = vmatprep.subr.bf16.mxu0 %v3128
    %4359 = vmatpush1.bf16.msra.mxu0 %v3127
    %4360 = vmatprep.subr.bf16.mxu0 %v3132
    %4361 = vmatpush1.bf16.msra.mxu0 %v3131
    %4362 = vmatprep.subr.bf16.mxu0 %v3136
    %4363 = vmatpush1.bf16.msra.mxu0 %v3135
    %4364 = vmatprep.subr.bf16.mxu0 %v3140
    %4365 = vmatpush1.bf16.msra.mxu0 %v3139
    %4366 = vmatprep.subr.bf16.mxu0 %v3144
    %4367 = vmatpush1.bf16.msra.mxu0 %v3143
    %4368 = vmatprep.subr.bf16.mxu0 %v3148
    %4369 = vmatpush1.bf16.msra.mxu0 %v3147
    %4370 = vmatprep.subr.bf16.mxu0 %v3152
    %4371 = vmatpush1.bf16.msra.mxu0 %v3151
    %4372 = vmatprep.subr.bf16.mxu0 %v3156
    %4373 = vmatpush1.bf16.msra.mxu0 %v3155
    %4374 = vmatprep.subr.bf16.mxu0 %v3160
    %4375 = vmatpush1.bf16.msra.mxu0 %v3159
    %4376 = vmatprep.subr.bf16.mxu0 %v3164
    %4377 = vmatpush1.bf16.msra.mxu0 %v3163
    %4378 = vmatprep.mubr.bf16.mxu0 %v282
    %4379 = vmatmul.mubr.bf16.gmra.mrb[0].mxu0 %v281
    %v4380 = vpop.f32.mrb[0].mxu0
    %v4381 = vadd.f32 %v4308, %v4380
    %v4382 = vpop.f32.mrb[0].mxu0
    %v4383 = vadd.f32 %v4310, %v4382
    %v4384 = vpop.f32.mrb[0].mxu0
    %v4385 = vadd.f32 %v4312, %v4384
    %v4386 = vpop.f32.mrb[0].mxu0
    %v4387 = vadd.f32 %v4314, %v4386
    %4388 = vmatprep.mubr.bf16.mxu0 %v301
    %4389 = vmatmul.mubr.bf16.gmra.mrb[0].mxu0 %v300
    %v4390 = vpop.f32.mrb[0].mxu0
    %v4391 = vadd.f32 %v4318, %v4390
    %v4392 = vpop.f32.mrb[0].mxu0
    %v4393 = vadd.f32 %v4320, %v4392
    %v4394 = vpop.f32.mrb[0].mxu0
    %v4395 = vadd.f32 %v4322, %v4394
    %v4396 = vpop.f32.mrb[0].mxu0
    %v4397 = vadd.f32 %v4324, %v4396
    %4398 = vmatprep.mubr.bf16.mxu0 %v320
    %4399 = vmatmul.mubr.bf16.gmra.mrb[0].mxu0 %v319
    %v4400 = vpop.f32.mrb[0].mxu0
    %v4401 = vadd.f32 %v4328, %v4400
    %v4402 = vpop.f32.mrb[0].mxu0
    %v4403 = vadd.f32 %v4330, %v4402
    %v4404 = vpop.f32.mrb[0].mxu0
    %v4405 = vadd.f32 %v4332, %v4404
    %v4406 = vpop.f32.mrb[0].mxu0
    %v4407 = vadd.f32 %v4334, %v4406
    %4408 = vmatprep.mubr.bf16.mxu0 %v339
    %4409 = vmatmul.mubr.bf16.gmra.mrb[0].mxu0 %v338
    %v4410 = vpop.f32.mrb[0].mxu0
    %v4411 = vadd.f32 %v4338, %v4410
    %v4412 = vpop.f32.mrb[0].mxu0
    %v4413 = vadd.f32 %v4340, %v4412
    %v4414 = vpop.f32.mrb[0].mxu0
    %v4415 = vadd.f32 %v4342, %v4414
    %v4416 = vpop.f32.mrb[0].mxu0
    %v4417 = vadd.f32 %v4344, %v4416
    %4418 = vdwg.mxu0
    %4419 = vmatprep.subr.bf16.mxu0 %v3168
    %4420 = vmatpush1.bf16.msra.mxu0 %v3167
    %4421 = vmatprep.subr.bf16.mxu0 %v3172
    %4422 = vmatpush1.bf16.msra.mxu0 %v3171
    %4423 = vmatprep.subr.bf16.mxu0 %v3176
    %4424 = vmatpush1.bf16.msra.mxu0 %v3175
    %4425 = vmatprep.subr.bf16.mxu0 %v3180
    %4426 = vmatpush1.bf16.msra.mxu0 %v3179
    %4427 = vmatprep.subr.bf16.mxu0 %v3184
    %4428 = vmatpush1.bf16.msra.mxu0 %v3183
    %4429 = vmatprep.subr.bf16.mxu0 %v3188
    %4430 = vmatpush1.bf16.msra.mxu0 %v3187
    %4431 = vmatprep.subr.bf16.mxu0 %v3192
    %4432 = vmatpush1.bf16.msra.mxu0 %v3191
    %4433 = vmatprep.subr.bf16.mxu0 %v3196
    %4434 = vmatpush1.bf16.msra.mxu0 %v3195
    %4435 = vmatprep.subr.bf16.mxu0 %v3200
    %4436 = vmatpush1.bf16.msra.mxu0 %v3199
    %4437 = vmatprep.subr.bf16.mxu0 %v3204
    %4438 = vmatpush1.bf16.msra.mxu0 %v3203
    %4439 = vmatprep.subr.bf16.mxu0 %v3208
    %4440 = vmatpush1.bf16.msra.mxu0 %v3207
    %4441 = vmatprep.subr.bf16.mxu0 %v3212
    %4442 = vmatpush1.bf16.msra.mxu0 %v3211
    %4443 = vmatprep.subr.bf16.mxu0 %v3216
    %4444 = vmatpush1.bf16.msra.mxu0 %v3215
    %4445 = vmatprep.subr.bf16.mxu0 %v3220
    %4446 = vmatpush1.bf16.msra.mxu0 %v3219
    %4447 = vmatprep.subr.bf16.mxu0 %v3224
    %4448 = vmatpush1.bf16.msra.mxu0 %v3223
    %4449 = vmatprep.subr.bf16.mxu0 %v3228
    %4450 = vmatpush1.bf16.msra.mxu0 %v3227
    %4451 = vmatprep.mubr.bf16.mxu0 %v284
    %4452 = vmatmul.mubr.bf16.gmra.mrb[0].mxu0 %v283
    %v4453 = vpop.f32.mrb[0].mxu0
    %v4454 = vadd.f32 %v4381, %v4453
    %v4455 = vpop.f32.mrb[0].mxu0
    %v4456 = vadd.f32 %v4383, %v4455
    %v4457 = vpop.f32.mrb[0].mxu0
    %v4458 = vadd.f32 %v4385, %v4457
    %v4459 = vpop.f32.mrb[0].mxu0
    %v4460 = vadd.f32 %v4387, %v4459
    %4461 = vmatprep.mubr.bf16.mxu0 %v303
    %4462 = vmatmul.mubr.bf16.gmra.mrb[0].mxu0 %v302
    %v4463 = vpop.f32.mrb[0].mxu0
    %v4464 = vadd.f32 %v4391, %v4463
    %v4465 = vpop.f32.mrb[0].mxu0
    %v4466 = vadd.f32 %v4393, %v4465
    %v4467 = vpop.f32.mrb[0].mxu0
    %v4468 = vadd.f32 %v4395, %v4467
    %v4469 = vpop.f32.mrb[0].mxu0
    %v4470 = vadd.f32 %v4397, %v4469
    %4471 = vmatprep.mubr.bf16.mxu0 %v322
    %4472 = vmatmul.mubr.bf16.gmra.mrb[0].mxu0 %v321
    %v4473 = vpop.f32.mrb[0].mxu0
    %v4474 = vadd.f32 %v4401, %v4473
    %v4475 = vpop.f32.mrb[0].mxu0
    %v4476 = vadd.f32 %v4403, %v4475
    %v4477 = vpop.f32.mrb[0].mxu0
    %v4478 = vadd.f32 %v4405, %v4477
    %v4479 = vpop.f32.mrb[0].mxu0
    %v4480 = vadd.f32 %v4407, %v4479
    %4481 = vmatprep.mubr.bf16.mxu0 %v341
    %4482 = vmatmul.mubr.bf16.gmra.mrb[0].mxu0 %v340
    %v4483 = vpop.f32.mrb[0].mxu0
    %v4484 = vadd.f32 %v4411, %v4483
    %v4485 = vpop.f32.mrb[0].mxu0
    %v4486 = vadd.f32 %v4413, %v4485
    %v4487 = vpop.f32.mrb[0].mxu0
    %v4488 = vadd.f32 %v4415, %v4487
    %v4489 = vpop.f32.mrb[0].mxu0
    %v4490 = vadd.f32 %v4417, %v4489
    %4491 = vdwg.mxu0
    %4492 = vmatprep.subr.bf16.mxu0 %v3232
    %4493 = vmatpush1.bf16.msra.mxu0 %v3231
    %4494 = vmatprep.subr.bf16.mxu0 %v3236
    %4495 = vmatpush1.bf16.msra.mxu0 %v3235
    %4496 = vmatprep.subr.bf16.mxu0 %v3240
    %4497 = vmatpush1.bf16.msra.mxu0 %v3239
    %4498 = vmatprep.subr.bf16.mxu0 %v3244
    %4499 = vmatpush1.bf16.msra.mxu0 %v3243
    %4500 = vmatprep.subr.bf16.mxu0 %v3248
    %4501 = vmatpush1.bf16.msra.mxu0 %v3247
    %4502 = vmatprep.subr.bf16.mxu0 %v3252
    %4503 = vmatpush1.bf16.msra.mxu0 %v3251
    %4504 = vmatprep.subr.bf16.mxu0 %v3256
    %4505 = vmatpush1.bf16.msra.mxu0 %v3255
    %4506 = vmatprep.subr.bf16.mxu0 %v3260
    %4507 = vmatpush1.bf16.msra.mxu0 %v3259
    %4508 = vmatprep.subr.bf16.mxu0 %v3264
    %4509 = vmatpush1.bf16.msra.mxu0 %v3263
    %4510 = vmatprep.subr.bf16.mxu0 %v3268
    %4511 = vmatpush1.bf16.msra.mxu0 %v3267
    %4512 = vmatprep.subr.bf16.mxu0 %v3272
    %4513 = vmatpush1.bf16.msra.mxu0 %v3271
    %4514 = vmatprep.subr.bf16.mxu0 %v3276
    %4515 = vmatpush1.bf16.msra.mxu0 %v3275
    %4516 = vmatprep.subr.bf16.mxu0 %v3280
    %4517 = vmatpush1.bf16.msra.mxu0 %v3279
    %4518 = vmatprep.subr.bf16.mxu0 %v3284
    %4519 = vmatpush1.bf16.msra.mxu0 %v3283
    %4520 = vmatprep.subr.bf16.mxu0 %v3288
    %4521 = vmatpush1.bf16.msra.mxu0 %v3287
    %4522 = vmatprep.subr.bf16.mxu0 %v3292
    %4523 = vmatpush1.bf16.msra.mxu0 %v3291
    %4524 = vmatprep.mubr.bf16.mxu0 %v286
    %4525 = vmatmul.mubr.bf16.gmra.mrb[0].mxu0 %v285
    %v4526 = vpop.f32.mrb[0].mxu0
    %v4527 = vadd.f32 %v4454, %v4526
    %v4528 = vpop.f32.mrb[0].mxu0
    %v4529 = vadd.f32 %v4456, %v4528
    %v4530 = vpop.f32.mrb[0].mxu0
    %v4531 = vadd.f32 %v4458, %v4530
    %v4532 = vpop.f32.mrb[0].mxu0
    %v4533 = vadd.f32 %v4460, %v4532
    %4534 = vmatprep.mubr.bf16.mxu0 %v305
    %4535 = vmatmul.mubr.bf16.gmra.mrb[0].mxu0 %v304
    %v4536 = vpop.f32.mrb[0].mxu0
    %v4537 = vadd.f32 %v4464, %v4536
    %v4538 = vpop.f32.mrb[0].mxu0
    %v4539 = vadd.f32 %v4466, %v4538
    %v4540 = vpop.f32.mrb[0].mxu0
    %v4541 = vadd.f32 %v4468, %v4540
    %v4542 = vpop.f32.mrb[0].mxu0
    %v4543 = vadd.f32 %v4470, %v4542
    %4544 = vmatprep.mubr.bf16.mxu0 %v324
    %4545 = vmatmul.mubr.bf16.gmra.mrb[0].mxu0 %v323
    %v4546 = vpop.f32.mrb[0].mxu0
    %v4547 = vadd.f32 %v4474, %v4546
    %v4548 = vpop.f32.mrb[0].mxu0
    %v4549 = vadd.f32 %v4476, %v4548
    %v4550 = vpop.f32.mrb[0].mxu0
    %v4551 = vadd.f32 %v4478, %v4550
    %v4552 = vpop.f32.mrb[0].mxu0
    %v4553 = vadd.f32 %v4480, %v4552
    %4554 = vmatprep.mubr.bf16.mxu0 %v343
    %4555 = vmatmul.mubr.bf16.gmra.mrb[0].mxu0 %v342
    %v4556 = vpop.f32.mrb[0].mxu0
    %v4557 = vadd.f32 %v4484, %v4556
    %v4558 = vpop.f32.mrb[0].mxu0
    %v4559 = vadd.f32 %v4486, %v4558
    %v4560 = vpop.f32.mrb[0].mxu0
    %v4561 = vadd.f32 %v4488, %v4560
    %v4562 = vpop.f32.mrb[0].mxu0
    %v4563 = vadd.f32 %v4490, %v4562
    %4564 = vdwg.mxu0
    %4565 = vmatprep.subr.bf16.mxu0 %v3296
    %4566 = vmatpush1.bf16.msra.mxu0 %v3295
    %4567 = vmatprep.subr.bf16.mxu0 %v3300
    %4568 = vmatpush1.bf16.msra.mxu0 %v3299
    %4569 = vmatprep.subr.bf16.mxu0 %v3304
    %4570 = vmatpush1.bf16.msra.mxu0 %v3303
    %4571 = vmatprep.subr.bf16.mxu0 0
    %4572 = vmatpush1.bf16.msra.mxu0 0
    %4573 = vmatprep.subr.bf16.mxu0 0
    %4574 = vmatpush1.bf16.msra.mxu0 0
    %4575 = vmatprep.subr.bf16.mxu0 0
    %4576 = vmatpush1.bf16.msra.mxu0 0
    %4577 = vmatprep.subr.bf16.mxu0 0
    %4578 = vmatpush1.bf16.msra.mxu0 0
    %4579 = vmatprep.subr.bf16.mxu0 0
    %4580 = vmatpush1.bf16.msra.mxu0 0
    %4581 = vmatprep.subr.bf16.mxu0 0
    %4582 = vmatpush1.bf16.msra.mxu0 0
    %4583 = vmatprep.subr.bf16.mxu0 0
    %4584 = vmatpush1.bf16.msra.mxu0 0
    %4585 = vmatprep.subr.bf16.mxu0 0
    %4586 = vmatpush1.bf16.msra.mxu0 0
    %4587 = vmatprep.subr.bf16.mxu0 0
    %4588 = vmatpush1.bf16.msra.mxu0 0
    %4589 = vmatprep.subr.bf16.mxu0 0
    %4590 = vmatpush1.bf16.msra.mxu0 0
    %4591 = vmatprep.subr.bf16.mxu0 0
    %4592 = vmatpush1.bf16.msra.mxu0 0
    %4593 = vmatprep.subr.bf16.mxu0 0
    %4594 = vmatpush1.bf16.msra.mxu0 0
    %4595 = vmatprep.subr.bf16.mxu0 0
    %4596 = vmatpush1.bf16.msra.mxu0 0
    %4597 = vmatprep.mubr.bf16.mxu0 0
    %4598 = vmatmul.mubr.bf16.gmra.mrb[0].mxu0 %v3897
    %v4599 = vpop.f32.mrb[0].mxu0
    %v4600 = vadd.f32 %v4527, %v4599
    %v4601 = vpop.f32.mrb[0].mxu0
    %v4602 = vadd.f32 %v4529, %v4601
    %v4603 = vpop.f32.mrb[0].mxu0
    %v4604 = vadd.f32 %v4531, %v4603
    %v4605 = vpop.f32.mrb[0].mxu0
    %v4606 = vadd.f32 %v4533, %v4605
    %4607 = vmatprep.mubr.bf16.mxu0 0
    %4608 = vmatmul.mubr.bf16.gmra.mrb[0].mxu0 %v3900
    %v4609 = vpop.f32.mrb[0].mxu0
    %v4610 = vadd.f32 %v4537, %v4609
    %v4611 = vpop.f32.mrb[0].mxu0
    %v4612 = vadd.f32 %v4539, %v4611
    %v4613 = vpop.f32.mrb[0].mxu0
    %v4614 = vadd.f32 %v4541, %v4613
    %v4615 = vpop.f32.mrb[0].mxu0
    %v4616 = vadd.f32 %v4543, %v4615
    %4617 = vmatprep.mubr.bf16.mxu0 0
    %4618 = vmatmul.mubr.bf16.gmra.mrb[0].mxu0 %v3903
    %v4619 = vpop.f32.mrb[0].mxu0
    %v4620 = vadd.f32 %v4547, %v4619
    %v4621 = vpop.f32.mrb[0].mxu0
    %v4622 = vadd.f32 %v4549, %v4621
    %v4623 = vpop.f32.mrb[0].mxu0
    %v4624 = vadd.f32 %v4551, %v4623
    %v4625 = vpop.f32.mrb[0].mxu0
    %v4626 = vadd.f32 %v4553, %v4625
    %4627 = vmatprep.mubr.bf16.mxu0 0
    %4628 = vmatmul.mubr.bf16.gmra.mrb[0].mxu0 %v3906
    %v4629 = vpop.f32.mrb[0].mxu0
    %v4630 = vadd.f32 %v4557, %v4629
    %v4631 = vpop.f32.mrb[0].mxu0
    %v4632 = vadd.f32 %v4559, %v4631
    %v4633 = vpop.f32.mrb[0].mxu0
    %v4634 = vadd.f32 %v4561, %v4633
    %v4635 = vpop.f32.mrb[0].mxu0
    %v4636 = vadd.f32 %v4563, %v4635
    %4637 = vdwg.mxu0
    %4638 = vmatprep.subr.bf16.mxu0 %v2722
    %4639 = vmatpush1.bf16.msra.mxu0 %v2721
    %4640 = vmatprep.subr.bf16.mxu0 %v2726
    %4641 = vmatpush1.bf16.msra.mxu0 %v2725
    %4642 = vmatprep.subr.bf16.mxu0 %v2730
    %4643 = vmatpush1.bf16.msra.mxu0 %v2729
    %4644 = vmatprep.subr.bf16.mxu0 %v2734
    %4645 = vmatpush1.bf16.msra.mxu0 %v2733
    %4646 = vmatprep.subr.bf16.mxu0 %v2738
    %4647 = vmatpush1.bf16.msra.mxu0 %v2737
    %4648 = vmatprep.subr.bf16.mxu0 %v2742
    %4649 = vmatpush1.bf16.msra.mxu0 %v2741
    %4650 = vmatprep.subr.bf16.mxu0 %v2746
    %4651 = vmatpush1.bf16.msra.mxu0 %v2745
    %4652 = vmatprep.subr.bf16.mxu0 %v2750
    %4653 = vmatpush1.bf16.msra.mxu0 %v2749
    %4654 = vmatprep.subr.bf16.mxu0 %v2754
    %4655 = vmatpush1.bf16.msra.mxu0 %v2753
    %4656 = vmatprep.subr.bf16.mxu0 %v2758
    %4657 = vmatpush1.bf16.msra.mxu0 %v2757
    %4658 = vmatprep.subr.bf16.mxu0 %v2762
    %4659 = vmatpush1.bf16.msra.mxu0 %v2761
    %4660 = vmatprep.subr.bf16.mxu0 %v2766
    %4661 = vmatpush1.bf16.msra.mxu0 %v2765
    %4662 = vmatprep.subr.bf16.mxu0 %v2770
    %4663 = vmatpush1.bf16.msra.mxu0 %v2769
    %4664 = vmatprep.subr.bf16.mxu0 %v2774
    %4665 = vmatpush1.bf16.msra.mxu0 %v2773
    %4666 = vmatprep.subr.bf16.mxu0 %v2778
    %4667 = vmatpush1.bf16.msra.mxu0 %v2777
    %4668 = vmatprep.subr.bf16.mxu0 %v2782
    %4669 = vmatpush1.bf16.msra.mxu0 %v2781
    %4670 = vmatprep.mubr.bf16.mxu0 %v270
    %4671 = vmatmul.mubr.bf16.gmra.mrb[0].mxu0 %v269
    %v4672 = vpop.f32.mrb[0].mxu0
    %v4673 = vadd.f32 %v946, %v4672
    %v4674 = vpop.f32.mrb[0].mxu0
    %v4675 = vadd.f32 %v950, %v4674
    %v4676 = vpop.f32.mrb[0].mxu0
    %v4677 = vadd.f32 %v946, %v4676
    %v4678 = vpop.f32.mrb[0].mxu0
    %v4679 = vadd.f32 %v950, %v4678
    %4680 = vmatprep.mubr.bf16.mxu0 %v289
    %4681 = vmatmul.mubr.bf16.gmra.mrb[0].mxu0 %v288
    %v4682 = vpop.f32.mrb[0].mxu0
    %v4683 = vadd.f32 %v946, %v4682
    %v4684 = vpop.f32.mrb[0].mxu0
    %v4685 = vadd.f32 %v950, %v4684
    %v4686 = vpop.f32.mrb[0].mxu0
    %v4687 = vadd.f32 %v946, %v4686
    %v4688 = vpop.f32.mrb[0].mxu0
    %v4689 = vadd.f32 %v950, %v4688
    %4690 = vmatprep.mubr.bf16.mxu0 %v308
    %4691 = vmatmul.mubr.bf16.gmra.mrb[0].mxu0 %v307
    %v4692 = vpop.f32.mrb[0].mxu0
    %v4693 = vadd.f32 %v946, %v4692
    %v4694 = vpop.f32.mrb[0].mxu0
    %v4695 = vadd.f32 %v950, %v4694
    %v4696 = vpop.f32.mrb[0].mxu0
    %v4697 = vadd.f32 %v946, %v4696
    %v4698 = vpop.f32.mrb[0].mxu0
    %v4699 = vadd.f32 %v950, %v4698
    %4700 = vmatprep.mubr.bf16.mxu0 %v327
    %4701 = vmatmul.mubr.bf16.gmra.mrb[0].mxu0 %v326
    %v4702 = vpop.f32.mrb[0].mxu0
    %v4703 = vadd.f32 %v946, %v4702
    %v4704 = vpop.f32.mrb[0].mxu0
    %v4705 = vadd.f32 %v950, %v4704
    %v4706 = vpop.f32.mrb[0].mxu0
    %v4707 = vadd.f32 %v946, %v4706
    %v4708 = vpop.f32.mrb[0].mxu0
    %v4709 = vadd.f32 %v950, %v4708
    %4710 = vdwg.mxu0
    %4711 = vmatprep.subr.bf16.mxu0 %v2786
    %4712 = vmatpush1.bf16.msra.mxu0 %v2785
    %4713 = vmatprep.subr.bf16.mxu0 %v2790
    %4714 = vmatpush1.bf16.msra.mxu0 %v2789
    %4715 = vmatprep.subr.bf16.mxu0 %v2794
    %4716 = vmatpush1.bf16.msra.mxu0 %v2793
    %4717 = vmatprep.subr.bf16.mxu0 %v2798
    %4718 = vmatpush1.bf16.msra.mxu0 %v2797
    %4719 = vmatprep.subr.bf16.mxu0 %v2802
    %4720 = vmatpush1.bf16.msra.mxu0 %v2801
    %4721 = vmatprep.subr.bf16.mxu0 %v2806
    %4722 = vmatpush1.bf16.msra.mxu0 %v2805
    %4723 = vmatprep.subr.bf16.mxu0 %v2810
    %4724 = vmatpush1.bf16.msra.mxu0 %v2809
    %4725 = vmatprep.subr.bf16.mxu0 %v2814
    %4726 = vmatpush1.bf16.msra.mxu0 %v2813
    %4727 = vmatprep.subr.bf16.mxu0 %v2818
    %4728 = vmatpush1.bf16.msra.mxu0 %v2817
    %4729 = vmatprep.subr.bf16.mxu0 %v2822
    %4730 = vmatpush1.bf16.msra.mxu0 %v2821
    %4731 = vmatprep.subr.bf16.mxu0 %v2826
    %4732 = vmatpush1.bf16.msra.mxu0 %v2825
    %4733 = vmatprep.subr.bf16.mxu0 %v2830
    %4734 = vmatpush1.bf16.msra.mxu0 %v2829
    %4735 = vmatprep.subr.bf16.mxu0 %v2834
    %4736 = vmatpush1.bf16.msra.mxu0 %v2833
    %4737 = vmatprep.subr.bf16.mxu0 %v2838
    %4738 = vmatpush1.bf16.msra.mxu0 %v2837
    %4739 = vmatprep.subr.bf16.mxu0 %v2842
    %4740 = vmatpush1.bf16.msra.mxu0 %v2841
    %4741 = vmatprep.subr.bf16.mxu0 %v2846
    %4742 = vmatpush1.bf16.msra.mxu0 %v2845
    %4743 = vmatprep.mubr.bf16.mxu0 %v272
    %4744 = vmatmul.mubr.bf16.gmra.mrb[0].mxu0 %v271
    %v4745 = vpop.f32.mrb[0].mxu0
    %v4746 = vadd.f32 %v4673, %v4745
    %v4747 = vpop.f32.mrb[0].mxu0
    %v4748 = vadd.f32 %v4675, %v4747
    %v4749 = vpop.f32.mrb[0].mxu0
    %v4750 = vadd.f32 %v4677, %v4749
    %v4751 = vpop.f32.mrb[0].mxu0
    %v4752 = vadd.f32 %v4679, %v4751
    %4753 = vmatprep.mubr.bf16.mxu0 %v291
    %4754 = vmatmul.mubr.bf16.gmra.mrb[0].mxu0 %v290
    %v4755 = vpop.f32.mrb[0].mxu0
    %v4756 = vadd.f32 %v4683, %v4755
    %v4757 = vpop.f32.mrb[0].mxu0
    %v4758 = vadd.f32 %v4685, %v4757
    %v4759 = vpop.f32.mrb[0].mxu0
    %v4760 = vadd.f32 %v4687, %v4759
    %v4761 = vpop.f32.mrb[0].mxu0
    %v4762 = vadd.f32 %v4689, %v4761
    %4763 = vmatprep.mubr.bf16.mxu0 %v310
    %4764 = vmatmul.mubr.bf16.gmra.mrb[0].mxu0 %v309
    %v4765 = vpop.f32.mrb[0].mxu0
    %v4766 = vadd.f32 %v4693, %v4765
    %v4767 = vpop.f32.mrb[0].mxu0
    %v4768 = vadd.f32 %v4695, %v4767
    %v4769 = vpop.f32.mrb[0].mxu0
    %v4770 = vadd.f32 %v4697, %v4769
    %v4771 = vpop.f32.mrb[0].mxu0
    %v4772 = vadd.f32 %v4699, %v4771
    %4773 = vmatprep.mubr.bf16.mxu0 %v329
    %4774 = vmatmul.mubr.bf16.gmra.mrb[0].mxu0 %v328
    %v4775 = vpop.f32.mrb[0].mxu0
    %v4776 = vadd.f32 %v4703, %v4775
    %v4777 = vpop.f32.mrb[0].mxu0
    %v4778 = vadd.f32 %v4705, %v4777
    %v4779 = vpop.f32.mrb[0].mxu0
    %v4780 = vadd.f32 %v4707, %v4779
    %v4781 = vpop.f32.mrb[0].mxu0
    %v4782 = vadd.f32 %v4709, %v4781
    %4783 = vdwg.mxu0
    %4784 = vmatprep.subr.bf16.mxu0 %v2850
    %4785 = vmatpush1.bf16.msra.mxu0 %v2849
    %4786 = vmatprep.subr.bf16.mxu0 %v2854
    %4787 = vmatpush1.bf16.msra.mxu0 %v2853
    %4788 = vmatprep.subr.bf16.mxu0 %v2858
    %4789 = vmatpush1.bf16.msra.mxu0 %v2857
    %4790 = vmatprep.subr.bf16.mxu0 %v2862
    %4791 = vmatpush1.bf16.msra.mxu0 %v2861
    %4792 = vmatprep.subr.bf16.mxu0 %v2866
    %4793 = vmatpush1.bf16.msra.mxu0 %v2865
    %4794 = vmatprep.subr.bf16.mxu0 %v2870
    %4795 = vmatpush1.bf16.msra.mxu0 %v2869
    %4796 = vmatprep.subr.bf16.mxu0 %v2874
    %4797 = vmatpush1.bf16.msra.mxu0 %v2873
    %4798 = vmatprep.subr.bf16.mxu0 %v2878
    %4799 = vmatpush1.bf16.msra.mxu0 %v2877
    %4800 = vmatprep.subr.bf16.mxu0 %v2882
    %4801 = vmatpush1.bf16.msra.mxu0 %v2881
    %4802 = vmatprep.subr.bf16.mxu0 %v2886
    %4803 = vmatpush1.bf16.msra.mxu0 %v2885
    %4804 = vmatprep.subr.bf16.mxu0 %v2890
    %4805 = vmatpush1.bf16.msra.mxu0 %v2889
    %4806 = vmatprep.subr.bf16.mxu0 %v2894
    %4807 = vmatpush1.bf16.msra.mxu0 %v2893
    %4808 = vmatprep.subr.bf16.mxu0 %v2898
    %4809 = vmatpush1.bf16.msra.mxu0 %v2897
    %4810 = vmatprep.subr.bf16.mxu0 %v2902
    %4811 = vmatpush1.bf16.msra.mxu0 %v2901
    %4812 = vmatprep.subr.bf16.mxu0 %v2906
    %4813 = vmatpush1.bf16.msra.mxu0 %v2905
    %4814 = vmatprep.subr.bf16.mxu0 %v2910
    %4815 = vmatpush1.bf16.msra.mxu0 %v2909
    %4816 = vmatprep.mubr.bf16.mxu0 %v274
    %4817 = vmatmul.mubr.bf16.gmra.mrb[0].mxu0 %v273
    %v4818 = vpop.f32.mrb[0].mxu0
    %v4819 = vadd.f32 %v4746, %v4818
    %v4820 = vpop.f32.mrb[0].mxu0
    %v4821 = vadd.f32 %v4748, %v4820
    %v4822 = vpop.f32.mrb[0].mxu0
    %v4823 = vadd.f32 %v4750, %v4822
    %v4824 = vpop.f32.mrb[0].mxu0
    %v4825 = vadd.f32 %v4752, %v4824
    %4826 = vmatprep.mubr.bf16.mxu0 %v293
    %4827 = vmatmul.mubr.bf16.gmra.mrb[0].mxu0 %v292
    %v4828 = vpop.f32.mrb[0].mxu0
    %v4829 = vadd.f32 %v4756, %v4828
    %v4830 = vpop.f32.mrb[0].mxu0
    %v4831 = vadd.f32 %v4758, %v4830
    %v4832 = vpop.f32.mrb[0].mxu0
    %v4833 = vadd.f32 %v4760, %v4832
    %v4834 = vpop.f32.mrb[0].mxu0
    %v4835 = vadd.f32 %v4762, %v4834
    %4836 = vmatprep.mubr.bf16.mxu0 %v312
    %4837 = vmatmul.mubr.bf16.gmra.mrb[0].mxu0 %v311
    %v4838 = vpop.f32.mrb[0].mxu0
    %v4839 = vadd.f32 %v4766, %v4838
    %v4840 = vpop.f32.mrb[0].mxu0
    %v4841 = vadd.f32 %v4768, %v4840
    %v4842 = vpop.f32.mrb[0].mxu0
    %v4843 = vadd.f32 %v4770, %v4842
    %v4844 = vpop.f32.mrb[0].mxu0
    %v4845 = vadd.f32 %v4772, %v4844
    %4846 = vmatprep.mubr.bf16.mxu0 %v331
    %4847 = vmatmul.mubr.bf16.gmra.mrb[0].mxu0 %v330
    %v4848 = vpop.f32.mrb[0].mxu0
    %v4849 = vadd.f32 %v4776, %v4848
    %v4850 = vpop.f32.mrb[0].mxu0
    %v4851 = vadd.f32 %v4778, %v4850
    %v4852 = vpop.f32.mrb[0].mxu0
    %v4853 = vadd.f32 %v4780, %v4852
    %v4854 = vpop.f32.mrb[0].mxu0
    %v4855 = vadd.f32 %v4782, %v4854
    %4856 = vdwg.mxu0
    %4857 = vmatprep.subr.bf16.mxu0 %v2914
    %4858 = vmatpush1.bf16.msra.mxu0 %v2913
    %4859 = vmatprep.subr.bf16.mxu0 %v2918
    %4860 = vmatpush1.bf16.msra.mxu0 %v2917
    %4861 = vmatprep.subr.bf16.mxu0 %v2922
    %4862 = vmatpush1.bf16.msra.mxu0 %v2921
    %4863 = vmatprep.subr.bf16.mxu0 %v2926
    %4864 = vmatpush1.bf16.msra.mxu0 %v2925
    %4865 = vmatprep.subr.bf16.mxu0 %v2930
    %4866 = vmatpush1.bf16.msra.mxu0 %v2929
    %4867 = vmatprep.subr.bf16.mxu0 %v2934
    %4868 = vmatpush1.bf16.msra.mxu0 %v2933
    %4869 = vmatprep.subr.bf16.mxu0 %v2938
    %4870 = vmatpush1.bf16.msra.mxu0 %v2937
    %4871 = vmatprep.subr.bf16.mxu0 %v2942
    %4872 = vmatpush1.bf16.msra.mxu0 %v2941
    %4873 = vmatprep.subr.bf16.mxu0 %v2946
    %4874 = vmatpush1.bf16.msra.mxu0 %v2945
    %4875 = vmatprep.subr.bf16.mxu0 %v2950
    %4876 = vmatpush1.bf16.msra.mxu0 %v2949
    %4877 = vmatprep.subr.bf16.mxu0 %v2954
    %4878 = vmatpush1.bf16.msra.mxu0 %v2953
    %4879 = vmatprep.subr.bf16.mxu0 %v2958
    %4880 = vmatpush1.bf16.msra.mxu0 %v2957
    %4881 = vmatprep.subr.bf16.mxu0 %v2962
    %4882 = vmatpush1.bf16.msra.mxu0 %v2961
    %4883 = vmatprep.subr.bf16.mxu0 %v2966
    %4884 = vmatpush1.bf16.msra.mxu0 %v2965
    %4885 = vmatprep.subr.bf16.mxu0 %v2970
    %4886 = vmatpush1.bf16.msra.mxu0 %v2969
    %4887 = vmatprep.subr.bf16.mxu0 %v2974
    %4888 = vmatpush1.bf16.msra.mxu0 %v2973
    %4889 = vmatprep.mubr.bf16.mxu0 %v276
    %4890 = vmatmul.mubr.bf16.gmra.mrb[0].mxu0 %v275
    %v4891 = vpop.f32.mrb[0].mxu0
    %v4892 = vadd.f32 %v4819, %v4891
    %v4893 = vpop.f32.mrb[0].mxu0
    %v4894 = vadd.f32 %v4821, %v4893
    %v4895 = vpop.f32.mrb[0].mxu0
    %v4896 = vadd.f32 %v4823, %v4895
    %v4897 = vpop.f32.mrb[0].mxu0
    %v4898 = vadd.f32 %v4825, %v4897
    %4899 = vmatprep.mubr.bf16.mxu0 %v295
    %4900 = vmatmul.mubr.bf16.gmra.mrb[0].mxu0 %v294
    %v4901 = vpop.f32.mrb[0].mxu0
    %v4902 = vadd.f32 %v4829, %v4901
    %v4903 = vpop.f32.mrb[0].mxu0
    %v4904 = vadd.f32 %v4831, %v4903
    %v4905 = vpop.f32.mrb[0].mxu0
    %v4906 = vadd.f32 %v4833, %v4905
    %v4907 = vpop.f32.mrb[0].mxu0
    %v4908 = vadd.f32 %v4835, %v4907
    %4909 = vmatprep.mubr.bf16.mxu0 %v314
    %4910 = vmatmul.mubr.bf16.gmra.mrb[0].mxu0 %v313
    %v4911 = vpop.f32.mrb[0].mxu0
    %v4912 = vadd.f32 %v4839, %v4911
    %v4913 = vpop.f32.mrb[0].mxu0
    %v4914 = vadd.f32 %v4841, %v4913
    %v4915 = vpop.f32.mrb[0].mxu0
    %v4916 = vadd.f32 %v4843, %v4915
    %v4917 = vpop.f32.mrb[0].mxu0
    %v4918 = vadd.f32 %v4845, %v4917
    %4919 = vmatprep.mubr.bf16.mxu0 %v333
    %4920 = vmatmul.mubr.bf16.gmra.mrb[0].mxu0 %v332
    %v4921 = vpop.f32.mrb[0].mxu0
    %v4922 = vadd.f32 %v4849, %v4921
    %v4923 = vpop.f32.mrb[0].mxu0
    %v4924 = vadd.f32 %v4851, %v4923
    %v4925 = vpop.f32.mrb[0].mxu0
    %v4926 = vadd.f32 %v4853, %v4925
    %v4927 = vpop.f32.mrb[0].mxu0
    %v4928 = vadd.f32 %v4855, %v4927
    %4929 = vdwg.mxu0
    %4930 = vmatprep.subr.bf16.mxu0 %v2978
    %4931 = vmatpush1.bf16.msra.mxu0 %v2977
    %4932 = vmatprep.subr.bf16.mxu0 %v2982
    %4933 = vmatpush1.bf16.msra.mxu0 %v2981
    %4934 = vmatprep.subr.bf16.mxu0 %v2986
    %4935 = vmatpush1.bf16.msra.mxu0 %v2985
    %4936 = vmatprep.subr.bf16.mxu0 %v2990
    %4937 = vmatpush1.bf16.msra.mxu0 %v2989
    %4938 = vmatprep.subr.bf16.mxu0 %v2994
    %4939 = vmatpush1.bf16.msra.mxu0 %v2993
    %4940 = vmatprep.subr.bf16.mxu0 %v2998
    %4941 = vmatpush1.bf16.msra.mxu0 %v2997
    %4942 = vmatprep.subr.bf16.mxu0 %v3002
    %4943 = vmatpush1.bf16.msra.mxu0 %v3001
    %4944 = vmatprep.subr.bf16.mxu0 %v3006
    %4945 = vmatpush1.bf16.msra.mxu0 %v3005
    %4946 = vmatprep.subr.bf16.mxu0 %v3010
    %4947 = vmatpush1.bf16.msra.mxu0 %v3009
    %4948 = vmatprep.subr.bf16.mxu0 %v3014
    %4949 = vmatpush1.bf16.msra.mxu0 %v3013
    %4950 = vmatprep.subr.bf16.mxu0 %v3018
    %4951 = vmatpush1.bf16.msra.mxu0 %v3017
    %4952 = vmatprep.subr.bf16.mxu0 %v3022
    %4953 = vmatpush1.bf16.msra.mxu0 %v3021
    %4954 = vmatprep.subr.bf16.mxu0 %v3026
    %4955 = vmatpush1.bf16.msra.mxu0 %v3025
    %4956 = vmatprep.subr.bf16.mxu0 %v3030
    %4957 = vmatpush1.bf16.msra.mxu0 %v3029
    %4958 = vmatprep.subr.bf16.mxu0 %v3034
    %4959 = vmatpush1.bf16.msra.mxu0 %v3033
    %4960 = vmatprep.subr.bf16.mxu0 %v3038
    %4961 = vmatpush1.bf16.msra.mxu0 %v3037
    %4962 = vmatprep.mubr.bf16.mxu0 %v278
    %4963 = vmatmul.mubr.bf16.gmra.mrb[0].mxu0 %v277
    %v4964 = vpop.f32.mrb[0].mxu0
    %v4965 = vadd.f32 %v4892, %v4964
    %v4966 = vpop.f32.mrb[0].mxu0
    %v4967 = vadd.f32 %v4894, %v4966
    %v4968 = vpop.f32.mrb[0].mxu0
    %v4969 = vadd.f32 %v4896, %v4968
    %v4970 = vpop.f32.mrb[0].mxu0
    %v4971 = vadd.f32 %v4898, %v4970
    %4972 = vmatprep.mubr.bf16.mxu0 %v297
    %4973 = vmatmul.mubr.bf16.gmra.mrb[0].mxu0 %v296
    %v4974 = vpop.f32.mrb[0].mxu0
    %v4975 = vadd.f32 %v4902, %v4974
    %v4976 = vpop.f32.mrb[0].mxu0
    %v4977 = vadd.f32 %v4904, %v4976
    %v4978 = vpop.f32.mrb[0].mxu0
    %v4979 = vadd.f32 %v4906, %v4978
    %v4980 = vpop.f32.mrb[0].mxu0
    %v4981 = vadd.f32 %v4908, %v4980
    %4982 = vmatprep.mubr.bf16.mxu0 %v316
    %4983 = vmatmul.mubr.bf16.gmra.mrb[0].mxu0 %v315
    %v4984 = vpop.f32.mrb[0].mxu0
    %v4985 = vadd.f32 %v4912, %v4984
    %v4986 = vpop.f32.mrb[0].mxu0
    %v4987 = vadd.f32 %v4914, %v4986
    %v4988 = vpop.f32.mrb[0].mxu0
    %v4989 = vadd.f32 %v4916, %v4988
    %v4990 = vpop.f32.mrb[0].mxu0
    %v4991 = vadd.f32 %v4918, %v4990
    %4992 = vmatprep.mubr.bf16.mxu0 %v335
    %4993 = vmatmul.mubr.bf16.gmra.mrb[0].mxu0 %v334
    %v4994 = vpop.f32.mrb[0].mxu0
    %v4995 = vadd.f32 %v4922, %v4994
    %v4996 = vpop.f32.mrb[0].mxu0
    %v4997 = vadd.f32 %v4924, %v4996
    %v4998 = vpop.f32.mrb[0].mxu0
    %v4999 = vadd.f32 %v4926, %v4998
    %v5000 = vpop.f32.mrb[0].mxu0
    %v5001 = vadd.f32 %v4928, %v5000
    %5002 = vdwg.mxu0
    %5003 = vmatprep.subr.bf16.mxu0 %v3042
    %5004 = vmatpush1.bf16.msra.mxu0 %v3041
    %5005 = vmatprep.subr.bf16.mxu0 %v3046
    %5006 = vmatpush1.bf16.msra.mxu0 %v3045
    %5007 = vmatprep.subr.bf16.mxu0 %v3050
    %5008 = vmatpush1.bf16.msra.mxu0 %v3049
    %5009 = vmatprep.subr.bf16.mxu0 %v3054
    %5010 = vmatpush1.bf16.msra.mxu0 %v3053
    %5011 = vmatprep.subr.bf16.mxu0 %v3058
    %5012 = vmatpush1.bf16.msra.mxu0 %v3057
    %5013 = vmatprep.subr.bf16.mxu0 %v3062
    %5014 = vmatpush1.bf16.msra.mxu0 %v3061
    %5015 = vmatprep.subr.bf16.mxu0 %v3066
    %5016 = vmatpush1.bf16.msra.mxu0 %v3065
    %5017 = vmatprep.subr.bf16.mxu0 %v3070
    %5018 = vmatpush1.bf16.msra.mxu0 %v3069
    %5019 = vmatprep.subr.bf16.mxu0 %v3074
    %5020 = vmatpush1.bf16.msra.mxu0 %v3073
    %5021 = vmatprep.subr.bf16.mxu0 %v3078
    %5022 = vmatpush1.bf16.msra.mxu0 %v3077
    %5023 = vmatprep.subr.bf16.mxu0 %v3082
    %5024 = vmatpush1.bf16.msra.mxu0 %v3081
    %5025 = vmatprep.subr.bf16.mxu0 %v3086
    %5026 = vmatpush1.bf16.msra.mxu0 %v3085
    %5027 = vmatprep.subr.bf16.mxu0 %v3090
    %5028 = vmatpush1.bf16.msra.mxu0 %v3089
    %5029 = vmatprep.subr.bf16.mxu0 %v3094
    %5030 = vmatpush1.bf16.msra.mxu0 %v3093
    %5031 = vmatprep.subr.bf16.mxu0 %v3098
    %5032 = vmatpush1.bf16.msra.mxu0 %v3097
    %5033 = vmatprep.subr.bf16.mxu0 %v3102
    %5034 = vmatpush1.bf16.msra.mxu0 %v3101
    %5035 = vmatprep.mubr.bf16.mxu0 %v280
    %5036 = vmatmul.mubr.bf16.gmra.mrb[0].mxu0 %v279
    %v5037 = vpop.f32.mrb[0].mxu0
    %v5038 = vadd.f32 %v4965, %v5037
    %v5039 = vpop.f32.mrb[0].mxu0
    %v5040 = vadd.f32 %v4967, %v5039
    %v5041 = vpop.f32.mrb[0].mxu0
    %v5042 = vadd.f32 %v4969, %v5041
    %v5043 = vpop.f32.mrb[0].mxu0
    %v5044 = vadd.f32 %v4971, %v5043
    %5045 = vmatprep.mubr.bf16.mxu0 %v299
    %5046 = vmatmul.mubr.bf16.gmra.mrb[0].mxu0 %v298
    %v5047 = vpop.f32.mrb[0].mxu0
    %v5048 = vadd.f32 %v4975, %v5047
    %v5049 = vpop.f32.mrb[0].mxu0
    %v5050 = vadd.f32 %v4977, %v5049
    %v5051 = vpop.f32.mrb[0].mxu0
    %v5052 = vadd.f32 %v4979, %v5051
    %v5053 = vpop.f32.mrb[0].mxu0
    %v5054 = vadd.f32 %v4981, %v5053
    %5055 = vmatprep.mubr.bf16.mxu0 %v318
    %5056 = vmatmul.mubr.bf16.gmra.mrb[0].mxu0 %v317
    %v5057 = vpop.f32.mrb[0].mxu0
    %v5058 = vadd.f32 %v4985, %v5057
    %v5059 = vpop.f32.mrb[0].mxu0
    %v5060 = vadd.f32 %v4987, %v5059
    %v5061 = vpop.f32.mrb[0].mxu0
    %v5062 = vadd.f32 %v4989, %v5061
    %v5063 = vpop.f32.mrb[0].mxu0
    %v5064 = vadd.f32 %v4991, %v5063
    %5065 = vmatprep.mubr.bf16.mxu0 %v337
    %5066 = vmatmul.mubr.bf16.gmra.mrb[0].mxu0 %v336
    %v5067 = vpop.f32.mrb[0].mxu0
    %v5068 = vadd.f32 %v4995, %v5067
    %v5069 = vpop.f32.mrb[0].mxu0
    %v5070 = vadd.f32 %v4997, %v5069
    %v5071 = vpop.f32.mrb[0].mxu0
    %v5072 = vadd.f32 %v4999, %v5071
    %v5073 = vpop.f32.mrb[0].mxu0
    %v5074 = vadd.f32 %v5001, %v5073
    %5075 = vdwg.mxu0
    %5076 = vmatprep.subr.bf16.mxu0 %v3106
    %5077 = vmatpush1.bf16.msra.mxu0 %v3105
    %5078 = vmatprep.subr.bf16.mxu0 %v3110
    %5079 = vmatpush1.bf16.msra.mxu0 %v3109
    %5080 = vmatprep.subr.bf16.mxu0 %v3114
    %5081 = vmatpush1.bf16.msra.mxu0 %v3113
    %5082 = vmatprep.subr.bf16.mxu0 %v3118
    %5083 = vmatpush1.bf16.msra.mxu0 %v3117
    %5084 = vmatprep.subr.bf16.mxu0 %v3122
    %5085 = vmatpush1.bf16.msra.mxu0 %v3121
    %5086 = vmatprep.subr.bf16.mxu0 %v3126
    %5087 = vmatpush1.bf16.msra.mxu0 %v3125
    %5088 = vmatprep.subr.bf16.mxu0 %v3130
    %5089 = vmatpush1.bf16.msra.mxu0 %v3129
    %5090 = vmatprep.subr.bf16.mxu0 %v3134
    %5091 = vmatpush1.bf16.msra.mxu0 %v3133
    %5092 = vmatprep.subr.bf16.mxu0 %v3138
    %5093 = vmatpush1.bf16.msra.mxu0 %v3137
    %5094 = vmatprep.subr.bf16.mxu0 %v3142
    %5095 = vmatpush1.bf16.msra.mxu0 %v3141
    %5096 = vmatprep.subr.bf16.mxu0 %v3146
    %5097 = vmatpush1.bf16.msra.mxu0 %v3145
    %5098 = vmatprep.subr.bf16.mxu0 %v3150
    %5099 = vmatpush1.bf16.msra.mxu0 %v3149
    %5100 = vmatprep.subr.bf16.mxu0 %v3154
    %5101 = vmatpush1.bf16.msra.mxu0 %v3153
    %5102 = vmatprep.subr.bf16.mxu0 %v3158
    %5103 = vmatpush1.bf16.msra.mxu0 %v3157
    %5104 = vmatprep.subr.bf16.mxu0 %v3162
    %5105 = vmatpush1.bf16.msra.mxu0 %v3161
    %5106 = vmatprep.subr.bf16.mxu0 %v3166
    %5107 = vmatpush1.bf16.msra.mxu0 %v3165
    %5108 = vmatprep.mubr.bf16.mxu0 %v282
    %5109 = vmatmul.mubr.bf16.gmra.mrb[0].mxu0 %v281
    %v5110 = vpop.f32.mrb[0].mxu0
    %v5111 = vadd.f32 %v5038, %v5110
    %v5112 = vpop.f32.mrb[0].mxu0
    %v5113 = vadd.f32 %v5040, %v5112
    %v5114 = vpop.f32.mrb[0].mxu0
    %v5115 = vadd.f32 %v5042, %v5114
    %v5116 = vpop.f32.mrb[0].mxu0
    %v5117 = vadd.f32 %v5044, %v5116
    %5118 = vmatprep.mubr.bf16.mxu0 %v301
    %5119 = vmatmul.mubr.bf16.gmra.mrb[0].mxu0 %v300
    %v5120 = vpop.f32.mrb[0].mxu0
    %v5121 = vadd.f32 %v5048, %v5120
    %v5122 = vpop.f32.mrb[0].mxu0
    %v5123 = vadd.f32 %v5050, %v5122
    %v5124 = vpop.f32.mrb[0].mxu0
    %v5125 = vadd.f32 %v5052, %v5124
    %v5126 = vpop.f32.mrb[0].mxu0
    %v5127 = vadd.f32 %v5054, %v5126
    %5128 = vmatprep.mubr.bf16.mxu0 %v320
    %5129 = vmatmul.mubr.bf16.gmra.mrb[0].mxu0 %v319
    %v5130 = vpop.f32.mrb[0].mxu0
    %v5131 = vadd.f32 %v5058, %v5130
    %v5132 = vpop.f32.mrb[0].mxu0
    %v5133 = vadd.f32 %v5060, %v5132
    %v5134 = vpop.f32.mrb[0].mxu0
    %v5135 = vadd.f32 %v5062, %v5134
    %v5136 = vpop.f32.mrb[0].mxu0
    %v5137 = vadd.f32 %v5064, %v5136
    %5138 = vmatprep.mubr.bf16.mxu0 %v339
    %5139 = vmatmul.mubr.bf16.gmra.mrb[0].mxu0 %v338
    %v5140 = vpop.f32.mrb[0].mxu0
    %v5141 = vadd.f32 %v5068, %v5140
    %v5142 = vpop.f32.mrb[0].mxu0
    %v5143 = vadd.f32 %v5070, %v5142
    %v5144 = vpop.f32.mrb[0].mxu0
    %v5145 = vadd.f32 %v5072, %v5144
    %v5146 = vpop.f32.mrb[0].mxu0
    %v5147 = vadd.f32 %v5074, %v5146
    %5148 = vdwg.mxu0
    %5149 = vmatprep.subr.bf16.mxu0 %v3170
    %5150 = vmatpush1.bf16.msra.mxu0 %v3169
    %5151 = vmatprep.subr.bf16.mxu0 %v3174
    %5152 = vmatpush1.bf16.msra.mxu0 %v3173
    %5153 = vmatprep.subr.bf16.mxu0 %v3178
    %5154 = vmatpush1.bf16.msra.mxu0 %v3177
    %5155 = vmatprep.subr.bf16.mxu0 %v3182
    %5156 = vmatpush1.bf16.msra.mxu0 %v3181
    %5157 = vmatprep.subr.bf16.mxu0 %v3186
    %5158 = vmatpush1.bf16.msra.mxu0 %v3185
    %5159 = vmatprep.subr.bf16.mxu0 %v3190
    %5160 = vmatpush1.bf16.msra.mxu0 %v3189
    %5161 = vmatprep.subr.bf16.mxu0 %v3194
    %5162 = vmatpush1.bf16.msra.mxu0 %v3193
    %5163 = vmatprep.subr.bf16.mxu0 %v3198
    %5164 = vmatpush1.bf16.msra.mxu0 %v3197
    %5165 = vmatprep.subr.bf16.mxu0 %v3202
    %5166 = vmatpush1.bf16.msra.mxu0 %v3201
    %5167 = vmatprep.subr.bf16.mxu0 %v3206
    %5168 = vmatpush1.bf16.msra.mxu0 %v3205
    %5169 = vmatprep.subr.bf16.mxu0 %v3210
    %5170 = vmatpush1.bf16.msra.mxu0 %v3209
    %5171 = vmatprep.subr.bf16.mxu0 %v3214
    %5172 = vmatpush1.bf16.msra.mxu0 %v3213
    %5173 = vmatprep.subr.bf16.mxu0 %v3218
    %5174 = vmatpush1.bf16.msra.mxu0 %v3217
    %5175 = vmatprep.subr.bf16.mxu0 %v3222
    %5176 = vmatpush1.bf16.msra.mxu0 %v3221
    %5177 = vmatprep.subr.bf16.mxu0 %v3226
    %5178 = vmatpush1.bf16.msra.mxu0 %v3225
    %5179 = vmatprep.subr.bf16.mxu0 %v3230
    %5180 = vmatpush1.bf16.msra.mxu0 %v3229
    %5181 = vmatprep.mubr.bf16.mxu0 %v284
    %5182 = vmatmul.mubr.bf16.gmra.mrb[0].mxu0 %v283
    %v5183 = vpop.f32.mrb[0].mxu0
    %v5184 = vadd.f32 %v5111, %v5183
    %v5185 = vpop.f32.mrb[0].mxu0
    %v5186 = vadd.f32 %v5113, %v5185
    %v5187 = vpop.f32.mrb[0].mxu0
    %v5188 = vadd.f32 %v5115, %v5187
    %v5189 = vpop.f32.mrb[0].mxu0
    %v5190 = vadd.f32 %v5117, %v5189
    %5191 = vmatprep.mubr.bf16.mxu0 %v303
    %5192 = vmatmul.mubr.bf16.gmra.mrb[0].mxu0 %v302
    %v5193 = vpop.f32.mrb[0].mxu0
    %v5194 = vadd.f32 %v5121, %v5193
    %v5195 = vpop.f32.mrb[0].mxu0
    %v5196 = vadd.f32 %v5123, %v5195
    %v5197 = vpop.f32.mrb[0].mxu0
    %v5198 = vadd.f32 %v5125, %v5197
    %v5199 = vpop.f32.mrb[0].mxu0
    %v5200 = vadd.f32 %v5127, %v5199
    %5201 = vmatprep.mubr.bf16.mxu0 %v322
    %5202 = vmatmul.mubr.bf16.gmra.mrb[0].mxu0 %v321
    %v5203 = vpop.f32.mrb[0].mxu0
    %v5204 = vadd.f32 %v5131, %v5203
    %v5205 = vpop.f32.mrb[0].mxu0
    %v5206 = vadd.f32 %v5133, %v5205
    %v5207 = vpop.f32.mrb[0].mxu0
    %v5208 = vadd.f32 %v5135, %v5207
    %v5209 = vpop.f32.mrb[0].mxu0
    %v5210 = vadd.f32 %v5137, %v5209
    %5211 = vmatprep.mubr.bf16.mxu0 %v341
    %5212 = vmatmul.mubr.bf16.gmra.mrb[0].mxu0 %v340
    %v5213 = vpop.f32.mrb[0].mxu0
    %v5214 = vadd.f32 %v5141, %v5213
    %v5215 = vpop.f32.mrb[0].mxu0
    %v5216 = vadd.f32 %v5143, %v5215
    %v5217 = vpop.f32.mrb[0].mxu0
    %v5218 = vadd.f32 %v5145, %v5217
    %v5219 = vpop.f32.mrb[0].mxu0
    %v5220 = vadd.f32 %v5147, %v5219
    %5221 = vdwg.mxu0
    %5222 = vmatprep.subr.bf16.mxu0 %v3234
    %5223 = vmatpush1.bf16.msra.mxu0 %v3233
    %5224 = vmatprep.subr.bf16.mxu0 %v3238
    %5225 = vmatpush1.bf16.msra.mxu0 %v3237
    %5226 = vmatprep.subr.bf16.mxu0 %v3242
    %5227 = vmatpush1.bf16.msra.mxu0 %v3241
    %5228 = vmatprep.subr.bf16.mxu0 %v3246
    %5229 = vmatpush1.bf16.msra.mxu0 %v3245
    %5230 = vmatprep.subr.bf16.mxu0 %v3250
    %5231 = vmatpush1.bf16.msra.mxu0 %v3249
    %5232 = vmatprep.subr.bf16.mxu0 %v3254
    %5233 = vmatpush1.bf16.msra.mxu0 %v3253
    %5234 = vmatprep.subr.bf16.mxu0 %v3258
    %5235 = vmatpush1.bf16.msra.mxu0 %v3257
    %5236 = vmatprep.subr.bf16.mxu0 %v3262
    %5237 = vmatpush1.bf16.msra.mxu0 %v3261
    %5238 = vmatprep.subr.bf16.mxu0 %v3266
    %5239 = vmatpush1.bf16.msra.mxu0 %v3265
    %5240 = vmatprep.subr.bf16.mxu0 %v3270
    %5241 = vmatpush1.bf16.msra.mxu0 %v3269
    %5242 = vmatprep.subr.bf16.mxu0 %v3274
    %5243 = vmatpush1.bf16.msra.mxu0 %v3273
    %5244 = vmatprep.subr.bf16.mxu0 %v3278
    %5245 = vmatpush1.bf16.msra.mxu0 %v3277
    %5246 = vmatprep.subr.bf16.mxu0 %v3282
    %5247 = vmatpush1.bf16.msra.mxu0 %v3281
    %5248 = vmatprep.subr.bf16.mxu0 %v3286
    %5249 = vmatpush1.bf16.msra.mxu0 %v3285
    %5250 = vmatprep.subr.bf16.mxu0 %v3290
    %5251 = vmatpush1.bf16.msra.mxu0 %v3289
    %5252 = vmatprep.subr.bf16.mxu0 %v3294
    %5253 = vmatpush1.bf16.msra.mxu0 %v3293
    %5254 = vmatprep.mubr.bf16.mxu0 %v286
    %5255 = vmatmul.mubr.bf16.gmra.mrb[0].mxu0 %v285
    %v5256 = vpop.f32.mrb[0].mxu0
    %v5257 = vadd.f32 %v5184, %v5256
    %v5258 = vpop.f32.mrb[0].mxu0
    %v5259 = vadd.f32 %v5186, %v5258
    %v5260 = vpop.f32.mrb[0].mxu0
    %v5261 = vadd.f32 %v5188, %v5260
    %v5262 = vpop.f32.mrb[0].mxu0
    %v5263 = vadd.f32 %v5190, %v5262
    %5264 = vmatprep.mubr.bf16.mxu0 %v305
    %5265 = vmatmul.mubr.bf16.gmra.mrb[0].mxu0 %v304
    %v5266 = vpop.f32.mrb[0].mxu0
    %v5267 = vadd.f32 %v5194, %v5266
    %v5268 = vpop.f32.mrb[0].mxu0
    %v5269 = vadd.f32 %v5196, %v5268
    %v5270 = vpop.f32.mrb[0].mxu0
    %v5271 = vadd.f32 %v5198, %v5270
    %v5272 = vpop.f32.mrb[0].mxu0
    %v5273 = vadd.f32 %v5200, %v5272
    %5274 = vmatprep.mubr.bf16.mxu0 %v324
    %5275 = vmatmul.mubr.bf16.gmra.mrb[0].mxu0 %v323
    %v5276 = vpop.f32.mrb[0].mxu0
    %v5277 = vadd.f32 %v5204, %v5276
    %v5278 = vpop.f32.mrb[0].mxu0
    %v5279 = vadd.f32 %v5206, %v5278
    %v5280 = vpop.f32.mrb[0].mxu0
    %v5281 = vadd.f32 %v5208, %v5280
    %v5282 = vpop.f32.mrb[0].mxu0
    %v5283 = vadd.f32 %v5210, %v5282
    %5284 = vmatprep.mubr.bf16.mxu0 %v343
    %5285 = vmatmul.mubr.bf16.gmra.mrb[0].mxu0 %v342
    %v5286 = vpop.f32.mrb[0].mxu0
    %v5287 = vadd.f32 %v5214, %v5286
    %v5288 = vpop.f32.mrb[0].mxu0
    %v5289 = vadd.f32 %v5216, %v5288
    %v5290 = vpop.f32.mrb[0].mxu0
    %v5291 = vadd.f32 %v5218, %v5290
    %v5292 = vpop.f32.mrb[0].mxu0
    %v5293 = vadd.f32 %v5220, %v5292
    %5294 = vdwg.mxu0
    %5295 = vmatprep.subr.bf16.mxu0 %v3298
    %5296 = vmatpush1.bf16.msra.mxu0 %v3297
    %5297 = vmatprep.subr.bf16.mxu0 %v3302
    %5298 = vmatpush1.bf16.msra.mxu0 %v3301
    %5299 = vmatprep.subr.bf16.mxu0 %v3306
    %5300 = vmatpush1.bf16.msra.mxu0 %v3305
    %5301 = vmatprep.subr.bf16.mxu0 0
    %5302 = vmatpush1.bf16.msra.mxu0 0
    %5303 = vmatprep.subr.bf16.mxu0 0
    %5304 = vmatpush1.bf16.msra.mxu0 0
    %5305 = vmatprep.subr.bf16.mxu0 0
    %5306 = vmatpush1.bf16.msra.mxu0 0
    %5307 = vmatprep.subr.bf16.mxu0 0
    %5308 = vmatpush1.bf16.msra.mxu0 0
    %5309 = vmatprep.subr.bf16.mxu0 0
    %5310 = vmatpush1.bf16.msra.mxu0 0
    %5311 = vmatprep.subr.bf16.mxu0 0
    %5312 = vmatpush1.bf16.msra.mxu0 0
    %5313 = vmatprep.subr.bf16.mxu0 0
    %5314 = vmatpush1.bf16.msra.mxu0 0
    %5315 = vmatprep.subr.bf16.mxu0 0
    %5316 = vmatpush1.bf16.msra.mxu0 0
    %5317 = vmatprep.subr.bf16.mxu0 0
    %5318 = vmatpush1.bf16.msra.mxu0 0
    %5319 = vmatprep.subr.bf16.mxu0 0
    %5320 = vmatpush1.bf16.msra.mxu0 0
    %5321 = vmatprep.subr.bf16.mxu0 0
    %5322 = vmatpush1.bf16.msra.mxu0 0
    %5323 = vmatprep.subr.bf16.mxu0 0
    %5324 = vmatpush1.bf16.msra.mxu0 0
    %5325 = vmatprep.subr.bf16.mxu0 0
    %5326 = vmatpush1.bf16.msra.mxu0 0
    %5327 = vmatprep.mubr.bf16.mxu0 0
    %5328 = vmatmul.mubr.bf16.gmra.mrb[0].mxu0 %v3897
    %v5329 = vpop.f32.mrb[0].mxu0
    %v5330 = vadd.f32 %v5257, %v5329
    %v5331 = vpop.f32.mrb[0].mxu0
    %v5332 = vadd.f32 %v5259, %v5331
    %v5333 = vpop.f32.mrb[0].mxu0
    %v5334 = vadd.f32 %v5261, %v5333
    %v5335 = vpop.f32.mrb[0].mxu0
    %v5336 = vadd.f32 %v5263, %v5335
    %5337 = vmatprep.mubr.bf16.mxu0 0
    %5338 = vmatmul.mubr.bf16.gmra.mrb[0].mxu0 %v3900
    %v5339 = vpop.f32.mrb[0].mxu0
    %v5340 = vadd.f32 %v5267, %v5339
    %v5341 = vpop.f32.mrb[0].mxu0
    %v5342 = vadd.f32 %v5269, %v5341
    %v5343 = vpop.f32.mrb[0].mxu0
    %v5344 = vadd.f32 %v5271, %v5343
    %v5345 = vpop.f32.mrb[0].mxu0
    %v5346 = vadd.f32 %v5273, %v5345
    %5347 = vmatprep.mubr.bf16.mxu0 0
    %5348 = vmatmul.mubr.bf16.gmra.mrb[0].mxu0 %v3903
    %v5349 = vpop.f32.mrb[0].mxu0
    %v5350 = vadd.f32 %v5277, %v5349
    %v5351 = vpop.f32.mrb[0].mxu0
    %v5352 = vadd.f32 %v5279, %v5351
    %v5353 = vpop.f32.mrb[0].mxu0
    %v5354 = vadd.f32 %v5281, %v5353
    %v5355 = vpop.f32.mrb[0].mxu0
    %v5356 = vadd.f32 %v5283, %v5355
    %5357 = vmatprep.mubr.bf16.mxu0 0
    %5358 = vmatmul.mubr.bf16.gmra.mrb[0].mxu0 %v3906
    %v5359 = vpop.f32.mrb[0].mxu0
    %v5360 = vadd.f32 %v5287, %v5359
    %v5361 = vpop.f32.mrb[0].mxu0
    %v5362 = vadd.f32 %v5289, %v5361
    %v5363 = vpop.f32.mrb[0].mxu0
    %v5364 = vadd.f32 %v5291, %v5363
    %v5365 = vpop.f32.mrb[0].mxu0
    %v5366 = vadd.f32 %v5293, %v5365
    %5367 = vdwg.mxu0
    %v5368 = vmax.f32 %v4600, 0.0
    %v5369 = vmax.f32 %v4602, 0.0
    %v5370 = vmax.f32 %v5330, 0.0
    %v5371 = vmax.f32 %v5332, 0.0
    %v5372 = vmax.f32 %v4604, 0.0
    %v5373 = vmax.f32 %v4606, 0.0
    %v5374 = vmax.f32 %v5334, 0.0
    %v5375 = vmax.f32 %v5336, 0.0
    %v5376 = vmax.f32 %v4610, 0.0
    %v5377 = vmax.f32 %v4612, 0.0
    %v5378 = vmax.f32 %v5340, 0.0
    %v5379 = vmax.f32 %v5342, 0.0
    %v5380 = vmax.f32 %v4614, 0.0
    %v5381 = vmax.f32 %v4616, 0.0
    %v5382 = vmax.f32 %v5344, 0.0
    %v5383 = vmax.f32 %v5346, 0.0
    %v5384 = vmax.f32 %v4620, 0.0
    %v5385 = vmax.f32 %v4622, 0.0
    %v5386 = vmax.f32 %v5350, 0.0
    %v5387 = vmax.f32 %v5352, 0.0
    %v5388 = vmax.f32 %v4624, 0.0
    %v5389 = vmax.f32 %v4626, 0.0
    %v5390 = vmax.f32 %v5354, 0.0
    %v5391 = vmax.f32 %v5356, 0.0
    %v5392 = vmax.f32 %v4630, 0.0
    %v5393 = vmax.f32 %v4632, 0.0
    %v5394 = vmax.f32 %v5360, 0.0
    %v5395 = vmax.f32 %v5362, 0.0
    %v5396 = vmax.f32 %v4634, 0.0
    %v5397 = vmax.f32 %v4636, 0.0
    %v5398 = vmax.f32 %v5364, 0.0
    %v5399 = vmax.f32 %v5366, 0.0
    %v5400 = vpack.c.bf16 %v5372, %v5368
    %v5401 = vpack.c.bf16 %v5373, %v5369
    %v5402 = vpack.c.bf16 %v5374, %v5370
    %v5403 = vpack.c.bf16 %v5375, %v5371
    %v5404 = vpack.c.bf16 %v5380, %v5376
    %v5405 = vpack.c.bf16 %v5381, %v5377
    %v5406 = vpack.c.bf16 %v5382, %v5378
    %v5407 = vpack.c.bf16 %v5383, %v5379
    %v5408 = vpack.c.bf16 %v5388, %v5384
    %v5409 = vpack.c.bf16 %v5389, %v5385
    %v5410 = vpack.c.bf16 %v5390, %v5386
    %v5411 = vpack.c.bf16 %v5391, %v5387
    %v5412 = vpack.c.bf16 %v5396, %v5392
    %v5413 = vpack.c.bf16 %v5397, %v5393
    %v5414 = vpack.c.bf16 %v5398, %v5394
    %v5415 = vpack.c.bf16 %v5399, %v5395
    %v5416 = vld [vmem:[#allocation8] sm:$0xff]
    %v5417 = vld [vmem:[#allocation8 + $0x8] sm:$0xff]
    %v5418 = vld [vmem:[#allocation8 + $0x10] sm:$0xff]
    %v5419 = vld [vmem:[#allocation8 + $0x18] sm:$0xff]
    %v5420 = vld [vmem:[#allocation8 + $0x20] sm:$0xff]
    %v5421 = vld [vmem:[#allocation8 + $0x28] sm:$0xff]
    %v5422 = vld [vmem:[#allocation8 + $0x30] sm:$0xff]
    %v5423 = vld [vmem:[#allocation8 + $0x38] sm:$0xff]
    %v5424 = vld [vmem:[#allocation8 + $0x40] sm:$0xff]
    %v5425 = vld [vmem:[#allocation8 + $0x48] sm:$0xff]
    %v5426 = vld [vmem:[#allocation8 + $0x50] sm:$0xff]
    %v5427 = vld [vmem:[#allocation8 + $0x58] sm:$0xff]
    %v5428 = vld [vmem:[#allocation8 + $0x60] sm:$0xff]
    %v5429 = vld [vmem:[#allocation8 + $0x68] sm:$0xff]
    %v5430 = vld [vmem:[#allocation8 + $0x70] sm:$0xff]
    %v5431 = vld [vmem:[#allocation8 + $0x78] sm:$0xff]
    %v5432 = vld [vmem:[#allocation8 + $0x80] sm:$0xff]
    %v5433 = vld [vmem:[#allocation8 + $0x88] sm:$0xff]
    %v5434 = vld [vmem:[#allocation8 + $0x90] sm:$0xff]
    %v5435 = vld [vmem:[#allocation8 + $0x98] sm:$0xff]
    %v5436 = vld [vmem:[#allocation8 + $0xa0] sm:$0xff]
    %v5437 = vld [vmem:[#allocation8 + $0xa8] sm:$0xff]
    %v5438 = vld [vmem:[#allocation8 + $0xb0] sm:$0xff]
    %v5439 = vld [vmem:[#allocation8 + $0xb8] sm:$0xff]
    %v5440 = vld [vmem:[#allocation8 + $0xc0] sm:$0xff]
    %v5441 = vld [vmem:[#allocation8 + $0xc8] sm:$0xff]
    %v5442 = vld [vmem:[#allocation8 + $0xd0] sm:$0xff]
    %v5443 = vld [vmem:[#allocation8 + $0xd8] sm:$0xff]
    %v5444 = vld [vmem:[#allocation8 + $0xe0] sm:$0xff]
    %v5445 = vld [vmem:[#allocation8 + $0xe8] sm:$0xff]
    %v5446 = vld [vmem:[#allocation8 + $0xf0] sm:$0xff]
    %v5447 = vld [vmem:[#allocation8 + $0xf8] sm:$0xff]
    %v5448 = vld [vmem:[#allocation8 + $0x100] sm:$0xff]
    %v5449 = vld [vmem:[#allocation8 + $0x108] sm:$0xff]
    %v5450 = vld [vmem:[#allocation8 + $0x110] sm:$0xff]
    %v5451 = vld [vmem:[#allocation8 + $0x118] sm:$0xff]
    %v5452 = vld [vmem:[#allocation8 + $0x120] sm:$0xff]
    %v5453 = vld [vmem:[#allocation8 + $0x128] sm:$0xff]
    %v5454 = vld [vmem:[#allocation8 + $0x130] sm:$0xff]
    %v5455 = vld [vmem:[#allocation8 + $0x138] sm:$0xff]
    %v5456 = vld [vmem:[#allocation8 + $0x140] sm:$0xff]
    %v5457 = vld [vmem:[#allocation8 + $0x148] sm:$0xff]
    %v5458 = vld [vmem:[#allocation8 + $0x150] sm:$0xff]
    %v5459 = vld [vmem:[#allocation8 + $0x158] sm:$0xff]
    %v5460 = vld [vmem:[#allocation8 + $0x160] sm:$0xff]
    %v5461 = vld [vmem:[#allocation8 + $0x168] sm:$0xff]
    %v5462 = vld [vmem:[#allocation8 + $0x170] sm:$0xff]
    %v5463 = vld [vmem:[#allocation8 + $0x178] sm:$0xff]
    %v5464 = vld [vmem:[#allocation8 + $0x180] sm:$0xff]
    %v5465 = vld [vmem:[#allocation8 + $0x188] sm:$0xff]
    %v5466 = vld [vmem:[#allocation8 + $0x190] sm:$0xff]
    %v5467 = vld [vmem:[#allocation8 + $0x198] sm:$0xff]
    %v5468 = vld [vmem:[#allocation8 + $0x1a0] sm:$0xff]
    %v5469 = vld [vmem:[#allocation8 + $0x1a8] sm:$0xff]
    %v5470 = vld [vmem:[#allocation8 + $0x1b0] sm:$0xff]
    %v5471 = vld [vmem:[#allocation8 + $0x1b8] sm:$0xff]
    %v5472 = vld [vmem:[#allocation8 + $0x1c0] sm:$0xff]
    %v5473 = vld [vmem:[#allocation8 + $0x1c8] sm:$0xff]
    %v5474 = vld [vmem:[#allocation8 + $0x1d0] sm:$0xff]
    %v5475 = vld [vmem:[#allocation8 + $0x1d8] sm:$0xff]
    %v5476 = vld [vmem:[#allocation8 + $0x1e0] sm:$0xff]
    %v5477 = vld [vmem:[#allocation8 + $0x1e8] sm:$0xff]
    %v5478 = vld [vmem:[#allocation8 + $0x1f0] sm:$0xff]
    %v5479 = vld [vmem:[#allocation8 + $0x1f8] sm:$0xff]
    %v5480 = vld [vmem:[#allocation10] sm:$0x3]
    %v5482 = vlaneseq
    %v5483 = vshrl.u32 %v5482, 7
    %v5484 = vsub.s32 0, %v5483
    %v5485 = vrot.slane %v5480, %v5484
    %v5486 = vlaneseq
    %v5487 = vshrl.u32 %v5486, 7
    %v5488 = vsub.s32 1, %v5487
    %v5489 = vrot.slane %v5480, %v5488
    %v5556 = vunpack.c.l.b16 %v5416
    %v5557 = vunpack.c.h.b16 %v5416
    %v5558 = vunpack.c.l.b16 %v5417
    %v5559 = vunpack.c.h.b16 %v5417
    %v5560 = vunpack.c.l.b16 %v5418
    %v5561 = vunpack.c.h.b16 %v5418
    %v5562 = vunpack.c.l.b16 %v5419
    %v5563 = vunpack.c.h.b16 %v5419
    %v5564 = vunpack.c.l.b16 %v5420
    %v5565 = vunpack.c.h.b16 %v5420
    %v5566 = vunpack.c.l.b16 %v5421
    %v5567 = vunpack.c.h.b16 %v5421
    %v5568 = vunpack.c.l.b16 %v5422
    %v5569 = vunpack.c.h.b16 %v5422
    %v5570 = vunpack.c.l.b16 %v5423
    %v5571 = vunpack.c.h.b16 %v5423
    %v5572 = vunpack.c.l.b16 %v5424
    %v5573 = vunpack.c.h.b16 %v5424
    %v5574 = vunpack.c.l.b16 %v5425
    %v5575 = vunpack.c.h.b16 %v5425
    %v5576 = vunpack.c.l.b16 %v5426
    %v5577 = vunpack.c.h.b16 %v5426
    %v5578 = vunpack.c.l.b16 %v5427
    %v5579 = vunpack.c.h.b16 %v5427
    %v5580 = vunpack.c.l.b16 %v5428
    %v5581 = vunpack.c.h.b16 %v5428
    %v5582 = vunpack.c.l.b16 %v5429
    %v5583 = vunpack.c.h.b16 %v5429
    %v5584 = vunpack.c.l.b16 %v5430
    %v5585 = vunpack.c.h.b16 %v5430
    %v5586 = vunpack.c.l.b16 %v5431
    %v5587 = vunpack.c.h.b16 %v5431
    %v5588 = vunpack.c.l.b16 %v5432
    %v5589 = vunpack.c.h.b16 %v5432
    %v5590 = vunpack.c.l.b16 %v5433
    %v5591 = vunpack.c.h.b16 %v5433
    %v5592 = vunpack.c.l.b16 %v5434
    %v5593 = vunpack.c.h.b16 %v5434
    %v5594 = vunpack.c.l.b16 %v5435
    %v5595 = vunpack.c.h.b16 %v5435
    %v5596 = vunpack.c.l.b16 %v5436
    %v5597 = vunpack.c.h.b16 %v5436
    %v5598 = vunpack.c.l.b16 %v5437
    %v5599 = vunpack.c.h.b16 %v5437
    %v5600 = vunpack.c.l.b16 %v5438
    %v5601 = vunpack.c.h.b16 %v5438
    %v5602 = vunpack.c.l.b16 %v5439
    %v5603 = vunpack.c.h.b16 %v5439
    %v5604 = vunpack.c.l.b16 %v5440
    %v5605 = vunpack.c.h.b16 %v5440
    %v5606 = vunpack.c.l.b16 %v5441
    %v5607 = vunpack.c.h.b16 %v5441
    %v5608 = vunpack.c.l.b16 %v5442
    %v5609 = vunpack.c.h.b16 %v5442
    %v5610 = vunpack.c.l.b16 %v5443
    %v5611 = vunpack.c.h.b16 %v5443
    %v5612 = vunpack.c.l.b16 %v5444
    %v5613 = vunpack.c.h.b16 %v5444
    %v5614 = vunpack.c.l.b16 %v5445
    %v5615 = vunpack.c.h.b16 %v5445
    %v5616 = vunpack.c.l.b16 %v5446
    %v5617 = vunpack.c.h.b16 %v5446
    %v5618 = vunpack.c.l.b16 %v5447
    %v5619 = vunpack.c.h.b16 %v5447
    %v5620 = vunpack.c.l.b16 %v5448
    %v5621 = vunpack.c.h.b16 %v5448
    %v5622 = vunpack.c.l.b16 %v5449
    %v5623 = vunpack.c.h.b16 %v5449
    %v5624 = vunpack.c.l.b16 %v5450
    %v5625 = vunpack.c.h.b16 %v5450
    %v5626 = vunpack.c.l.b16 %v5451
    %v5627 = vunpack.c.h.b16 %v5451
    %v5628 = vunpack.c.l.b16 %v5452
    %v5629 = vunpack.c.h.b16 %v5452
    %v5630 = vunpack.c.l.b16 %v5453
    %v5631 = vunpack.c.h.b16 %v5453
    %v5632 = vunpack.c.l.b16 %v5454
    %v5633 = vunpack.c.h.b16 %v5454
    %v5634 = vunpack.c.l.b16 %v5455
    %v5635 = vunpack.c.h.b16 %v5455
    %v5636 = vunpack.c.l.b16 %v5456
    %v5637 = vunpack.c.h.b16 %v5456
    %v5638 = vunpack.c.l.b16 %v5457
    %v5639 = vunpack.c.h.b16 %v5457
    %v5640 = vunpack.c.l.b16 %v5458
    %v5641 = vunpack.c.h.b16 %v5458
    %v5642 = vunpack.c.l.b16 %v5459
    %v5643 = vunpack.c.h.b16 %v5459
    %v5644 = vunpack.c.l.b16 %v5460
    %v5645 = vunpack.c.h.b16 %v5460
    %v5646 = vunpack.c.l.b16 %v5461
    %v5647 = vunpack.c.h.b16 %v5461
    %v5648 = vunpack.c.l.b16 %v5462
    %v5649 = vunpack.c.h.b16 %v5462
    %v5650 = vunpack.c.l.b16 %v5463
    %v5651 = vunpack.c.h.b16 %v5463
    %v5652 = vunpack.c.l.b16 %v5464
    %v5653 = vunpack.c.h.b16 %v5464
    %v5654 = vunpack.c.l.b16 %v5465
    %v5655 = vunpack.c.h.b16 %v5465
    %v5656 = vunpack.c.l.b16 %v5466
    %v5657 = vunpack.c.h.b16 %v5466
    %v5658 = vunpack.c.l.b16 %v5467
    %v5659 = vunpack.c.h.b16 %v5467
    %v5660 = vunpack.c.l.b16 %v5468
    %v5661 = vunpack.c.h.b16 %v5468
    %v5662 = vunpack.c.l.b16 %v5469
    %v5663 = vunpack.c.h.b16 %v5469
    %v5664 = vunpack.c.l.b16 %v5470
    %v5665 = vunpack.c.h.b16 %v5470
    %v5666 = vunpack.c.l.b16 %v5471
    %v5667 = vunpack.c.h.b16 %v5471
    %v5668 = vunpack.c.l.b16 %v5472
    %v5669 = vunpack.c.h.b16 %v5472
    %v5670 = vunpack.c.l.b16 %v5473
    %v5671 = vunpack.c.h.b16 %v5473
    %v5672 = vunpack.c.l.b16 %v5474
    %v5673 = vunpack.c.h.b16 %v5474
    %v5674 = vunpack.c.l.b16 %v5475
    %v5675 = vunpack.c.h.b16 %v5475
    %v5676 = vunpack.c.l.b16 %v5476
    %v5677 = vunpack.c.h.b16 %v5476
    %v5678 = vunpack.c.l.b16 %v5477
    %v5679 = vunpack.c.h.b16 %v5477
    %v5680 = vunpack.c.l.b16 %v5478
    %v5681 = vunpack.c.h.b16 %v5478
    %v5682 = vunpack.c.l.b16 %v5479
    %v5683 = vunpack.c.h.b16 %v5479
    %v5684 = vpack.c.b16 %v5558, %v5556
    %v5685 = vpack.c.b16 %v5559, %v5557
    %v5686 = vpack.c.b16 %v5562, %v5560
    %v5687 = vpack.c.b16 %v5563, %v5561
    %v5688 = vpack.c.b16 %v5566, %v5564
    %v5689 = vpack.c.b16 %v5567, %v5565
    %v5690 = vpack.c.b16 %v5570, %v5568
    %v5691 = vpack.c.b16 %v5571, %v5569
    %v5692 = vpack.c.b16 %v5574, %v5572
    %v5693 = vpack.c.b16 %v5575, %v5573
    %v5694 = vpack.c.b16 %v5578, %v5576
    %v5695 = vpack.c.b16 %v5579, %v5577
    %v5696 = vpack.c.b16 %v5582, %v5580
    %v5697 = vpack.c.b16 %v5583, %v5581
    %v5698 = vpack.c.b16 %v5586, %v5584
    %v5699 = vpack.c.b16 %v5587, %v5585
    %v5700 = vpack.c.b16 %v5590, %v5588
    %v5701 = vpack.c.b16 %v5591, %v5589
    %v5702 = vpack.c.b16 %v5594, %v5592
    %v5703 = vpack.c.b16 %v5595, %v5593
    %v5704 = vpack.c.b16 %v5598, %v5596
    %v5705 = vpack.c.b16 %v5599, %v5597
    %v5706 = vpack.c.b16 %v5602, %v5600
    %v5707 = vpack.c.b16 %v5603, %v5601
    %v5708 = vpack.c.b16 %v5606, %v5604
    %v5709 = vpack.c.b16 %v5607, %v5605
    %v5710 = vpack.c.b16 %v5610, %v5608
    %v5711 = vpack.c.b16 %v5611, %v5609
    %v5712 = vpack.c.b16 %v5614, %v5612
    %v5713 = vpack.c.b16 %v5615, %v5613
    %v5714 = vpack.c.b16 %v5618, %v5616
    %v5715 = vpack.c.b16 %v5619, %v5617
    %v5716 = vpack.c.b16 %v5622, %v5620
    %v5717 = vpack.c.b16 %v5623, %v5621
    %v5718 = vpack.c.b16 %v5626, %v5624
    %v5719 = vpack.c.b16 %v5627, %v5625
    %v5720 = vpack.c.b16 %v5630, %v5628
    %v5721 = vpack.c.b16 %v5631, %v5629
    %v5722 = vpack.c.b16 %v5634, %v5632
    %v5723 = vpack.c.b16 %v5635, %v5633
    %v5724 = vpack.c.b16 %v5638, %v5636
    %v5725 = vpack.c.b16 %v5639, %v5637
    %v5726 = vpack.c.b16 %v5642, %v5640
    %v5727 = vpack.c.b16 %v5643, %v5641
    %v5728 = vpack.c.b16 %v5646, %v5644
    %v5729 = vpack.c.b16 %v5647, %v5645
    %v5730 = vpack.c.b16 %v5650, %v5648
    %v5731 = vpack.c.b16 %v5651, %v5649
    %v5732 = vpack.c.b16 %v5654, %v5652
    %v5733 = vpack.c.b16 %v5655, %v5653
    %v5734 = vpack.c.b16 %v5658, %v5656
    %v5735 = vpack.c.b16 %v5659, %v5657
    %v5736 = vpack.c.b16 %v5662, %v5660
    %v5737 = vpack.c.b16 %v5663, %v5661
    %v5738 = vpack.c.b16 %v5666, %v5664
    %v5739 = vpack.c.b16 %v5667, %v5665
    %v5740 = vpack.c.b16 %v5670, %v5668
    %v5741 = vpack.c.b16 %v5671, %v5669
    %v5742 = vpack.c.b16 %v5674, %v5672
    %v5743 = vpack.c.b16 %v5675, %v5673
    %v5744 = vpack.c.b16 %v5678, %v5676
    %v5745 = vpack.c.b16 %v5679, %v5677
    %v5746 = vpack.c.b16 %v5682, %v5680
    %v5747 = vpack.c.b16 %v5683, %v5681
    %5812 = vmatprep.subr.bf16.mxu0 %v5685
    %5813 = vmatpush1.bf16.msra.mxu0 %v5684
    %5814 = vmatprep.subr.bf16.mxu0 %v5687
    %5815 = vmatpush1.bf16.msra.mxu0 %v5686
    %5816 = vmatprep.subr.bf16.mxu0 %v5689
    %5817 = vmatpush1.bf16.msra.mxu0 %v5688
    %5818 = vmatprep.subr.bf16.mxu0 %v5691
    %5819 = vmatpush1.bf16.msra.mxu0 %v5690
    %5820 = vmatprep.subr.bf16.mxu0 %v5693
    %5821 = vmatpush1.bf16.msra.mxu0 %v5692
    %5822 = vmatprep.subr.bf16.mxu0 %v5695
    %5823 = vmatpush1.bf16.msra.mxu0 %v5694
    %5824 = vmatprep.subr.bf16.mxu0 %v5697
    %5825 = vmatpush1.bf16.msra.mxu0 %v5696
    %5826 = vmatprep.subr.bf16.mxu0 %v5699
    %5827 = vmatpush1.bf16.msra.mxu0 %v5698
    %5828 = vmatprep.subr.bf16.mxu0 %v5701
    %5829 = vmatpush1.bf16.msra.mxu0 %v5700
    %5830 = vmatprep.subr.bf16.mxu0 %v5703
    %5831 = vmatpush1.bf16.msra.mxu0 %v5702
    %5832 = vmatprep.subr.bf16.mxu0 %v5705
    %5833 = vmatpush1.bf16.msra.mxu0 %v5704
    %5834 = vmatprep.subr.bf16.mxu0 %v5707
    %5835 = vmatpush1.bf16.msra.mxu0 %v5706
    %5836 = vmatprep.subr.bf16.mxu0 %v5709
    %5837 = vmatpush1.bf16.msra.mxu0 %v5708
    %5838 = vmatprep.subr.bf16.mxu0 %v5711
    %5839 = vmatpush1.bf16.msra.mxu0 %v5710
    %5840 = vmatprep.subr.bf16.mxu0 %v5713
    %5841 = vmatpush1.bf16.msra.mxu0 %v5712
    %5842 = vmatprep.subr.bf16.mxu0 %v5715
    %5843 = vmatpush1.bf16.msra.mxu0 %v5714
    %5844 = vmatprep.mubr.bf16.mxu0 %v5401
    %5845 = vmatmul.mubr.bf16.gmra.mrb[0].mxu0 %v5400
    %v5846 = vpop.f32.mrb[0].mxu0
    %v5847 = vadd.f32 %v5485, %v5846
    %v5848 = vpop.f32.mrb[0].mxu0
    %v5849 = vadd.f32 %v5489, %v5848
    %v5850 = vpop.f32.mrb[0].mxu0
    %v5851 = vadd.f32 %v5485, %v5850
    %v5852 = vpop.f32.mrb[0].mxu0
    %v5853 = vadd.f32 %v5489, %v5852
    %5854 = vmatprep.mubr.bf16.mxu0 %v5405
    %5855 = vmatmul.mubr.bf16.gmra.mrb[0].mxu0 %v5404
    %v5856 = vpop.f32.mrb[0].mxu0
    %v5857 = vadd.f32 %v5485, %v5856
    %v5858 = vpop.f32.mrb[0].mxu0
    %v5859 = vadd.f32 %v5489, %v5858
    %v5860 = vpop.f32.mrb[0].mxu0
    %v5861 = vadd.f32 %v5485, %v5860
    %v5862 = vpop.f32.mrb[0].mxu0
    %v5863 = vadd.f32 %v5489, %v5862
    %5864 = vmatprep.mubr.bf16.mxu0 %v5409
    %5865 = vmatmul.mubr.bf16.gmra.mrb[0].mxu0 %v5408
    %v5866 = vpop.f32.mrb[0].mxu0
    %v5867 = vadd.f32 %v5485, %v5866
    %v5868 = vpop.f32.mrb[0].mxu0
    %v5869 = vadd.f32 %v5489, %v5868
    %v5870 = vpop.f32.mrb[0].mxu0
    %v5871 = vadd.f32 %v5485, %v5870
    %v5872 = vpop.f32.mrb[0].mxu0
    %v5873 = vadd.f32 %v5489, %v5872
    %5874 = vmatprep.mubr.bf16.mxu0 %v5413
    %5875 = vmatmul.mubr.bf16.gmra.mrb[0].mxu0 %v5412
    %v5876 = vpop.f32.mrb[0].mxu0
    %v5877 = vadd.f32 %v5485, %v5876
    %v5878 = vpop.f32.mrb[0].mxu0
    %v5879 = vadd.f32 %v5489, %v5878
    %v5880 = vpop.f32.mrb[0].mxu0
    %v5881 = vadd.f32 %v5485, %v5880
    %v5882 = vpop.f32.mrb[0].mxu0
    %v5883 = vadd.f32 %v5489, %v5882
    %5884 = vdwg.mxu0
    %5885 = vmatprep.subr.bf16.mxu0 %v5717
    %5886 = vmatpush1.bf16.msra.mxu0 %v5716
    %5887 = vmatprep.subr.bf16.mxu0 %v5719
    %5888 = vmatpush1.bf16.msra.mxu0 %v5718
    %5889 = vmatprep.subr.bf16.mxu0 %v5721
    %5890 = vmatpush1.bf16.msra.mxu0 %v5720
    %5891 = vmatprep.subr.bf16.mxu0 %v5723
    %5892 = vmatpush1.bf16.msra.mxu0 %v5722
    %5893 = vmatprep.subr.bf16.mxu0 %v5725
    %5894 = vmatpush1.bf16.msra.mxu0 %v5724
    %5895 = vmatprep.subr.bf16.mxu0 %v5727
    %5896 = vmatpush1.bf16.msra.mxu0 %v5726
    %5897 = vmatprep.subr.bf16.mxu0 %v5729
    %5898 = vmatpush1.bf16.msra.mxu0 %v5728
    %5899 = vmatprep.subr.bf16.mxu0 %v5731
    %5900 = vmatpush1.bf16.msra.mxu0 %v5730
    %5901 = vmatprep.subr.bf16.mxu0 %v5733
    %5902 = vmatpush1.bf16.msra.mxu0 %v5732
    %5903 = vmatprep.subr.bf16.mxu0 %v5735
    %5904 = vmatpush1.bf16.msra.mxu0 %v5734
    %5905 = vmatprep.subr.bf16.mxu0 %v5737
    %5906 = vmatpush1.bf16.msra.mxu0 %v5736
    %5907 = vmatprep.subr.bf16.mxu0 %v5739
    %5908 = vmatpush1.bf16.msra.mxu0 %v5738
    %5909 = vmatprep.subr.bf16.mxu0 %v5741
    %5910 = vmatpush1.bf16.msra.mxu0 %v5740
    %5911 = vmatprep.subr.bf16.mxu0 %v5743
    %5912 = vmatpush1.bf16.msra.mxu0 %v5742
    %5913 = vmatprep.subr.bf16.mxu0 %v5745
    %5914 = vmatpush1.bf16.msra.mxu0 %v5744
    %5915 = vmatprep.subr.bf16.mxu0 %v5747
    %5916 = vmatpush1.bf16.msra.mxu0 %v5746
    %5917 = vmatprep.mubr.bf16.mxu0 %v5403
    %5918 = vmatmul.mubr.bf16.gmra.mrb[0].mxu0 %v5402
    %v5919 = vpop.f32.mrb[0].mxu0
    %v5920 = vadd.f32 %v5847, %v5919
    %v5921 = vpop.f32.mrb[0].mxu0
    %v5922 = vadd.f32 %v5849, %v5921
    %v5923 = vpop.f32.mrb[0].mxu0
    %v5924 = vadd.f32 %v5851, %v5923
    %v5925 = vpop.f32.mrb[0].mxu0
    %v5926 = vadd.f32 %v5853, %v5925
    %5927 = vmatprep.mubr.bf16.mxu0 %v5407
    %5928 = vmatmul.mubr.bf16.gmra.mrb[0].mxu0 %v5406
    %v5929 = vpop.f32.mrb[0].mxu0
    %v5930 = vadd.f32 %v5857, %v5929
    %v5931 = vpop.f32.mrb[0].mxu0
    %v5932 = vadd.f32 %v5859, %v5931
    %v5933 = vpop.f32.mrb[0].mxu0
    %v5934 = vadd.f32 %v5861, %v5933
    %v5935 = vpop.f32.mrb[0].mxu0
    %v5936 = vadd.f32 %v5863, %v5935
    %5937 = vmatprep.mubr.bf16.mxu0 %v5411
    %5938 = vmatmul.mubr.bf16.gmra.mrb[0].mxu0 %v5410
    %v5939 = vpop.f32.mrb[0].mxu0
    %v5940 = vadd.f32 %v5867, %v5939
    %v5941 = vpop.f32.mrb[0].mxu0
    %v5942 = vadd.f32 %v5869, %v5941
    %v5943 = vpop.f32.mrb[0].mxu0
    %v5944 = vadd.f32 %v5871, %v5943
    %v5945 = vpop.f32.mrb[0].mxu0
    %v5946 = vadd.f32 %v5873, %v5945
    %5947 = vmatprep.mubr.bf16.mxu0 %v5415
    %5948 = vmatmul.mubr.bf16.gmra.mrb[0].mxu0 %v5414
    %v5949 = vpop.f32.mrb[0].mxu0
    %v5950 = vadd.f32 %v5877, %v5949
    %v5951 = vpop.f32.mrb[0].mxu0
    %v5952 = vadd.f32 %v5879, %v5951
    %v5953 = vpop.f32.mrb[0].mxu0
    %v5954 = vadd.f32 %v5881, %v5953
    %v5955 = vpop.f32.mrb[0].mxu0
    %v5956 = vadd.f32 %v5883, %v5955
    %5957 = vdwg.mxu0
    %v5958 = vmax.f32 %v5920, 0.0
    %v5959 = vmax.f32 %v5922, 0.0
    %v5960 = vmax.f32 %v5924, 0.0
    %v5961 = vmax.f32 %v5926, 0.0
    %v5962 = vmax.f32 %v5930, 0.0
    %v5963 = vmax.f32 %v5932, 0.0
    %v5964 = vmax.f32 %v5934, 0.0
    %v5965 = vmax.f32 %v5936, 0.0
    %v5966 = vmax.f32 %v5940, 0.0
    %v5967 = vmax.f32 %v5942, 0.0
    %v5968 = vmax.f32 %v5944, 0.0
    %v5969 = vmax.f32 %v5946, 0.0
    %v5970 = vmax.f32 %v5950, 0.0
    %v5971 = vmax.f32 %v5952, 0.0
    %v5972 = vmax.f32 %v5954, 0.0
    %v5973 = vmax.f32 %v5956, 0.0
    %v5974 = vpack.c.bf16 %v5960, %v5958
    %v5975 = vpack.c.bf16 %v5961, %v5959
    %v5976 = vpack.c.bf16 %v5964, %v5962
    %v5977 = vpack.c.bf16 %v5965, %v5963
    %v5978 = vpack.c.bf16 %v5968, %v5966
    %v5979 = vpack.c.bf16 %v5969, %v5967
    %v5980 = vpack.c.bf16 %v5972, %v5970
    %v5981 = vpack.c.bf16 %v5973, %v5971
    %v5982 = vld [vmem:[#allocation11] sm:$0xf]
    %v5983 = vld [vmem:[#allocation11 + $0x4] sm:$0xf]
    %v5984 = vld [vmem:[#allocation11 + $0x8] sm:$0xf]
    %v5985 = vld [vmem:[#allocation11 + $0xc] sm:$0xf]
    %v5986 = vld [vmem:[#allocation11 + $0x10] sm:$0xf]
    %v5987 = vld [vmem:[#allocation11 + $0x14] sm:$0xf]
    %v5988 = vld [vmem:[#allocation11 + $0x18] sm:$0xf]
    %v5989 = vld [vmem:[#allocation11 + $0x1c] sm:$0xf]
    %v5990 = vld [vmem:[#allocation11 + $0x20] sm:$0xf]
    %v5991 = vld [vmem:[#allocation11 + $0x24] sm:$0xf]
    %v5992 = vld [vmem:[#allocation11 + $0x28] sm:$0xf]
    %v5993 = vld [vmem:[#allocation11 + $0x2c] sm:$0xf]
    %v5994 = vld [vmem:[#allocation11 + $0x30] sm:$0xf]
    %v5995 = vld [vmem:[#allocation11 + $0x34] sm:$0xf]
    %v5996 = vld [vmem:[#allocation11 + $0x38] sm:$0xf]
    %v5997 = vld [vmem:[#allocation11 + $0x3c] sm:$0xf]
    %v5998 = vld [vmem:[#allocation11 + $0x40] sm:$0xf]
    %v5999 = vld [vmem:[#allocation11 + $0x44] sm:$0xf]
    %v6000 = vld [vmem:[#allocation11 + $0x48] sm:$0xf]
    %v6001 = vld [vmem:[#allocation11 + $0x4c] sm:$0xf]
    %v6002 = vld [vmem:[#allocation11 + $0x50] sm:$0xf]
    %v6003 = vld [vmem:[#allocation11 + $0x54] sm:$0xf]
    %v6004 = vld [vmem:[#allocation11 + $0x58] sm:$0xf]
    %v6005 = vld [vmem:[#allocation11 + $0x5c] sm:$0xf]
    %v6006 = vld [vmem:[#allocation11 + $0x60] sm:$0xf]
    %v6007 = vld [vmem:[#allocation11 + $0x64] sm:$0xf]
    %v6008 = vld [vmem:[#allocation11 + $0x68] sm:$0xf]
    %v6009 = vld [vmem:[#allocation11 + $0x6c] sm:$0xf]
    %v6010 = vld [vmem:[#allocation11 + $0x70] sm:$0xf]
    %v6011 = vld [vmem:[#allocation11 + $0x74] sm:$0xf]
    %v6012 = vld [vmem:[#allocation11 + $0x78] sm:$0xf]
    %v6013 = vld [vmem:[#allocation11 + $0x7c] sm:$0xf]
    %v6014 = vld [vmem:[#allocation13] sm:$0x1]
    %v6016 = vlaneseq
    %v6017 = vshrl.u32 %v6016, 7
    %v6018 = vsub.s32 0, %v6017
    %v6019 = vrot.slane %v6014, %v6018
    %v6053 = vunpack.c.l.b16 %v5982
    %v6054 = vunpack.c.l.b16 %v5983
    %v6055 = vunpack.c.l.b16 %v5984
    %v6056 = vunpack.c.l.b16 %v5985
    %v6057 = vunpack.c.l.b16 %v5986
    %v6058 = vunpack.c.l.b16 %v5987
    %v6059 = vunpack.c.l.b16 %v5988
    %v6060 = vunpack.c.l.b16 %v5989
    %v6061 = vunpack.c.l.b16 %v5990
    %v6062 = vunpack.c.l.b16 %v5991
    %v6063 = vunpack.c.l.b16 %v5992
    %v6064 = vunpack.c.l.b16 %v5993
    %v6065 = vunpack.c.l.b16 %v5994
    %v6066 = vunpack.c.l.b16 %v5995
    %v6067 = vunpack.c.l.b16 %v5996
    %v6068 = vunpack.c.l.b16 %v5997
    %v6069 = vunpack.c.l.b16 %v5998
    %v6070 = vunpack.c.l.b16 %v5999
    %v6071 = vunpack.c.l.b16 %v6000
    %v6072 = vunpack.c.l.b16 %v6001
    %v6073 = vunpack.c.l.b16 %v6002
    %v6074 = vunpack.c.l.b16 %v6003
    %v6075 = vunpack.c.l.b16 %v6004
    %v6076 = vunpack.c.l.b16 %v6005
    %v6077 = vunpack.c.l.b16 %v6006
    %v6078 = vunpack.c.l.b16 %v6007
    %v6079 = vunpack.c.l.b16 %v6008
    %v6080 = vunpack.c.l.b16 %v6009
    %v6081 = vunpack.c.l.b16 %v6010
    %v6082 = vunpack.c.l.b16 %v6011
    %v6083 = vunpack.c.l.b16 %v6012
    %v6084 = vunpack.c.l.b16 %v6013
    %v6085 = vpack.c.b16 %v6054, %v6053
    %v6086 = vpack.c.b16 %v6056, %v6055
    %v6087 = vpack.c.b16 %v6058, %v6057
    %v6088 = vpack.c.b16 %v6060, %v6059
    %v6089 = vpack.c.b16 %v6062, %v6061
    %v6090 = vpack.c.b16 %v6064, %v6063
    %v6091 = vpack.c.b16 %v6066, %v6065
    %v6092 = vpack.c.b16 %v6068, %v6067
    %v6093 = vpack.c.b16 %v6070, %v6069
    %v6094 = vpack.c.b16 %v6072, %v6071
    %v6095 = vpack.c.b16 %v6074, %v6073
    %v6096 = vpack.c.b16 %v6076, %v6075
    %v6097 = vpack.c.b16 %v6078, %v6077
    %v6098 = vpack.c.b16 %v6080, %v6079
    %v6099 = vpack.c.b16 %v6082, %v6081
    %v6100 = vpack.c.b16 %v6084, %v6083
    %6117 = vmatprep.subr.bf16.mxu0 0
    %6118 = vmatpush1.bf16.msra.mxu0 %v6085
    %6119 = vmatprep.subr.bf16.mxu0 0
    %6120 = vmatpush1.bf16.msra.mxu0 %v6086
    %6121 = vmatprep.subr.bf16.mxu0 0
    %6122 = vmatpush1.bf16.msra.mxu0 %v6087
    %6123 = vmatprep.subr.bf16.mxu0 0
    %6124 = vmatpush1.bf16.msra.mxu0 %v6088
    %6125 = vmatprep.subr.bf16.mxu0 0
    %6126 = vmatpush1.bf16.msra.mxu0 %v6089
    %6127 = vmatprep.subr.bf16.mxu0 0
    %6128 = vmatpush1.bf16.msra.mxu0 %v6090
    %6129 = vmatprep.subr.bf16.mxu0 0
    %6130 = vmatpush1.bf16.msra.mxu0 %v6091
    %6131 = vmatprep.subr.bf16.mxu0 0
    %6132 = vmatpush1.bf16.msra.mxu0 %v6092
    %6133 = vmatprep.subr.bf16.mxu0 0
    %6134 = vmatpush1.bf16.msra.mxu0 %v6093
    %6135 = vmatprep.subr.bf16.mxu0 0
    %6136 = vmatpush1.bf16.msra.mxu0 %v6094
    %6137 = vmatprep.subr.bf16.mxu0 0
    %6138 = vmatpush1.bf16.msra.mxu0 %v6095
    %6139 = vmatprep.subr.bf16.mxu0 0
    %6140 = vmatpush1.bf16.msra.mxu0 %v6096
    %6141 = vmatprep.subr.bf16.mxu0 0
    %6142 = vmatpush1.bf16.msra.mxu0 %v6097
    %6143 = vmatprep.subr.bf16.mxu0 0
    %6144 = vmatpush1.bf16.msra.mxu0 %v6098
    %6145 = vmatprep.subr.bf16.mxu0 0
    %6146 = vmatpush1.bf16.msra.mxu0 %v6099
    %6147 = vmatprep.subr.bf16.mxu0 0
    %6148 = vmatpush1.bf16.msra.mxu0 %v6100
    %6149 = vmatprep.mubr.bf16.mxu0 %v5975
    %6150 = vmatmul.mubr.bf16.gmra.mrb[0].mxu0 %v5974
    %v6151 = vpop.f32.mrb[0].mxu0
    %v6152 = vadd.f32 %v6019, %v6151
    %v6153 = vpop.f32.mrb[0].mxu0
    %v6154 = vpop.f32.mrb[0].mxu0
    %v6155 = vadd.f32 %v6019, %v6154
    %v6156 = vpop.f32.mrb[0].mxu0
    %6157 = vmatprep.mubr.bf16.mxu0 %v5977
    %6158 = vmatmul.mubr.bf16.gmra.mrb[0].mxu0 %v5976
    %v6159 = vpop.f32.mrb[0].mxu0
    %v6160 = vadd.f32 %v6019, %v6159
    %v6161 = vpop.f32.mrb[0].mxu0
    %v6162 = vpop.f32.mrb[0].mxu0
    %v6163 = vadd.f32 %v6019, %v6162
    %v6164 = vpop.f32.mrb[0].mxu0
    %6165 = vmatprep.mubr.bf16.mxu0 %v5979
    %6166 = vmatmul.mubr.bf16.gmra.mrb[0].mxu0 %v5978
    %v6167 = vpop.f32.mrb[0].mxu0
    %v6168 = vadd.f32 %v6019, %v6167
    %v6169 = vpop.f32.mrb[0].mxu0
    %v6170 = vpop.f32.mrb[0].mxu0
    %v6171 = vadd.f32 %v6019, %v6170
    %v6172 = vpop.f32.mrb[0].mxu0
    %6173 = vmatprep.mubr.bf16.mxu0 %v5981
    %6174 = vmatmul.mubr.bf16.gmra.mrb[0].mxu0 %v5980
    %v6175 = vpop.f32.mrb[0].mxu0
    %v6176 = vadd.f32 %v6019, %v6175
    %v6177 = vpop.f32.mrb[0].mxu0
    %v6178 = vpop.f32.mrb[0].mxu0
    %v6179 = vadd.f32 %v6019, %v6178
    %v6180 = vpop.f32.mrb[0].mxu0
    %6181 = vdwg.mxu0
    %6182 = vmax.xlane.f32.xlu0 %v6152
    %v6183 = vpop.xlane.xlu0 %6182
    %6184 = vmax.xlane.f32.xlu0 %v6155
    %v6185 = vpop.xlane.xlu0 %6184
    %6186 = vmax.xlane.f32.xlu0 %v6160
    %v6187 = vpop.xlane.xlu0 %6186
    %6188 = vmax.xlane.f32.xlu0 %v6163
    %v6189 = vpop.xlane.xlu0 %6188
    %6190 = vmax.xlane.f32.xlu0 %v6168
    %v6191 = vpop.xlane.xlu0 %6190
    %6192 = vmax.xlane.f32.xlu0 %v6171
    %v6193 = vpop.xlane.xlu0 %6192
    %6194 = vmax.xlane.f32.xlu0 %v6176
    %v6195 = vpop.xlane.xlu0 %6194
    %6196 = vmax.xlane.f32.xlu0 %v6179
    %v6197 = vpop.xlane.xlu0 %6196
    %v6198 = vsub.f32 %v6152, %v6183
    %v6199 = vsub.f32 %v6155, %v6185
    %v6200 = vsub.f32 %v6160, %v6187
    %v6201 = vsub.f32 %v6163, %v6189
    %v6202 = vsub.f32 %v6168, %v6191
    %v6203 = vsub.f32 %v6171, %v6193
    %v6204 = vsub.f32 %v6176, %v6195
    %v6205 = vsub.f32 %v6179, %v6197
    %v6206 = vmul.f32 %v6198, 1.442695
    %v6207 = vpow.pop %v6206
    %v6208 = vmul.f32 %v6199, 1.442695
    %v6209 = vpow.pop %v6208
    %v6210 = vmul.f32 %v6200, 1.442695
    %v6211 = vpow.pop %v6210
    %v6212 = vmul.f32 %v6201, 1.442695
    %v6213 = vpow.pop %v6212
    %v6214 = vmul.f32 %v6202, 1.442695
    %v6215 = vpow.pop %v6214
    %v6216 = vmul.f32 %v6203, 1.442695
    %v6217 = vpow.pop %v6216
    %v6218 = vmul.f32 %v6204, 1.442695
    %v6219 = vpow.pop %v6218
    %v6220 = vmul.f32 %v6205, 1.442695
    %v6221 = vpow.pop %v6220
    %6222 = vadd.xlane.f32.xlu0 %v6207
    %v6223 = vpop.xlane.xlu0 %6222
    %6224 = vadd.xlane.f32.xlu0 %v6209
    %v6225 = vpop.xlane.xlu0 %6224
    %6226 = vadd.xlane.f32.xlu0 %v6211
    %v6227 = vpop.xlane.xlu0 %6226
    %6228 = vadd.xlane.f32.xlu0 %v6213
    %v6229 = vpop.xlane.xlu0 %6228
    %6230 = vadd.xlane.f32.xlu0 %v6215
    %v6231 = vpop.xlane.xlu0 %6230
    %6232 = vadd.xlane.f32.xlu0 %v6217
    %v6233 = vpop.xlane.xlu0 %6232
    %6234 = vadd.xlane.f32.xlu0 %v6219
    %v6235 = vpop.xlane.xlu0 %6234
    %6236 = vadd.xlane.f32.xlu0 %v6221
    %v6237 = vpop.xlane.xlu0 %6236
    %v6238 = vlog2.pop %v6223
    %v6239 = vmul.f32 %v6238, 0.6931472
    %v6240 = vlog2.pop %v6225
    %v6241 = vmul.f32 %v6240, 0.6931472
    %v6242 = vlog2.pop %v6227
    %v6243 = vmul.f32 %v6242, 0.6931472
    %v6244 = vlog2.pop %v6229
    %v6245 = vmul.f32 %v6244, 0.6931472
    %v6246 = vlog2.pop %v6231
    %v6247 = vmul.f32 %v6246, 0.6931472
    %v6248 = vlog2.pop %v6233
    %v6249 = vmul.f32 %v6248, 0.6931472
    %v6250 = vlog2.pop %v6235
    %v6251 = vmul.f32 %v6250, 0.6931472
    %v6252 = vlog2.pop %v6237
    %v6253 = vmul.f32 %v6252, 0.6931472
    %v6254 = vsub.f32 %v6198, %v6239
    %v6255 = vsub.f32 %v6199, %v6241
    %v6256 = vsub.f32 %v6200, %v6243
    %v6257 = vsub.f32 %v6201, %v6245
    %v6258 = vsub.f32 %v6202, %v6247
    %v6259 = vsub.f32 %v6203, %v6249
    %v6260 = vsub.f32 %v6204, %v6251
    %v6261 = vsub.f32 %v6205, %v6253
    %6262 = vst [vmem:[#allocation14] sm:$0xff] %v6254
    %6263 = vst [vmem:[#allocation14 + $0x8] sm:$0xff] %v6255
    %6264 = vst [vmem:[#allocation14 + $0x10] sm:$0xff] %v6256
    %6265 = vst [vmem:[#allocation14 + $0x18] sm:$0xff] %v6257
    %6266 = vst [vmem:[#allocation14 + $0x20] sm:$0xff] %v6258
    %6267 = vst [vmem:[#allocation14 + $0x28] sm:$0xff] %v6259
    %6268 = vst [vmem:[#allocation14 + $0x30] sm:$0xff] %v6260
    %6269 = vst [vmem:[#allocation14 + $0x38] sm:$0xff] %v6261
    // Predicated region
    $region58: #{tpu_custom_call.1} parent=1 // pred_check
      _
    $region59: #{tpu_custom_call.1} parent=1 // pred_check_branch
      %6271 = sbr.rel (0) target = $region61
    $region60: #{tpu_custom_call.1} parent=1 // pred_region
      %s6273 = ssub.s32 1024, 1024
      %6274 = vsyncadd [#allocation4], %s6273
      %s6275 = sshll.u32 [#allocation14], 4
      %s6276 = int_to_ptr.vmem [resolvable:$true] %s6275
      %6281 = dma.vmem_to_hbm [thread:$0]  %s6276, 1024, %s7, [#allocation4], 128, 128, 8
    $region61: #{tpu_custom_call.1} parent=1 // pred_fallthru
      _
    // Predicated region
    $region62: #{tpu_custom_call.1} parent=1 // pred_check
      _
    $region63: #{tpu_custom_call.1} parent=1 // pred_check_branch
      %6283 = sbr.rel (0) target = $region65
    $region64: #{tpu_custom_call.1} parent=1 // pred_region
      %6284 = dma.done [#allocation4], 1024
    $region65: #{tpu_custom_call.1} parent=1 // pred_fallthru
      _
    %6285 = vsyncpa [#allocation3], 1
    %6286 = vsyncpa [#allocation6], 1
    %6287 = vsyncpa [#allocation9], 1
    %6288 = vsyncpa [#allocation12], 1
    %6289 = vsyncpa [#allocation4], 1

</llo_original>
